<compile_context>
chip_gen: v7x
topology: tpu7x:2x2x1
jax: 0.10.0
libtpu: 0.0.40
codegen_flags: <defaults>
</compile_context>

<pallas_src>
import functools
import math

import numpy as np
import jax
import jax.numpy as jnp
from jax import lax
from jax.experimental import pallas as pl
from jax.experimental.pallas import tpu as pltpu

_F32 = jnp.float32


# --------------------------------------------------------------------------------------
# Config (mirrors the fields used by Model.__init__/forward)
# --------------------------------------------------------------------------------------
class Config:
    seq_len = 16
    label_len = 8
    pred_len = 8
    enc_in = 4
    dec_in = 4
    c_out = 4
    d_model = 32
    n_heads = 4
    d_ff = 64
    e_layers = 1
    d_layers = 1
    kernel_size = 5          # moving-average window (odd)
    factor = 1
    dropout = 0.0            # eval mode -> dropout identity
    activation = 'relu'
    embed_type = 0           # DataEmbedding_wo_pos_temp: token conv only (marks unused)
    attn_type = 'SA'
    output_attention = False


# --------------------------------------------------------------------------------------
# Host-side packed constants (become VMEM-resident kernel inputs, loaded once)
# --------------------------------------------------------------------------------------
@functools.lru_cache(maxsize=None)
def _packed_consts(L, kernel_size, label_len):
    """mats  : (2*nb+2, L, L) = [shiftL_0..nb-1 | shiftR_0..nb-1 | avg A | msel]
       cols  : (nb+1, L, 1)   = [bit_0..nb-1 of row index | pred-row mask]
       nb    : number of shift steps (log2-ish of L)."""
    nb = max(1, (L - 1).bit_length())
    shiftL = np.zeros((nb, L, L), np.float32)   # (shiftL_i @ x)[t] = x[(t - 2^i) % L]
    shiftR = np.zeros((nb, L, L), np.float32)   # (shiftR_i @ x)[t] = x[(t + 2^i) % L]
    bits = np.zeros((nb, L, 1), np.float32)
    for i in range(nb):
        b = 1 << i
        for t in range(L):
            shiftL[i, t, (t - b) % L] = 1.0
            shiftR[i, t, (t + b) % L] = 1.0
            bits[i, t, 0] = float((t >> i) & 1)
    # replicate-padded moving average (AvgPool1d stride 1) as a matmul
    pad = (kernel_size - 1) // 2
    A = np.zeros((L, L), np.float32)
    for t in range(L):
        for j in range(-pad, pad + 1):
            A[t, min(max(t + j, 0), L - 1)] += 1.0 / kernel_size
    # decoder init: row t < label_len selects encoder row t + L - label_len; rest = pred rows
    msel = np.zeros((L, L), np.float32)
    maskp = np.zeros((L, 1), np.float32)
    for t in range(L):
        if t < label_len:
            msel[t, t + L - label_len] = 1.0
        else:
            maskp[t, 0] = 1.0
    mats = np.concatenate([shiftL, shiftR, A[None], msel[None]], axis=0)
    cols = np.concatenate([bits, maskp[None]], axis=0)
    return jnp.asarray(mats), jnp.asarray(cols), nb


# --------------------------------------------------------------------------------------
# Fully fused forward kernel (one grid step == one batch element)
# --------------------------------------------------------------------------------------
def _autoformer_kernel(x_ref, mats_ref, cols_ref, wemb_ref,
                       e_wqkv_ref, e_wo_ref, e_wff1_ref, e_wff2_ref, e_vec_ref, enorm_ref,
                       d_swqkv_ref, d_swo_ref, d_cwq_ref, d_cwkv_ref, d_cwo_ref,
                       d_wff1_ref, d_wff2_ref, d_wtrend_ref, d_vec_ref,
                       fnorm_ref, fproj_ref,
                       out_ref, *,
                       nb, d_model, top_k, activation, pred_len, e_layers, d_layers):
    L = x_ref.shape[1]
    D = d_model

    def mm(a, b):
        return jnp.dot(a, b, preferred_element_type=jnp.float32)

    # ---- VMEM-resident constants, hoisted once per grid step --------------------------
    shl = [mats_ref[i] for i in range(nb)]
    shr = [mats_ref[nb + i] for i in range(nb)]
    A = mats_ref[2 * nb]
    msel = mats_ref[2 * nb + 1]
    bitmask = [jnp.broadcast_to(cols_ref[i] > 0.0, (L, L)) for i in range(nb)]   # hoisted
    maskp = cols_ref[nb]                                                          # (L, 1)

    def act(y):
        if activation == 'relu':
            return jnp.maximum(y, 0.0)
        return 0.5 * y * (1.0 + lax.erf(y * (1.0 / math.sqrt(2.0))))             # gelu (unused)

    def my_layernorm(x, gamma, beta):
        mu = jnp.mean(x, axis=-1, keepdims=True)
        var = jnp.mean(jnp.square(x - mu), axis=-1, keepdims=True)
        xh = (x - mu) * lax.rsqrt(var + 1e-5)
        xh = xh * gamma + beta
        return xh - jnp.mean(xh, axis=0, keepdims=True)

    def roll_left_by_row(m):          # row t -> columns rolled LEFT by t
        for i in range(nb):
            m = jnp.where(bitmask[i], mm(m, shl[i]), m)
        return m

    def roll_right_by_row(m):         # row t -> columns rolled RIGHT by t
        for i in range(nb):
            m = jnp.where(bitmask[i], mm(m, shr[i]), m)
        return m

    def circ_conv3(x, w0, w1, w2):
        # Conv1d(kernel=3, padding=1, circular, no bias) along time (axis 0)
        xm1 = mm(shl[0], x)           # x[(t-1)%L]
        xp1 = mm(shr[0], x)           # x[(t+1)%L]
        return mm(xm1, w0) + mm(x, w1) + mm(xp1, w2)

    def autocorr(q, k, v):
        """AutoCorrelation (inference time_delay_agg), exact equivalent of the FFT version."""
        c2 = lax.dot_general(k, q, (((1,), (1,)), ((), ())),
                             preferred_element_type=jnp.float32)   # c2[s,u] = <K[s], Q[u]>
        mv = jnp.sum(roll_left_by_row(c2), axis=0, keepdims=True) * (1.0 / D)   # (1, L)
        # top-k delay selection + softmax over the k selected correlations
        # TODO(synk): exact float ties among mean_value entries would double-count a delay.
        neg = jnp.float32(-1e30)
        cur = mv
        vals, ohs = [], []
        for _ in range(top_k):
            mx = jnp.max(cur, axis=-1, keepdims=True)
            oh = (cur >= mx).astype(jnp.float32)
            vals.append(mx)
            ohs.append(oh)
            cur = jnp.where(oh > 0.0, neg, cur)
        exps = [jnp.exp(vv - vals[0]) for vv in vals]
        denom = exps[0]
        for e in exps[1:]:
            denom = denom + e
        inv = 1.0 / denom
        wvec = ohs[0] * (exps[0] * inv)
        for e, oh in zip(exps[1:], ohs[1:]):
            wvec = wvec + oh * (e * inv)                           # (1, L) weights at delays
        # P[t, j] = wvec[(j - t) % L]  ->  V_agg = P @ V   (circular gather as a circulant matmul)
        p = roll_right_by_row(jnp.broadcast_to(wvec, (L, L)))
        return mm(p, v)

    # ---- prep: model-level series_decomp + seasonal/trend init + both embeddings ------
    xin = x_ref[0]                                   # (L, Cin)
    mov = mm(A, xin)                                 # trend part of x_enc
    seas = xin - mov                                 # seasonal part
    xmean = jnp.mean(xin, axis=0, keepdims=True)     # (1, Cin)
    seasonal_init = mm(msel, seas)                   # last label_len seasonal rows, zeros after
    trend = mm(msel, mov) + maskp * xmean            # trend_init (L, c_out)
    x = circ_conv3(xin, wemb_ref[0], wemb_ref[1], wemb_ref[2])                 # enc embedding
    dec_x = circ_conv3(seasonal_init, wemb_ref[3], wemb_ref[4], wemb_ref[5])   # dec embedding

    # ---- encoder -----------------------------------------------------------------------
    for l in range(e_layers):
        ev = e_vec_ref[l]                            # rows: b_q, b_k, b_v, b_o
        qkv = mm(x, e_wqkv_ref[l])                   # fused Q/K/V projection (L, 3D)
        q = qkv[:, 0:D] + ev[0:1]
        k = qkv[:, D:2 * D] + ev[1:2]
        v = qkv[:, 2 * D:3 * D] + ev[2:3]
        x = x + (mm(autocorr(q, k, v), e_wo_ref[l]) + ev[3:4])
        x = x - mm(A, x)                             # decomp1 (keep residual)
        y = mm(act(mm(x, e_wff1_ref[l])), e_wff2_ref[l])
        x2 = x + y
        x = x2 - mm(A, x2)                           # decomp2 (keep residual)
    enorm = enorm_ref[...]
    cross = my_layernorm(x, enorm[0:1], enorm[1:2])  # encoder output (enc_out)

    # ---- decoder -----------------------------------------------------------------------
    x = dec_x
    for l in range(d_layers):
        dv = d_vec_ref[l]                            # rows: sbq,sbk,sbv,sbo,cbq,cbk,cbv,cbo
        # self AutoCorrelation (mask ignored, as in the reference AutoCorrelation)
        qkv = mm(x, d_swqkv_ref[l])
        q = qkv[:, 0:D] + dv[0:1]
        k = qkv[:, D:2 * D] + dv[1:2]
        v = qkv[:, 2 * D:3 * D] + dv[2:3]
        x = x + (mm(autocorr(q, k, v), d_swo_ref[l]) + dv[3:4])
        t1 = mm(A, x)
        x = x - t1
        # cross AutoCorrelation (L == S for this config; fused K/V projection)
        q = mm(x, d_cwq_ref[l]) + dv[4:5]
        kv = mm(cross, d_cwkv_ref[l])
        k = kv[:, 0:D] + dv[5:6]
        v = kv[:, D:2 * D] + dv[6:7]
        x = x + (mm(autocorr(q, k, v), d_cwo_ref[l]) + dv[7:8])
        t2 = mm(A, x)
        x = x - t2
        # FFN
        y = mm(act(mm(x, d_wff1_ref[l])), d_wff2_ref[l])
        x = x + y
        t3 = mm(A, x)
        x = x - t3
        # residual trend: circular Conv1d(d_model -> c_out, k=3), then accumulate
        rt = t1 + t2 + t3
        rt = circ_conv3(rt, d_wtrend_ref[l, 0], d_wtrend_ref[l, 1], d_wtrend_ref[l, 2])
        trend = trend + rt

    # ---- final norm + projection + trend add + pred-slice -------------------------------
    fnorm = fnorm_ref[...]
    seasonal = mm(my_layernorm(x, fnorm[0:1], fnorm[1:2]), fproj_ref[0:D]) + fproj_ref[D:D + 1]
    dec_out = trend + seasonal                       # (L, c_out)
    out_ref[0] = dec_out[L - pred_len:, :]


# --------------------------------------------------------------------------------------
# Wrapper: single pallas_call for the whole forward
# --------------------------------------------------------------------------------------
def autoformer_forward(params, cfg, x_enc, x_mark_enc, x_dec, x_mark_dec):
    del x_mark_enc, x_mark_dec, x_dec     # embed_type==0 ignores marks; x_dec only gives a shape
    B, Lenc, Cin = x_enc.shape
    Ldec = cfg.label_len + cfg.pred_len
    # TODO(synk): Lenc != Ldec would need separate shift/avg constants per stream + K/V pad/trunc.
    assert Lenc == Ldec, "fused kernel assumes seq_len == label_len + pred_len"
    L = Lenc
    D, C = cfg.d_model, cfg.c_out
    mats, cols, nb = _packed_consts(L, cfg.kernel_size, cfg.label_len)
    top_k = max(1, min(L, int(cfg.factor * math.log(L))))

    p = params
    ins = (x_enc.astype(_F32), mats, cols, p['wemb'],
           p['e_wqkv'], p['e_wo'], p['e_wff1'], p['e_wff2'], p['e_vec'], p['enorm'],
           p['d_swqkv'], p['d_swo'], p['d_cwq'], p['d_cwkv'], p['d_cwo'],
           p['d_wff1'], p['d_wff2'], p['d_wtrend'], p['d_vec'],
           p['fnorm'], p['fproj'])

    def cspec(arr):
        n = arr.ndim
        return pl.BlockSpec(arr.shape, lambda b, n=n: (0,) * n)   # constant block: DMA'd once

    in_specs = [pl.BlockSpec((1, L, Cin), lambda b: (b, 0, 0))] + [cspec(a) for a in ins[1:]]

    kernel = functools.partial(
        _autoformer_kernel, nb=nb, d_model=D, top_k=top_k,
        activation=cfg.activation, pred_len=cfg.pred_len,
        e_layers=cfg.e_layers, d_layers=cfg.d_layers)

    out = pl.pallas_call(
        kernel,
        out_shape=jax.ShapeDtypeStruct((B, cfg.pred_len, C), _F32),
        grid=(B,),
        in_specs=in_specs,
        out_specs=pl.BlockSpec((1, cfg.pred_len, C), lambda b: (b, 0, 0)),
        compiler_params=pltpu.CompilerParams(dimension_semantics=("parallel",)),
    )(*ins)

    attns = [None] * cfg.e_layers
    return out, attns


# --------------------------------------------------------------------------------------
# Deterministic synthetic parameters (packed layout; shapes follow the PyTorch module)
# --------------------------------------------------------------------------------------
def init_params(cfg, key):
    keys = iter(jax.random.split(key, 256))

    def nrm(shape, scale):
        return (jax.random.normal(next(keys), shape, _F32) * scale).astype(_F32)

    D, F, C = cfg.d_model, cfg.d_ff, cfg.c_out
    s = 1.0 / math.sqrt(D)

    def stack(fn, n):
        return jnp.stack([fn() for _ in range(n)], axis=0)

    # encoder layers (stacked on a leading "layer" axis)
    e_wqkv = stack(lambda: nrm((D, 3 * D), s), cfg.e_layers)      # fused Q/K/V weights
    e_wo = stack(lambda: nrm((D, D), s), cfg.e_layers)
    e_wff1 = stack(lambda: nrm((D, F), 1.0 / math.sqrt(D)), cfg.e_layers)
    e_wff2 = stack(lambda: nrm((F, D), 1.0 / math.sqrt(F)), cfg.e_layers)
    e_vec = stack(lambda: nrm((4, D), s), cfg.e_layers)           # b_q, b_k, b_v, b_o

    # decoder layers
    d_swqkv = stack(lambda: nrm((D, 3 * D), s), cfg.d_layers)
    d_swo = stack(lambda: nrm((D, D), s), cfg.d_layers)
    d_cwq = stack(lambda: nrm((D, D), s), cfg.d_layers)
    d_cwkv = stack(lambda: nrm((D, 2 * D), s), cfg.d_layers)      # fused cross K/V weights
    d_cwo = stack(lambda: nrm((D, D), s), cfg.d_layers)
    d_wff1 = stack(lambda: nrm((D, F), 1.0 / math.sqrt(D)), cfg.d_layers)
    d_wff2 = stack(lambda: nrm((F, D), 1.0 / math.sqrt(F)), cfg.d_layers)
    d_wtrend = stack(lambda: nrm((3, D, C), 1.0 / math.sqrt(3 * D)), cfg.d_layers)
    d_vec = stack(lambda: nrm((8, D), s), cfg.d_layers)           # self b_q..b_o, cross b_q..b_o

    # token embeddings (circular k=3 conv taps), enc + dec packed
    wemb = jnp.concatenate([
        nrm((3, cfg.enc_in, D), 1.0 / math.sqrt(3 * cfg.enc_in)),
        nrm((3, cfg.dec_in, D), 1.0 / math.sqrt(3 * cfg.dec_in))], axis=0)

    enorm = jnp.concatenate([jnp.ones((1, D), _F32), jnp.zeros((1, D), _F32)], axis=0)
    fnorm = jnp.concatenate([jnp.ones((1, D), _F32), jnp.zeros((1, D), _F32)], axis=0)
    fproj = jnp.concatenate([nrm((D, C), 1.0 / math.sqrt(D)),
                             nrm((1, C), 1.0 / math.sqrt(D))], axis=0)   # [W ; b]

    return dict(wemb=wemb,
                e_wqkv=e_wqkv, e_wo=e_wo, e_wff1=e_wff1, e_wff2=e_wff2, e_vec=e_vec, enorm=enorm,
                d_swqkv=d_swqkv, d_swo=d_swo, d_cwq=d_cwq, d_cwkv=d_cwkv, d_cwo=d_cwo,
                d_wff1=d_wff1, d_wff2=d_wff2, d_wtrend=d_wtrend, d_vec=d_vec,
                fnorm=fnorm, fproj=fproj)


# --------------------------------------------------------------------------------------
if __name__ == "__main__":
    cfg = Config()
    key = jax.random.PRNGKey(0)
    kp, k1, k2, k3, k4 = jax.random.split(key, 5)

    params = init_params(cfg, kp)

    B = 2
    L_dec = cfg.label_len + cfg.pred_len
    x_enc = jax.random.normal(k1, (B, cfg.seq_len, cfg.enc_in), _F32)
    x_mark_enc = jax.random.normal(k2, (B, cfg.seq_len, 4), _F32)
    x_dec = jax.random.normal(k3, (B, L_dec, cfg.dec_in), _F32)
    x_mark_dec = jax.random.normal(k4, (B, L_dec, 4), _F32)

    fwd = jax.jit(lambda p, xe, xme, xd, xmd: autoformer_forward(p, cfg, xe, xme, xd, xmd))
    out, attns = fwd(params, x_enc, x_mark_enc, x_dec, x_mark_dec)
    out = jax.block_until_ready(out)

    assert out.shape == (B, cfg.pred_len, cfg.c_out), out.shape
    assert len(attns) == cfg.e_layers
    assert bool(jnp.all(jnp.isfinite(out)))
    print("KERNEL_OK")
</pallas_src>

<mosaic_0001>
module attributes {stable_mosaic.version = 11 : i64} {
  func.func @_autoformer_kernel(%arg0: i32, %arg1: memref<1x16x4xf32, #tpu.memory_space<vmem>>, %arg2: memref<10x16x16xf32, #tpu.memory_space<vmem>>, %arg3: memref<5x16x1xf32, #tpu.memory_space<vmem>>, %arg4: memref<6x4x32xf32, #tpu.memory_space<vmem>>, %arg5: memref<1x32x96xf32, #tpu.memory_space<vmem>>, %arg6: memref<1x32x32xf32, #tpu.memory_space<vmem>>, %arg7: memref<1x32x64xf32, #tpu.memory_space<vmem>>, %arg8: memref<1x64x32xf32, #tpu.memory_space<vmem>>, %arg9: memref<1x4x32xf32, #tpu.memory_space<vmem>>, %arg10: memref<2x32xf32, #tpu.memory_space<vmem>>, %arg11: memref<1x32x96xf32, #tpu.memory_space<vmem>>, %arg12: memref<1x32x32xf32, #tpu.memory_space<vmem>>, %arg13: memref<1x32x32xf32, #tpu.memory_space<vmem>>, %arg14: memref<1x32x64xf32, #tpu.memory_space<vmem>>, %arg15: memref<1x32x32xf32, #tpu.memory_space<vmem>>, %arg16: memref<1x32x64xf32, #tpu.memory_space<vmem>>, %arg17: memref<1x64x32xf32, #tpu.memory_space<vmem>>, %arg18: memref<1x3x32x4xf32, #tpu.memory_space<vmem>>, %arg19: memref<1x8x32xf32, #tpu.memory_space<vmem>>, %arg20: memref<2x32xf32, #tpu.memory_space<vmem>>, %arg21: memref<33x4xf32, #tpu.memory_space<vmem>>, %arg22: memref<1x8x4xf32, #tpu.memory_space<vmem>>) attributes {dimension_semantics = [#tpu.dimension_semantics<parallel>], iteration_bounds = array<i64: 2>, scalar_prefetch = 0 : i64, scratch_operands = 0 : i64, tpu.core_type = #tpu.core_type<tc>, window_params = [{transform_indices = @transform_0, window_bounds = array<i64: 1, 16, 4>}, {pipeline_mode = #tpu.pipeline_mode<synchronous>, transform_indices = @transform_1, window_bounds = array<i64: 10, 16, 16>}, {pipeline_mode = #tpu.pipeline_mode<synchronous>, transform_indices = @transform_2, window_bounds = array<i64: 5, 16, 1>}, {pipeline_mode = #tpu.pipeline_mode<synchronous>, transform_indices = @transform_3, window_bounds = array<i64: 6, 4, 32>}, {pipeline_mode = #tpu.pipeline_mode<synchronous>, transform_indices = @transform_4, window_bounds = array<i64: 1, 32, 96>}, {pipeline_mode = #tpu.pipeline_mode<synchronous>, transform_indices = @transform_5, window_bounds = array<i64: 1, 32, 32>}, {pipeline_mode = #tpu.pipeline_mode<synchronous>, transform_indices = @transform_6, window_bounds = array<i64: 1, 32, 64>}, {pipeline_mode = #tpu.pipeline_mode<synchronous>, transform_indices = @transform_7, window_bounds = array<i64: 1, 64, 32>}, {pipeline_mode = #tpu.pipeline_mode<synchronous>, transform_indices = @transform_8, window_bounds = array<i64: 1, 4, 32>}, {pipeline_mode = #tpu.pipeline_mode<synchronous>, transform_indices = @transform_9, window_bounds = array<i64: 2, 32>}, {pipeline_mode = #tpu.pipeline_mode<synchronous>, transform_indices = @transform_10, window_bounds = array<i64: 1, 32, 96>}, {pipeline_mode = #tpu.pipeline_mode<synchronous>, transform_indices = @transform_11, window_bounds = array<i64: 1, 32, 32>}, {pipeline_mode = #tpu.pipeline_mode<synchronous>, transform_indices = @transform_12, window_bounds = array<i64: 1, 32, 32>}, {pipeline_mode = #tpu.pipeline_mode<synchronous>, transform_indices = @transform_13, window_bounds = array<i64: 1, 32, 64>}, {pipeline_mode = #tpu.pipeline_mode<synchronous>, transform_indices = @transform_14, window_bounds = array<i64: 1, 32, 32>}, {pipeline_mode = #tpu.pipeline_mode<synchronous>, transform_indices = @transform_15, window_bounds = array<i64: 1, 32, 64>}, {pipeline_mode = #tpu.pipeline_mode<synchronous>, transform_indices = @transform_16, window_bounds = array<i64: 1, 64, 32>}, {pipeline_mode = #tpu.pipeline_mode<synchronous>, transform_indices = @transform_17, window_bounds = array<i64: 1, 3, 32, 4>}, {pipeline_mode = #tpu.pipeline_mode<synchronous>, transform_indices = @transform_18, window_bounds = array<i64: 1, 8, 32>}, {pipeline_mode = #tpu.pipeline_mode<synchronous>, transform_indices = @transform_19, window_bounds = array<i64: 2, 32>}, {pipeline_mode = #tpu.pipeline_mode<synchronous>, transform_indices = @transform_20, window_bounds = array<i64: 33, 4>}, {transform_indices = @transform_21, window_bounds = array<i64: 1, 8, 4>}]} {
    %c0 = arith.constant 0 : index
    %c0_0 = arith.constant 0 : index
    %c0_1 = arith.constant 0 : index
    %0 = vector.load %arg2[%c0, %c0_0, %c0_1] : memref<10x16x16xf32, #tpu.memory_space<vmem>>, vector<1x16x16xf32>
    %1 = vector.shape_cast %0 : vector<1x16x16xf32> to vector<16x16xf32>
    %c1 = arith.constant 1 : index
    %c0_2 = arith.constant 0 : index
    %c0_3 = arith.constant 0 : index
    %2 = vector.load %arg2[%c1, %c0_2, %c0_3] : memref<10x16x16xf32, #tpu.memory_space<vmem>>, vector<1x16x16xf32>
    %3 = vector.shape_cast %2 : vector<1x16x16xf32> to vector<16x16xf32>
    %c2 = arith.constant 2 : index
    %c0_4 = arith.constant 0 : index
    %c0_5 = arith.constant 0 : index
    %4 = vector.load %arg2[%c2, %c0_4, %c0_5] : memref<10x16x16xf32, #tpu.memory_space<vmem>>, vector<1x16x16xf32>
    %5 = vector.shape_cast %4 : vector<1x16x16xf32> to vector<16x16xf32>
    %c3 = arith.constant 3 : index
    %c0_6 = arith.constant 0 : index
    %c0_7 = arith.constant 0 : index
    %6 = vector.load %arg2[%c3, %c0_6, %c0_7] : memref<10x16x16xf32, #tpu.memory_space<vmem>>, vector<1x16x16xf32>
    %7 = vector.shape_cast %6 : vector<1x16x16xf32> to vector<16x16xf32>
    %c4 = arith.constant 4 : index
    %c0_8 = arith.constant 0 : index
    %c0_9 = arith.constant 0 : index
    %8 = vector.load %arg2[%c4, %c0_8, %c0_9] : memref<10x16x16xf32, #tpu.memory_space<vmem>>, vector<1x16x16xf32>
    %9 = vector.shape_cast %8 : vector<1x16x16xf32> to vector<16x16xf32>
    %c5 = arith.constant 5 : index
    %c0_10 = arith.constant 0 : index
    %c0_11 = arith.constant 0 : index
    %10 = vector.load %arg2[%c5, %c0_10, %c0_11] : memref<10x16x16xf32, #tpu.memory_space<vmem>>, vector<1x16x16xf32>
    %11 = vector.shape_cast %10 : vector<1x16x16xf32> to vector<16x16xf32>
    %c6 = arith.constant 6 : index
    %c0_12 = arith.constant 0 : index
    %c0_13 = arith.constant 0 : index
    %12 = vector.load %arg2[%c6, %c0_12, %c0_13] : memref<10x16x16xf32, #tpu.memory_space<vmem>>, vector<1x16x16xf32>
    %13 = vector.shape_cast %12 : vector<1x16x16xf32> to vector<16x16xf32>
    %c7 = arith.constant 7 : index
    %c0_14 = arith.constant 0 : index
    %c0_15 = arith.constant 0 : index
    %14 = vector.load %arg2[%c7, %c0_14, %c0_15] : memref<10x16x16xf32, #tpu.memory_space<vmem>>, vector<1x16x16xf32>
    %15 = vector.shape_cast %14 : vector<1x16x16xf32> to vector<16x16xf32>
    %c8 = arith.constant 8 : index
    %c0_16 = arith.constant 0 : index
    %c0_17 = arith.constant 0 : index
    %16 = vector.load %arg2[%c8, %c0_16, %c0_17] : memref<10x16x16xf32, #tpu.memory_space<vmem>>, vector<1x16x16xf32>
    %17 = vector.shape_cast %16 : vector<1x16x16xf32> to vector<16x16xf32>
    %c9 = arith.constant 9 : index
    %c0_18 = arith.constant 0 : index
    %c0_19 = arith.constant 0 : index
    %18 = vector.load %arg2[%c9, %c0_18, %c0_19] : memref<10x16x16xf32, #tpu.memory_space<vmem>>, vector<1x16x16xf32>
    %19 = vector.shape_cast %18 : vector<1x16x16xf32> to vector<16x16xf32>
    %c0_20 = arith.constant 0 : index
    %c0_21 = arith.constant 0 : index
    %c0_22 = arith.constant 0 : index
    %20 = vector.load %arg3[%c0_20, %c0_21, %c0_22] : memref<5x16x1xf32, #tpu.memory_space<vmem>>, vector<1x16x1xf32>
    %21 = vector.shape_cast %20 : vector<1x16x1xf32> to vector<16x1xf32>
    %cst = arith.constant 0.000000e+00 : f32
    %22 = vector.broadcast %cst : f32 to vector<16x1xf32>
    %23 = arith.cmpf ogt, %21, %22 : vector<16x1xf32>
    %24 = vector.shape_cast %23 : vector<16x1xi1> to vector<16x1xi1>
    %25 = vector.broadcast %24 : vector<16x1xi1> to vector<16x16xi1>
    %c1_23 = arith.constant 1 : index
    %c0_24 = arith.constant 0 : index
    %c0_25 = arith.constant 0 : index
    %26 = vector.load %arg3[%c1_23, %c0_24, %c0_25] : memref<5x16x1xf32, #tpu.memory_space<vmem>>, vector<1x16x1xf32>
    %27 = vector.shape_cast %26 : vector<1x16x1xf32> to vector<16x1xf32>
    %cst_26 = arith.constant 0.000000e+00 : f32
    %28 = vector.broadcast %cst_26 : f32 to vector<16x1xf32>
    %29 = arith.cmpf ogt, %27, %28 : vector<16x1xf32>
    %30 = vector.shape_cast %29 : vector<16x1xi1> to vector<16x1xi1>
    %31 = vector.broadcast %30 : vector<16x1xi1> to vector<16x16xi1>
    %c2_27 = arith.constant 2 : index
    %c0_28 = arith.constant 0 : index
    %c0_29 = arith.constant 0 : index
    %32 = vector.load %arg3[%c2_27, %c0_28, %c0_29] : memref<5x16x1xf32, #tpu.memory_space<vmem>>, vector<1x16x1xf32>
    %33 = vector.shape_cast %32 : vector<1x16x1xf32> to vector<16x1xf32>
    %cst_30 = arith.constant 0.000000e+00 : f32
    %34 = vector.broadcast %cst_30 : f32 to vector<16x1xf32>
    %35 = arith.cmpf ogt, %33, %34 : vector<16x1xf32>
    %36 = vector.shape_cast %35 : vector<16x1xi1> to vector<16x1xi1>
    %37 = vector.broadcast %36 : vector<16x1xi1> to vector<16x16xi1>
    %c3_31 = arith.constant 3 : index
    %c0_32 = arith.constant 0 : index
    %c0_33 = arith.constant 0 : index
    %38 = vector.load %arg3[%c3_31, %c0_32, %c0_33] : memref<5x16x1xf32, #tpu.memory_space<vmem>>, vector<1x16x1xf32>
    %39 = vector.shape_cast %38 : vector<1x16x1xf32> to vector<16x1xf32>
    %cst_34 = arith.constant 0.000000e+00 : f32
    %40 = vector.broadcast %cst_34 : f32 to vector<16x1xf32>
    %41 = arith.cmpf ogt, %39, %40 : vector<16x1xf32>
    %42 = vector.shape_cast %41 : vector<16x1xi1> to vector<16x1xi1>
    %43 = vector.broadcast %42 : vector<16x1xi1> to vector<16x16xi1>
    %c4_35 = arith.constant 4 : index
    %c0_36 = arith.constant 0 : index
    %c0_37 = arith.constant 0 : index
    %44 = vector.load %arg3[%c4_35, %c0_36, %c0_37] : memref<5x16x1xf32, #tpu.memory_space<vmem>>, vector<1x16x1xf32>
    %45 = vector.shape_cast %44 : vector<1x16x1xf32> to vector<16x1xf32>
    %c0_38 = arith.constant 0 : index
    %c0_39 = arith.constant 0 : index
    %c0_40 = arith.constant 0 : index
    %46 = vector.load %arg1[%c0_38, %c0_39, %c0_40] : memref<1x16x4xf32, #tpu.memory_space<vmem>>, vector<1x16x4xf32>
    %47 = vector.shape_cast %46 : vector<1x16x4xf32> to vector<16x4xf32>
    %cst_41 = arith.constant dense<0.000000e+00> : vector<16x4xf32>
    %48 = tpu.matmul %17, %47, %cst_41 {dimension_numbers = #tpu.dot_dimension_numbers<[1], [0], [0], [1], [0, 0, 1, 1], [], []>} : vector<16x16xf32>, vector<16x4xf32>, vector<16x4xf32> -> vector<16x4xf32>
    %49 = arith.subf %47, %48 : vector<16x4xf32>
    %cst_42 = arith.constant dense<0.000000e+00> : vector<4xf32>
    %50 = vector.multi_reduction <add>, %47, %cst_42 [0] : vector<16x4xf32> to vector<4xf32>
    %51 = vector.shape_cast %50 : vector<4xf32> to vector<1x4xf32>
    %cst_43 = arith.constant 1.600000e+01 : f32
    %52 = vector.broadcast %cst_43 : f32 to vector<1x4xf32>
    %53 = arith.divf %51, %52 : vector<1x4xf32>
    %cst_44 = arith.constant dense<0.000000e+00> : vector<16x4xf32>
    %54 = tpu.matmul %19, %49, %cst_44 {dimension_numbers = #tpu.dot_dimension_numbers<[1], [0], [0], [1], [0, 0, 1, 1], [], []>} : vector<16x16xf32>, vector<16x4xf32>, vector<16x4xf32> -> vector<16x4xf32>
    %cst_45 = arith.constant dense<0.000000e+00> : vector<16x4xf32>
    %55 = tpu.matmul %19, %48, %cst_45 {dimension_numbers = #tpu.dot_dimension_numbers<[1], [0], [0], [1], [0, 0, 1, 1], [], []>} : vector<16x16xf32>, vector<16x4xf32>, vector<16x4xf32> -> vector<16x4xf32>
    %56 = vector.broadcast %45 : vector<16x1xf32> to vector<16x4xf32>
    %57 = vector.broadcast %53 : vector<1x4xf32> to vector<16x4xf32>
    %58 = arith.mulf %56, %57 : vector<16x4xf32>
    %59 = arith.addf %55, %58 : vector<16x4xf32>
    %c0_46 = arith.constant 0 : index
    %c0_47 = arith.constant 0 : index
    %c0_48 = arith.constant 0 : index
    %60 = vector.load %arg4[%c0_46, %c0_47, %c0_48] : memref<6x4x32xf32, #tpu.memory_space<vmem>>, vector<1x4x32xf32>
    %61 = vector.shape_cast %60 : vector<1x4x32xf32> to vector<4x32xf32>
    %c1_49 = arith.constant 1 : index
    %c0_50 = arith.constant 0 : index
    %c0_51 = arith.constant 0 : index
    %62 = vector.load %arg4[%c1_49, %c0_50, %c0_51] : memref<6x4x32xf32, #tpu.memory_space<vmem>>, vector<1x4x32xf32>
    %63 = vector.shape_cast %62 : vector<1x4x32xf32> to vector<4x32xf32>
    %c2_52 = arith.constant 2 : index
    %c0_53 = arith.constant 0 : index
    %c0_54 = arith.constant 0 : index
    %64 = vector.load %arg4[%c2_52, %c0_53, %c0_54] : memref<6x4x32xf32, #tpu.memory_space<vmem>>, vector<1x4x32xf32>
    %65 = vector.shape_cast %64 : vector<1x4x32xf32> to vector<4x32xf32>
    %cst_55 = arith.constant dense<0.000000e+00> : vector<16x4xf32>
    %66 = tpu.matmul %1, %47, %cst_55 {dimension_numbers = #tpu.dot_dimension_numbers<[1], [0], [0], [1], [0, 0, 1, 1], [], []>} : vector<16x16xf32>, vector<16x4xf32>, vector<16x4xf32> -> vector<16x4xf32>
    %cst_56 = arith.constant dense<0.000000e+00> : vector<16x4xf32>
    %67 = tpu.matmul %9, %47, %cst_56 {dimension_numbers = #tpu.dot_dimension_numbers<[1], [0], [0], [1], [0, 0, 1, 1], [], []>} : vector<16x16xf32>, vector<16x4xf32>, vector<16x4xf32> -> vector<16x4xf32>
    %cst_57 = arith.constant dense<0.000000e+00> : vector<16x32xf32>
    %68 = tpu.matmul %66, %61, %cst_57 {dimension_numbers = #tpu.dot_dimension_numbers<[1], [0], [0], [1], [0, 0, 1, 1], [], []>} : vector<16x4xf32>, vector<4x32xf32>, vector<16x32xf32> -> vector<16x32xf32>
    %cst_58 = arith.constant dense<0.000000e+00> : vector<16x32xf32>
    %69 = tpu.matmul %47, %63, %cst_58 {dimension_numbers = #tpu.dot_dimension_numbers<[1], [0], [0], [1], [0, 0, 1, 1], [], []>} : vector<16x4xf32>, vector<4x32xf32>, vector<16x32xf32> -> vector<16x32xf32>
    %70 = arith.addf %68, %69 : vector<16x32xf32>
    %cst_59 = arith.constant dense<0.000000e+00> : vector<16x32xf32>
    %71 = tpu.matmul %67, %65, %cst_59 {dimension_numbers = #tpu.dot_dimension_numbers<[1], [0], [0], [1], [0, 0, 1, 1], [], []>} : vector<16x4xf32>, vector<4x32xf32>, vector<16x32xf32> -> vector<16x32xf32>
    %72 = arith.addf %70, %71 : vector<16x32xf32>
    %c3_60 = arith.constant 3 : index
    %c0_61 = arith.constant 0 : index
    %c0_62 = arith.constant 0 : index
    %73 = vector.load %arg4[%c3_60, %c0_61, %c0_62] : memref<6x4x32xf32, #tpu.memory_space<vmem>>, vector<1x4x32xf32>
    %74 = vector.shape_cast %73 : vector<1x4x32xf32> to vector<4x32xf32>
    %c4_63 = arith.constant 4 : index
    %c0_64 = arith.constant 0 : index
    %c0_65 = arith.constant 0 : index
    %75 = vector.load %arg4[%c4_63, %c0_64, %c0_65] : memref<6x4x32xf32, #tpu.memory_space<vmem>>, vector<1x4x32xf32>
    %76 = vector.shape_cast %75 : vector<1x4x32xf32> to vector<4x32xf32>
    %c5_66 = arith.constant 5 : index
    %c0_67 = arith.constant 0 : index
    %c0_68 = arith.constant 0 : index
    %77 = vector.load %arg4[%c5_66, %c0_67, %c0_68] : memref<6x4x32xf32, #tpu.memory_space<vmem>>, vector<1x4x32xf32>
    %78 = vector.shape_cast %77 : vector<1x4x32xf32> to vector<4x32xf32>
    %cst_69 = arith.constant dense<0.000000e+00> : vector<16x4xf32>
    %79 = tpu.matmul %1, %54, %cst_69 {dimension_numbers = #tpu.dot_dimension_numbers<[1], [0], [0], [1], [0, 0, 1, 1], [], []>} : vector<16x16xf32>, vector<16x4xf32>, vector<16x4xf32> -> vector<16x4xf32>
    %cst_70 = arith.constant dense<0.000000e+00> : vector<16x4xf32>
    %80 = tpu.matmul %9, %54, %cst_70 {dimension_numbers = #tpu.dot_dimension_numbers<[1], [0], [0], [1], [0, 0, 1, 1], [], []>} : vector<16x16xf32>, vector<16x4xf32>, vector<16x4xf32> -> vector<16x4xf32>
    %cst_71 = arith.constant dense<0.000000e+00> : vector<16x32xf32>
    %81 = tpu.matmul %79, %74, %cst_71 {dimension_numbers = #tpu.dot_dimension_numbers<[1], [0], [0], [1], [0, 0, 1, 1], [], []>} : vector<16x4xf32>, vector<4x32xf32>, vector<16x32xf32> -> vector<16x32xf32>
    %cst_72 = arith.constant dense<0.000000e+00> : vector<16x32xf32>
    %82 = tpu.matmul %54, %76, %cst_72 {dimension_numbers = #tpu.dot_dimension_numbers<[1], [0], [0], [1], [0, 0, 1, 1], [], []>} : vector<16x4xf32>, vector<4x32xf32>, vector<16x32xf32> -> vector<16x32xf32>
    %83 = arith.addf %81, %82 : vector<16x32xf32>
    %cst_73 = arith.constant dense<0.000000e+00> : vector<16x32xf32>
    %84 = tpu.matmul %80, %78, %cst_73 {dimension_numbers = #tpu.dot_dimension_numbers<[1], [0], [0], [1], [0, 0, 1, 1], [], []>} : vector<16x4xf32>, vector<4x32xf32>, vector<16x32xf32> -> vector<16x32xf32>
    %85 = arith.addf %83, %84 : vector<16x32xf32>
    %c0_74 = arith.constant 0 : index
    %c0_75 = arith.constant 0 : index
    %c0_76 = arith.constant 0 : index
    %86 = vector.load %arg9[%c0_74, %c0_75, %c0_76] : memref<1x4x32xf32, #tpu.memory_space<vmem>>, vector<1x4x32xf32>
    %87 = vector.shape_cast %86 : vector<1x4x32xf32> to vector<4x32xf32>
    %c0_77 = arith.constant 0 : index
    %c0_78 = arith.constant 0 : index
    %c0_79 = arith.constant 0 : index
    %88 = vector.load %arg5[%c0_77, %c0_78, %c0_79] : memref<1x32x96xf32, #tpu.memory_space<vmem>>, vector<1x32x96xf32>
    %89 = vector.shape_cast %88 : vector<1x32x96xf32> to vector<32x96xf32>
    %cst_80 = arith.constant dense<0.000000e+00> : vector<16x96xf32>
    %90 = tpu.matmul %72, %89, %cst_80 {dimension_numbers = #tpu.dot_dimension_numbers<[1], [0], [0], [1], [0, 0, 1, 1], [], []>} : vector<16x32xf32>, vector<32x96xf32>, vector<16x96xf32> -> vector<16x96xf32>
    %91 = vector.extract_strided_slice %90 {offsets = [0, 0], sizes = [16, 32], strides = [1, 1]} : vector<16x96xf32> to vector<16x32xf32>
    %92 = vector.extract_strided_slice %87 {offsets = [0, 0], sizes = [1, 32], strides = [1, 1]} : vector<4x32xf32> to vector<1x32xf32>
    %93 = vector.broadcast %92 : vector<1x32xf32> to vector<16x32xf32>
    %94 = arith.addf %91, %93 : vector<16x32xf32>
    %95 = vector.extract_strided_slice %90 {offsets = [0, 32], sizes = [16, 32], strides = [1, 1]} : vector<16x96xf32> to vector<16x32xf32>
    %96 = vector.extract_strided_slice %87 {offsets = [1, 0], sizes = [1, 32], strides = [1, 1]} : vector<4x32xf32> to vector<1x32xf32>
    %97 = vector.broadcast %96 : vector<1x32xf32> to vector<16x32xf32>
    %98 = arith.addf %95, %97 : vector<16x32xf32>
    %99 = vector.extract_strided_slice %90 {offsets = [0, 64], sizes = [16, 32], strides = [1, 1]} : vector<16x96xf32> to vector<16x32xf32>
    %100 = vector.extract_strided_slice %87 {offsets = [2, 0], sizes = [1, 32], strides = [1, 1]} : vector<4x32xf32> to vector<1x32xf32>
    %101 = vector.broadcast %100 : vector<1x32xf32> to vector<16x32xf32>
    %102 = arith.addf %99, %101 : vector<16x32xf32>
    %cst_81 = arith.constant dense<0.000000e+00> : vector<16x16xf32>
    %103 = tpu.matmul %98, %94, %cst_81 {dimension_numbers = #tpu.dot_dimension_numbers<[1], [1], [0], [0], [0, 0, 1, 0], [], []>} : vector<16x32xf32>, vector<16x32xf32>, vector<16x16xf32> -> vector<16x16xf32>
    %cst_82 = arith.constant dense<0.000000e+00> : vector<16x16xf32>
    %104 = tpu.matmul %103, %1, %cst_82 {dimension_numbers = #tpu.dot_dimension_numbers<[1], [0], [0], [1], [0, 0, 1, 1], [], []>} : vector<16x16xf32>, vector<16x16xf32>, vector<16x16xf32> -> vector<16x16xf32>
    %105 = arith.select %25, %104, %103 : vector<16x16xi1>, vector<16x16xf32>
    %cst_83 = arith.constant dense<0.000000e+00> : vector<16x16xf32>
    %106 = tpu.matmul %105, %3, %cst_83 {dimension_numbers = #tpu.dot_dimension_numbers<[1], [0], [0], [1], [0, 0, 1, 1], [], []>} : vector<16x16xf32>, vector<16x16xf32>, vector<16x16xf32> -> vector<16x16xf32>
    %107 = arith.select %31, %106, %105 : vector<16x16xi1>, vector<16x16xf32>
    %cst_84 = arith.constant dense<0.000000e+00> : vector<16x16xf32>
    %108 = tpu.matmul %107, %5, %cst_84 {dimension_numbers = #tpu.dot_dimension_numbers<[1], [0], [0], [1], [0, 0, 1, 1], [], []>} : vector<16x16xf32>, vector<16x16xf32>, vector<16x16xf32> -> vector<16x16xf32>
    %109 = arith.select %37, %108, %107 : vector<16x16xi1>, vector<16x16xf32>
    %cst_85 = arith.constant dense<0.000000e+00> : vector<16x16xf32>
    %110 = tpu.matmul %109, %7, %cst_85 {dimension_numbers = #tpu.dot_dimension_numbers<[1], [0], [0], [1], [0, 0, 1, 1], [], []>} : vector<16x16xf32>, vector<16x16xf32>, vector<16x16xf32> -> vector<16x16xf32>
    %111 = arith.select %43, %110, %109 : vector<16x16xi1>, vector<16x16xf32>
    %cst_86 = arith.constant dense<0.000000e+00> : vector<16xf32>
    %112 = vector.multi_reduction <add>, %111, %cst_86 [0] : vector<16x16xf32> to vector<16xf32>
    %113 = vector.shape_cast %112 : vector<16xf32> to vector<1x16xf32>
    %cst_87 = arith.constant 3.125000e-02 : f32
    %114 = vector.broadcast %cst_87 : f32 to vector<1x16xf32>
    %115 = arith.mulf %113, %114 : vector<1x16xf32>
    %cst_88 = arith.constant dense<0xFF800000> : vector<1xf32>
    %116 = vector.multi_reduction <maximumf>, %115, %cst_88 [1] : vector<1x16xf32> to vector<1xf32>
    %117 = vector.shape_cast %116 : vector<1xf32> to vector<1x1xf32>
    %118 = vector.broadcast %117 : vector<1x1xf32> to vector<1x16xf32>
    %119 = arith.cmpf oge, %115, %118 : vector<1x16xf32>
    %120 = arith.extui %119 : vector<1x16xi1> to vector<1x16xi32>
    %121 = arith.sitofp %120 : vector<1x16xi32> to vector<1x16xf32>
    %cst_89 = arith.constant 0.000000e+00 : f32
    %122 = vector.broadcast %cst_89 : f32 to vector<1x16xf32>
    %123 = arith.cmpf ogt, %121, %122 : vector<1x16xf32>
    %cst_90 = arith.constant -1.000000e+30 : f32
    %124 = vector.broadcast %cst_90 : f32 to vector<1x16xf32>
    %125 = arith.select %123, %124, %115 : vector<1x16xi1>, vector<1x16xf32>
    %cst_91 = arith.constant dense<0xFF800000> : vector<1xf32>
    %126 = vector.multi_reduction <maximumf>, %125, %cst_91 [1] : vector<1x16xf32> to vector<1xf32>
    %127 = vector.shape_cast %126 : vector<1xf32> to vector<1x1xf32>
    %128 = vector.broadcast %127 : vector<1x1xf32> to vector<1x16xf32>
    %129 = arith.cmpf oge, %125, %128 : vector<1x16xf32>
    %130 = arith.extui %129 : vector<1x16xi1> to vector<1x16xi32>
    %131 = arith.sitofp %130 : vector<1x16xi32> to vector<1x16xf32>
    %132 = arith.subf %117, %117 : vector<1x1xf32>
    %133 = math.exp %132 : vector<1x1xf32>
    %134 = arith.subf %127, %117 : vector<1x1xf32>
    %135 = math.exp %134 : vector<1x1xf32>
    %136 = arith.addf %133, %135 : vector<1x1xf32>
    %cst_92 = arith.constant 1.000000e+00 : f32
    %137 = vector.broadcast %cst_92 : f32 to vector<1x1xf32>
    %138 = arith.divf %137, %136 : vector<1x1xf32>
    %139 = arith.mulf %133, %138 : vector<1x1xf32>
    %140 = vector.broadcast %139 : vector<1x1xf32> to vector<1x16xf32>
    %141 = arith.mulf %121, %140 : vector<1x16xf32>
    %142 = arith.mulf %135, %138 : vector<1x1xf32>
    %143 = vector.broadcast %142 : vector<1x1xf32> to vector<1x16xf32>
    %144 = arith.mulf %131, %143 : vector<1x16xf32>
    %145 = arith.addf %141, %144 : vector<1x16xf32>
    %146 = vector.shape_cast %145 : vector<1x16xf32> to vector<1x16xf32>
    %147 = vector.broadcast %146 : vector<1x16xf32> to vector<16x16xf32>
    %cst_93 = arith.constant dense<0.000000e+00> : vector<16x16xf32>
    %148 = tpu.matmul %147, %9, %cst_93 {dimension_numbers = #tpu.dot_dimension_numbers<[1], [0], [0], [1], [0, 0, 1, 1], [], []>} : vector<16x16xf32>, vector<16x16xf32>, vector<16x16xf32> -> vector<16x16xf32>
    %149 = arith.select %25, %148, %147 : vector<16x16xi1>, vector<16x16xf32>
    %cst_94 = arith.constant dense<0.000000e+00> : vector<16x16xf32>
    %150 = tpu.matmul %149, %11, %cst_94 {dimension_numbers = #tpu.dot_dimension_numbers<[1], [0], [0], [1], [0, 0, 1, 1], [], []>} : vector<16x16xf32>, vector<16x16xf32>, vector<16x16xf32> -> vector<16x16xf32>
    %151 = arith.select %31, %150, %149 : vector<16x16xi1>, vector<16x16xf32>
    %cst_95 = arith.constant dense<0.000000e+00> : vector<16x16xf32>
    %152 = tpu.matmul %151, %13, %cst_95 {dimension_numbers = #tpu.dot_dimension_numbers<[1], [0], [0], [1], [0, 0, 1, 1], [], []>} : vector<16x16xf32>, vector<16x16xf32>, vector<16x16xf32> -> vector<16x16xf32>
    %153 = arith.select %37, %152, %151 : vector<16x16xi1>, vector<16x16xf32>
    %cst_96 = arith.constant dense<0.000000e+00> : vector<16x16xf32>
    %154 = tpu.matmul %153, %15, %cst_96 {dimension_numbers = #tpu.dot_dimension_numbers<[1], [0], [0], [1], [0, 0, 1, 1], [], []>} : vector<16x16xf32>, vector<16x16xf32>, vector<16x16xf32> -> vector<16x16xf32>
    %155 = arith.select %43, %154, %153 : vector<16x16xi1>, vector<16x16xf32>
    %cst_97 = arith.constant dense<0.000000e+00> : vector<16x32xf32>
    %156 = tpu.matmul %155, %102, %cst_97 {dimension_numbers = #tpu.dot_dimension_numbers<[1], [0], [0], [1], [0, 0, 1, 1], [], []>} : vector<16x16xf32>, vector<16x32xf32>, vector<16x32xf32> -> vector<16x32xf32>
    %c0_98 = arith.constant 0 : index
    %c0_99 = arith.constant 0 : index
    %c0_100 = arith.constant 0 : index
    %157 = vector.load %arg6[%c0_98, %c0_99, %c0_100] : memref<1x32x32xf32, #tpu.memory_space<vmem>>, vector<1x32x32xf32>
    %158 = vector.shape_cast %157 : vector<1x32x32xf32> to vector<32x32xf32>
    %cst_101 = arith.constant dense<0.000000e+00> : vector<16x32xf32>
    %159 = tpu.matmul %156, %158, %cst_101 {dimension_numbers = #tpu.dot_dimension_numbers<[1], [0], [0], [1], [0, 0, 1, 1], [], []>} : vector<16x32xf32>, vector<32x32xf32>, vector<16x32xf32> -> vector<16x32xf32>
    %160 = vector.extract_strided_slice %87 {offsets = [3, 0], sizes = [1, 32], strides = [1, 1]} : vector<4x32xf32> to vector<1x32xf32>
    %161 = vector.broadcast %160 : vector<1x32xf32> to vector<16x32xf32>
    %162 = arith.addf %159, %161 : vector<16x32xf32>
    %163 = arith.addf %72, %162 : vector<16x32xf32>
    %cst_102 = arith.constant dense<0.000000e+00> : vector<16x32xf32>
    %164 = tpu.matmul %17, %163, %cst_102 {dimension_numbers = #tpu.dot_dimension_numbers<[1], [0], [0], [1], [0, 0, 1, 1], [], []>} : vector<16x16xf32>, vector<16x32xf32>, vector<16x32xf32> -> vector<16x32xf32>
    %165 = arith.subf %163, %164 : vector<16x32xf32>
    %c0_103 = arith.constant 0 : index
    %c0_104 = arith.constant 0 : index
    %c0_105 = arith.constant 0 : index
    %166 = vector.load %arg7[%c0_103, %c0_104, %c0_105] : memref<1x32x64xf32, #tpu.memory_space<vmem>>, vector<1x32x64xf32>
    %167 = vector.shape_cast %166 : vector<1x32x64xf32> to vector<32x64xf32>
    %cst_106 = arith.constant dense<0.000000e+00> : vector<16x64xf32>
    %168 = tpu.matmul %165, %167, %cst_106 {dimension_numbers = #tpu.dot_dimension_numbers<[1], [0], [0], [1], [0, 0, 1, 1], [], []>} : vector<16x32xf32>, vector<32x64xf32>, vector<16x64xf32> -> vector<16x64xf32>
    %cst_107 = arith.constant 0.000000e+00 : f32
    %169 = vector.broadcast %cst_107 : f32 to vector<16x64xf32>
    %170 = arith.maximumf %168, %169 : vector<16x64xf32>
    %c0_108 = arith.constant 0 : index
    %c0_109 = arith.constant 0 : index
    %c0_110 = arith.constant 0 : index
    %171 = vector.load %arg8[%c0_108, %c0_109, %c0_110] : memref<1x64x32xf32, #tpu.memory_space<vmem>>, vector<1x64x32xf32>
    %172 = vector.shape_cast %171 : vector<1x64x32xf32> to vector<64x32xf32>
    %cst_111 = arith.constant dense<0.000000e+00> : vector<16x32xf32>
    %173 = tpu.matmul %170, %172, %cst_111 {dimension_numbers = #tpu.dot_dimension_numbers<[1], [0], [0], [1], [0, 0, 1, 1], [], []>} : vector<16x64xf32>, vector<64x32xf32>, vector<16x32xf32> -> vector<16x32xf32>
    %174 = arith.addf %165, %173 : vector<16x32xf32>
    %cst_112 = arith.constant dense<0.000000e+00> : vector<16x32xf32>
    %175 = tpu.matmul %17, %174, %cst_112 {dimension_numbers = #tpu.dot_dimension_numbers<[1], [0], [0], [1], [0, 0, 1, 1], [], []>} : vector<16x16xf32>, vector<16x32xf32>, vector<16x32xf32> -> vector<16x32xf32>
    %176 = arith.subf %174, %175 : vector<16x32xf32>
    %c0_113 = arith.constant 0 : index
    %c0_114 = arith.constant 0 : index
    %177 = vector.load %arg10[%c0_113, %c0_114] : memref<2x32xf32, #tpu.memory_space<vmem>>, vector<2x32xf32>
    %178 = vector.extract_strided_slice %177 {offsets = [0, 0], sizes = [1, 32], strides = [1, 1]} : vector<2x32xf32> to vector<1x32xf32>
    %179 = vector.extract_strided_slice %177 {offsets = [1, 0], sizes = [1, 32], strides = [1, 1]} : vector<2x32xf32> to vector<1x32xf32>
    %cst_115 = arith.constant dense<0.000000e+00> : vector<16xf32>
    %180 = vector.multi_reduction <add>, %176, %cst_115 [1] : vector<16x32xf32> to vector<16xf32>
    %181 = vector.shape_cast %180 : vector<16xf32> to vector<16x1xf32>
    %cst_116 = arith.constant 3.200000e+01 : f32
    %182 = vector.broadcast %cst_116 : f32 to vector<16x1xf32>
    %183 = arith.divf %181, %182 : vector<16x1xf32>
    %184 = vector.broadcast %183 : vector<16x1xf32> to vector<16x32xf32>
    %185 = arith.subf %176, %184 : vector<16x32xf32>
    %186 = arith.mulf %185, %185 : vector<16x32xf32>
    %cst_117 = arith.constant dense<0.000000e+00> : vector<16xf32>
    %187 = vector.multi_reduction <add>, %186, %cst_117 [1] : vector<16x32xf32> to vector<16xf32>
    %188 = vector.shape_cast %187 : vector<16xf32> to vector<16x1xf32>
    %cst_118 = arith.constant 3.200000e+01 : f32
    %189 = vector.broadcast %cst_118 : f32 to vector<16x1xf32>
    %190 = arith.divf %188, %189 : vector<16x1xf32>
    %191 = vector.broadcast %183 : vector<16x1xf32> to vector<16x32xf32>
    %192 = arith.subf %176, %191 : vector<16x32xf32>
    %cst_119 = arith.constant 9.99999974E-6 : f32
    %193 = vector.broadcast %cst_119 : f32 to vector<16x1xf32>
    %194 = arith.addf %190, %193 : vector<16x1xf32>
    %195 = math.rsqrt %194 : vector<16x1xf32>
    %196 = vector.broadcast %195 : vector<16x1xf32> to vector<16x32xf32>
    %197 = arith.mulf %192, %196 : vector<16x32xf32>
    %198 = vector.broadcast %178 : vector<1x32xf32> to vector<16x32xf32>
    %199 = arith.mulf %197, %198 : vector<16x32xf32>
    %200 = vector.broadcast %179 : vector<1x32xf32> to vector<16x32xf32>
    %201 = arith.addf %199, %200 : vector<16x32xf32>
    %cst_120 = arith.constant dense<0.000000e+00> : vector<32xf32>
    %202 = vector.multi_reduction <add>, %201, %cst_120 [0] : vector<16x32xf32> to vector<32xf32>
    %203 = vector.shape_cast %202 : vector<32xf32> to vector<1x32xf32>
    %cst_121 = arith.constant 1.600000e+01 : f32
    %204 = vector.broadcast %cst_121 : f32 to vector<1x32xf32>
    %205 = arith.divf %203, %204 : vector<1x32xf32>
    %206 = vector.broadcast %205 : vector<1x32xf32> to vector<16x32xf32>
    %207 = arith.subf %201, %206 : vector<16x32xf32>
    %c0_122 = arith.constant 0 : index
    %c0_123 = arith.constant 0 : index
    %c0_124 = arith.constant 0 : index
    %208 = vector.load %arg19[%c0_122, %c0_123, %c0_124] : memref<1x8x32xf32, #tpu.memory_space<vmem>>, vector<1x8x32xf32>
    %209 = vector.shape_cast %208 : vector<1x8x32xf32> to vector<8x32xf32>
    %c0_125 = arith.constant 0 : index
    %c0_126 = arith.constant 0 : index
    %c0_127 = arith.constant 0 : index
    %210 = vector.load %arg11[%c0_125, %c0_126, %c0_127] : memref<1x32x96xf32, #tpu.memory_space<vmem>>, vector<1x32x96xf32>
    %211 = vector.shape_cast %210 : vector<1x32x96xf32> to vector<32x96xf32>
    %cst_128 = arith.constant dense<0.000000e+00> : vector<16x96xf32>
    %212 = tpu.matmul %85, %211, %cst_128 {dimension_numbers = #tpu.dot_dimension_numbers<[1], [0], [0], [1], [0, 0, 1, 1], [], []>} : vector<16x32xf32>, vector<32x96xf32>, vector<16x96xf32> -> vector<16x96xf32>
    %213 = vector.extract_strided_slice %212 {offsets = [0, 0], sizes = [16, 32], strides = [1, 1]} : vector<16x96xf32> to vector<16x32xf32>
    %214 = vector.extract_strided_slice %209 {offsets = [0, 0], sizes = [1, 32], strides = [1, 1]} : vector<8x32xf32> to vector<1x32xf32>
    %215 = vector.broadcast %214 : vector<1x32xf32> to vector<16x32xf32>
    %216 = arith.addf %213, %215 : vector<16x32xf32>
    %217 = vector.extract_strided_slice %212 {offsets = [0, 32], sizes = [16, 32], strides = [1, 1]} : vector<16x96xf32> to vector<16x32xf32>
    %218 = vector.extract_strided_slice %209 {offsets = [1, 0], sizes = [1, 32], strides = [1, 1]} : vector<8x32xf32> to vector<1x32xf32>
    %219 = vector.broadcast %218 : vector<1x32xf32> to vector<16x32xf32>
    %220 = arith.addf %217, %219 : vector<16x32xf32>
    %221 = vector.extract_strided_slice %212 {offsets = [0, 64], sizes = [16, 32], strides = [1, 1]} : vector<16x96xf32> to vector<16x32xf32>
    %222 = vector.extract_strided_slice %209 {offsets = [2, 0], sizes = [1, 32], strides = [1, 1]} : vector<8x32xf32> to vector<1x32xf32>
    %223 = vector.broadcast %222 : vector<1x32xf32> to vector<16x32xf32>
    %224 = arith.addf %221, %223 : vector<16x32xf32>
    %cst_129 = arith.constant dense<0.000000e+00> : vector<16x16xf32>
    %225 = tpu.matmul %220, %216, %cst_129 {dimension_numbers = #tpu.dot_dimension_numbers<[1], [1], [0], [0], [0, 0, 1, 0], [], []>} : vector<16x32xf32>, vector<16x32xf32>, vector<16x16xf32> -> vector<16x16xf32>
    %cst_130 = arith.constant dense<0.000000e+00> : vector<16x16xf32>
    %226 = tpu.matmul %225, %1, %cst_130 {dimension_numbers = #tpu.dot_dimension_numbers<[1], [0], [0], [1], [0, 0, 1, 1], [], []>} : vector<16x16xf32>, vector<16x16xf32>, vector<16x16xf32> -> vector<16x16xf32>
    %227 = arith.select %25, %226, %225 : vector<16x16xi1>, vector<16x16xf32>
    %cst_131 = arith.constant dense<0.000000e+00> : vector<16x16xf32>
    %228 = tpu.matmul %227, %3, %cst_131 {dimension_numbers = #tpu.dot_dimension_numbers<[1], [0], [0], [1], [0, 0, 1, 1], [], []>} : vector<16x16xf32>, vector<16x16xf32>, vector<16x16xf32> -> vector<16x16xf32>
    %229 = arith.select %31, %228, %227 : vector<16x16xi1>, vector<16x16xf32>
    %cst_132 = arith.constant dense<0.000000e+00> : vector<16x16xf32>
    %230 = tpu.matmul %229, %5, %cst_132 {dimension_numbers = #tpu.dot_dimension_numbers<[1], [0], [0], [1], [0, 0, 1, 1], [], []>} : vector<16x16xf32>, vector<16x16xf32>, vector<16x16xf32> -> vector<16x16xf32>
    %231 = arith.select %37, %230, %229 : vector<16x16xi1>, vector<16x16xf32>
    %cst_133 = arith.constant dense<0.000000e+00> : vector<16x16xf32>
    %232 = tpu.matmul %231, %7, %cst_133 {dimension_numbers = #tpu.dot_dimension_numbers<[1], [0], [0], [1], [0, 0, 1, 1], [], []>} : vector<16x16xf32>, vector<16x16xf32>, vector<16x16xf32> -> vector<16x16xf32>
    %233 = arith.select %43, %232, %231 : vector<16x16xi1>, vector<16x16xf32>
    %cst_134 = arith.constant dense<0.000000e+00> : vector<16xf32>
    %234 = vector.multi_reduction <add>, %233, %cst_134 [0] : vector<16x16xf32> to vector<16xf32>
    %235 = vector.shape_cast %234 : vector<16xf32> to vector<1x16xf32>
    %cst_135 = arith.constant 3.125000e-02 : f32
    %236 = vector.broadcast %cst_135 : f32 to vector<1x16xf32>
    %237 = arith.mulf %235, %236 : vector<1x16xf32>
    %cst_136 = arith.constant dense<0xFF800000> : vector<1xf32>
    %238 = vector.multi_reduction <maximumf>, %237, %cst_136 [1] : vector<1x16xf32> to vector<1xf32>
    %239 = vector.shape_cast %238 : vector<1xf32> to vector<1x1xf32>
    %240 = vector.broadcast %239 : vector<1x1xf32> to vector<1x16xf32>
    %241 = arith.cmpf oge, %237, %240 : vector<1x16xf32>
    %242 = arith.extui %241 : vector<1x16xi1> to vector<1x16xi32>
    %243 = arith.sitofp %242 : vector<1x16xi32> to vector<1x16xf32>
    %cst_137 = arith.constant 0.000000e+00 : f32
    %244 = vector.broadcast %cst_137 : f32 to vector<1x16xf32>
    %245 = arith.cmpf ogt, %243, %244 : vector<1x16xf32>
    %cst_138 = arith.constant -1.000000e+30 : f32
    %246 = vector.broadcast %cst_138 : f32 to vector<1x16xf32>
    %247 = arith.select %245, %246, %237 : vector<1x16xi1>, vector<1x16xf32>
    %cst_139 = arith.constant dense<0xFF800000> : vector<1xf32>
    %248 = vector.multi_reduction <maximumf>, %247, %cst_139 [1] : vector<1x16xf32> to vector<1xf32>
    %249 = vector.shape_cast %248 : vector<1xf32> to vector<1x1xf32>
    %250 = vector.broadcast %249 : vector<1x1xf32> to vector<1x16xf32>
    %251 = arith.cmpf oge, %247, %250 : vector<1x16xf32>
    %252 = arith.extui %251 : vector<1x16xi1> to vector<1x16xi32>
    %253 = arith.sitofp %252 : vector<1x16xi32> to vector<1x16xf32>
    %254 = arith.subf %239, %239 : vector<1x1xf32>
    %255 = math.exp %254 : vector<1x1xf32>
    %256 = arith.subf %249, %239 : vector<1x1xf32>
    %257 = math.exp %256 : vector<1x1xf32>
    %258 = arith.addf %255, %257 : vector<1x1xf32>
    %cst_140 = arith.constant 1.000000e+00 : f32
    %259 = vector.broadcast %cst_140 : f32 to vector<1x1xf32>
    %260 = arith.divf %259, %258 : vector<1x1xf32>
    %261 = arith.mulf %255, %260 : vector<1x1xf32>
    %262 = vector.broadcast %261 : vector<1x1xf32> to vector<1x16xf32>
    %263 = arith.mulf %243, %262 : vector<1x16xf32>
    %264 = arith.mulf %257, %260 : vector<1x1xf32>
    %265 = vector.broadcast %264 : vector<1x1xf32> to vector<1x16xf32>
    %266 = arith.mulf %253, %265 : vector<1x16xf32>
    %267 = arith.addf %263, %266 : vector<1x16xf32>
    %268 = vector.shape_cast %267 : vector<1x16xf32> to vector<1x16xf32>
    %269 = vector.broadcast %268 : vector<1x16xf32> to vector<16x16xf32>
    %cst_141 = arith.constant dense<0.000000e+00> : vector<16x16xf32>
    %270 = tpu.matmul %269, %9, %cst_141 {dimension_numbers = #tpu.dot_dimension_numbers<[1], [0], [0], [1], [0, 0, 1, 1], [], []>} : vector<16x16xf32>, vector<16x16xf32>, vector<16x16xf32> -> vector<16x16xf32>
    %271 = arith.select %25, %270, %269 : vector<16x16xi1>, vector<16x16xf32>
    %cst_142 = arith.constant dense<0.000000e+00> : vector<16x16xf32>
    %272 = tpu.matmul %271, %11, %cst_142 {dimension_numbers = #tpu.dot_dimension_numbers<[1], [0], [0], [1], [0, 0, 1, 1], [], []>} : vector<16x16xf32>, vector<16x16xf32>, vector<16x16xf32> -> vector<16x16xf32>
    %273 = arith.select %31, %272, %271 : vector<16x16xi1>, vector<16x16xf32>
    %cst_143 = arith.constant dense<0.000000e+00> : vector<16x16xf32>
    %274 = tpu.matmul %273, %13, %cst_143 {dimension_numbers = #tpu.dot_dimension_numbers<[1], [0], [0], [1], [0, 0, 1, 1], [], []>} : vector<16x16xf32>, vector<16x16xf32>, vector<16x16xf32> -> vector<16x16xf32>
    %275 = arith.select %37, %274, %273 : vector<16x16xi1>, vector<16x16xf32>
    %cst_144 = arith.constant dense<0.000000e+00> : vector<16x16xf32>
    %276 = tpu.matmul %275, %15, %cst_144 {dimension_numbers = #tpu.dot_dimension_numbers<[1], [0], [0], [1], [0, 0, 1, 1], [], []>} : vector<16x16xf32>, vector<16x16xf32>, vector<16x16xf32> -> vector<16x16xf32>
    %277 = arith.select %43, %276, %275 : vector<16x16xi1>, vector<16x16xf32>
    %cst_145 = arith.constant dense<0.000000e+00> : vector<16x32xf32>
    %278 = tpu.matmul %277, %224, %cst_145 {dimension_numbers = #tpu.dot_dimension_numbers<[1], [0], [0], [1], [0, 0, 1, 1], [], []>} : vector<16x16xf32>, vector<16x32xf32>, vector<16x32xf32> -> vector<16x32xf32>
    %c0_146 = arith.constant 0 : index
    %c0_147 = arith.constant 0 : index
    %c0_148 = arith.constant 0 : index
    %279 = vector.load %arg12[%c0_146, %c0_147, %c0_148] : memref<1x32x32xf32, #tpu.memory_space<vmem>>, vector<1x32x32xf32>
    %280 = vector.shape_cast %279 : vector<1x32x32xf32> to vector<32x32xf32>
    %cst_149 = arith.constant dense<0.000000e+00> : vector<16x32xf32>
    %281 = tpu.matmul %278, %280, %cst_149 {dimension_numbers = #tpu.dot_dimension_numbers<[1], [0], [0], [1], [0, 0, 1, 1], [], []>} : vector<16x32xf32>, vector<32x32xf32>, vector<16x32xf32> -> vector<16x32xf32>
    %282 = vector.extract_strided_slice %209 {offsets = [3, 0], sizes = [1, 32], strides = [1, 1]} : vector<8x32xf32> to vector<1x32xf32>
    %283 = vector.broadcast %282 : vector<1x32xf32> to vector<16x32xf32>
    %284 = arith.addf %281, %283 : vector<16x32xf32>
    %285 = arith.addf %85, %284 : vector<16x32xf32>
    %cst_150 = arith.constant dense<0.000000e+00> : vector<16x32xf32>
    %286 = tpu.matmul %17, %285, %cst_150 {dimension_numbers = #tpu.dot_dimension_numbers<[1], [0], [0], [1], [0, 0, 1, 1], [], []>} : vector<16x16xf32>, vector<16x32xf32>, vector<16x32xf32> -> vector<16x32xf32>
    %287 = arith.subf %285, %286 : vector<16x32xf32>
    %c0_151 = arith.constant 0 : index
    %c0_152 = arith.constant 0 : index
    %c0_153 = arith.constant 0 : index
    %288 = vector.load %arg13[%c0_151, %c0_152, %c0_153] : memref<1x32x32xf32, #tpu.memory_space<vmem>>, vector<1x32x32xf32>
    %289 = vector.shape_cast %288 : vector<1x32x32xf32> to vector<32x32xf32>
    %cst_154 = arith.constant dense<0.000000e+00> : vector<16x32xf32>
    %290 = tpu.matmul %287, %289, %cst_154 {dimension_numbers = #tpu.dot_dimension_numbers<[1], [0], [0], [1], [0, 0, 1, 1], [], []>} : vector<16x32xf32>, vector<32x32xf32>, vector<16x32xf32> -> vector<16x32xf32>
    %291 = vector.extract_strided_slice %209 {offsets = [4, 0], sizes = [1, 32], strides = [1, 1]} : vector<8x32xf32> to vector<1x32xf32>
    %292 = vector.broadcast %291 : vector<1x32xf32> to vector<16x32xf32>
    %293 = arith.addf %290, %292 : vector<16x32xf32>
    %c0_155 = arith.constant 0 : index
    %c0_156 = arith.constant 0 : index
    %c0_157 = arith.constant 0 : index
    %294 = vector.load %arg14[%c0_155, %c0_156, %c0_157] : memref<1x32x64xf32, #tpu.memory_space<vmem>>, vector<1x32x64xf32>
    %295 = vector.shape_cast %294 : vector<1x32x64xf32> to vector<32x64xf32>
    %cst_158 = arith.constant dense<0.000000e+00> : vector<16x64xf32>
    %296 = tpu.matmul %207, %295, %cst_158 {dimension_numbers = #tpu.dot_dimension_numbers<[1], [0], [0], [1], [0, 0, 1, 1], [], []>} : vector<16x32xf32>, vector<32x64xf32>, vector<16x64xf32> -> vector<16x64xf32>
    %297 = vector.extract_strided_slice %296 {offsets = [0, 0], sizes = [16, 32], strides = [1, 1]} : vector<16x64xf32> to vector<16x32xf32>
    %298 = vector.extract_strided_slice %209 {offsets = [5, 0], sizes = [1, 32], strides = [1, 1]} : vector<8x32xf32> to vector<1x32xf32>
    %299 = vector.broadcast %298 : vector<1x32xf32> to vector<16x32xf32>
    %300 = arith.addf %297, %299 : vector<16x32xf32>
    %301 = vector.extract_strided_slice %296 {offsets = [0, 32], sizes = [16, 32], strides = [1, 1]} : vector<16x64xf32> to vector<16x32xf32>
    %302 = vector.extract_strided_slice %209 {offsets = [6, 0], sizes = [1, 32], strides = [1, 1]} : vector<8x32xf32> to vector<1x32xf32>
    %303 = vector.broadcast %302 : vector<1x32xf32> to vector<16x32xf32>
    %304 = arith.addf %301, %303 : vector<16x32xf32>
    %cst_159 = arith.constant dense<0.000000e+00> : vector<16x16xf32>
    %305 = tpu.matmul %300, %293, %cst_159 {dimension_numbers = #tpu.dot_dimension_numbers<[1], [1], [0], [0], [0, 0, 1, 0], [], []>} : vector<16x32xf32>, vector<16x32xf32>, vector<16x16xf32> -> vector<16x16xf32>
    %cst_160 = arith.constant dense<0.000000e+00> : vector<16x16xf32>
    %306 = tpu.matmul %305, %1, %cst_160 {dimension_numbers = #tpu.dot_dimension_numbers<[1], [0], [0], [1], [0, 0, 1, 1], [], []>} : vector<16x16xf32>, vector<16x16xf32>, vector<16x16xf32> -> vector<16x16xf32>
    %307 = arith.select %25, %306, %305 : vector<16x16xi1>, vector<16x16xf32>
    %cst_161 = arith.constant dense<0.000000e+00> : vector<16x16xf32>
    %308 = tpu.matmul %307, %3, %cst_161 {dimension_numbers = #tpu.dot_dimension_numbers<[1], [0], [0], [1], [0, 0, 1, 1], [], []>} : vector<16x16xf32>, vector<16x16xf32>, vector<16x16xf32> -> vector<16x16xf32>
    %309 = arith.select %31, %308, %307 : vector<16x16xi1>, vector<16x16xf32>
    %cst_162 = arith.constant dense<0.000000e+00> : vector<16x16xf32>
    %310 = tpu.matmul %309, %5, %cst_162 {dimension_numbers = #tpu.dot_dimension_numbers<[1], [0], [0], [1], [0, 0, 1, 1], [], []>} : vector<16x16xf32>, vector<16x16xf32>, vector<16x16xf32> -> vector<16x16xf32>
    %311 = arith.select %37, %310, %309 : vector<16x16xi1>, vector<16x16xf32>
    %cst_163 = arith.constant dense<0.000000e+00> : vector<16x16xf32>
    %312 = tpu.matmul %311, %7, %cst_163 {dimension_numbers = #tpu.dot_dimension_numbers<[1], [0], [0], [1], [0, 0, 1, 1], [], []>} : vector<16x16xf32>, vector<16x16xf32>, vector<16x16xf32> -> vector<16x16xf32>
    %313 = arith.select %43, %312, %311 : vector<16x16xi1>, vector<16x16xf32>
    %cst_164 = arith.constant dense<0.000000e+00> : vector<16xf32>
    %314 = vector.multi_reduction <add>, %313, %cst_164 [0] : vector<16x16xf32> to vector<16xf32>
    %315 = vector.shape_cast %314 : vector<16xf32> to vector<1x16xf32>
    %cst_165 = arith.constant 3.125000e-02 : f32
    %316 = vector.broadcast %cst_165 : f32 to vector<1x16xf32>
    %317 = arith.mulf %315, %316 : vector<1x16xf32>
    %cst_166 = arith.constant dense<0xFF800000> : vector<1xf32>
    %318 = vector.multi_reduction <maximumf>, %317, %cst_166 [1] : vector<1x16xf32> to vector<1xf32>
    %319 = vector.shape_cast %318 : vector<1xf32> to vector<1x1xf32>
    %320 = vector.broadcast %319 : vector<1x1xf32> to vector<1x16xf32>
    %321 = arith.cmpf oge, %317, %320 : vector<1x16xf32>
    %322 = arith.extui %321 : vector<1x16xi1> to vector<1x16xi32>
    %323 = arith.sitofp %322 : vector<1x16xi32> to vector<1x16xf32>
    %cst_167 = arith.constant 0.000000e+00 : f32
    %324 = vector.broadcast %cst_167 : f32 to vector<1x16xf32>
    %325 = arith.cmpf ogt, %323, %324 : vector<1x16xf32>
    %cst_168 = arith.constant -1.000000e+30 : f32
    %326 = vector.broadcast %cst_168 : f32 to vector<1x16xf32>
    %327 = arith.select %325, %326, %317 : vector<1x16xi1>, vector<1x16xf32>
    %cst_169 = arith.constant dense<0xFF800000> : vector<1xf32>
    %328 = vector.multi_reduction <maximumf>, %327, %cst_169 [1] : vector<1x16xf32> to vector<1xf32>
    %329 = vector.shape_cast %328 : vector<1xf32> to vector<1x1xf32>
    %330 = vector.broadcast %329 : vector<1x1xf32> to vector<1x16xf32>
    %331 = arith.cmpf oge, %327, %330 : vector<1x16xf32>
    %332 = arith.extui %331 : vector<1x16xi1> to vector<1x16xi32>
    %333 = arith.sitofp %332 : vector<1x16xi32> to vector<1x16xf32>
    %334 = arith.subf %319, %319 : vector<1x1xf32>
    %335 = math.exp %334 : vector<1x1xf32>
    %336 = arith.subf %329, %319 : vector<1x1xf32>
    %337 = math.exp %336 : vector<1x1xf32>
    %338 = arith.addf %335, %337 : vector<1x1xf32>
    %cst_170 = arith.constant 1.000000e+00 : f32
    %339 = vector.broadcast %cst_170 : f32 to vector<1x1xf32>
    %340 = arith.divf %339, %338 : vector<1x1xf32>
    %341 = arith.mulf %335, %340 : vector<1x1xf32>
    %342 = vector.broadcast %341 : vector<1x1xf32> to vector<1x16xf32>
    %343 = arith.mulf %323, %342 : vector<1x16xf32>
    %344 = arith.mulf %337, %340 : vector<1x1xf32>
    %345 = vector.broadcast %344 : vector<1x1xf32> to vector<1x16xf32>
    %346 = arith.mulf %333, %345 : vector<1x16xf32>
    %347 = arith.addf %343, %346 : vector<1x16xf32>
    %348 = vector.shape_cast %347 : vector<1x16xf32> to vector<1x16xf32>
    %349 = vector.broadcast %348 : vector<1x16xf32> to vector<16x16xf32>
    %cst_171 = arith.constant dense<0.000000e+00> : vector<16x16xf32>
    %350 = tpu.matmul %349, %9, %cst_171 {dimension_numbers = #tpu.dot_dimension_numbers<[1], [0], [0], [1], [0, 0, 1, 1], [], []>} : vector<16x16xf32>, vector<16x16xf32>, vector<16x16xf32> -> vector<16x16xf32>
    %351 = arith.select %25, %350, %349 : vector<16x16xi1>, vector<16x16xf32>
    %cst_172 = arith.constant dense<0.000000e+00> : vector<16x16xf32>
    %352 = tpu.matmul %351, %11, %cst_172 {dimension_numbers = #tpu.dot_dimension_numbers<[1], [0], [0], [1], [0, 0, 1, 1], [], []>} : vector<16x16xf32>, vector<16x16xf32>, vector<16x16xf32> -> vector<16x16xf32>
    %353 = arith.select %31, %352, %351 : vector<16x16xi1>, vector<16x16xf32>
    %cst_173 = arith.constant dense<0.000000e+00> : vector<16x16xf32>
    %354 = tpu.matmul %353, %13, %cst_173 {dimension_numbers = #tpu.dot_dimension_numbers<[1], [0], [0], [1], [0, 0, 1, 1], [], []>} : vector<16x16xf32>, vector<16x16xf32>, vector<16x16xf32> -> vector<16x16xf32>
    %355 = arith.select %37, %354, %353 : vector<16x16xi1>, vector<16x16xf32>
    %cst_174 = arith.constant dense<0.000000e+00> : vector<16x16xf32>
    %356 = tpu.matmul %355, %15, %cst_174 {dimension_numbers = #tpu.dot_dimension_numbers<[1], [0], [0], [1], [0, 0, 1, 1], [], []>} : vector<16x16xf32>, vector<16x16xf32>, vector<16x16xf32> -> vector<16x16xf32>
    %357 = arith.select %43, %356, %355 : vector<16x16xi1>, vector<16x16xf32>
    %cst_175 = arith.constant dense<0.000000e+00> : vector<16x32xf32>
    %358 = tpu.matmul %357, %304, %cst_175 {dimension_numbers = #tpu.dot_dimension_numbers<[1], [0], [0], [1], [0, 0, 1, 1], [], []>} : vector<16x16xf32>, vector<16x32xf32>, vector<16x32xf32> -> vector<16x32xf32>
    %c0_176 = arith.constant 0 : index
    %c0_177 = arith.constant 0 : index
    %c0_178 = arith.constant 0 : index
    %359 = vector.load %arg15[%c0_176, %c0_177, %c0_178] : memref<1x32x32xf32, #tpu.memory_space<vmem>>, vector<1x32x32xf32>
    %360 = vector.shape_cast %359 : vector<1x32x32xf32> to vector<32x32xf32>
    %cst_179 = arith.constant dense<0.000000e+00> : vector<16x32xf32>
    %361 = tpu.matmul %358, %360, %cst_179 {dimension_numbers = #tpu.dot_dimension_numbers<[1], [0], [0], [1], [0, 0, 1, 1], [], []>} : vector<16x32xf32>, vector<32x32xf32>, vector<16x32xf32> -> vector<16x32xf32>
    %362 = vector.extract_strided_slice %209 {offsets = [7, 0], sizes = [1, 32], strides = [1, 1]} : vector<8x32xf32> to vector<1x32xf32>
    %363 = vector.broadcast %362 : vector<1x32xf32> to vector<16x32xf32>
    %364 = arith.addf %361, %363 : vector<16x32xf32>
    %365 = arith.addf %287, %364 : vector<16x32xf32>
    %cst_180 = arith.constant dense<0.000000e+00> : vector<16x32xf32>
    %366 = tpu.matmul %17, %365, %cst_180 {dimension_numbers = #tpu.dot_dimension_numbers<[1], [0], [0], [1], [0, 0, 1, 1], [], []>} : vector<16x16xf32>, vector<16x32xf32>, vector<16x32xf32> -> vector<16x32xf32>
    %367 = arith.subf %365, %366 : vector<16x32xf32>
    %c0_181 = arith.constant 0 : index
    %c0_182 = arith.constant 0 : index
    %c0_183 = arith.constant 0 : index
    %368 = vector.load %arg16[%c0_181, %c0_182, %c0_183] : memref<1x32x64xf32, #tpu.memory_space<vmem>>, vector<1x32x64xf32>
    %369 = vector.shape_cast %368 : vector<1x32x64xf32> to vector<32x64xf32>
    %cst_184 = arith.constant dense<0.000000e+00> : vector<16x64xf32>
    %370 = tpu.matmul %367, %369, %cst_184 {dimension_numbers = #tpu.dot_dimension_numbers<[1], [0], [0], [1], [0, 0, 1, 1], [], []>} : vector<16x32xf32>, vector<32x64xf32>, vector<16x64xf32> -> vector<16x64xf32>
    %cst_185 = arith.constant 0.000000e+00 : f32
    %371 = vector.broadcast %cst_185 : f32 to vector<16x64xf32>
    %372 = arith.maximumf %370, %371 : vector<16x64xf32>
    %c0_186 = arith.constant 0 : index
    %c0_187 = arith.constant 0 : index
    %c0_188 = arith.constant 0 : index
    %373 = vector.load %arg17[%c0_186, %c0_187, %c0_188] : memref<1x64x32xf32, #tpu.memory_space<vmem>>, vector<1x64x32xf32>
    %374 = vector.shape_cast %373 : vector<1x64x32xf32> to vector<64x32xf32>
    %cst_189 = arith.constant dense<0.000000e+00> : vector<16x32xf32>
    %375 = tpu.matmul %372, %374, %cst_189 {dimension_numbers = #tpu.dot_dimension_numbers<[1], [0], [0], [1], [0, 0, 1, 1], [], []>} : vector<16x64xf32>, vector<64x32xf32>, vector<16x32xf32> -> vector<16x32xf32>
    %376 = arith.addf %367, %375 : vector<16x32xf32>
    %cst_190 = arith.constant dense<0.000000e+00> : vector<16x32xf32>
    %377 = tpu.matmul %17, %376, %cst_190 {dimension_numbers = #tpu.dot_dimension_numbers<[1], [0], [0], [1], [0, 0, 1, 1], [], []>} : vector<16x16xf32>, vector<16x32xf32>, vector<16x32xf32> -> vector<16x32xf32>
    %378 = arith.subf %376, %377 : vector<16x32xf32>
    %379 = arith.addf %286, %366 : vector<16x32xf32>
    %380 = arith.addf %379, %377 : vector<16x32xf32>
    %c0_191 = arith.constant 0 : index
    %c0_192 = arith.constant 0 : index
    %c0_193 = arith.constant 0 : index
    %c0_194 = arith.constant 0 : index
    %381 = vector.load %arg18[%c0_191, %c0_192, %c0_193, %c0_194] : memref<1x3x32x4xf32, #tpu.memory_space<vmem>>, vector<1x1x32x4xf32>
    %382 = vector.shape_cast %381 : vector<1x1x32x4xf32> to vector<32x4xf32>
    %c0_195 = arith.constant 0 : index
    %c1_196 = arith.constant 1 : index
    %c0_197 = arith.constant 0 : index
    %c0_198 = arith.constant 0 : index
    %383 = vector.load %arg18[%c0_195, %c1_196, %c0_197, %c0_198] : memref<1x3x32x4xf32, #tpu.memory_space<vmem>>, vector<1x1x32x4xf32>
    %384 = vector.shape_cast %383 : vector<1x1x32x4xf32> to vector<32x4xf32>
    %c0_199 = arith.constant 0 : index
    %c2_200 = arith.constant 2 : index
    %c0_201 = arith.constant 0 : index
    %c0_202 = arith.constant 0 : index
    %385 = vector.load %arg18[%c0_199, %c2_200, %c0_201, %c0_202] : memref<1x3x32x4xf32, #tpu.memory_space<vmem>>, vector<1x1x32x4xf32>
    %386 = vector.shape_cast %385 : vector<1x1x32x4xf32> to vector<32x4xf32>
    %cst_203 = arith.constant dense<0.000000e+00> : vector<16x32xf32>
    %387 = tpu.matmul %1, %380, %cst_203 {dimension_numbers = #tpu.dot_dimension_numbers<[1], [0], [0], [1], [0, 0, 1, 1], [], []>} : vector<16x16xf32>, vector<16x32xf32>, vector<16x32xf32> -> vector<16x32xf32>
    %cst_204 = arith.constant dense<0.000000e+00> : vector<16x32xf32>
    %388 = tpu.matmul %9, %380, %cst_204 {dimension_numbers = #tpu.dot_dimension_numbers<[1], [0], [0], [1], [0, 0, 1, 1], [], []>} : vector<16x16xf32>, vector<16x32xf32>, vector<16x32xf32> -> vector<16x32xf32>
    %cst_205 = arith.constant dense<0.000000e+00> : vector<16x4xf32>
    %389 = tpu.matmul %387, %382, %cst_205 {dimension_numbers = #tpu.dot_dimension_numbers<[1], [0], [0], [1], [0, 0, 1, 1], [], []>} : vector<16x32xf32>, vector<32x4xf32>, vector<16x4xf32> -> vector<16x4xf32>
    %cst_206 = arith.constant dense<0.000000e+00> : vector<16x4xf32>
    %390 = tpu.matmul %380, %384, %cst_206 {dimension_numbers = #tpu.dot_dimension_numbers<[1], [0], [0], [1], [0, 0, 1, 1], [], []>} : vector<16x32xf32>, vector<32x4xf32>, vector<16x4xf32> -> vector<16x4xf32>
    %391 = arith.addf %389, %390 : vector<16x4xf32>
    %cst_207 = arith.constant dense<0.000000e+00> : vector<16x4xf32>
    %392 = tpu.matmul %388, %386, %cst_207 {dimension_numbers = #tpu.dot_dimension_numbers<[1], [0], [0], [1], [0, 0, 1, 1], [], []>} : vector<16x32xf32>, vector<32x4xf32>, vector<16x4xf32> -> vector<16x4xf32>
    %393 = arith.addf %391, %392 : vector<16x4xf32>
    %394 = arith.addf %59, %393 : vector<16x4xf32>
    %c0_208 = arith.constant 0 : index
    %c0_209 = arith.constant 0 : index
    %395 = vector.load %arg20[%c0_208, %c0_209] : memref<2x32xf32, #tpu.memory_space<vmem>>, vector<2x32xf32>
    %396 = vector.extract_strided_slice %395 {offsets = [0, 0], sizes = [1, 32], strides = [1, 1]} : vector<2x32xf32> to vector<1x32xf32>
    %397 = vector.extract_strided_slice %395 {offsets = [1, 0], sizes = [1, 32], strides = [1, 1]} : vector<2x32xf32> to vector<1x32xf32>
    %cst_210 = arith.constant dense<0.000000e+00> : vector<16xf32>
    %398 = vector.multi_reduction <add>, %378, %cst_210 [1] : vector<16x32xf32> to vector<16xf32>
    %399 = vector.shape_cast %398 : vector<16xf32> to vector<16x1xf32>
    %cst_211 = arith.constant 3.200000e+01 : f32
    %400 = vector.broadcast %cst_211 : f32 to vector<16x1xf32>
    %401 = arith.divf %399, %400 : vector<16x1xf32>
    %402 = vector.broadcast %401 : vector<16x1xf32> to vector<16x32xf32>
    %403 = arith.subf %378, %402 : vector<16x32xf32>
    %404 = arith.mulf %403, %403 : vector<16x32xf32>
    %cst_212 = arith.constant dense<0.000000e+00> : vector<16xf32>
    %405 = vector.multi_reduction <add>, %404, %cst_212 [1] : vector<16x32xf32> to vector<16xf32>
    %406 = vector.shape_cast %405 : vector<16xf32> to vector<16x1xf32>
    %cst_213 = arith.constant 3.200000e+01 : f32
    %407 = vector.broadcast %cst_213 : f32 to vector<16x1xf32>
    %408 = arith.divf %406, %407 : vector<16x1xf32>
    %409 = vector.broadcast %401 : vector<16x1xf32> to vector<16x32xf32>
    %410 = arith.subf %378, %409 : vector<16x32xf32>
    %cst_214 = arith.constant 9.99999974E-6 : f32
    %411 = vector.broadcast %cst_214 : f32 to vector<16x1xf32>
    %412 = arith.addf %408, %411 : vector<16x1xf32>
    %413 = math.rsqrt %412 : vector<16x1xf32>
    %414 = vector.broadcast %413 : vector<16x1xf32> to vector<16x32xf32>
    %415 = arith.mulf %410, %414 : vector<16x32xf32>
    %416 = vector.broadcast %396 : vector<1x32xf32> to vector<16x32xf32>
    %417 = arith.mulf %415, %416 : vector<16x32xf32>
    %418 = vector.broadcast %397 : vector<1x32xf32> to vector<16x32xf32>
    %419 = arith.addf %417, %418 : vector<16x32xf32>
    %cst_215 = arith.constant dense<0.000000e+00> : vector<32xf32>
    %420 = vector.multi_reduction <add>, %419, %cst_215 [0] : vector<16x32xf32> to vector<32xf32>
    %421 = vector.shape_cast %420 : vector<32xf32> to vector<1x32xf32>
    %cst_216 = arith.constant 1.600000e+01 : f32
    %422 = vector.broadcast %cst_216 : f32 to vector<1x32xf32>
    %423 = arith.divf %421, %422 : vector<1x32xf32>
    %424 = vector.broadcast %423 : vector<1x32xf32> to vector<16x32xf32>
    %425 = arith.subf %419, %424 : vector<16x32xf32>
    %c0_217 = arith.constant 0 : index
    %c0_218 = arith.constant 0 : index
    %426 = vector.load %arg21[%c0_217, %c0_218] : memref<33x4xf32, #tpu.memory_space<vmem>>, vector<32x4xf32>
    %cst_219 = arith.constant dense<0.000000e+00> : vector<16x4xf32>
    %427 = tpu.matmul %425, %426, %cst_219 {dimension_numbers = #tpu.dot_dimension_numbers<[1], [0], [0], [1], [0, 0, 1, 1], [], []>} : vector<16x32xf32>, vector<32x4xf32>, vector<16x4xf32> -> vector<16x4xf32>
    %c32 = arith.constant 32 : index
    %c0_220 = arith.constant 0 : index
    %428 = vector.load %arg21[%c32, %c0_220] : memref<33x4xf32, #tpu.memory_space<vmem>>, vector<1x4xf32>
    %429 = vector.broadcast %428 : vector<1x4xf32> to vector<16x4xf32>
    %430 = arith.addf %427, %429 : vector<16x4xf32>
    %431 = arith.addf %394, %430 : vector<16x4xf32>
    %432 = vector.extract_strided_slice %431 {offsets = [8, 0], sizes = [8, 4], strides = [1, 1]} : vector<16x4xf32> to vector<8x4xf32>
    %c0_221 = arith.constant 0 : index
    %c0_222 = arith.constant 0 : index
    %c0_223 = arith.constant 0 : index
    %433 = vector.load %arg22[%c0_221, %c0_222, %c0_223] : memref<1x8x4xf32, #tpu.memory_space<vmem>>, vector<1x8x4xf32>
    %434 = vector.shape_cast %433 : vector<1x8x4xf32> to vector<8x4xf32>
    %435 = vector.shape_cast %432 : vector<8x4xf32> to vector<1x8x4xf32>
    tpu.vector_store %arg22[%c0_221, %c0_222, %c0_223], %435 {strides = array<i32>} : memref<1x8x4xf32, #tpu.memory_space<vmem>>, vector<1x8x4xf32>,
    return
  }
  func.func @transform_0(%arg0: i32) -> (i32, i32, i32) {
    %c0_i32 = arith.constant 0 : i32
    %c0_i32_0 = arith.constant 0 : i32
    %c0_i32_1 = arith.constant 0 : i32
    return %arg0, %c0_i32, %c0_i32_0 : i32, i32, i32
  }
  func.func @transform_1(%arg0: i32) -> (i32, i32, i32) {
    %c0_i32 = arith.constant 0 : i32
    %c0_i32_0 = arith.constant 0 : i32
    %c0_i32_1 = arith.constant 0 : i32
    %c0_i32_2 = arith.constant 0 : i32
    return %c0_i32, %c0_i32_0, %c0_i32_1 : i32, i32, i32
  }
  func.func @transform_2(%arg0: i32) -> (i32, i32, i32) {
    %c0_i32 = arith.constant 0 : i32
    %c0_i32_0 = arith.constant 0 : i32
    %c0_i32_1 = arith.constant 0 : i32
    %c0_i32_2 = arith.constant 0 : i32
    return %c0_i32, %c0_i32_0, %c0_i32_1 : i32, i32, i32
  }
  func.func @transform_3(%arg0: i32) -> (i32, i32, i32) {
    %c0_i32 = arith.constant 0 : i32
    %c0_i32_0 = arith.constant 0 : i32
    %c0_i32_1 = arith.constant 0 : i32
    %c0_i32_2 = arith.constant 0 : i32
    return %c0_i32, %c0_i32_0, %c0_i32_1 : i32, i32, i32
  }
  func.func @transform_4(%arg0: i32) -> (i32, i32, i32) {
    %c0_i32 = arith.constant 0 : i32
    %c0_i32_0 = arith.constant 0 : i32
    %c0_i32_1 = arith.constant 0 : i32
    %c0_i32_2 = arith.constant 0 : i32
    return %c0_i32, %c0_i32_0, %c0_i32_1 : i32, i32, i32
  }
  func.func @transform_5(%arg0: i32) -> (i32, i32, i32) {
    %c0_i32 = arith.constant 0 : i32
    %c0_i32_0 = arith.constant 0 : i32
    %c0_i32_1 = arith.constant 0 : i32
    %c0_i32_2 = arith.constant 0 : i32
    return %c0_i32, %c0_i32_0, %c0_i32_1 : i32, i32, i32
  }
  func.func @transform_6(%arg0: i32) -> (i32, i32, i32) {
    %c0_i32 = arith.constant 0 : i32
    %c0_i32_0 = arith.constant 0 : i32
    %c0_i32_1 = arith.constant 0 : i32
    %c0_i32_2 = arith.constant 0 : i32
    return %c0_i32, %c0_i32_0, %c0_i32_1 : i32, i32, i32
  }
  func.func @transform_7(%arg0: i32) -> (i32, i32, i32) {
    %c0_i32 = arith.constant 0 : i32
    %c0_i32_0 = arith.constant 0 : i32
    %c0_i32_1 = arith.constant 0 : i32
    %c0_i32_2 = arith.constant 0 : i32
    return %c0_i32, %c0_i32_0, %c0_i32_1 : i32, i32, i32
  }
  func.func @transform_8(%arg0: i32) -> (i32, i32, i32) {
    %c0_i32 = arith.constant 0 : i32
    %c0_i32_0 = arith.constant 0 : i32
    %c0_i32_1 = arith.constant 0 : i32
    %c0_i32_2 = arith.constant 0 : i32
    return %c0_i32, %c0_i32_0, %c0_i32_1 : i32, i32, i32
  }
  func.func @transform_9(%arg0: i32) -> (i32, i32) {
    %c0_i32 = arith.constant 0 : i32
    %c0_i32_0 = arith.constant 0 : i32
    %c0_i32_1 = arith.constant 0 : i32
    return %c0_i32, %c0_i32_0 : i32, i32
  }
  func.func @transform_10(%arg0: i32) -> (i32, i32, i32) {
    %c0_i32 = arith.constant 0 : i32
    %c0_i32_0 = arith.constant 0 : i32
    %c0_i32_1 = arith.constant 0 : i32
    %c0_i32_2 = arith.constant 0 : i32
    return %c0_i32, %c0_i32_0, %c0_i32_1 : i32, i32, i32
  }
  func.func @transform_11(%arg0: i32) -> (i32, i32, i32) {
    %c0_i32 = arith.constant 0 : i32
    %c0_i32_0 = arith.constant 0 : i32
    %c0_i32_1 = arith.constant 0 : i32
    %c0_i32_2 = arith.constant 0 : i32
    return %c0_i32, %c0_i32_0, %c0_i32_1 : i32, i32, i32
  }
  func.func @transform_12(%arg0: i32) -> (i32, i32, i32) {
    %c0_i32 = arith.constant 0 : i32
    %c0_i32_0 = arith.constant 0 : i32
    %c0_i32_1 = arith.constant 0 : i32
    %c0_i32_2 = arith.constant 0 : i32
    return %c0_i32, %c0_i32_0, %c0_i32_1 : i32, i32, i32
  }
  func.func @transform_13(%arg0: i32) -> (i32, i32, i32) {
    %c0_i32 = arith.constant 0 : i32
    %c0_i32_0 = arith.constant 0 : i32
    %c0_i32_1 = arith.constant 0 : i32
    %c0_i32_2 = arith.constant 0 : i32
    return %c0_i32, %c0_i32_0, %c0_i32_1 : i32, i32, i32
  }
  func.func @transform_14(%arg0: i32) -> (i32, i32, i32) {
    %c0_i32 = arith.constant 0 : i32
    %c0_i32_0 = arith.constant 0 : i32
    %c0_i32_1 = arith.constant 0 : i32
    %c0_i32_2 = arith.constant 0 : i32
    return %c0_i32, %c0_i32_0, %c0_i32_1 : i32, i32, i32
  }
  func.func @transform_15(%arg0: i32) -> (i32, i32, i32) {
    %c0_i32 = arith.constant 0 : i32
    %c0_i32_0 = arith.constant 0 : i32
    %c0_i32_1 = arith.constant 0 : i32
    %c0_i32_2 = arith.constant 0 : i32
    return %c0_i32, %c0_i32_0, %c0_i32_1 : i32, i32, i32
  }
  func.func @transform_16(%arg0: i32) -> (i32, i32, i32) {
    %c0_i32 = arith.constant 0 : i32
    %c0_i32_0 = arith.constant 0 : i32
    %c0_i32_1 = arith.constant 0 : i32
    %c0_i32_2 = arith.constant 0 : i32
    return %c0_i32, %c0_i32_0, %c0_i32_1 : i32, i32, i32
  }
  func.func @transform_17(%arg0: i32) -> (i32, i32, i32, i32) {
    %c0_i32 = arith.constant 0 : i32
    %c0_i32_0 = arith.constant 0 : i32
    %c0_i32_1 = arith.constant 0 : i32
    %c0_i32_2 = arith.constant 0 : i32
    %c0_i32_3 = arith.constant 0 : i32
    return %c0_i32, %c0_i32_0, %c0_i32_1, %c0_i32_2 : i32, i32, i32, i32
  }
  func.func @transform_18(%arg0: i32) -> (i32, i32, i32) {
    %c0_i32 = arith.constant 0 : i32
    %c0_i32_0 = arith.constant 0 : i32
    %c0_i32_1 = arith.constant 0 : i32
    %c0_i32_2 = arith.constant 0 : i32
    return %c0_i32, %c0_i32_0, %c0_i32_1 : i32, i32, i32
  }
  func.func @transform_19(%arg0: i32) -> (i32, i32) {
    %c0_i32 = arith.constant 0 : i32
    %c0_i32_0 = arith.constant 0 : i32
    %c0_i32_1 = arith.constant 0 : i32
    return %c0_i32, %c0_i32_0 : i32, i32
  }
  func.func @transform_20(%arg0: i32) -> (i32, i32) {
    %c0_i32 = arith.constant 0 : i32
    %c0_i32_0 = arith.constant 0 : i32
    %c0_i32_1 = arith.constant 0 : i32
    return %c0_i32, %c0_i32_0 : i32, i32
  }
  func.func @transform_21(%arg0: i32) -> (i32, i32, i32) {
    %c0_i32 = arith.constant 0 : i32
    %c0_i32_0 = arith.constant 0 : i32
    %c0_i32_1 = arith.constant 0 : i32
    return %arg0, %c0_i32, %c0_i32_0 : i32, i32, i32
  }
}

</mosaic_0001>

<llo_original>
// kernel: _lambda_.1
$region0: #{_lambda_.1}
  #allocation0 [shape = 'u32[]', space=smem, size = 0x4, offset = 0x4, fixed_abs, tag = 'smem constant byte address 0x4 - core index']
  #allocation1 [shape = 'u32[144,128]{1,0:T(1,128)}', space=vmem, size = 0x12000, scoped, tag = 'internal scratch']
  %s0 = inlined_call_operand.vmem [shape: f32[2,16,4], index: 0, kind: input, shape index: {}]
  %s1 = inlined_call_operand.vmem [shape: f32[10,16,16], index: 1, kind: input, shape index: {}]
  %s2 = inlined_call_operand.vmem [shape: f32[5,16,1], index: 2, kind: input, shape index: {}]
  %s3 = inlined_call_operand.vmem [shape: f32[6,4,32], index: 3, kind: input, shape index: {}]
  %s4 = inlined_call_operand.vmem [shape: f32[1,32,96], index: 4, kind: input, shape index: {}]
  %s5 = inlined_call_operand.vmem [shape: f32[1,32,32], index: 5, kind: input, shape index: {}]
  %s6 = inlined_call_operand.vmem [shape: f32[1,32,64], index: 6, kind: input, shape index: {}]
  %s7 = inlined_call_operand.vmem [shape: f32[1,64,32], index: 7, kind: input, shape index: {}]
  %s8 = inlined_call_operand.hbm [shape: f32[1,4,32], index: 8, kind: input, shape index: {}]
  %s9 = inlined_call_operand.hbm [shape: f32[2,32], index: 9, kind: input, shape index: {}]
  %s10 = inlined_call_operand.vmem [shape: f32[1,32,96], index: 10, kind: input, shape index: {}]
  %s11 = inlined_call_operand.hbm [shape: f32[1,32,32], index: 11, kind: input, shape index: {}]
  %s12 = inlined_call_operand.hbm [shape: f32[1,32,32], index: 12, kind: input, shape index: {}]
  %s13 = inlined_call_operand.hbm [shape: f32[1,32,64], index: 13, kind: input, shape index: {}]
  %s14 = inlined_call_operand.hbm [shape: f32[1,32,32], index: 14, kind: input, shape index: {}]
  %s15 = inlined_call_operand.vmem [shape: f32[1,32,64], index: 15, kind: input, shape index: {}]
  %s16 = inlined_call_operand.vmem [shape: f32[1,64,32], index: 16, kind: input, shape index: {}]
  %s17 = inlined_call_operand.vmem [shape: f32[1,3,32,4], index: 17, kind: input, shape index: {}]
  %s18 = inlined_call_operand.hbm [shape: f32[1,8,32], index: 18, kind: input, shape index: {}]
  %s19 = inlined_call_operand.hbm [shape: f32[2,32], index: 19, kind: input, shape index: {}]
  %s20 = inlined_call_operand.vmem [shape: f32[33,4], index: 20, kind: input, shape index: {}]
  %s21 = inlined_call_operand.vmem [shape: f32[2,8,4], index: 21, kind: output, shape index: {}]
  %s22 = sld [smem:[#allocation0]]
  $region149: #{_lambda_.1} parent=0
    _
  %s24 = ssub.s32 1, %s22
  %s25 = scalar_select 0, %s24, %s22
  $region1: #{_lambda_.1} parent=0
    #allocation2 [shape = 'u8[2048]{0}', space=vmem, size = 0x800, scoped, tag = 'input window, operand 8, single buffered']
    #allocation3 [shape = 's32[2]{0}', space=sflag, size = 0x8, scoped, tag = 'scoped memory for _lambda_.1']
    #allocation4 [shape = 'u8[1024]{0}', space=vmem, size = 0x400, scoped, tag = 'input window, operand 9, single buffered']
    #allocation5 [shape = 's32[1]{0}', space=sflag, size = 0x4, scoped, tag = 'scoped memory for _lambda_.1']
    #allocation6 [shape = 'u8[16384]{0}', space=vmem, size = 0x4000, scoped, tag = 'input window, operand 11, single buffered']
    #allocation7 [shape = 'u8[16384]{0}', space=vmem, size = 0x4000, scoped, tag = 'input window, operand 12, single buffered']
    #allocation8 [shape = 's32[1]{0}', space=sflag, size = 0x4, scoped, tag = 'scoped memory for _lambda_.1']
    #allocation9 [shape = 'u8[16384]{0}', space=vmem, size = 0x4000, scoped, tag = 'input window, operand 13, single buffered']
    #allocation10 [shape = 'u8[16384]{0}', space=vmem, size = 0x4000, scoped, tag = 'input window, operand 14, single buffered']
    #allocation11 [shape = 's32[1]{0}', space=sflag, size = 0x4, scoped, tag = 'scoped memory for _lambda_.1']
    #allocation12 [shape = 'u8[4096]{0}', space=vmem, size = 0x1000, scoped, tag = 'input window, operand 18, single buffered']
    #allocation13 [shape = 'u8[1024]{0}', space=vmem, size = 0x400, scoped, tag = 'input window, operand 19, single buffered']
    #allocation14 [shape = 's32[1]{0}', space=sflag, size = 0x4, scoped, tag = 'scoped memory for _lambda_.1']
    %26 = vsyncpa [#allocation3], 0
    %27 = vsyncpa [#allocation5], 0
    %28 = vsyncpa [#allocation8], 0
    %29 = vsyncpa [#allocation11], 0
    %30 = vsyncpa [#allocation14], 0
    loop: start=0, step=1, limit=4
    $region2: #{_lambda_.1} parent=1 // loop_pre_header
      _
    $region3: #{_lambda_.1} parent=1 // loop_header
      %s32 = sphi 0, %s36
      %p33 = scmp.ge.s32.totalorder %s32, 4
      %s42 = sphi 0, %s44
      %s45 = sphi 0, %s42
      %s46 = sphi 0, %s45
      %s62 = sphi 0, %s46
      %s66 = sphi 0, %s66
      %s68 = sphi 0, %s66
      %s69 = sphi 0, %s68
      %s83 = sphi 0, %s69
      %s87 = sphi 0, %s87
      %s89 = sphi 0, %s87
      %s90 = sphi 0, %s89
      %s104 = sphi 0, %s90
      %s108 = sphi 0, %s108
      %s110 = sphi 0, %s108
      %s111 = sphi 0, %s110
      %s125 = sphi 0, %s111
      %s129 = sphi 0, %s129
      %s131 = sphi 0, %s129
      %s132 = sphi 0, %s131
      %s146 = sphi 0, %s132
      %s150 = sphi 0, %s150
      %s152 = sphi 0, %s150
      %s153 = sphi 0, %s152
      %s167 = sphi 0, %s153
      %s171 = sphi 0, %s171
      %s173 = sphi 0, %s171
      %s174 = sphi 0, %s173
      %s188 = sphi 0, %s174
      %s192 = sphi 0, %s192
      %s194 = sphi 0, %s192
      %s195 = sphi 0, %s194
      %s209 = sphi 0, %s195
      %s213 = sphi 0, %s213
      %s215 = sphi 0, %s213
      %s216 = sphi 0, %s215
      %s230 = sphi 0, %s216
      %s234 = sphi 0, %s234
      %s236 = sphi 0, %s234
      %s237 = sphi 0, %s236
      %s251 = sphi 0, %s237
      %s255 = sphi 0, %s255
      %s257 = sphi 0, %s255
      %s258 = sphi 0, %s257
      %s272 = sphi 0, %s258
      %s276 = sphi 0, %s276
      %s278 = sphi 0, %s276
      %s279 = sphi 0, %s278
      %s293 = sphi 0, %s279
      %s297 = sphi 0, %s297
      %s299 = sphi 0, %s297
      %s300 = sphi 0, %s299
      %s314 = sphi 0, %s300
      %s318 = sphi 0, %s318
      %s320 = sphi 0, %s318
      %s321 = sphi 0, %s320
      %s335 = sphi 0, %s321
      %s339 = sphi 0, %s339
      %s341 = sphi 0, %s339
      %s342 = sphi 0, %s341
      %s356 = sphi 0, %s342
      %s360 = sphi 0, %s360
      %s362 = sphi 0, %s360
      %s363 = sphi 0, %s362
      %s377 = sphi 0, %s363
      %s381 = sphi 0, %s381
      %s383 = sphi 0, %s381
      %s384 = sphi 0, %s383
      %s398 = sphi 0, %s384
      %s402 = sphi 0, %s402
      %s404 = sphi 0, %s402
      %s405 = sphi 0, %s404
      %s419 = sphi 0, %s405
      %s423 = sphi 0, %s423
      %s425 = sphi 0, %s423
      %s426 = sphi 0, %s425
      %s440 = sphi 0, %s426
      %s444 = sphi 0, %s444
      %s446 = sphi 0, %s444
      %s447 = sphi 0, %s446
      %s461 = sphi 0, %s447
      %s465 = sphi 0, %s465
      %s467 = sphi 0, %s465
      %s468 = sphi 0, %s467
      %s482 = sphi 0, %s468
      %s488 = sphi 0, %s490
      %s491 = sphi 0, %s488
      %s492 = sphi 0, %s491
      %s508 = sphi 0, %s492
    $region4: #{_lambda_.1} parent=1 // loop_header_branch
      %35 = sbr.rel (%p33) target = $region8
    $region5: #{_lambda_.1} parent=1 // loop_body
      %s37 = ssub.s32 %s32, 1
      %s38 = ssub.s32 %s32, 2
      %s39 = sadd.s32 %s32, 1
      %s40 = ssub.s32 %s32, %s39
      %p41 = scmp.eq.s32.totalorder %s40, 0
      %s43 = sadd.s32 %s42, 1
      %s44 = scalar_select %p41, %s42, %s43
      %p47 = pneg %p41
      %p48 = scmp.eq.s32.totalorder %s32, 1
      %p49 = por %p47, %p48
      %p50 = scmp.ne.s32.totalorder %s42, %s45
      %p51 = scmp.eq.s32.totalorder %s32, 0
      %p52 = por %p50, %p51
      %p53 = scmp.ne.s32.totalorder %s42, %s45
      %p54 = scmp.eq.s32.totalorder %s37, 1
      %p55 = por %p53, %p54
      %p56 = scmp.ne.s32.totalorder %s45, %s46
      %p57 = scmp.eq.s32.totalorder %s37, 0
      %p58 = por %p56, %p57
      %p59 = scmp.ne.s32.totalorder %s45, %s46
      %p60 = scmp.eq.s32.totalorder %s38, 1
      %p61 = por %p59, %p60
      %p63 = scmp.ne.s32.totalorder %s46, %s62
      %p64 = scmp.eq.s32.totalorder %s38, 0
      %p65 = por %p63, %p64
      %s67 = sadd.s32 %s66, 1
      %p70 = scmp.eq.s32.totalorder %s32, 1
      %p71 = scmp.ne.s32.totalorder %s66, %s68
      %p72 = scmp.eq.s32.totalorder %s32, 0
      %p73 = por %p71, %p72
      %p74 = scmp.ne.s32.totalorder %s66, %s68
      %p75 = scmp.eq.s32.totalorder %s37, 1
      %p76 = por %p74, %p75
      %p77 = scmp.ne.s32.totalorder %s68, %s69
      %p78 = scmp.eq.s32.totalorder %s37, 0
      %p79 = por %p77, %p78
      %p80 = scmp.ne.s32.totalorder %s68, %s69
      %p81 = scmp.eq.s32.totalorder %s38, 1
      %p82 = por %p80, %p81
      %p84 = scmp.ne.s32.totalorder %s69, %s83
      %p85 = scmp.eq.s32.totalorder %s38, 0
      %p86 = por %p84, %p85
      %s88 = sadd.s32 %s87, 1
      %p91 = scmp.eq.s32.totalorder %s32, 1
      %p92 = scmp.ne.s32.totalorder %s87, %s89
      %p93 = scmp.eq.s32.totalorder %s32, 0
      %p94 = por %p92, %p93
      %p95 = scmp.ne.s32.totalorder %s87, %s89
      %p96 = scmp.eq.s32.totalorder %s37, 1
      %p97 = por %p95, %p96
      %p98 = scmp.ne.s32.totalorder %s89, %s90
      %p99 = scmp.eq.s32.totalorder %s37, 0
      %p100 = por %p98, %p99
      %p101 = scmp.ne.s32.totalorder %s89, %s90
      %p102 = scmp.eq.s32.totalorder %s38, 1
      %p103 = por %p101, %p102
      %p105 = scmp.ne.s32.totalorder %s90, %s104
      %p106 = scmp.eq.s32.totalorder %s38, 0
      %p107 = por %p105, %p106
      %s109 = sadd.s32 %s108, 1
      %p112 = scmp.eq.s32.totalorder %s32, 1
      %p113 = scmp.ne.s32.totalorder %s108, %s110
      %p114 = scmp.eq.s32.totalorder %s32, 0
      %p115 = por %p113, %p114
      %p116 = scmp.ne.s32.totalorder %s108, %s110
      %p117 = scmp.eq.s32.totalorder %s37, 1
      %p118 = por %p116, %p117
      %p119 = scmp.ne.s32.totalorder %s110, %s111
      %p120 = scmp.eq.s32.totalorder %s37, 0
      %p121 = por %p119, %p120
      %p122 = scmp.ne.s32.totalorder %s110, %s111
      %p123 = scmp.eq.s32.totalorder %s38, 1
      %p124 = por %p122, %p123
      %p126 = scmp.ne.s32.totalorder %s111, %s125
      %p127 = scmp.eq.s32.totalorder %s38, 0
      %p128 = por %p126, %p127
      %s130 = sadd.s32 %s129, 1
      %p133 = scmp.eq.s32.totalorder %s32, 1
      %p134 = scmp.ne.s32.totalorder %s129, %s131
      %p135 = scmp.eq.s32.totalorder %s32, 0
      %p136 = por %p134, %p135
      %p137 = scmp.ne.s32.totalorder %s129, %s131
      %p138 = scmp.eq.s32.totalorder %s37, 1
      %p139 = por %p137, %p138
      %p140 = scmp.ne.s32.totalorder %s131, %s132
      %p141 = scmp.eq.s32.totalorder %s37, 0
      %p142 = por %p140, %p141
      %p143 = scmp.ne.s32.totalorder %s131, %s132
      %p144 = scmp.eq.s32.totalorder %s38, 1
      %p145 = por %p143, %p144
      %p147 = scmp.ne.s32.totalorder %s132, %s146
      %p148 = scmp.eq.s32.totalorder %s38, 0
      %p149 = por %p147, %p148
      %s151 = sadd.s32 %s150, 1
      %p154 = scmp.eq.s32.totalorder %s32, 1
      %p155 = scmp.ne.s32.totalorder %s150, %s152
      %p156 = scmp.eq.s32.totalorder %s32, 0
      %p157 = por %p155, %p156
      %p158 = scmp.ne.s32.totalorder %s150, %s152
      %p159 = scmp.eq.s32.totalorder %s37, 1
      %p160 = por %p158, %p159
      %p161 = scmp.ne.s32.totalorder %s152, %s153
      %p162 = scmp.eq.s32.totalorder %s37, 0
      %p163 = por %p161, %p162
      %p164 = scmp.ne.s32.totalorder %s152, %s153
      %p165 = scmp.eq.s32.totalorder %s38, 1
      %p166 = por %p164, %p165
      %p168 = scmp.ne.s32.totalorder %s153, %s167
      %p169 = scmp.eq.s32.totalorder %s38, 0
      %p170 = por %p168, %p169
      %s172 = sadd.s32 %s171, 1
      %p175 = scmp.eq.s32.totalorder %s32, 1
      %p176 = scmp.ne.s32.totalorder %s171, %s173
      %p177 = scmp.eq.s32.totalorder %s32, 0
      %p178 = por %p176, %p177
      %p179 = scmp.ne.s32.totalorder %s171, %s173
      %p180 = scmp.eq.s32.totalorder %s37, 1
      %p181 = por %p179, %p180
      %p182 = scmp.ne.s32.totalorder %s173, %s174
      %p183 = scmp.eq.s32.totalorder %s37, 0
      %p184 = por %p182, %p183
      %p185 = scmp.ne.s32.totalorder %s173, %s174
      %p186 = scmp.eq.s32.totalorder %s38, 1
      %p187 = por %p185, %p186
      %p189 = scmp.ne.s32.totalorder %s174, %s188
      %p190 = scmp.eq.s32.totalorder %s38, 0
      %p191 = por %p189, %p190
      %s193 = sadd.s32 %s192, 1
      %p196 = scmp.eq.s32.totalorder %s32, 1
      %p197 = scmp.ne.s32.totalorder %s192, %s194
      %p198 = scmp.eq.s32.totalorder %s32, 0
      %p199 = por %p197, %p198
      %p200 = scmp.ne.s32.totalorder %s192, %s194
      %p201 = scmp.eq.s32.totalorder %s37, 1
      %p202 = por %p200, %p201
      %p203 = scmp.ne.s32.totalorder %s194, %s195
      %p204 = scmp.eq.s32.totalorder %s37, 0
      %p205 = por %p203, %p204
      %p206 = scmp.ne.s32.totalorder %s194, %s195
      %p207 = scmp.eq.s32.totalorder %s38, 1
      %p208 = por %p206, %p207
      %p210 = scmp.ne.s32.totalorder %s195, %s209
      %p211 = scmp.eq.s32.totalorder %s38, 0
      %p212 = por %p210, %p211
      %s214 = sadd.s32 %s213, 1
      %p217 = scmp.eq.s32.totalorder %s32, 1
      %p218 = scmp.ne.s32.totalorder %s213, %s215
      %p219 = scmp.eq.s32.totalorder %s32, 0
      %p220 = por %p218, %p219
      %p221 = scmp.ne.s32.totalorder %s213, %s215
      %p222 = scmp.eq.s32.totalorder %s37, 1
      %p223 = por %p221, %p222
      %p224 = scmp.ne.s32.totalorder %s215, %s216
      %p225 = scmp.eq.s32.totalorder %s37, 0
      %p226 = por %p224, %p225
      %p227 = scmp.ne.s32.totalorder %s215, %s216
      %p228 = scmp.eq.s32.totalorder %s38, 1
      %p229 = por %p227, %p228
      %p231 = scmp.ne.s32.totalorder %s216, %s230
      %p232 = scmp.eq.s32.totalorder %s38, 0
      %p233 = por %p231, %p232
      %s235 = sadd.s32 %s234, 1
      %p238 = scmp.eq.s32.totalorder %s32, 1
      %p239 = scmp.ne.s32.totalorder %s234, %s236
      %p240 = scmp.eq.s32.totalorder %s32, 0
      %p241 = por %p239, %p240
      %p242 = scmp.ne.s32.totalorder %s234, %s236
      %p243 = scmp.eq.s32.totalorder %s37, 1
      %p244 = por %p242, %p243
      %p245 = scmp.ne.s32.totalorder %s236, %s237
      %p246 = scmp.eq.s32.totalorder %s37, 0
      %p247 = por %p245, %p246
      %p248 = scmp.ne.s32.totalorder %s236, %s237
      %p249 = scmp.eq.s32.totalorder %s38, 1
      %p250 = por %p248, %p249
      %p252 = scmp.ne.s32.totalorder %s237, %s251
      %p253 = scmp.eq.s32.totalorder %s38, 0
      %p254 = por %p252, %p253
      %s256 = sadd.s32 %s255, 1
      %p259 = scmp.eq.s32.totalorder %s32, 1
      %p260 = scmp.ne.s32.totalorder %s255, %s257
      %p261 = scmp.eq.s32.totalorder %s32, 0
      %p262 = por %p260, %p261
      %p263 = scmp.ne.s32.totalorder %s255, %s257
      %p264 = scmp.eq.s32.totalorder %s37, 1
      %p265 = por %p263, %p264
      %p266 = scmp.ne.s32.totalorder %s257, %s258
      %p267 = scmp.eq.s32.totalorder %s37, 0
      %p268 = por %p266, %p267
      %p269 = scmp.ne.s32.totalorder %s257, %s258
      %p270 = scmp.eq.s32.totalorder %s38, 1
      %p271 = por %p269, %p270
      %p273 = scmp.ne.s32.totalorder %s258, %s272
      %p274 = scmp.eq.s32.totalorder %s38, 0
      %p275 = por %p273, %p274
      %s277 = sadd.s32 %s276, 1
      %p280 = scmp.eq.s32.totalorder %s32, 1
      %p281 = scmp.ne.s32.totalorder %s276, %s278
      %p282 = scmp.eq.s32.totalorder %s32, 0
      %p283 = por %p281, %p282
      %p284 = scmp.ne.s32.totalorder %s276, %s278
      %p285 = scmp.eq.s32.totalorder %s37, 1
      %p286 = por %p284, %p285
      %p287 = scmp.ne.s32.totalorder %s278, %s279
      %p288 = scmp.eq.s32.totalorder %s37, 0
      %p289 = por %p287, %p288
      %p290 = scmp.ne.s32.totalorder %s278, %s279
      %p291 = scmp.eq.s32.totalorder %s38, 1
      %p292 = por %p290, %p291
      %p294 = scmp.ne.s32.totalorder %s279, %s293
      %p295 = scmp.eq.s32.totalorder %s38, 0
      %p296 = por %p294, %p295
      %s298 = sadd.s32 %s297, 1
      %p301 = scmp.eq.s32.totalorder %s32, 1
      %p302 = scmp.ne.s32.totalorder %s297, %s299
      %p303 = scmp.eq.s32.totalorder %s32, 0
      %p304 = por %p302, %p303
      %p305 = scmp.ne.s32.totalorder %s297, %s299
      %p306 = scmp.eq.s32.totalorder %s37, 1
      %p307 = por %p305, %p306
      %p308 = scmp.ne.s32.totalorder %s299, %s300
      %p309 = scmp.eq.s32.totalorder %s37, 0
      %p310 = por %p308, %p309
      %p311 = scmp.ne.s32.totalorder %s299, %s300
      %p312 = scmp.eq.s32.totalorder %s38, 1
      %p313 = por %p311, %p312
      %p315 = scmp.ne.s32.totalorder %s300, %s314
      %p316 = scmp.eq.s32.totalorder %s38, 0
      %p317 = por %p315, %p316
      %s319 = sadd.s32 %s318, 1
      %p322 = scmp.eq.s32.totalorder %s32, 1
      %p323 = scmp.ne.s32.totalorder %s318, %s320
      %p324 = scmp.eq.s32.totalorder %s32, 0
      %p325 = por %p323, %p324
      %p326 = scmp.ne.s32.totalorder %s318, %s320
      %p327 = scmp.eq.s32.totalorder %s37, 1
      %p328 = por %p326, %p327
      %p329 = scmp.ne.s32.totalorder %s320, %s321
      %p330 = scmp.eq.s32.totalorder %s37, 0
      %p331 = por %p329, %p330
      %p332 = scmp.ne.s32.totalorder %s320, %s321
      %p333 = scmp.eq.s32.totalorder %s38, 1
      %p334 = por %p332, %p333
      %p336 = scmp.ne.s32.totalorder %s321, %s335
      %p337 = scmp.eq.s32.totalorder %s38, 0
      %p338 = por %p336, %p337
      %s340 = sadd.s32 %s339, 1
      %p343 = scmp.eq.s32.totalorder %s32, 1
      %p344 = scmp.ne.s32.totalorder %s339, %s341
      %p345 = scmp.eq.s32.totalorder %s32, 0
      %p346 = por %p344, %p345
      %p347 = scmp.ne.s32.totalorder %s339, %s341
      %p348 = scmp.eq.s32.totalorder %s37, 1
      %p349 = por %p347, %p348
      %p350 = scmp.ne.s32.totalorder %s341, %s342
      %p351 = scmp.eq.s32.totalorder %s37, 0
      %p352 = por %p350, %p351
      %p353 = scmp.ne.s32.totalorder %s341, %s342
      %p354 = scmp.eq.s32.totalorder %s38, 1
      %p355 = por %p353, %p354
      %p357 = scmp.ne.s32.totalorder %s342, %s356
      %p358 = scmp.eq.s32.totalorder %s38, 0
      %p359 = por %p357, %p358
      %s361 = sadd.s32 %s360, 1
      %p364 = scmp.eq.s32.totalorder %s32, 1
      %p365 = scmp.ne.s32.totalorder %s360, %s362
      %p366 = scmp.eq.s32.totalorder %s32, 0
      %p367 = por %p365, %p366
      %p368 = scmp.ne.s32.totalorder %s360, %s362
      %p369 = scmp.eq.s32.totalorder %s37, 1
      %p370 = por %p368, %p369
      %p371 = scmp.ne.s32.totalorder %s362, %s363
      %p372 = scmp.eq.s32.totalorder %s37, 0
      %p373 = por %p371, %p372
      %p374 = scmp.ne.s32.totalorder %s362, %s363
      %p375 = scmp.eq.s32.totalorder %s38, 1
      %p376 = por %p374, %p375
      %p378 = scmp.ne.s32.totalorder %s363, %s377
      %p379 = scmp.eq.s32.totalorder %s38, 0
      %p380 = por %p378, %p379
      %s382 = sadd.s32 %s381, 1
      %p385 = scmp.eq.s32.totalorder %s32, 1
      %p386 = scmp.ne.s32.totalorder %s381, %s383
      %p387 = scmp.eq.s32.totalorder %s32, 0
      %p388 = por %p386, %p387
      %p389 = scmp.ne.s32.totalorder %s381, %s383
      %p390 = scmp.eq.s32.totalorder %s37, 1
      %p391 = por %p389, %p390
      %p392 = scmp.ne.s32.totalorder %s383, %s384
      %p393 = scmp.eq.s32.totalorder %s37, 0
      %p394 = por %p392, %p393
      %p395 = scmp.ne.s32.totalorder %s383, %s384
      %p396 = scmp.eq.s32.totalorder %s38, 1
      %p397 = por %p395, %p396
      %p399 = scmp.ne.s32.totalorder %s384, %s398
      %p400 = scmp.eq.s32.totalorder %s38, 0
      %p401 = por %p399, %p400
      %s403 = sadd.s32 %s402, 1
      %p406 = scmp.eq.s32.totalorder %s32, 1
      %p407 = scmp.ne.s32.totalorder %s402, %s404
      %p408 = scmp.eq.s32.totalorder %s32, 0
      %p409 = por %p407, %p408
      %p410 = scmp.ne.s32.totalorder %s402, %s404
      %p411 = scmp.eq.s32.totalorder %s37, 1
      %p412 = por %p410, %p411
      %p413 = scmp.ne.s32.totalorder %s404, %s405
      %p414 = scmp.eq.s32.totalorder %s37, 0
      %p415 = por %p413, %p414
      %p416 = scmp.ne.s32.totalorder %s404, %s405
      %p417 = scmp.eq.s32.totalorder %s38, 1
      %p418 = por %p416, %p417
      %p420 = scmp.ne.s32.totalorder %s405, %s419
      %p421 = scmp.eq.s32.totalorder %s38, 0
      %p422 = por %p420, %p421
      %s424 = sadd.s32 %s423, 1
      %p427 = scmp.eq.s32.totalorder %s32, 1
      %p428 = scmp.ne.s32.totalorder %s423, %s425
      %p429 = scmp.eq.s32.totalorder %s32, 0
      %p430 = por %p428, %p429
      %p431 = scmp.ne.s32.totalorder %s423, %s425
      %p432 = scmp.eq.s32.totalorder %s37, 1
      %p433 = por %p431, %p432
      %p434 = scmp.ne.s32.totalorder %s425, %s426
      %p435 = scmp.eq.s32.totalorder %s37, 0
      %p436 = por %p434, %p435
      %p437 = scmp.ne.s32.totalorder %s425, %s426
      %p438 = scmp.eq.s32.totalorder %s38, 1
      %p439 = por %p437, %p438
      %p441 = scmp.ne.s32.totalorder %s426, %s440
      %p442 = scmp.eq.s32.totalorder %s38, 0
      %p443 = por %p441, %p442
      %s445 = sadd.s32 %s444, 1
      %p448 = scmp.eq.s32.totalorder %s32, 1
      %p449 = scmp.ne.s32.totalorder %s444, %s446
      %p450 = scmp.eq.s32.totalorder %s32, 0
      %p451 = por %p449, %p450
      %p452 = scmp.ne.s32.totalorder %s444, %s446
      %p453 = scmp.eq.s32.totalorder %s37, 1
      %p454 = por %p452, %p453
      %p455 = scmp.ne.s32.totalorder %s446, %s447
      %p456 = scmp.eq.s32.totalorder %s37, 0
      %p457 = por %p455, %p456
      %p458 = scmp.ne.s32.totalorder %s446, %s447
      %p459 = scmp.eq.s32.totalorder %s38, 1
      %p460 = por %p458, %p459
      %p462 = scmp.ne.s32.totalorder %s447, %s461
      %p463 = scmp.eq.s32.totalorder %s38, 0
      %p464 = por %p462, %p463
      %s466 = sadd.s32 %s465, 1
      %p469 = scmp.eq.s32.totalorder %s32, 1
      %p470 = scmp.ne.s32.totalorder %s465, %s467
      %p471 = scmp.eq.s32.totalorder %s32, 0
      %p472 = por %p470, %p471
      %p473 = scmp.ne.s32.totalorder %s465, %s467
      %p474 = scmp.eq.s32.totalorder %s37, 1
      %p475 = por %p473, %p474
      %p476 = scmp.ne.s32.totalorder %s467, %s468
      %p477 = scmp.eq.s32.totalorder %s37, 0
      %p478 = por %p476, %p477
      %p479 = scmp.ne.s32.totalorder %s467, %s468
      %p480 = scmp.eq.s32.totalorder %s38, 1
      %p481 = por %p479, %p480
      %p483 = scmp.ne.s32.totalorder %s468, %s482
      %p484 = scmp.eq.s32.totalorder %s38, 0
      %p485 = por %p483, %p484
      %s486 = ssub.s32 %s32, %s39
      %p487 = scmp.eq.s32.totalorder %s486, 0
      %s489 = sadd.s32 %s488, 1
      %s490 = scalar_select %p487, %s488, %s489
      %p493 = pneg %p487
      %p494 = scmp.eq.s32.totalorder %s32, 1
      %p495 = por %p493, %p494
      %p496 = scmp.ne.s32.totalorder %s488, %s491
      %p497 = scmp.eq.s32.totalorder %s32, 0
      %p498 = por %p496, %p497
      %p499 = scmp.ne.s32.totalorder %s488, %s491
      %p500 = scmp.eq.s32.totalorder %s37, 1
      %p501 = por %p499, %p500
      %p502 = scmp.ne.s32.totalorder %s491, %s492
      %p503 = scmp.eq.s32.totalorder %s37, 0
      %p504 = por %p502, %p503
      %p505 = scmp.ne.s32.totalorder %s491, %s492
      %p506 = scmp.eq.s32.totalorder %s38, 1
      %p507 = por %p505, %p506
      %p509 = scmp.ne.s32.totalorder %s492, %s508
      %p510 = scmp.eq.s32.totalorder %s38, 0
      %p511 = por %p509, %p510
      %p512 = scmp.le.s32.totalorder 1, %s32
      %p513 = scmp.lt.s32.totalorder %s32, 3
      %p514 = pnand %p512, %p513
      %p515 = pneg %p514
      // Predicated region
      $region9: #{_lambda_.1} parent=5 // pred_check
        _
      $region10: #{_lambda_.1} parent=5 // pred_check_branch
        %517 = sbr.rel (%p514) target = $region12
      $region11: #{_lambda_.1} parent=5 // pred_region
        %s518 = ssub.s32 %s32, 1
        // Predicated region
        $region13: #{_lambda_.1} parent=11 // pred_check
          %p519 = pneg %p79
        $region14: #{_lambda_.1} parent=11 // pred_check_branch
          %521 = sbr.rel (%p519) target = $region16
        $region15: #{_lambda_.1} parent=11 // pred_region
          _
        $region16: #{_lambda_.1} parent=11 // pred_fallthru
          _
        // Predicated region
        $region17: #{_lambda_.1} parent=11 // pred_check
          %p522 = pneg %p100
        $region18: #{_lambda_.1} parent=11 // pred_check_branch
          %524 = sbr.rel (%p522) target = $region20
        $region19: #{_lambda_.1} parent=11 // pred_region
          _
        $region20: #{_lambda_.1} parent=11 // pred_fallthru
          _
        // Predicated region
        $region21: #{_lambda_.1} parent=11 // pred_check
          %p525 = pneg %p121
        $region22: #{_lambda_.1} parent=11 // pred_check_branch
          %527 = sbr.rel (%p525) target = $region24
        $region23: #{_lambda_.1} parent=11 // pred_region
          _
        $region24: #{_lambda_.1} parent=11 // pred_fallthru
          _
        // Predicated region
        $region25: #{_lambda_.1} parent=11 // pred_check
          %p528 = pneg %p142
        $region26: #{_lambda_.1} parent=11 // pred_check_branch
          %530 = sbr.rel (%p528) target = $region28
        $region27: #{_lambda_.1} parent=11 // pred_region
          _
        $region28: #{_lambda_.1} parent=11 // pred_fallthru
          _
        // Predicated region
        $region29: #{_lambda_.1} parent=11 // pred_check
          %p531 = pneg %p163
        $region30: #{_lambda_.1} parent=11 // pred_check_branch
          %533 = sbr.rel (%p531) target = $region32
        $region31: #{_lambda_.1} parent=11 // pred_region
          _
        $region32: #{_lambda_.1} parent=11 // pred_fallthru
          _
        // Predicated region
        $region33: #{_lambda_.1} parent=11 // pred_check
          %p534 = pneg %p184
        $region34: #{_lambda_.1} parent=11 // pred_check_branch
          %536 = sbr.rel (%p534) target = $region36
        $region35: #{_lambda_.1} parent=11 // pred_region
          _
        $region36: #{_lambda_.1} parent=11 // pred_fallthru
          _
        // Predicated region
        $region37: #{_lambda_.1} parent=11 // pred_check
          %p537 = pneg %p205
        $region38: #{_lambda_.1} parent=11 // pred_check_branch
          %539 = sbr.rel (%p537) target = $region40
        $region39: #{_lambda_.1} parent=11 // pred_region
          _
        $region40: #{_lambda_.1} parent=11 // pred_fallthru
          _
        // Predicated region
        $region41: #{_lambda_.1} parent=11 // pred_check
          %p540 = pneg %p226
        $region42: #{_lambda_.1} parent=11 // pred_check_branch
          %542 = sbr.rel (%p540) target = $region44
        $region43: #{_lambda_.1} parent=11 // pred_region
          %s544 = ssub.s32 64, 64
          %545 = vsyncadd [#allocation3], %s544
          %s547 = sshll.u32 [#allocation2], 4
          %s548 = int_to_ptr.vmem [resolvable:$true] %s547
          %550 = dma.hbm_to_vmem [thread:$0]  %s8, 64, %s548, [#allocation3]
        $region44: #{_lambda_.1} parent=11 // pred_fallthru
          _
        // Predicated region
        $region45: #{_lambda_.1} parent=11 // pred_check
          %p551 = pneg %p247
        $region46: #{_lambda_.1} parent=11 // pred_check_branch
          %553 = sbr.rel (%p551) target = $region48
        $region47: #{_lambda_.1} parent=11 // pred_region
          %s555 = ssub.s32 32, 32
          %556 = vsyncadd [#allocation5], %s555
          %s558 = sshll.u32 [#allocation4], 4
          %s559 = int_to_ptr.vmem [resolvable:$true] %s558
          %561 = dma.hbm_to_vmem [thread:$0]  %s9, 32, %s559, [#allocation5]
        $region48: #{_lambda_.1} parent=11 // pred_fallthru
          _
        // Predicated region
        $region49: #{_lambda_.1} parent=11 // pred_check
          %p562 = pneg %p268
        $region50: #{_lambda_.1} parent=11 // pred_check_branch
          %564 = sbr.rel (%p562) target = $region52
        $region51: #{_lambda_.1} parent=11 // pred_region
          _
        $region52: #{_lambda_.1} parent=11 // pred_fallthru
          _
        // Predicated region
        $region53: #{_lambda_.1} parent=11 // pred_check
          %p565 = pneg %p289
        $region54: #{_lambda_.1} parent=11 // pred_check_branch
          %567 = sbr.rel (%p565) target = $region56
        $region55: #{_lambda_.1} parent=11 // pred_region
          %s569 = ssub.s32 512, 512
          %570 = vsyncadd [#allocation5], %s569
          %s571 = sshll.u32 [#allocation6], 4
          %s572 = int_to_ptr.vmem [resolvable:$true] %s571
          %577 = dma.hbm_to_vmem [thread:$0]  %s11, 512, %s572, [#allocation5], 128, 128, 8
        $region56: #{_lambda_.1} parent=11 // pred_fallthru
          _
        // Predicated region
        $region57: #{_lambda_.1} parent=11 // pred_check
          %p578 = pneg %p310
        $region58: #{_lambda_.1} parent=11 // pred_check_branch
          %580 = sbr.rel (%p578) target = $region60
        $region59: #{_lambda_.1} parent=11 // pred_region
          %s582 = ssub.s32 512, 512
          %583 = vsyncadd [#allocation8], %s582
          %s584 = sshll.u32 [#allocation7], 4
          %s585 = int_to_ptr.vmem [resolvable:$true] %s584
          %590 = dma.hbm_to_vmem [thread:$0]  %s12, 512, %s585, [#allocation8], 128, 128, 8
        $region60: #{_lambda_.1} parent=11 // pred_fallthru
          _
        // Predicated region
        $region61: #{_lambda_.1} parent=11 // pred_check
          %p591 = pneg %p331
        $region62: #{_lambda_.1} parent=11 // pred_check_branch
          %593 = sbr.rel (%p591) target = $region64
        $region63: #{_lambda_.1} parent=11 // pred_region
          %s595 = ssub.s32 512, 512
          %596 = vsyncadd [#allocation8], %s595
          %s597 = sshll.u32 [#allocation9], 4
          %s598 = int_to_ptr.vmem [resolvable:$true] %s597
          %603 = dma.hbm_to_vmem [thread:$0]  %s13, 512, %s598, [#allocation8], 128, 128, 8
        $region64: #{_lambda_.1} parent=11 // pred_fallthru
          _
        // Predicated region
        $region65: #{_lambda_.1} parent=11 // pred_check
          %p604 = pneg %p352
        $region66: #{_lambda_.1} parent=11 // pred_check_branch
          %606 = sbr.rel (%p604) target = $region68
        $region67: #{_lambda_.1} parent=11 // pred_region
          %s608 = ssub.s32 512, 512
          %609 = vsyncadd [#allocation11], %s608
          %s610 = sshll.u32 [#allocation10], 4
          %s611 = int_to_ptr.vmem [resolvable:$true] %s610
          %616 = dma.hbm_to_vmem [thread:$0]  %s14, 512, %s611, [#allocation11], 128, 128, 8
        $region68: #{_lambda_.1} parent=11 // pred_fallthru
          _
        // Predicated region
        $region69: #{_lambda_.1} parent=11 // pred_check
          %p617 = pneg %p373
        $region70: #{_lambda_.1} parent=11 // pred_check_branch
          %619 = sbr.rel (%p617) target = $region72
        $region71: #{_lambda_.1} parent=11 // pred_region
          _
        $region72: #{_lambda_.1} parent=11 // pred_fallthru
          _
        // Predicated region
        $region73: #{_lambda_.1} parent=11 // pred_check
          %p620 = pneg %p394
        $region74: #{_lambda_.1} parent=11 // pred_check_branch
          %622 = sbr.rel (%p620) target = $region76
        $region75: #{_lambda_.1} parent=11 // pred_region
          _
        $region76: #{_lambda_.1} parent=11 // pred_fallthru
          _
        // Predicated region
        $region77: #{_lambda_.1} parent=11 // pred_check
          %p623 = pneg %p415
        $region78: #{_lambda_.1} parent=11 // pred_check_branch
          %625 = sbr.rel (%p623) target = $region80
        $region79: #{_lambda_.1} parent=11 // pred_region
          _
        $region80: #{_lambda_.1} parent=11 // pred_fallthru
          _
        // Predicated region
        $region81: #{_lambda_.1} parent=11 // pred_check
          %p626 = pneg %p436
        $region82: #{_lambda_.1} parent=11 // pred_check_branch
          %628 = sbr.rel (%p626) target = $region84
        $region83: #{_lambda_.1} parent=11 // pred_region
          %s630 = ssub.s32 128, 128
          %631 = vsyncadd [#allocation11], %s630
          %s633 = sshll.u32 [#allocation12], 4
          %s634 = int_to_ptr.vmem [resolvable:$true] %s633
          %636 = dma.hbm_to_vmem [thread:$0]  %s18, 128, %s634, [#allocation11]
        $region84: #{_lambda_.1} parent=11 // pred_fallthru
          _
        // Predicated region
        $region85: #{_lambda_.1} parent=11 // pred_check
          %p637 = pneg %p457
        $region86: #{_lambda_.1} parent=11 // pred_check_branch
          %639 = sbr.rel (%p637) target = $region88
        $region87: #{_lambda_.1} parent=11 // pred_region
          %s641 = ssub.s32 32, 32
          %642 = vsyncadd [#allocation14], %s641
          %s644 = sshll.u32 [#allocation13], 4
          %s645 = int_to_ptr.vmem [resolvable:$true] %s644
          %647 = dma.hbm_to_vmem [thread:$0]  %s19, 32, %s645, [#allocation14]
        $region88: #{_lambda_.1} parent=11 // pred_fallthru
          _
        // Predicated region
        $region89: #{_lambda_.1} parent=11 // pred_check
          %p648 = pneg %p478
        $region90: #{_lambda_.1} parent=11 // pred_check_branch
          %650 = sbr.rel (%p648) target = $region92
        $region91: #{_lambda_.1} parent=11 // pred_region
          _
        $region92: #{_lambda_.1} parent=11 // pred_fallthru
          _
      $region12: #{_lambda_.1} parent=5 // pred_fallthru
        _
      %p651 = scmp.lt.s32.totalorder %s32, 2
      // Predicated region
      $region93: #{_lambda_.1} parent=5 // pred_check
        %p652 = pneg %p651
      $region94: #{_lambda_.1} parent=5 // pred_check_branch
        %654 = sbr.rel (%p652) target = $region96
      $region95: #{_lambda_.1} parent=5 // pred_region
        // Predicated region
        $region97: #{_lambda_.1} parent=95 // pred_check
          %p655 = pneg %p52
        $region98: #{_lambda_.1} parent=95 // pred_check_branch
          %657 = sbr.rel (%p655) target = $region100
        $region99: #{_lambda_.1} parent=95 // pred_region
          %p658 = scmp.lt.s32.totalorder %s32, 1
          %s659 = scalar_select %p658, %s32, 1
          %s660 = smul.addr %s659, 2
          %s661 = smul.addr %s660, 8
          %s662 = scalar_lea.vmem %s0, %s661
        $region100: #{_lambda_.1} parent=95 // pred_fallthru
          _
      $region96: #{_lambda_.1} parent=5 // pred_fallthru
        _
      %p663 = scmp.le.s32.totalorder 1, %s32
      %p664 = scmp.lt.s32.totalorder %s32, 3
      %p665 = pnand %p663, %p664
      %p666 = pneg %p665
      // Predicated region
      $region101: #{_lambda_.1} parent=5 // pred_check
        _
      $region102: #{_lambda_.1} parent=5 // pred_check_branch
        %668 = sbr.rel (%p665) target = $region104
      $region103: #{_lambda_.1} parent=5 // pred_region
        %s669 = ssub.s32 %s32, 1
        // Predicated region
        $region105: #{_lambda_.1} parent=103 // pred_check
          %p670 = pneg %p226
        $region106: #{_lambda_.1} parent=103 // pred_check_branch
          %672 = sbr.rel (%p670) target = $region108
        $region107: #{_lambda_.1} parent=103 // pred_region
          %673 = dma.done [#allocation3], 64
        $region108: #{_lambda_.1} parent=103 // pred_fallthru
          _
        // Predicated region
        $region109: #{_lambda_.1} parent=103 // pred_check
          %p674 = pneg %p247
        $region110: #{_lambda_.1} parent=103 // pred_check_branch
          %676 = sbr.rel (%p674) target = $region112
        $region111: #{_lambda_.1} parent=103 // pred_region
          %677 = dma.done [#allocation5], 32
        $region112: #{_lambda_.1} parent=103 // pred_fallthru
          _
        // Predicated region
        $region113: #{_lambda_.1} parent=103 // pred_check
          %p678 = pneg %p289
        $region114: #{_lambda_.1} parent=103 // pred_check_branch
          %680 = sbr.rel (%p678) target = $region116
        $region115: #{_lambda_.1} parent=103 // pred_region
          %681 = dma.done [#allocation5], 512
        $region116: #{_lambda_.1} parent=103 // pred_fallthru
          _
        // Predicated region
        $region117: #{_lambda_.1} parent=103 // pred_check
          %p682 = pneg %p310
        $region118: #{_lambda_.1} parent=103 // pred_check_branch
          %684 = sbr.rel (%p682) target = $region120
        $region119: #{_lambda_.1} parent=103 // pred_region
          %685 = dma.done [#allocation8], 512
        $region120: #{_lambda_.1} parent=103 // pred_fallthru
          _
        // Predicated region
        $region121: #{_lambda_.1} parent=103 // pred_check
          %p686 = pneg %p331
        $region122: #{_lambda_.1} parent=103 // pred_check_branch
          %688 = sbr.rel (%p686) target = $region124
        $region123: #{_lambda_.1} parent=103 // pred_region
          %689 = dma.done [#allocation8], 512
        $region124: #{_lambda_.1} parent=103 // pred_fallthru
          _
        // Predicated region
        $region125: #{_lambda_.1} parent=103 // pred_check
          %p690 = pneg %p352
        $region126: #{_lambda_.1} parent=103 // pred_check_branch
          %692 = sbr.rel (%p690) target = $region128
        $region127: #{_lambda_.1} parent=103 // pred_region
          %693 = dma.done [#allocation11], 512
        $region128: #{_lambda_.1} parent=103 // pred_fallthru
          _
        // Predicated region
        $region129: #{_lambda_.1} parent=103 // pred_check
          %p694 = pneg %p436
        $region130: #{_lambda_.1} parent=103 // pred_check_branch
          %696 = sbr.rel (%p694) target = $region132
        $region131: #{_lambda_.1} parent=103 // pred_region
          %697 = dma.done [#allocation11], 128
        $region132: #{_lambda_.1} parent=103 // pred_fallthru
          _
        // Predicated region
        $region133: #{_lambda_.1} parent=103 // pred_check
          %p698 = pneg %p457
        $region134: #{_lambda_.1} parent=103 // pred_check_branch
          %700 = sbr.rel (%p698) target = $region136
        $region135: #{_lambda_.1} parent=103 // pred_region
          %701 = dma.done [#allocation14], 32
        $region136: #{_lambda_.1} parent=103 // pred_fallthru
          _
        %p702 = scmp.lt.s32.totalorder %s37, 1
        %s703 = scalar_select %p702, %s37, 1
        %s704 = smul.addr %s703, 2
        %s705 = smul.addr %s704, 8
        %s706 = scalar_lea.vmem %s0, %s705
        %p707 = pneg %p58
        %p708 = pneg %p55
        %p709 = pneg %p79
        %p710 = pneg %p76
        %p711 = pneg %p100
        %p712 = pneg %p97
        %p713 = pneg %p121
        %p714 = pneg %p118
        %p715 = pneg %p142
        %p716 = pneg %p139
        %p717 = pneg %p163
        %p718 = pneg %p160
        %p719 = pneg %p184
        %p720 = pneg %p181
        %p721 = pneg %p205
        %p722 = pneg %p202
        %p723 = pneg %p226
        %p724 = pneg %p223
        %p725 = pneg %p247
        %p726 = pneg %p244
        %p727 = pneg %p268
        %p728 = pneg %p265
        %p729 = pneg %p289
        %p730 = pneg %p286
        %p731 = pneg %p310
        %p732 = pneg %p307
        %p733 = pneg %p331
        %p734 = pneg %p328
        %p735 = pneg %p352
        %p736 = pneg %p349
        %p737 = pneg %p373
        %p738 = pneg %p370
        %p739 = pneg %p394
        %p740 = pneg %p391
        %p741 = pneg %p415
        %p742 = pneg %p412
        %p743 = pneg %p436
        %p744 = pneg %p433
        %p745 = pneg %p457
        %p746 = pneg %p454
        %p747 = pneg %p478
        %p748 = pneg %p475
        %p749 = pneg %p504
        %p750 = pneg %p501
        %p751 = scmp.lt.s32.totalorder %s37, 1
        %s752 = scalar_select %p751, %s37, 1
        %s753 = smul.addr %s752, 8
        %s754 = scalar_lea.vmem %s21, %s753
        %p755 = scmp.lt.s32.totalorder %s37, 1
        %s756 = scalar_select %p755, %s37, 1
        %s757 = smul.addr %s756, 2
        %s758 = smul.addr %s757, 8
        %s759 = scalar_lea.vmem %s0, %s758
        %p760 = scmp.lt.s32.totalorder %s37, 1
        %s761 = scalar_select %p760, %s37, 1
        %s762 = smul.addr %s761, 8
        %s763 = scalar_lea.vmem %s21, %s762
        %v764 = vld [vmem:[%s1] sm:$0xff]
        %v765 = vld [vmem:[%s1 + $0x8] sm:$0xff]
        %s766 = scalar_lea.vmem %s1, 16
        %v767 = vld [vmem:[%s766] sm:$0xff]
        %v768 = vld [vmem:[%s766 + $0x8] sm:$0xff]
        %s769 = scalar_lea.vmem %s1, 32
        %v770 = vld [vmem:[%s769] sm:$0xff]
        %v771 = vld [vmem:[%s769 + $0x8] sm:$0xff]
        %s772 = scalar_lea.vmem %s1, 48
        %v773 = vld [vmem:[%s772] sm:$0xff]
        %v774 = vld [vmem:[%s772 + $0x8] sm:$0xff]
        %s775 = scalar_lea.vmem %s1, 64
        %v776 = vld [vmem:[%s775] sm:$0xff]
        %v777 = vld [vmem:[%s775 + $0x8] sm:$0xff]
        %s778 = scalar_lea.vmem %s1, 80
        %v779 = vld [vmem:[%s778] sm:$0xff]
        %v780 = vld [vmem:[%s778 + $0x8] sm:$0xff]
        %s781 = scalar_lea.vmem %s1, 96
        %v782 = vld [vmem:[%s781] sm:$0xff]
        %v783 = vld [vmem:[%s781 + $0x8] sm:$0xff]
        %s784 = scalar_lea.vmem %s1, 112
        %v785 = vld [vmem:[%s784] sm:$0xff]
        %v786 = vld [vmem:[%s784 + $0x8] sm:$0xff]
        %s787 = scalar_lea.vmem %s1, 128
        %v788 = vld [vmem:[%s787] sm:$0xff]
        %v789 = vld [vmem:[%s787 + $0x8] sm:$0xff]
        %s790 = scalar_lea.vmem %s1, 144
        %v791 = vld [vmem:[%s790] sm:$0xff]
        %v792 = vld [vmem:[%s790 + $0x8] sm:$0xff]
        %v793 = vld [vmem:[%s2] sm:$0xff]
        %v794 = vld [vmem:[%s2 + $0x8] sm:$0xff]
        %vm795 = vcmp.gt.f32.partialorder %v793, 0.0
        %vm796 = vcmp.gt.f32.partialorder %v794, 0.0
        %v797 = vsel %vm795, 1, 0
        %v798 = vsel %vm796, 1, 0
        %799 = vset.pattern.permute.xlu0 0
        %800 = vperm.xlu0 %799, %v797
        %v801 = vpop.permute.xlu0 %800
        %802 = vset.pattern.permute.xlu0 0
        %803 = vperm.xlu0 %802, %v798
        %v804 = vpop.permute.xlu0 %803
        %vm805 = vcmp.eq.s32.totalorder %v801, 1
        %vm806 = vcmp.eq.s32.totalorder %v804, 1
        %s807 = scalar_lea.vmem %s2, 16
        %v808 = vld [vmem:[%s807] sm:$0xff]
        %v809 = vld [vmem:[%s807 + $0x8] sm:$0xff]
        %vm810 = vcmp.gt.f32.partialorder %v808, 0.0
        %vm811 = vcmp.gt.f32.partialorder %v809, 0.0
        %v812 = vsel %vm810, 1, 0
        %v813 = vsel %vm811, 1, 0
        %814 = vset.pattern.permute.xlu0 0
        %815 = vperm.xlu0 %814, %v812
        %v816 = vpop.permute.xlu0 %815
        %817 = vset.pattern.permute.xlu0 0
        %818 = vperm.xlu0 %817, %v813
        %v819 = vpop.permute.xlu0 %818
        %vm820 = vcmp.eq.s32.totalorder %v816, 1
        %vm821 = vcmp.eq.s32.totalorder %v819, 1
        %s822 = scalar_lea.vmem %s2, 32
        %v823 = vld [vmem:[%s822] sm:$0xff]
        %v824 = vld [vmem:[%s822 + $0x8] sm:$0xff]
        %vm825 = vcmp.gt.f32.partialorder %v823, 0.0
        %vm826 = vcmp.gt.f32.partialorder %v824, 0.0
        %v827 = vsel %vm825, 1, 0
        %v828 = vsel %vm826, 1, 0
        %829 = vset.pattern.permute.xlu0 0
        %830 = vperm.xlu0 %829, %v827
        %v831 = vpop.permute.xlu0 %830
        %832 = vset.pattern.permute.xlu0 0
        %833 = vperm.xlu0 %832, %v828
        %v834 = vpop.permute.xlu0 %833
        %vm835 = vcmp.eq.s32.totalorder %v831, 1
        %vm836 = vcmp.eq.s32.totalorder %v834, 1
        %s837 = scalar_lea.vmem %s2, 48
        %v838 = vld [vmem:[%s837] sm:$0xff]
        %v839 = vld [vmem:[%s837 + $0x8] sm:$0xff]
        %vm840 = vcmp.gt.f32.partialorder %v838, 0.0
        %vm841 = vcmp.gt.f32.partialorder %v839, 0.0
        %v842 = vsel %vm840, 1, 0
        %v843 = vsel %vm841, 1, 0
        %844 = vset.pattern.permute.xlu0 0
        %845 = vperm.xlu0 %844, %v842
        %v846 = vpop.permute.xlu0 %845
        %847 = vset.pattern.permute.xlu0 0
        %848 = vperm.xlu0 %847, %v843
        %v849 = vpop.permute.xlu0 %848
        %vm850 = vcmp.eq.s32.totalorder %v846, 1
        %vm851 = vcmp.eq.s32.totalorder %v849, 1
        %s852 = scalar_lea.vmem %s2, 64
        %v853 = vld [vmem:[%s852] sm:$0xff]
        %v854 = vld [vmem:[%s852 + $0x8] sm:$0xff]
        %v855 = vld [vmem:[%s759] sm:$0xff]
        %v856 = vld [vmem:[%s759 + $0x8] sm:$0xff]
        %vm857 = vcmask 130048
        %v859 = vsel %vm857, %v788, 0
        %v862 = vsel %vm857, %v789, 0
        %864 = vmatprep.subr.mxu0 0.0
        %865 = vmatpush1.msra.mxu0 %v855
        %866 = vmatprep.subr.mxu0 0.0
        %867 = vmatpush1.msra.mxu0 %v856
        %868 = vmatprep.subr.mxu0 0.0
        %869 = vmatpush1.msra.mxu0 0.0
        %870 = vmatprep.subr.mxu0 0.0
        %871 = vmatpush1.msra.mxu0 0.0
        %872 = vmatprep.subr.mxu0 0.0
        %873 = vmatpush1.msra.mxu0 0.0
        %874 = vmatprep.subr.mxu0 0.0
        %875 = vmatpush1.msra.mxu0 0.0
        %876 = vmatprep.subr.mxu0 0.0
        %877 = vmatpush1.msra.mxu0 0.0
        %878 = vmatprep.subr.mxu0 0.0
        %879 = vmatpush1.msra.mxu0 0.0
        %880 = vmatprep.subr.mxu0 0.0
        %881 = vmatpush1.msra.mxu0 0.0
        %882 = vmatprep.subr.mxu0 0.0
        %883 = vmatpush1.msra.mxu0 0.0
        %884 = vmatprep.subr.mxu0 0.0
        %885 = vmatpush1.msra.mxu0 0.0
        %886 = vmatprep.subr.mxu0 0.0
        %887 = vmatpush1.msra.mxu0 0.0
        %888 = vmatprep.subr.mxu0 0.0
        %889 = vmatpush1.msra.mxu0 0.0
        %890 = vmatprep.subr.mxu0 0.0
        %891 = vmatpush1.msra.mxu0 0.0
        %892 = vmatprep.subr.mxu0 0.0
        %893 = vmatpush1.msra.mxu0 0.0
        %894 = vmatprep.subr.mxu0 0.0
        %895 = vmatpush1.msra.mxu0 0.0
        %896 = vmatprep.subr.mxu0 0.0
        %897 = vmatpush1.msra.mxu0 0.0
        %898 = vmatprep.subr.mxu0 0.0
        %899 = vmatpush1.msra.mxu0 0.0
        %900 = vmatprep.subr.mxu0 0.0
        %901 = vmatpush1.msra.mxu0 0.0
        %902 = vmatprep.subr.mxu0 0.0
        %903 = vmatpush1.msra.mxu0 0.0
        %904 = vmatprep.subr.mxu0 0.0
        %905 = vmatpush1.msra.mxu0 0.0
        %906 = vmatprep.subr.mxu0 0.0
        %907 = vmatpush1.msra.mxu0 0.0
        %908 = vmatprep.subr.mxu0 0.0
        %909 = vmatpush1.msra.mxu0 0.0
        %910 = vmatprep.subr.mxu0 0.0
        %911 = vmatpush1.msra.mxu0 0.0
        %912 = vmatprep.subr.mxu0 0.0
        %913 = vmatpush1.msra.mxu0 0.0
        %914 = vmatprep.subr.mxu0 0.0
        %915 = vmatpush1.msra.mxu0 0.0
        %916 = vmatprep.subr.mxu0 0.0
        %917 = vmatpush1.msra.mxu0 0.0
        %918 = vmatprep.subr.mxu0 0.0
        %919 = vmatpush1.msra.mxu0 0.0
        %920 = vmatprep.subr.mxu0 0.0
        %921 = vmatpush1.msra.mxu0 0.0
        %922 = vmatprep.subr.mxu0 0.0
        %923 = vmatpush1.msra.mxu0 0.0
        %924 = vmatprep.subr.mxu0 0.0
        %925 = vmatpush1.msra.mxu0 0.0
        %926 = vmatprep.subr.mxu0 0.0
        %927 = vmatpush1.msra.mxu0 0.0
        %928 = vmatprep.mubr.f32.mxu0 0.0
        %929 = vmatmul.mubr.f32.gmra.mrb[0].mxu0 %v859
        %v930 = vpop.f32.mrb[0].mxu0
        %v931 = vadd.f32 0.0, %v930
        %v932 = vpop.f32.mrb[0].mxu0
        %933 = vmatprep.mubr.f32.mxu0 0.0
        %934 = vmatmul.mubr.f32.gmra.mrb[0].mxu0 %v862
        %v935 = vpop.f32.mrb[0].mxu0
        %v936 = vadd.f32 0.0, %v935
        %v937 = vpop.f32.mrb[0].mxu0
        %938 = vdwg.mxu0
        %v939 = vsub.f32 %v855, %v931
        %v940 = vsub.f32 %v856, %v936
        %vm941 = vcmask 31744
        %v942 = vsel %vm941, %v855, 0.0
        %v943 = vsel %vm941, %v856, 0.0
        %v944 = vadd.f32 %v942, %v943
        %v945 = vrot.slane %v944, 4
        %v946 = vadd.f32 %v944, %v945
        %v947 = vrot.slane %v946, 2
        %v948 = vadd.f32 %v946, %v947
        %v949 = vrot.slane %v948, 1
        %v950 = vadd.f32 %v948, %v949
        %v951 = vrcp.pop 16.0
        %v952 = vmul.f32 %v950, %v951
        %v954 = vsel %vm857, %v791, 0
        %v957 = vsel %vm857, %v792, 0
        %959 = vmatprep.subr.mxu0 0.0
        %960 = vmatpush1.msra.mxu0 %v939
        %961 = vmatprep.subr.mxu0 0.0
        %962 = vmatpush1.msra.mxu0 %v940
        %963 = vmatprep.subr.mxu0 0.0
        %964 = vmatpush1.msra.mxu0 0.0
        %965 = vmatprep.subr.mxu0 0.0
        %966 = vmatpush1.msra.mxu0 0.0
        %967 = vmatprep.subr.mxu0 0.0
        %968 = vmatpush1.msra.mxu0 0.0
        %969 = vmatprep.subr.mxu0 0.0
        %970 = vmatpush1.msra.mxu0 0.0
        %971 = vmatprep.subr.mxu0 0.0
        %972 = vmatpush1.msra.mxu0 0.0
        %973 = vmatprep.subr.mxu0 0.0
        %974 = vmatpush1.msra.mxu0 0.0
        %975 = vmatprep.subr.mxu0 0.0
        %976 = vmatpush1.msra.mxu0 0.0
        %977 = vmatprep.subr.mxu0 0.0
        %978 = vmatpush1.msra.mxu0 0.0
        %979 = vmatprep.subr.mxu0 0.0
        %980 = vmatpush1.msra.mxu0 0.0
        %981 = vmatprep.subr.mxu0 0.0
        %982 = vmatpush1.msra.mxu0 0.0
        %983 = vmatprep.subr.mxu0 0.0
        %984 = vmatpush1.msra.mxu0 0.0
        %985 = vmatprep.subr.mxu0 0.0
        %986 = vmatpush1.msra.mxu0 0.0
        %987 = vmatprep.subr.mxu0 0.0
        %988 = vmatpush1.msra.mxu0 0.0
        %989 = vmatprep.subr.mxu0 0.0
        %990 = vmatpush1.msra.mxu0 0.0
        %991 = vmatprep.subr.mxu0 0.0
        %992 = vmatpush1.msra.mxu0 0.0
        %993 = vmatprep.subr.mxu0 0.0
        %994 = vmatpush1.msra.mxu0 0.0
        %995 = vmatprep.subr.mxu0 0.0
        %996 = vmatpush1.msra.mxu0 0.0
        %997 = vmatprep.subr.mxu0 0.0
        %998 = vmatpush1.msra.mxu0 0.0
        %999 = vmatprep.subr.mxu0 0.0
        %1000 = vmatpush1.msra.mxu0 0.0
        %1001 = vmatprep.subr.mxu0 0.0
        %1002 = vmatpush1.msra.mxu0 0.0
        %1003 = vmatprep.subr.mxu0 0.0
        %1004 = vmatpush1.msra.mxu0 0.0
        %1005 = vmatprep.subr.mxu0 0.0
        %1006 = vmatpush1.msra.mxu0 0.0
        %1007 = vmatprep.subr.mxu0 0.0
        %1008 = vmatpush1.msra.mxu0 0.0
        %1009 = vmatprep.subr.mxu0 0.0
        %1010 = vmatpush1.msra.mxu0 0.0
        %1011 = vmatprep.subr.mxu0 0.0
        %1012 = vmatpush1.msra.mxu0 0.0
        %1013 = vmatprep.subr.mxu0 0.0
        %1014 = vmatpush1.msra.mxu0 0.0
        %1015 = vmatprep.subr.mxu0 0.0
        %1016 = vmatpush1.msra.mxu0 0.0
        %1017 = vmatprep.subr.mxu0 0.0
        %1018 = vmatpush1.msra.mxu0 0.0
        %1019 = vmatprep.subr.mxu0 0.0
        %1020 = vmatpush1.msra.mxu0 0.0
        %1021 = vmatprep.subr.mxu0 0.0
        %1022 = vmatpush1.msra.mxu0 0.0
        %1023 = vmatprep.mubr.f32.mxu0 0.0
        %1024 = vmatmul.mubr.f32.gmra.mrb[0].mxu0 %v954
        %v1025 = vpop.f32.mrb[0].mxu0
        %v1026 = vadd.f32 0.0, %v1025
        %v1027 = vpop.f32.mrb[0].mxu0
        %1028 = vmatprep.mubr.f32.mxu0 0.0
        %1029 = vmatmul.mubr.f32.gmra.mrb[0].mxu0 %v957
        %v1030 = vpop.f32.mrb[0].mxu0
        %v1031 = vadd.f32 0.0, %v1030
        %v1032 = vpop.f32.mrb[0].mxu0
        %1033 = vdwg.mxu0
        %1035 = vset.pattern.permute.xlu0 0
        %1036 = vperm.xlu0 %1035, %v853
        %v1037 = vpop.permute.xlu0 %1036
        %1039 = vset.pattern.permute.xlu0 0
        %1040 = vperm.xlu0 %1039, %v854
        %v1041 = vpop.permute.xlu0 %1040
        %v1043 = vmul.f32 %v1041, %v952
        %1044 = vmatprep.subr.mxu0 0.0
        %1045 = vmatpush1.msra.mxu0 %v931
        %1046 = vmatprep.subr.mxu0 0.0
        %1047 = vmatpush1.msra.mxu0 %v936
        %1048 = vmatprep.subr.mxu0 0.0
        %1049 = vmatpush1.msra.mxu0 0.0
        %1050 = vmatprep.subr.mxu0 0.0
        %1051 = vmatpush1.msra.mxu0 0.0
        %1052 = vmatprep.subr.mxu0 0.0
        %1053 = vmatpush1.msra.mxu0 0.0
        %1054 = vmatprep.subr.mxu0 0.0
        %1055 = vmatpush1.msra.mxu0 0.0
        %1056 = vmatprep.subr.mxu0 0.0
        %1057 = vmatpush1.msra.mxu0 0.0
        %1058 = vmatprep.subr.mxu0 0.0
        %1059 = vmatpush1.msra.mxu0 0.0
        %1060 = vmatprep.subr.mxu0 0.0
        %1061 = vmatpush1.msra.mxu0 0.0
        %1062 = vmatprep.subr.mxu0 0.0
        %1063 = vmatpush1.msra.mxu0 0.0
        %1064 = vmatprep.subr.mxu0 0.0
        %1065 = vmatpush1.msra.mxu0 0.0
        %1066 = vmatprep.subr.mxu0 0.0
        %1067 = vmatpush1.msra.mxu0 0.0
        %1068 = vmatprep.subr.mxu0 0.0
        %1069 = vmatpush1.msra.mxu0 0.0
        %1070 = vmatprep.subr.mxu0 0.0
        %1071 = vmatpush1.msra.mxu0 0.0
        %1072 = vmatprep.subr.mxu0 0.0
        %1073 = vmatpush1.msra.mxu0 0.0
        %1074 = vmatprep.subr.mxu0 0.0
        %1075 = vmatpush1.msra.mxu0 0.0
        %1076 = vmatprep.subr.mxu0 0.0
        %1077 = vmatpush1.msra.mxu0 0.0
        %1078 = vmatprep.subr.mxu0 0.0
        %1079 = vmatpush1.msra.mxu0 0.0
        %1080 = vmatprep.subr.mxu0 0.0
        %1081 = vmatpush1.msra.mxu0 0.0
        %1082 = vmatprep.subr.mxu0 0.0
        %1083 = vmatpush1.msra.mxu0 0.0
        %1084 = vmatprep.subr.mxu0 0.0
        %1085 = vmatpush1.msra.mxu0 0.0
        %1086 = vmatprep.subr.mxu0 0.0
        %1087 = vmatpush1.msra.mxu0 0.0
        %1088 = vmatprep.subr.mxu0 0.0
        %1089 = vmatpush1.msra.mxu0 0.0
        %1090 = vmatprep.subr.mxu0 0.0
        %1091 = vmatpush1.msra.mxu0 0.0
        %1092 = vmatprep.subr.mxu0 0.0
        %1093 = vmatpush1.msra.mxu0 0.0
        %1094 = vmatprep.subr.mxu0 0.0
        %1095 = vmatpush1.msra.mxu0 0.0
        %1096 = vmatprep.subr.mxu0 0.0
        %1097 = vmatpush1.msra.mxu0 0.0
        %1098 = vmatprep.subr.mxu0 0.0
        %1099 = vmatpush1.msra.mxu0 0.0
        %1100 = vmatprep.subr.mxu0 0.0
        %1101 = vmatpush1.msra.mxu0 0.0
        %1102 = vmatprep.subr.mxu0 0.0
        %1103 = vmatpush1.msra.mxu0 0.0
        %1104 = vmatprep.subr.mxu0 0.0
        %1105 = vmatpush1.msra.mxu0 0.0
        %1106 = vmatprep.subr.mxu0 0.0
        %1107 = vmatpush1.msra.mxu0 0.0
        %1108 = vmatprep.mubr.f32.mxu0 0.0
        %1109 = vmatmul.mubr.f32.gmra.mrb[0].mxu0 %v954
        %v1110 = vpop.f32.mrb[0].mxu0
        %v1111 = vpop.f32.mrb[0].mxu0
        %1112 = vmatprep.mubr.f32.mxu0 0.0
        %1113 = vmatmul.mubr.f32.gmra.mrb[0].mxu0 %v957
        %v1114 = vpop.f32.mrb[0].mxu0
        %v1115 = vadd.f32 %v1043, %v1114
        %v1116 = vpop.f32.mrb[0].mxu0
        %1117 = vdwg.mxu0
        %v1118 = vld [vmem:[%s3] sm:$0xf]
        %s1119 = scalar_lea.vmem %s3, 4
        %v1120 = vld [vmem:[%s1119] sm:$0xf]
        %s1121 = scalar_lea.vmem %s3, 8
        %v1122 = vld [vmem:[%s1121] sm:$0xf]
        %v1124 = vsel %vm857, %v764, 0
        %v1127 = vsel %vm857, %v765, 0
        %1129 = vmatprep.subr.mxu0 0.0
        %1130 = vmatpush1.msra.mxu0 %v855
        %1131 = vmatprep.subr.mxu0 0.0
        %1132 = vmatpush1.msra.mxu0 %v856
        %1133 = vmatprep.subr.mxu0 0.0
        %1134 = vmatpush1.msra.mxu0 0.0
        %1135 = vmatprep.subr.mxu0 0.0
        %1136 = vmatpush1.msra.mxu0 0.0
        %1137 = vmatprep.subr.mxu0 0.0
        %1138 = vmatpush1.msra.mxu0 0.0
        %1139 = vmatprep.subr.mxu0 0.0
        %1140 = vmatpush1.msra.mxu0 0.0
        %1141 = vmatprep.subr.mxu0 0.0
        %1142 = vmatpush1.msra.mxu0 0.0
        %1143 = vmatprep.subr.mxu0 0.0
        %1144 = vmatpush1.msra.mxu0 0.0
        %1145 = vmatprep.subr.mxu0 0.0
        %1146 = vmatpush1.msra.mxu0 0.0
        %1147 = vmatprep.subr.mxu0 0.0
        %1148 = vmatpush1.msra.mxu0 0.0
        %1149 = vmatprep.subr.mxu0 0.0
        %1150 = vmatpush1.msra.mxu0 0.0
        %1151 = vmatprep.subr.mxu0 0.0
        %1152 = vmatpush1.msra.mxu0 0.0
        %1153 = vmatprep.subr.mxu0 0.0
        %1154 = vmatpush1.msra.mxu0 0.0
        %1155 = vmatprep.subr.mxu0 0.0
        %1156 = vmatpush1.msra.mxu0 0.0
        %1157 = vmatprep.subr.mxu0 0.0
        %1158 = vmatpush1.msra.mxu0 0.0
        %1159 = vmatprep.subr.mxu0 0.0
        %1160 = vmatpush1.msra.mxu0 0.0
        %1161 = vmatprep.subr.mxu0 0.0
        %1162 = vmatpush1.msra.mxu0 0.0
        %1163 = vmatprep.subr.mxu0 0.0
        %1164 = vmatpush1.msra.mxu0 0.0
        %1165 = vmatprep.subr.mxu0 0.0
        %1166 = vmatpush1.msra.mxu0 0.0
        %1167 = vmatprep.subr.mxu0 0.0
        %1168 = vmatpush1.msra.mxu0 0.0
        %1169 = vmatprep.subr.mxu0 0.0
        %1170 = vmatpush1.msra.mxu0 0.0
        %1171 = vmatprep.subr.mxu0 0.0
        %1172 = vmatpush1.msra.mxu0 0.0
        %1173 = vmatprep.subr.mxu0 0.0
        %1174 = vmatpush1.msra.mxu0 0.0
        %1175 = vmatprep.subr.mxu0 0.0
        %1176 = vmatpush1.msra.mxu0 0.0
        %1177 = vmatprep.subr.mxu0 0.0
        %1178 = vmatpush1.msra.mxu0 0.0
        %1179 = vmatprep.subr.mxu0 0.0
        %1180 = vmatpush1.msra.mxu0 0.0
        %1181 = vmatprep.subr.mxu0 0.0
        %1182 = vmatpush1.msra.mxu0 0.0
        %1183 = vmatprep.subr.mxu0 0.0
        %1184 = vmatpush1.msra.mxu0 0.0
        %1185 = vmatprep.subr.mxu0 0.0
        %1186 = vmatpush1.msra.mxu0 0.0
        %1187 = vmatprep.subr.mxu0 0.0
        %1188 = vmatpush1.msra.mxu0 0.0
        %1189 = vmatprep.subr.mxu0 0.0
        %1190 = vmatpush1.msra.mxu0 0.0
        %1191 = vmatprep.subr.mxu0 0.0
        %1192 = vmatpush1.msra.mxu0 0.0
        %1193 = vmatprep.mubr.f32.mxu0 0.0
        %1194 = vmatmul.mubr.f32.gmra.mrb[0].mxu0 %v1124
        %v1195 = vpop.f32.mrb[0].mxu0
        %v1196 = vadd.f32 0.0, %v1195
        %v1197 = vpop.f32.mrb[0].mxu0
        %1198 = vmatprep.mubr.f32.mxu0 0.0
        %1199 = vmatmul.mubr.f32.gmra.mrb[0].mxu0 %v1127
        %v1200 = vpop.f32.mrb[0].mxu0
        %v1201 = vadd.f32 0.0, %v1200
        %v1202 = vpop.f32.mrb[0].mxu0
        %1203 = vdwg.mxu0
        %v1205 = vsel %vm857, %v776, 0
        %v1208 = vsel %vm857, %v777, 0
        %1210 = vmatprep.subr.mxu0 0.0
        %1211 = vmatpush1.msra.mxu0 %v855
        %1212 = vmatprep.subr.mxu0 0.0
        %1213 = vmatpush1.msra.mxu0 %v856
        %1214 = vmatprep.subr.mxu0 0.0
        %1215 = vmatpush1.msra.mxu0 0.0
        %1216 = vmatprep.subr.mxu0 0.0
        %1217 = vmatpush1.msra.mxu0 0.0
        %1218 = vmatprep.subr.mxu0 0.0
        %1219 = vmatpush1.msra.mxu0 0.0
        %1220 = vmatprep.subr.mxu0 0.0
        %1221 = vmatpush1.msra.mxu0 0.0
        %1222 = vmatprep.subr.mxu0 0.0
        %1223 = vmatpush1.msra.mxu0 0.0
        %1224 = vmatprep.subr.mxu0 0.0
        %1225 = vmatpush1.msra.mxu0 0.0
        %1226 = vmatprep.subr.mxu0 0.0
        %1227 = vmatpush1.msra.mxu0 0.0
        %1228 = vmatprep.subr.mxu0 0.0
        %1229 = vmatpush1.msra.mxu0 0.0
        %1230 = vmatprep.subr.mxu0 0.0
        %1231 = vmatpush1.msra.mxu0 0.0
        %1232 = vmatprep.subr.mxu0 0.0
        %1233 = vmatpush1.msra.mxu0 0.0
        %1234 = vmatprep.subr.mxu0 0.0
        %1235 = vmatpush1.msra.mxu0 0.0
        %1236 = vmatprep.subr.mxu0 0.0
        %1237 = vmatpush1.msra.mxu0 0.0
        %1238 = vmatprep.subr.mxu0 0.0
        %1239 = vmatpush1.msra.mxu0 0.0
        %1240 = vmatprep.subr.mxu0 0.0
        %1241 = vmatpush1.msra.mxu0 0.0
        %1242 = vmatprep.subr.mxu0 0.0
        %1243 = vmatpush1.msra.mxu0 0.0
        %1244 = vmatprep.subr.mxu0 0.0
        %1245 = vmatpush1.msra.mxu0 0.0
        %1246 = vmatprep.subr.mxu0 0.0
        %1247 = vmatpush1.msra.mxu0 0.0
        %1248 = vmatprep.subr.mxu0 0.0
        %1249 = vmatpush1.msra.mxu0 0.0
        %1250 = vmatprep.subr.mxu0 0.0
        %1251 = vmatpush1.msra.mxu0 0.0
        %1252 = vmatprep.subr.mxu0 0.0
        %1253 = vmatpush1.msra.mxu0 0.0
        %1254 = vmatprep.subr.mxu0 0.0
        %1255 = vmatpush1.msra.mxu0 0.0
        %1256 = vmatprep.subr.mxu0 0.0
        %1257 = vmatpush1.msra.mxu0 0.0
        %1258 = vmatprep.subr.mxu0 0.0
        %1259 = vmatpush1.msra.mxu0 0.0
        %1260 = vmatprep.subr.mxu0 0.0
        %1261 = vmatpush1.msra.mxu0 0.0
        %1262 = vmatprep.subr.mxu0 0.0
        %1263 = vmatpush1.msra.mxu0 0.0
        %1264 = vmatprep.subr.mxu0 0.0
        %1265 = vmatpush1.msra.mxu0 0.0
        %1266 = vmatprep.subr.mxu0 0.0
        %1267 = vmatpush1.msra.mxu0 0.0
        %1268 = vmatprep.subr.mxu0 0.0
        %1269 = vmatpush1.msra.mxu0 0.0
        %1270 = vmatprep.subr.mxu0 0.0
        %1271 = vmatpush1.msra.mxu0 0.0
        %1272 = vmatprep.subr.mxu0 0.0
        %1273 = vmatpush1.msra.mxu0 0.0
        %1274 = vmatprep.mubr.f32.mxu0 0.0
        %1275 = vmatmul.mubr.f32.gmra.mrb[0].mxu0 %v1205
        %v1276 = vpop.f32.mrb[0].mxu0
        %v1277 = vadd.f32 0.0, %v1276
        %v1278 = vpop.f32.mrb[0].mxu0
        %1279 = vmatprep.mubr.f32.mxu0 0.0
        %1280 = vmatmul.mubr.f32.gmra.mrb[0].mxu0 %v1208
        %v1281 = vpop.f32.mrb[0].mxu0
        %v1282 = vadd.f32 0.0, %v1281
        %v1283 = vpop.f32.mrb[0].mxu0
        %1284 = vdwg.mxu0
        %v1286 = vsel %vm941, %v855, 0
        %v1289 = vsel %vm941, %v856, 0
        %vm1291 = vcmask 1043456
        %v1293 = vsel %vm1291, %v1120, 0
        %1295 = vmatprep.subr.mxu0 0.0
        %1296 = vmatpush1.msra.mxu0 %v1293
        %1297 = vmatprep.subr.mxu0 0.0
        %1298 = vmatpush1.msra.mxu0 0.0
        %1299 = vmatprep.subr.mxu0 0.0
        %1300 = vmatpush1.msra.mxu0 0.0
        %1301 = vmatprep.subr.mxu0 0.0
        %1302 = vmatpush1.msra.mxu0 0.0
        %1303 = vmatprep.subr.mxu0 0.0
        %1304 = vmatpush1.msra.mxu0 0.0
        %1305 = vmatprep.subr.mxu0 0.0
        %1306 = vmatpush1.msra.mxu0 0.0
        %1307 = vmatprep.subr.mxu0 0.0
        %1308 = vmatpush1.msra.mxu0 0.0
        %1309 = vmatprep.subr.mxu0 0.0
        %1310 = vmatpush1.msra.mxu0 0.0
        %1311 = vmatprep.subr.mxu0 0.0
        %1312 = vmatpush1.msra.mxu0 0.0
        %1313 = vmatprep.subr.mxu0 0.0
        %1314 = vmatpush1.msra.mxu0 0.0
        %1315 = vmatprep.subr.mxu0 0.0
        %1316 = vmatpush1.msra.mxu0 0.0
        %1317 = vmatprep.subr.mxu0 0.0
        %1318 = vmatpush1.msra.mxu0 0.0
        %1319 = vmatprep.subr.mxu0 0.0
        %1320 = vmatpush1.msra.mxu0 0.0
        %1321 = vmatprep.subr.mxu0 0.0
        %1322 = vmatpush1.msra.mxu0 0.0
        %1323 = vmatprep.subr.mxu0 0.0
        %1324 = vmatpush1.msra.mxu0 0.0
        %1325 = vmatprep.subr.mxu0 0.0
        %1326 = vmatpush1.msra.mxu0 0.0
        %1327 = vmatprep.subr.mxu0 0.0
        %1328 = vmatpush1.msra.mxu0 0.0
        %1329 = vmatprep.subr.mxu0 0.0
        %1330 = vmatpush1.msra.mxu0 0.0
        %1331 = vmatprep.subr.mxu0 0.0
        %1332 = vmatpush1.msra.mxu0 0.0
        %1333 = vmatprep.subr.mxu0 0.0
        %1334 = vmatpush1.msra.mxu0 0.0
        %1335 = vmatprep.subr.mxu0 0.0
        %1336 = vmatpush1.msra.mxu0 0.0
        %1337 = vmatprep.subr.mxu0 0.0
        %1338 = vmatpush1.msra.mxu0 0.0
        %1339 = vmatprep.subr.mxu0 0.0
        %1340 = vmatpush1.msra.mxu0 0.0
        %1341 = vmatprep.subr.mxu0 0.0
        %1342 = vmatpush1.msra.mxu0 0.0
        %1343 = vmatprep.subr.mxu0 0.0
        %1344 = vmatpush1.msra.mxu0 0.0
        %1345 = vmatprep.subr.mxu0 0.0
        %1346 = vmatpush1.msra.mxu0 0.0
        %1347 = vmatprep.subr.mxu0 0.0
        %1348 = vmatpush1.msra.mxu0 0.0
        %1349 = vmatprep.subr.mxu0 0.0
        %1350 = vmatpush1.msra.mxu0 0.0
        %1351 = vmatprep.subr.mxu0 0.0
        %1352 = vmatpush1.msra.mxu0 0.0
        %1353 = vmatprep.subr.mxu0 0.0
        %1354 = vmatpush1.msra.mxu0 0.0
        %1355 = vmatprep.subr.mxu0 0.0
        %1356 = vmatpush1.msra.mxu0 0.0
        %1357 = vmatprep.subr.mxu0 0.0
        %1358 = vmatpush1.msra.mxu0 0.0
        %1359 = vmatprep.mubr.f32.mxu0 0.0
        %1360 = vmatmul.mubr.f32.gmra.mrb[0].mxu0 %v1286
        %v1361 = vpop.f32.mrb[0].mxu0
        %v1362 = vadd.f32 0.0, %v1361
        %v1363 = vpop.f32.mrb[0].mxu0
        %1364 = vmatprep.mubr.f32.mxu0 0.0
        %1365 = vmatmul.mubr.f32.gmra.mrb[0].mxu0 %v1289
        %v1366 = vpop.f32.mrb[0].mxu0
        %v1367 = vadd.f32 0.0, %v1366
        %v1368 = vpop.f32.mrb[0].mxu0
        %1369 = vdwg.mxu0
        %v1371 = vsel %vm941, %v1196, 0
        %v1374 = vsel %vm941, %v1201, 0
        %v1377 = vsel %vm1291, %v1118, 0
        %1379 = vmatprep.subr.mxu0 0.0
        %1380 = vmatpush1.msra.mxu0 %v1377
        %1381 = vmatprep.subr.mxu0 0.0
        %1382 = vmatpush1.msra.mxu0 0.0
        %1383 = vmatprep.subr.mxu0 0.0
        %1384 = vmatpush1.msra.mxu0 0.0
        %1385 = vmatprep.subr.mxu0 0.0
        %1386 = vmatpush1.msra.mxu0 0.0
        %1387 = vmatprep.subr.mxu0 0.0
        %1388 = vmatpush1.msra.mxu0 0.0
        %1389 = vmatprep.subr.mxu0 0.0
        %1390 = vmatpush1.msra.mxu0 0.0
        %1391 = vmatprep.subr.mxu0 0.0
        %1392 = vmatpush1.msra.mxu0 0.0
        %1393 = vmatprep.subr.mxu0 0.0
        %1394 = vmatpush1.msra.mxu0 0.0
        %1395 = vmatprep.subr.mxu0 0.0
        %1396 = vmatpush1.msra.mxu0 0.0
        %1397 = vmatprep.subr.mxu0 0.0
        %1398 = vmatpush1.msra.mxu0 0.0
        %1399 = vmatprep.subr.mxu0 0.0
        %1400 = vmatpush1.msra.mxu0 0.0
        %1401 = vmatprep.subr.mxu0 0.0
        %1402 = vmatpush1.msra.mxu0 0.0
        %1403 = vmatprep.subr.mxu0 0.0
        %1404 = vmatpush1.msra.mxu0 0.0
        %1405 = vmatprep.subr.mxu0 0.0
        %1406 = vmatpush1.msra.mxu0 0.0
        %1407 = vmatprep.subr.mxu0 0.0
        %1408 = vmatpush1.msra.mxu0 0.0
        %1409 = vmatprep.subr.mxu0 0.0
        %1410 = vmatpush1.msra.mxu0 0.0
        %1411 = vmatprep.subr.mxu0 0.0
        %1412 = vmatpush1.msra.mxu0 0.0
        %1413 = vmatprep.subr.mxu0 0.0
        %1414 = vmatpush1.msra.mxu0 0.0
        %1415 = vmatprep.subr.mxu0 0.0
        %1416 = vmatpush1.msra.mxu0 0.0
        %1417 = vmatprep.subr.mxu0 0.0
        %1418 = vmatpush1.msra.mxu0 0.0
        %1419 = vmatprep.subr.mxu0 0.0
        %1420 = vmatpush1.msra.mxu0 0.0
        %1421 = vmatprep.subr.mxu0 0.0
        %1422 = vmatpush1.msra.mxu0 0.0
        %1423 = vmatprep.subr.mxu0 0.0
        %1424 = vmatpush1.msra.mxu0 0.0
        %1425 = vmatprep.subr.mxu0 0.0
        %1426 = vmatpush1.msra.mxu0 0.0
        %1427 = vmatprep.subr.mxu0 0.0
        %1428 = vmatpush1.msra.mxu0 0.0
        %1429 = vmatprep.subr.mxu0 0.0
        %1430 = vmatpush1.msra.mxu0 0.0
        %1431 = vmatprep.subr.mxu0 0.0
        %1432 = vmatpush1.msra.mxu0 0.0
        %1433 = vmatprep.subr.mxu0 0.0
        %1434 = vmatpush1.msra.mxu0 0.0
        %1435 = vmatprep.subr.mxu0 0.0
        %1436 = vmatpush1.msra.mxu0 0.0
        %1437 = vmatprep.subr.mxu0 0.0
        %1438 = vmatpush1.msra.mxu0 0.0
        %1439 = vmatprep.subr.mxu0 0.0
        %1440 = vmatpush1.msra.mxu0 0.0
        %1441 = vmatprep.subr.mxu0 0.0
        %1442 = vmatpush1.msra.mxu0 0.0
        %1443 = vmatprep.mubr.f32.mxu0 0.0
        %1444 = vmatmul.mubr.f32.gmra.mrb[0].mxu0 %v1371
        %v1445 = vpop.f32.mrb[0].mxu0
        %v1446 = vadd.f32 %v1362, %v1445
        %v1447 = vpop.f32.mrb[0].mxu0
        %1448 = vmatprep.mubr.f32.mxu0 0.0
        %1449 = vmatmul.mubr.f32.gmra.mrb[0].mxu0 %v1374
        %v1450 = vpop.f32.mrb[0].mxu0
        %v1451 = vadd.f32 %v1367, %v1450
        %v1452 = vpop.f32.mrb[0].mxu0
        %1453 = vdwg.mxu0
        %v1455 = vsel %vm941, %v1277, 0
        %v1458 = vsel %vm941, %v1282, 0
        %v1461 = vsel %vm1291, %v1122, 0
        %1463 = vmatprep.subr.mxu0 0.0
        %1464 = vmatpush1.msra.mxu0 %v1461
        %1465 = vmatprep.subr.mxu0 0.0
        %1466 = vmatpush1.msra.mxu0 0.0
        %1467 = vmatprep.subr.mxu0 0.0
        %1468 = vmatpush1.msra.mxu0 0.0
        %1469 = vmatprep.subr.mxu0 0.0
        %1470 = vmatpush1.msra.mxu0 0.0
        %1471 = vmatprep.subr.mxu0 0.0
        %1472 = vmatpush1.msra.mxu0 0.0
        %1473 = vmatprep.subr.mxu0 0.0
        %1474 = vmatpush1.msra.mxu0 0.0
        %1475 = vmatprep.subr.mxu0 0.0
        %1476 = vmatpush1.msra.mxu0 0.0
        %1477 = vmatprep.subr.mxu0 0.0
        %1478 = vmatpush1.msra.mxu0 0.0
        %1479 = vmatprep.subr.mxu0 0.0
        %1480 = vmatpush1.msra.mxu0 0.0
        %1481 = vmatprep.subr.mxu0 0.0
        %1482 = vmatpush1.msra.mxu0 0.0
        %1483 = vmatprep.subr.mxu0 0.0
        %1484 = vmatpush1.msra.mxu0 0.0
        %1485 = vmatprep.subr.mxu0 0.0
        %1486 = vmatpush1.msra.mxu0 0.0
        %1487 = vmatprep.subr.mxu0 0.0
        %1488 = vmatpush1.msra.mxu0 0.0
        %1489 = vmatprep.subr.mxu0 0.0
        %1490 = vmatpush1.msra.mxu0 0.0
        %1491 = vmatprep.subr.mxu0 0.0
        %1492 = vmatpush1.msra.mxu0 0.0
        %1493 = vmatprep.subr.mxu0 0.0
        %1494 = vmatpush1.msra.mxu0 0.0
        %1495 = vmatprep.subr.mxu0 0.0
        %1496 = vmatpush1.msra.mxu0 0.0
        %1497 = vmatprep.subr.mxu0 0.0
        %1498 = vmatpush1.msra.mxu0 0.0
        %1499 = vmatprep.subr.mxu0 0.0
        %1500 = vmatpush1.msra.mxu0 0.0
        %1501 = vmatprep.subr.mxu0 0.0
        %1502 = vmatpush1.msra.mxu0 0.0
        %1503 = vmatprep.subr.mxu0 0.0
        %1504 = vmatpush1.msra.mxu0 0.0
        %1505 = vmatprep.subr.mxu0 0.0
        %1506 = vmatpush1.msra.mxu0 0.0
        %1507 = vmatprep.subr.mxu0 0.0
        %1508 = vmatpush1.msra.mxu0 0.0
        %1509 = vmatprep.subr.mxu0 0.0
        %1510 = vmatpush1.msra.mxu0 0.0
        %1511 = vmatprep.subr.mxu0 0.0
        %1512 = vmatpush1.msra.mxu0 0.0
        %1513 = vmatprep.subr.mxu0 0.0
        %1514 = vmatpush1.msra.mxu0 0.0
        %1515 = vmatprep.subr.mxu0 0.0
        %1516 = vmatpush1.msra.mxu0 0.0
        %1517 = vmatprep.subr.mxu0 0.0
        %1518 = vmatpush1.msra.mxu0 0.0
        %1519 = vmatprep.subr.mxu0 0.0
        %1520 = vmatpush1.msra.mxu0 0.0
        %1521 = vmatprep.subr.mxu0 0.0
        %1522 = vmatpush1.msra.mxu0 0.0
        %1523 = vmatprep.subr.mxu0 0.0
        %1524 = vmatpush1.msra.mxu0 0.0
        %1525 = vmatprep.subr.mxu0 0.0
        %1526 = vmatpush1.msra.mxu0 0.0
        %1527 = vmatprep.mubr.f32.mxu0 0.0
        %1528 = vmatmul.mubr.f32.gmra.mrb[0].mxu0 %v1455
        %v1529 = vpop.f32.mrb[0].mxu0
        %v1530 = vadd.f32 0.0, %v1529
        %v1531 = vpop.f32.mrb[0].mxu0
        %1532 = vmatprep.mubr.f32.mxu0 0.0
        %1533 = vmatmul.mubr.f32.gmra.mrb[0].mxu0 %v1458
        %v1534 = vpop.f32.mrb[0].mxu0
        %v1535 = vadd.f32 0.0, %v1534
        %v1536 = vpop.f32.mrb[0].mxu0
        %1537 = vdwg.mxu0
        %v1538 = vadd.f32 %v1446, %v1530
        %v1539 = vadd.f32 %v1451, %v1535
        %s1540 = scalar_lea.vmem %s3, 12
        %v1541 = vld [vmem:[%s1540] sm:$0xf]
        %s1542 = scalar_lea.vmem %s3, 16
        %v1543 = vld [vmem:[%s1542] sm:$0xf]
        %s1544 = scalar_lea.vmem %s3, 20
        %v1545 = vld [vmem:[%s1544] sm:$0xf]
        %1546 = vmatprep.subr.mxu0 0.0
        %1547 = vmatpush1.msra.mxu0 %v1026
        %1548 = vmatprep.subr.mxu0 0.0
        %1549 = vmatpush1.msra.mxu0 %v1031
        %1550 = vmatprep.subr.mxu0 0.0
        %1551 = vmatpush1.msra.mxu0 0.0
        %1552 = vmatprep.subr.mxu0 0.0
        %1553 = vmatpush1.msra.mxu0 0.0
        %1554 = vmatprep.subr.mxu0 0.0
        %1555 = vmatpush1.msra.mxu0 0.0
        %1556 = vmatprep.subr.mxu0 0.0
        %1557 = vmatpush1.msra.mxu0 0.0
        %1558 = vmatprep.subr.mxu0 0.0
        %1559 = vmatpush1.msra.mxu0 0.0
        %1560 = vmatprep.subr.mxu0 0.0
        %1561 = vmatpush1.msra.mxu0 0.0
        %1562 = vmatprep.subr.mxu0 0.0
        %1563 = vmatpush1.msra.mxu0 0.0
        %1564 = vmatprep.subr.mxu0 0.0
        %1565 = vmatpush1.msra.mxu0 0.0
        %1566 = vmatprep.subr.mxu0 0.0
        %1567 = vmatpush1.msra.mxu0 0.0
        %1568 = vmatprep.subr.mxu0 0.0
        %1569 = vmatpush1.msra.mxu0 0.0
        %1570 = vmatprep.subr.mxu0 0.0
        %1571 = vmatpush1.msra.mxu0 0.0
        %1572 = vmatprep.subr.mxu0 0.0
        %1573 = vmatpush1.msra.mxu0 0.0
        %1574 = vmatprep.subr.mxu0 0.0
        %1575 = vmatpush1.msra.mxu0 0.0
        %1576 = vmatprep.subr.mxu0 0.0
        %1577 = vmatpush1.msra.mxu0 0.0
        %1578 = vmatprep.subr.mxu0 0.0
        %1579 = vmatpush1.msra.mxu0 0.0
        %1580 = vmatprep.subr.mxu0 0.0
        %1581 = vmatpush1.msra.mxu0 0.0
        %1582 = vmatprep.subr.mxu0 0.0
        %1583 = vmatpush1.msra.mxu0 0.0
        %1584 = vmatprep.subr.mxu0 0.0
        %1585 = vmatpush1.msra.mxu0 0.0
        %1586 = vmatprep.subr.mxu0 0.0
        %1587 = vmatpush1.msra.mxu0 0.0
        %1588 = vmatprep.subr.mxu0 0.0
        %1589 = vmatpush1.msra.mxu0 0.0
        %1590 = vmatprep.subr.mxu0 0.0
        %1591 = vmatpush1.msra.mxu0 0.0
        %1592 = vmatprep.subr.mxu0 0.0
        %1593 = vmatpush1.msra.mxu0 0.0
        %1594 = vmatprep.subr.mxu0 0.0
        %1595 = vmatpush1.msra.mxu0 0.0
        %1596 = vmatprep.subr.mxu0 0.0
        %1597 = vmatpush1.msra.mxu0 0.0
        %1598 = vmatprep.subr.mxu0 0.0
        %1599 = vmatpush1.msra.mxu0 0.0
        %1600 = vmatprep.subr.mxu0 0.0
        %1601 = vmatpush1.msra.mxu0 0.0
        %1602 = vmatprep.subr.mxu0 0.0
        %1603 = vmatpush1.msra.mxu0 0.0
        %1604 = vmatprep.subr.mxu0 0.0
        %1605 = vmatpush1.msra.mxu0 0.0
        %1606 = vmatprep.subr.mxu0 0.0
        %1607 = vmatpush1.msra.mxu0 0.0
        %1608 = vmatprep.subr.mxu0 0.0
        %1609 = vmatpush1.msra.mxu0 0.0
        %1610 = vmatprep.mubr.f32.mxu0 0.0
        %1611 = vmatmul.mubr.f32.gmra.mrb[0].mxu0 %v1124
        %v1612 = vpop.f32.mrb[0].mxu0
        %v1613 = vadd.f32 0.0, %v1612
        %v1614 = vpop.f32.mrb[0].mxu0
        %1615 = vmatprep.mubr.f32.mxu0 0.0
        %1616 = vmatmul.mubr.f32.gmra.mrb[0].mxu0 %v1127
        %v1617 = vpop.f32.mrb[0].mxu0
        %v1618 = vadd.f32 0.0, %v1617
        %v1619 = vpop.f32.mrb[0].mxu0
        %1620 = vdwg.mxu0
        %1621 = vmatprep.subr.mxu0 0.0
        %1622 = vmatpush1.msra.mxu0 %v1026
        %1623 = vmatprep.subr.mxu0 0.0
        %1624 = vmatpush1.msra.mxu0 %v1031
        %1625 = vmatprep.subr.mxu0 0.0
        %1626 = vmatpush1.msra.mxu0 0.0
        %1627 = vmatprep.subr.mxu0 0.0
        %1628 = vmatpush1.msra.mxu0 0.0
        %1629 = vmatprep.subr.mxu0 0.0
        %1630 = vmatpush1.msra.mxu0 0.0
        %1631 = vmatprep.subr.mxu0 0.0
        %1632 = vmatpush1.msra.mxu0 0.0
        %1633 = vmatprep.subr.mxu0 0.0
        %1634 = vmatpush1.msra.mxu0 0.0
        %1635 = vmatprep.subr.mxu0 0.0
        %1636 = vmatpush1.msra.mxu0 0.0
        %1637 = vmatprep.subr.mxu0 0.0
        %1638 = vmatpush1.msra.mxu0 0.0
        %1639 = vmatprep.subr.mxu0 0.0
        %1640 = vmatpush1.msra.mxu0 0.0
        %1641 = vmatprep.subr.mxu0 0.0
        %1642 = vmatpush1.msra.mxu0 0.0
        %1643 = vmatprep.subr.mxu0 0.0
        %1644 = vmatpush1.msra.mxu0 0.0
        %1645 = vmatprep.subr.mxu0 0.0
        %1646 = vmatpush1.msra.mxu0 0.0
        %1647 = vmatprep.subr.mxu0 0.0
        %1648 = vmatpush1.msra.mxu0 0.0
        %1649 = vmatprep.subr.mxu0 0.0
        %1650 = vmatpush1.msra.mxu0 0.0
        %1651 = vmatprep.subr.mxu0 0.0
        %1652 = vmatpush1.msra.mxu0 0.0
        %1653 = vmatprep.subr.mxu0 0.0
        %1654 = vmatpush1.msra.mxu0 0.0
        %1655 = vmatprep.subr.mxu0 0.0
        %1656 = vmatpush1.msra.mxu0 0.0
        %1657 = vmatprep.subr.mxu0 0.0
        %1658 = vmatpush1.msra.mxu0 0.0
        %1659 = vmatprep.subr.mxu0 0.0
        %1660 = vmatpush1.msra.mxu0 0.0
        %1661 = vmatprep.subr.mxu0 0.0
        %1662 = vmatpush1.msra.mxu0 0.0
        %1663 = vmatprep.subr.mxu0 0.0
        %1664 = vmatpush1.msra.mxu0 0.0
        %1665 = vmatprep.subr.mxu0 0.0
        %1666 = vmatpush1.msra.mxu0 0.0
        %1667 = vmatprep.subr.mxu0 0.0
        %1668 = vmatpush1.msra.mxu0 0.0
        %1669 = vmatprep.subr.mxu0 0.0
        %1670 = vmatpush1.msra.mxu0 0.0
        %1671 = vmatprep.subr.mxu0 0.0
        %1672 = vmatpush1.msra.mxu0 0.0
        %1673 = vmatprep.subr.mxu0 0.0
        %1674 = vmatpush1.msra.mxu0 0.0
        %1675 = vmatprep.subr.mxu0 0.0
        %1676 = vmatpush1.msra.mxu0 0.0
        %1677 = vmatprep.subr.mxu0 0.0
        %1678 = vmatpush1.msra.mxu0 0.0
        %1679 = vmatprep.subr.mxu0 0.0
        %1680 = vmatpush1.msra.mxu0 0.0
        %1681 = vmatprep.subr.mxu0 0.0
        %1682 = vmatpush1.msra.mxu0 0.0
        %1683 = vmatprep.subr.mxu0 0.0
        %1684 = vmatpush1.msra.mxu0 0.0
        %1685 = vmatprep.mubr.f32.mxu0 0.0
        %1686 = vmatmul.mubr.f32.gmra.mrb[0].mxu0 %v1205
        %v1687 = vpop.f32.mrb[0].mxu0
        %v1688 = vadd.f32 0.0, %v1687
        %v1689 = vpop.f32.mrb[0].mxu0
        %1690 = vmatprep.mubr.f32.mxu0 0.0
        %1691 = vmatmul.mubr.f32.gmra.mrb[0].mxu0 %v1208
        %v1692 = vpop.f32.mrb[0].mxu0
        %v1693 = vadd.f32 0.0, %v1692
        %v1694 = vpop.f32.mrb[0].mxu0
        %1695 = vdwg.mxu0
        %v1697 = vsel %vm941, %v1026, 0
        %v1700 = vsel %vm941, %v1031, 0
        %v1703 = vsel %vm1291, %v1543, 0
        %1705 = vmatprep.subr.mxu0 0.0
        %1706 = vmatpush1.msra.mxu0 %v1703
        %1707 = vmatprep.subr.mxu0 0.0
        %1708 = vmatpush1.msra.mxu0 0.0
        %1709 = vmatprep.subr.mxu0 0.0
        %1710 = vmatpush1.msra.mxu0 0.0
        %1711 = vmatprep.subr.mxu0 0.0
        %1712 = vmatpush1.msra.mxu0 0.0
        %1713 = vmatprep.subr.mxu0 0.0
        %1714 = vmatpush1.msra.mxu0 0.0
        %1715 = vmatprep.subr.mxu0 0.0
        %1716 = vmatpush1.msra.mxu0 0.0
        %1717 = vmatprep.subr.mxu0 0.0
        %1718 = vmatpush1.msra.mxu0 0.0
        %1719 = vmatprep.subr.mxu0 0.0
        %1720 = vmatpush1.msra.mxu0 0.0
        %1721 = vmatprep.subr.mxu0 0.0
        %1722 = vmatpush1.msra.mxu0 0.0
        %1723 = vmatprep.subr.mxu0 0.0
        %1724 = vmatpush1.msra.mxu0 0.0
        %1725 = vmatprep.subr.mxu0 0.0
        %1726 = vmatpush1.msra.mxu0 0.0
        %1727 = vmatprep.subr.mxu0 0.0
        %1728 = vmatpush1.msra.mxu0 0.0
        %1729 = vmatprep.subr.mxu0 0.0
        %1730 = vmatpush1.msra.mxu0 0.0
        %1731 = vmatprep.subr.mxu0 0.0
        %1732 = vmatpush1.msra.mxu0 0.0
        %1733 = vmatprep.subr.mxu0 0.0
        %1734 = vmatpush1.msra.mxu0 0.0
        %1735 = vmatprep.subr.mxu0 0.0
        %1736 = vmatpush1.msra.mxu0 0.0
        %1737 = vmatprep.subr.mxu0 0.0
        %1738 = vmatpush1.msra.mxu0 0.0
        %1739 = vmatprep.subr.mxu0 0.0
        %1740 = vmatpush1.msra.mxu0 0.0
        %1741 = vmatprep.subr.mxu0 0.0
        %1742 = vmatpush1.msra.mxu0 0.0
        %1743 = vmatprep.subr.mxu0 0.0
        %1744 = vmatpush1.msra.mxu0 0.0
        %1745 = vmatprep.subr.mxu0 0.0
        %1746 = vmatpush1.msra.mxu0 0.0
        %1747 = vmatprep.subr.mxu0 0.0
        %1748 = vmatpush1.msra.mxu0 0.0
        %1749 = vmatprep.subr.mxu0 0.0
        %1750 = vmatpush1.msra.mxu0 0.0
        %1751 = vmatprep.subr.mxu0 0.0
        %1752 = vmatpush1.msra.mxu0 0.0
        %1753 = vmatprep.subr.mxu0 0.0
        %1754 = vmatpush1.msra.mxu0 0.0
        %1755 = vmatprep.subr.mxu0 0.0
        %1756 = vmatpush1.msra.mxu0 0.0
        %1757 = vmatprep.subr.mxu0 0.0
        %1758 = vmatpush1.msra.mxu0 0.0
        %1759 = vmatprep.subr.mxu0 0.0
        %1760 = vmatpush1.msra.mxu0 0.0
        %1761 = vmatprep.subr.mxu0 0.0
        %1762 = vmatpush1.msra.mxu0 0.0
        %1763 = vmatprep.subr.mxu0 0.0
        %1764 = vmatpush1.msra.mxu0 0.0
        %1765 = vmatprep.subr.mxu0 0.0
        %1766 = vmatpush1.msra.mxu0 0.0
        %1767 = vmatprep.subr.mxu0 0.0
        %1768 = vmatpush1.msra.mxu0 0.0
        %1769 = vmatprep.mubr.f32.mxu0 0.0
        %1770 = vmatmul.mubr.f32.gmra.mrb[0].mxu0 %v1697
        %v1771 = vpop.f32.mrb[0].mxu0
        %v1772 = vadd.f32 0.0, %v1771
        %v1773 = vpop.f32.mrb[0].mxu0
        %1774 = vmatprep.mubr.f32.mxu0 0.0
        %1775 = vmatmul.mubr.f32.gmra.mrb[0].mxu0 %v1700
        %v1776 = vpop.f32.mrb[0].mxu0
        %v1777 = vadd.f32 0.0, %v1776
        %v1778 = vpop.f32.mrb[0].mxu0
        %1779 = vdwg.mxu0
        %v1781 = vsel %vm941, %v1613, 0
        %v1784 = vsel %vm941, %v1618, 0
        %v1787 = vsel %vm1291, %v1541, 0
        %1789 = vmatprep.subr.mxu0 0.0
        %1790 = vmatpush1.msra.mxu0 %v1787
        %1791 = vmatprep.subr.mxu0 0.0
        %1792 = vmatpush1.msra.mxu0 0.0
        %1793 = vmatprep.subr.mxu0 0.0
        %1794 = vmatpush1.msra.mxu0 0.0
        %1795 = vmatprep.subr.mxu0 0.0
        %1796 = vmatpush1.msra.mxu0 0.0
        %1797 = vmatprep.subr.mxu0 0.0
        %1798 = vmatpush1.msra.mxu0 0.0
        %1799 = vmatprep.subr.mxu0 0.0
        %1800 = vmatpush1.msra.mxu0 0.0
        %1801 = vmatprep.subr.mxu0 0.0
        %1802 = vmatpush1.msra.mxu0 0.0
        %1803 = vmatprep.subr.mxu0 0.0
        %1804 = vmatpush1.msra.mxu0 0.0
        %1805 = vmatprep.subr.mxu0 0.0
        %1806 = vmatpush1.msra.mxu0 0.0
        %1807 = vmatprep.subr.mxu0 0.0
        %1808 = vmatpush1.msra.mxu0 0.0
        %1809 = vmatprep.subr.mxu0 0.0
        %1810 = vmatpush1.msra.mxu0 0.0
        %1811 = vmatprep.subr.mxu0 0.0
        %1812 = vmatpush1.msra.mxu0 0.0
        %1813 = vmatprep.subr.mxu0 0.0
        %1814 = vmatpush1.msra.mxu0 0.0
        %1815 = vmatprep.subr.mxu0 0.0
        %1816 = vmatpush1.msra.mxu0 0.0
        %1817 = vmatprep.subr.mxu0 0.0
        %1818 = vmatpush1.msra.mxu0 0.0
        %1819 = vmatprep.subr.mxu0 0.0
        %1820 = vmatpush1.msra.mxu0 0.0
        %1821 = vmatprep.subr.mxu0 0.0
        %1822 = vmatpush1.msra.mxu0 0.0
        %1823 = vmatprep.subr.mxu0 0.0
        %1824 = vmatpush1.msra.mxu0 0.0
        %1825 = vmatprep.subr.mxu0 0.0
        %1826 = vmatpush1.msra.mxu0 0.0
        %1827 = vmatprep.subr.mxu0 0.0
        %1828 = vmatpush1.msra.mxu0 0.0
        %1829 = vmatprep.subr.mxu0 0.0
        %1830 = vmatpush1.msra.mxu0 0.0
        %1831 = vmatprep.subr.mxu0 0.0
        %1832 = vmatpush1.msra.mxu0 0.0
        %1833 = vmatprep.subr.mxu0 0.0
        %1834 = vmatpush1.msra.mxu0 0.0
        %1835 = vmatprep.subr.mxu0 0.0
        %1836 = vmatpush1.msra.mxu0 0.0
        %1837 = vmatprep.subr.mxu0 0.0
        %1838 = vmatpush1.msra.mxu0 0.0
        %1839 = vmatprep.subr.mxu0 0.0
        %1840 = vmatpush1.msra.mxu0 0.0
        %1841 = vmatprep.subr.mxu0 0.0
        %1842 = vmatpush1.msra.mxu0 0.0
        %1843 = vmatprep.subr.mxu0 0.0
        %1844 = vmatpush1.msra.mxu0 0.0
        %1845 = vmatprep.subr.mxu0 0.0
        %1846 = vmatpush1.msra.mxu0 0.0
        %1847 = vmatprep.subr.mxu0 0.0
        %1848 = vmatpush1.msra.mxu0 0.0
        %1849 = vmatprep.subr.mxu0 0.0
        %1850 = vmatpush1.msra.mxu0 0.0
        %1851 = vmatprep.subr.mxu0 0.0
        %1852 = vmatpush1.msra.mxu0 0.0
        %1853 = vmatprep.mubr.f32.mxu0 0.0
        %1854 = vmatmul.mubr.f32.gmra.mrb[0].mxu0 %v1781
        %v1855 = vpop.f32.mrb[0].mxu0
        %v1856 = vadd.f32 %v1772, %v1855
        %v1857 = vpop.f32.mrb[0].mxu0
        %1858 = vmatprep.mubr.f32.mxu0 0.0
        %1859 = vmatmul.mubr.f32.gmra.mrb[0].mxu0 %v1784
        %v1860 = vpop.f32.mrb[0].mxu0
        %v1861 = vadd.f32 %v1777, %v1860
        %v1862 = vpop.f32.mrb[0].mxu0
        %1863 = vdwg.mxu0
        %v1865 = vsel %vm941, %v1688, 0
        %v1868 = vsel %vm941, %v1693, 0
        %v1871 = vsel %vm1291, %v1545, 0
        %1873 = vmatprep.subr.mxu0 0.0
        %1874 = vmatpush1.msra.mxu0 %v1871
        %1875 = vmatprep.subr.mxu0 0.0
        %1876 = vmatpush1.msra.mxu0 0.0
        %1877 = vmatprep.subr.mxu0 0.0
        %1878 = vmatpush1.msra.mxu0 0.0
        %1879 = vmatprep.subr.mxu0 0.0
        %1880 = vmatpush1.msra.mxu0 0.0
        %1881 = vmatprep.subr.mxu0 0.0
        %1882 = vmatpush1.msra.mxu0 0.0
        %1883 = vmatprep.subr.mxu0 0.0
        %1884 = vmatpush1.msra.mxu0 0.0
        %1885 = vmatprep.subr.mxu0 0.0
        %1886 = vmatpush1.msra.mxu0 0.0
        %1887 = vmatprep.subr.mxu0 0.0
        %1888 = vmatpush1.msra.mxu0 0.0
        %1889 = vmatprep.subr.mxu0 0.0
        %1890 = vmatpush1.msra.mxu0 0.0
        %1891 = vmatprep.subr.mxu0 0.0
        %1892 = vmatpush1.msra.mxu0 0.0
        %1893 = vmatprep.subr.mxu0 0.0
        %1894 = vmatpush1.msra.mxu0 0.0
        %1895 = vmatprep.subr.mxu0 0.0
        %1896 = vmatpush1.msra.mxu0 0.0
        %1897 = vmatprep.subr.mxu0 0.0
        %1898 = vmatpush1.msra.mxu0 0.0
        %1899 = vmatprep.subr.mxu0 0.0
        %1900 = vmatpush1.msra.mxu0 0.0
        %1901 = vmatprep.subr.mxu0 0.0
        %1902 = vmatpush1.msra.mxu0 0.0
        %1903 = vmatprep.subr.mxu0 0.0
        %1904 = vmatpush1.msra.mxu0 0.0
        %1905 = vmatprep.subr.mxu0 0.0
        %1906 = vmatpush1.msra.mxu0 0.0
        %1907 = vmatprep.subr.mxu0 0.0
        %1908 = vmatpush1.msra.mxu0 0.0
        %1909 = vmatprep.subr.mxu0 0.0
        %1910 = vmatpush1.msra.mxu0 0.0
        %1911 = vmatprep.subr.mxu0 0.0
        %1912 = vmatpush1.msra.mxu0 0.0
        %1913 = vmatprep.subr.mxu0 0.0
        %1914 = vmatpush1.msra.mxu0 0.0
        %1915 = vmatprep.subr.mxu0 0.0
        %1916 = vmatpush1.msra.mxu0 0.0
        %1917 = vmatprep.subr.mxu0 0.0
        %1918 = vmatpush1.msra.mxu0 0.0
        %1919 = vmatprep.subr.mxu0 0.0
        %1920 = vmatpush1.msra.mxu0 0.0
        %1921 = vmatprep.subr.mxu0 0.0
        %1922 = vmatpush1.msra.mxu0 0.0
        %1923 = vmatprep.subr.mxu0 0.0
        %1924 = vmatpush1.msra.mxu0 0.0
        %1925 = vmatprep.subr.mxu0 0.0
        %1926 = vmatpush1.msra.mxu0 0.0
        %1927 = vmatprep.subr.mxu0 0.0
        %1928 = vmatpush1.msra.mxu0 0.0
        %1929 = vmatprep.subr.mxu0 0.0
        %1930 = vmatpush1.msra.mxu0 0.0
        %1931 = vmatprep.subr.mxu0 0.0
        %1932 = vmatpush1.msra.mxu0 0.0
        %1933 = vmatprep.subr.mxu0 0.0
        %1934 = vmatpush1.msra.mxu0 0.0
        %1935 = vmatprep.subr.mxu0 0.0
        %1936 = vmatpush1.msra.mxu0 0.0
        %1937 = vmatprep.mubr.f32.mxu0 0.0
        %1938 = vmatmul.mubr.f32.gmra.mrb[0].mxu0 %v1865
        %v1939 = vpop.f32.mrb[0].mxu0
        %v1940 = vadd.f32 0.0, %v1939
        %v1941 = vpop.f32.mrb[0].mxu0
        %1942 = vmatprep.mubr.f32.mxu0 0.0
        %1943 = vmatmul.mubr.f32.gmra.mrb[0].mxu0 %v1868
        %v1944 = vpop.f32.mrb[0].mxu0
        %v1945 = vadd.f32 0.0, %v1944
        %v1946 = vpop.f32.mrb[0].mxu0
        %1947 = vdwg.mxu0
        %v1948 = vadd.f32 %v1856, %v1940
        %v1949 = vadd.f32 %v1861, %v1945
        %v1950 = vld [vmem:[#allocation2] sm:$0xf]
        %v1951 = vld [vmem:[%s4] sm:$0xff]
        %v1952 = vld [vmem:[%s4 + $0x8] sm:$0xff]
        %v1953 = vld [vmem:[%s4 + $0x10] sm:$0xff]
        %v1954 = vld [vmem:[%s4 + $0x18] sm:$0xff]
        %vm1955 = vcmask 261120
        %v1957 = vsel %vm1955, %v1538, 0
        %v1960 = vsel %vm1955, %v1539, 0
        %1962 = vmatprep.subr.mxu0 0.0
        %1963 = vmatpush1.msra.mxu0 %v1951
        %1964 = vmatprep.subr.mxu0 0.0
        %1965 = vmatpush1.msra.mxu0 %v1952
        %1966 = vmatprep.subr.mxu0 0.0
        %1967 = vmatpush1.msra.mxu0 %v1953
        %1968 = vmatprep.subr.mxu0 0.0
        %1969 = vmatpush1.msra.mxu0 %v1954
        %1970 = vmatprep.subr.mxu0 0.0
        %1971 = vmatpush1.msra.mxu0 0.0
        %1972 = vmatprep.subr.mxu0 0.0
        %1973 = vmatpush1.msra.mxu0 0.0
        %1974 = vmatprep.subr.mxu0 0.0
        %1975 = vmatpush1.msra.mxu0 0.0
        %1976 = vmatprep.subr.mxu0 0.0
        %1977 = vmatpush1.msra.mxu0 0.0
        %1978 = vmatprep.subr.mxu0 0.0
        %1979 = vmatpush1.msra.mxu0 0.0
        %1980 = vmatprep.subr.mxu0 0.0
        %1981 = vmatpush1.msra.mxu0 0.0
        %1982 = vmatprep.subr.mxu0 0.0
        %1983 = vmatpush1.msra.mxu0 0.0
        %1984 = vmatprep.subr.mxu0 0.0
        %1985 = vmatpush1.msra.mxu0 0.0
        %1986 = vmatprep.subr.mxu0 0.0
        %1987 = vmatpush1.msra.mxu0 0.0
        %1988 = vmatprep.subr.mxu0 0.0
        %1989 = vmatpush1.msra.mxu0 0.0
        %1990 = vmatprep.subr.mxu0 0.0
        %1991 = vmatpush1.msra.mxu0 0.0
        %1992 = vmatprep.subr.mxu0 0.0
        %1993 = vmatpush1.msra.mxu0 0.0
        %1994 = vmatprep.subr.mxu0 0.0
        %1995 = vmatpush1.msra.mxu0 0.0
        %1996 = vmatprep.subr.mxu0 0.0
        %1997 = vmatpush1.msra.mxu0 0.0
        %1998 = vmatprep.subr.mxu0 0.0
        %1999 = vmatpush1.msra.mxu0 0.0
        %2000 = vmatprep.subr.mxu0 0.0
        %2001 = vmatpush1.msra.mxu0 0.0
        %2002 = vmatprep.subr.mxu0 0.0
        %2003 = vmatpush1.msra.mxu0 0.0
        %2004 = vmatprep.subr.mxu0 0.0
        %2005 = vmatpush1.msra.mxu0 0.0
        %2006 = vmatprep.subr.mxu0 0.0
        %2007 = vmatpush1.msra.mxu0 0.0
        %2008 = vmatprep.subr.mxu0 0.0
        %2009 = vmatpush1.msra.mxu0 0.0
        %2010 = vmatprep.subr.mxu0 0.0
        %2011 = vmatpush1.msra.mxu0 0.0
        %2012 = vmatprep.subr.mxu0 0.0
        %2013 = vmatpush1.msra.mxu0 0.0
        %2014 = vmatprep.subr.mxu0 0.0
        %2015 = vmatpush1.msra.mxu0 0.0
        %2016 = vmatprep.subr.mxu0 0.0
        %2017 = vmatpush1.msra.mxu0 0.0
        %2018 = vmatprep.subr.mxu0 0.0
        %2019 = vmatpush1.msra.mxu0 0.0
        %2020 = vmatprep.subr.mxu0 0.0
        %2021 = vmatpush1.msra.mxu0 0.0
        %2022 = vmatprep.subr.mxu0 0.0
        %2023 = vmatpush1.msra.mxu0 0.0
        %2024 = vmatprep.subr.mxu0 0.0
        %2025 = vmatpush1.msra.mxu0 0.0
        %2026 = vmatprep.mubr.f32.mxu0 0.0
        %2027 = vmatmul.mubr.f32.gmra.mrb[0].mxu0 %v1957
        %v2028 = vpop.f32.mrb[0].mxu0
        %v2029 = vadd.f32 0.0, %v2028
        %v2030 = vpop.f32.mrb[0].mxu0
        %2031 = vmatprep.mubr.f32.mxu0 0.0
        %2032 = vmatmul.mubr.f32.gmra.mrb[0].mxu0 %v1960
        %v2033 = vpop.f32.mrb[0].mxu0
        %v2034 = vadd.f32 0.0, %v2033
        %v2035 = vpop.f32.mrb[0].mxu0
        %2036 = vdwg.mxu0
        %v2037 = vlaneseq
        %v2038 = vshrl.u32 %v2037, 7
        %v2039 = vsub.s32 0, %v2038
        %v2040 = vrot.slane %v1950, %v2039
        %v2041 = vadd.f32 %v2029, %v2040
        %v2042 = vadd.f32 %v2034, %v2040
        %v2043 = vlaneseq
        %v2044 = vshrl.u32 %v2043, 7
        %v2045 = vsub.s32 1, %v2044
        %v2046 = vrot.slane %v1950, %v2045
        %2048 = vrot.lane.b32.xlu0 %v2046, 32
        %v2049 = vpop.permute.xlu0 %2048
        %v2051 = vadd.f32 %v2029, %v2049
        %v2052 = vadd.f32 %v2034, %v2049
        %v2053 = vlaneseq
        %v2054 = vshrl.u32 %v2053, 7
        %v2055 = vsub.s32 2, %v2054
        %v2056 = vrot.slane %v1950, %v2055
        %2058 = vrot.lane.b32.xlu0 %v2056, 64
        %v2059 = vpop.permute.xlu0 %2058
        %v2061 = vadd.f32 %v2029, %v2059
        %v2062 = vadd.f32 %v2034, %v2059
        %2065 = vrot.lane.b32.xlu0 %v2051, 96
        %v2066 = vpop.permute.xlu0 %2065
        %2067 = vrot.lane.b32.xlu0 %v2052, 96
        %v2068 = vpop.permute.xlu0 %2067
        %v2069 = vsel %vm1955, %v2066, 0
        %v2071 = vsel %vm1955, %v2068, 0
        %v2074 = vsel %vm1955, %v2041, 0
        %v2077 = vsel %vm1955, %v2042, 0
        %2079 = vmatprep.subr.mxu0 0.0
        %2080 = vmatpush1.xpose.msra.mxu0 %v2074
        %2081 = vmatprep.subr.mxu0 0.0
        %2082 = vmatpush1.xpose.msra.mxu0 %v2077
        %2083 = vmatprep.subr.mxu0 0.0
        %2084 = vmatpush1.xpose.msra.mxu0 0.0
        %2085 = vmatprep.subr.mxu0 0.0
        %2086 = vmatpush1.xpose.msra.mxu0 0.0
        %2087 = vmatprep.subr.mxu0 0.0
        %2088 = vmatpush1.xpose.msra.mxu0 0.0
        %2089 = vmatprep.subr.mxu0 0.0
        %2090 = vmatpush1.xpose.msra.mxu0 0.0
        %2091 = vmatprep.subr.mxu0 0.0
        %2092 = vmatpush1.xpose.msra.mxu0 0.0
        %2093 = vmatprep.subr.mxu0 0.0
        %2094 = vmatpush1.xpose.msra.mxu0 0.0
        %2095 = vmatprep.subr.mxu0 0.0
        %2096 = vmatpush1.xpose.msra.mxu0 0.0
        %2097 = vmatprep.subr.mxu0 0.0
        %2098 = vmatpush1.xpose.msra.mxu0 0.0
        %2099 = vmatprep.subr.mxu0 0.0
        %2100 = vmatpush1.xpose.msra.mxu0 0.0
        %2101 = vmatprep.subr.mxu0 0.0
        %2102 = vmatpush1.xpose.msra.mxu0 0.0
        %2103 = vmatprep.subr.mxu0 0.0
        %2104 = vmatpush1.xpose.msra.mxu0 0.0
        %2105 = vmatprep.subr.mxu0 0.0
        %2106 = vmatpush1.xpose.msra.mxu0 0.0
        %2107 = vmatprep.subr.mxu0 0.0
        %2108 = vmatpush1.xpose.msra.mxu0 0.0
        %2109 = vmatprep.subr.mxu0 0.0
        %2110 = vmatpush1.xpose.msra.mxu0 0.0
        %2111 = vmatprep.subr.mxu0 0.0
        %2112 = vmatpush1.xpose.msra.mxu0 0.0
        %2113 = vmatprep.subr.mxu0 0.0
        %2114 = vmatpush1.xpose.msra.mxu0 0.0
        %2115 = vmatprep.subr.mxu0 0.0
        %2116 = vmatpush1.xpose.msra.mxu0 0.0
        %2117 = vmatprep.subr.mxu0 0.0
        %2118 = vmatpush1.xpose.msra.mxu0 0.0
        %2119 = vmatprep.subr.mxu0 0.0
        %2120 = vmatpush1.xpose.msra.mxu0 0.0
        %2121 = vmatprep.subr.mxu0 0.0
        %2122 = vmatpush1.xpose.msra.mxu0 0.0
        %2123 = vmatprep.subr.mxu0 0.0
        %2124 = vmatpush1.xpose.msra.mxu0 0.0
        %2125 = vmatprep.subr.mxu0 0.0
        %2126 = vmatpush1.xpose.msra.mxu0 0.0
        %2127 = vmatprep.subr.mxu0 0.0
        %2128 = vmatpush1.xpose.msra.mxu0 0.0
        %2129 = vmatprep.subr.mxu0 0.0
        %2130 = vmatpush1.xpose.msra.mxu0 0.0
        %2131 = vmatprep.subr.mxu0 0.0
        %2132 = vmatpush1.xpose.msra.mxu0 0.0
        %2133 = vmatprep.subr.mxu0 0.0
        %2134 = vmatpush1.xpose.msra.mxu0 0.0
        %2135 = vmatprep.subr.mxu0 0.0
        %2136 = vmatpush1.xpose.msra.mxu0 0.0
        %2137 = vmatprep.subr.mxu0 0.0
        %2138 = vmatpush1.xpose.msra.mxu0 0.0
        %2139 = vmatprep.subr.mxu0 0.0
        %2140 = vmatpush1.xpose.msra.mxu0 0.0
        %2141 = vmatprep.subr.mxu0 0.0
        %2142 = vmatpush1.xpose.msra.mxu0 0.0
        %2143 = vmatprep.mubr.f32.mxu0 0.0
        %2144 = vmatmul.mubr.f32.gmra.mrb[0].mxu0 %v2069
        %v2145 = vpop.f32.mrb[0].mxu0
        %v2146 = vadd.f32 0.0, %v2145
        %v2147 = vpop.f32.mrb[0].mxu0
        %2148 = vmatprep.mubr.f32.mxu0 0.0
        %2149 = vmatmul.mubr.f32.gmra.mrb[0].mxu0 %v2071
        %v2150 = vpop.f32.mrb[0].mxu0
        %v2151 = vadd.f32 0.0, %v2150
        %v2152 = vpop.f32.mrb[0].mxu0
        %2153 = vdwg.mxu0
        %v2155 = vsel %vm857, %v2146, 0
        %v2158 = vsel %vm857, %v2151, 0
        %2160 = vmatprep.subr.mxu0 0.0
        %2161 = vmatpush1.msra.mxu0 %v764
        %2162 = vmatprep.subr.mxu0 0.0
        %2163 = vmatpush1.msra.mxu0 %v765
        %2164 = vmatprep.subr.mxu0 0.0
        %2165 = vmatpush1.msra.mxu0 0.0
        %2166 = vmatprep.subr.mxu0 0.0
        %2167 = vmatpush1.msra.mxu0 0.0
        %2168 = vmatprep.subr.mxu0 0.0
        %2169 = vmatpush1.msra.mxu0 0.0
        %2170 = vmatprep.subr.mxu0 0.0
        %2171 = vmatpush1.msra.mxu0 0.0
        %2172 = vmatprep.subr.mxu0 0.0
        %2173 = vmatpush1.msra.mxu0 0.0
        %2174 = vmatprep.subr.mxu0 0.0
        %2175 = vmatpush1.msra.mxu0 0.0
        %2176 = vmatprep.subr.mxu0 0.0
        %2177 = vmatpush1.msra.mxu0 0.0
        %2178 = vmatprep.subr.mxu0 0.0
        %2179 = vmatpush1.msra.mxu0 0.0
        %2180 = vmatprep.subr.mxu0 0.0
        %2181 = vmatpush1.msra.mxu0 0.0
        %2182 = vmatprep.subr.mxu0 0.0
        %2183 = vmatpush1.msra.mxu0 0.0
        %2184 = vmatprep.subr.mxu0 0.0
        %2185 = vmatpush1.msra.mxu0 0.0
        %2186 = vmatprep.subr.mxu0 0.0
        %2187 = vmatpush1.msra.mxu0 0.0
        %2188 = vmatprep.subr.mxu0 0.0
        %2189 = vmatpush1.msra.mxu0 0.0
        %2190 = vmatprep.subr.mxu0 0.0
        %2191 = vmatpush1.msra.mxu0 0.0
        %2192 = vmatprep.subr.mxu0 0.0
        %2193 = vmatpush1.msra.mxu0 0.0
        %2194 = vmatprep.subr.mxu0 0.0
        %2195 = vmatpush1.msra.mxu0 0.0
        %2196 = vmatprep.subr.mxu0 0.0
        %2197 = vmatpush1.msra.mxu0 0.0
        %2198 = vmatprep.subr.mxu0 0.0
        %2199 = vmatpush1.msra.mxu0 0.0
        %2200 = vmatprep.subr.mxu0 0.0
        %2201 = vmatpush1.msra.mxu0 0.0
        %2202 = vmatprep.subr.mxu0 0.0
        %2203 = vmatpush1.msra.mxu0 0.0
        %2204 = vmatprep.subr.mxu0 0.0
        %2205 = vmatpush1.msra.mxu0 0.0
        %2206 = vmatprep.subr.mxu0 0.0
        %2207 = vmatpush1.msra.mxu0 0.0
        %2208 = vmatprep.subr.mxu0 0.0
        %2209 = vmatpush1.msra.mxu0 0.0
        %2210 = vmatprep.subr.mxu0 0.0
        %2211 = vmatpush1.msra.mxu0 0.0
        %2212 = vmatprep.subr.mxu0 0.0
        %2213 = vmatpush1.msra.mxu0 0.0
        %2214 = vmatprep.subr.mxu0 0.0
        %2215 = vmatpush1.msra.mxu0 0.0
        %2216 = vmatprep.subr.mxu0 0.0
        %2217 = vmatpush1.msra.mxu0 0.0
        %2218 = vmatprep.subr.mxu0 0.0
        %2219 = vmatpush1.msra.mxu0 0.0
        %2220 = vmatprep.subr.mxu0 0.0
        %2221 = vmatpush1.msra.mxu0 0.0
        %2222 = vmatprep.subr.mxu0 0.0
        %2223 = vmatpush1.msra.mxu0 0.0
        %2224 = vmatprep.mubr.f32.mxu0 0.0
        %2225 = vmatmul.mubr.f32.gmra.mrb[0].mxu0 %v2155
        %v2226 = vpop.f32.mrb[0].mxu0
        %v2227 = vadd.f32 0.0, %v2226
        %v2228 = vpop.f32.mrb[0].mxu0
        %2229 = vmatprep.mubr.f32.mxu0 0.0
        %2230 = vmatmul.mubr.f32.gmra.mrb[0].mxu0 %v2158
        %v2231 = vpop.f32.mrb[0].mxu0
        %v2232 = vadd.f32 0.0, %v2231
        %v2233 = vpop.f32.mrb[0].mxu0
        %2234 = vdwg.mxu0
        %v2235 = vsel %vm805, %v2227, %v2146
        %v2236 = vsel %vm806, %v2232, %v2151
        %v2238 = vsel %vm857, %v2235, 0
        %v2241 = vsel %vm857, %v2236, 0
        %2243 = vmatprep.subr.mxu0 0.0
        %2244 = vmatpush1.msra.mxu0 %v767
        %2245 = vmatprep.subr.mxu0 0.0
        %2246 = vmatpush1.msra.mxu0 %v768
        %2247 = vmatprep.subr.mxu0 0.0
        %2248 = vmatpush1.msra.mxu0 0.0
        %2249 = vmatprep.subr.mxu0 0.0
        %2250 = vmatpush1.msra.mxu0 0.0
        %2251 = vmatprep.subr.mxu0 0.0
        %2252 = vmatpush1.msra.mxu0 0.0
        %2253 = vmatprep.subr.mxu0 0.0
        %2254 = vmatpush1.msra.mxu0 0.0
        %2255 = vmatprep.subr.mxu0 0.0
        %2256 = vmatpush1.msra.mxu0 0.0
        %2257 = vmatprep.subr.mxu0 0.0
        %2258 = vmatpush1.msra.mxu0 0.0
        %2259 = vmatprep.subr.mxu0 0.0
        %2260 = vmatpush1.msra.mxu0 0.0
        %2261 = vmatprep.subr.mxu0 0.0
        %2262 = vmatpush1.msra.mxu0 0.0
        %2263 = vmatprep.subr.mxu0 0.0
        %2264 = vmatpush1.msra.mxu0 0.0
        %2265 = vmatprep.subr.mxu0 0.0
        %2266 = vmatpush1.msra.mxu0 0.0
        %2267 = vmatprep.subr.mxu0 0.0
        %2268 = vmatpush1.msra.mxu0 0.0
        %2269 = vmatprep.subr.mxu0 0.0
        %2270 = vmatpush1.msra.mxu0 0.0
        %2271 = vmatprep.subr.mxu0 0.0
        %2272 = vmatpush1.msra.mxu0 0.0
        %2273 = vmatprep.subr.mxu0 0.0
        %2274 = vmatpush1.msra.mxu0 0.0
        %2275 = vmatprep.subr.mxu0 0.0
        %2276 = vmatpush1.msra.mxu0 0.0
        %2277 = vmatprep.subr.mxu0 0.0
        %2278 = vmatpush1.msra.mxu0 0.0
        %2279 = vmatprep.subr.mxu0 0.0
        %2280 = vmatpush1.msra.mxu0 0.0
        %2281 = vmatprep.subr.mxu0 0.0
        %2282 = vmatpush1.msra.mxu0 0.0
        %2283 = vmatprep.subr.mxu0 0.0
        %2284 = vmatpush1.msra.mxu0 0.0
        %2285 = vmatprep.subr.mxu0 0.0
        %2286 = vmatpush1.msra.mxu0 0.0
        %2287 = vmatprep.subr.mxu0 0.0
        %2288 = vmatpush1.msra.mxu0 0.0
        %2289 = vmatprep.subr.mxu0 0.0
        %2290 = vmatpush1.msra.mxu0 0.0
        %2291 = vmatprep.subr.mxu0 0.0
        %2292 = vmatpush1.msra.mxu0 0.0
        %2293 = vmatprep.subr.mxu0 0.0
        %2294 = vmatpush1.msra.mxu0 0.0
        %2295 = vmatprep.subr.mxu0 0.0
        %2296 = vmatpush1.msra.mxu0 0.0
        %2297 = vmatprep.subr.mxu0 0.0
        %2298 = vmatpush1.msra.mxu0 0.0
        %2299 = vmatprep.subr.mxu0 0.0
        %2300 = vmatpush1.msra.mxu0 0.0
        %2301 = vmatprep.subr.mxu0 0.0
        %2302 = vmatpush1.msra.mxu0 0.0
        %2303 = vmatprep.subr.mxu0 0.0
        %2304 = vmatpush1.msra.mxu0 0.0
        %2305 = vmatprep.subr.mxu0 0.0
        %2306 = vmatpush1.msra.mxu0 0.0
        %2307 = vmatprep.mubr.f32.mxu0 0.0
        %2308 = vmatmul.mubr.f32.gmra.mrb[0].mxu0 %v2238
        %v2309 = vpop.f32.mrb[0].mxu0
        %v2310 = vadd.f32 0.0, %v2309
        %v2311 = vpop.f32.mrb[0].mxu0
        %2312 = vmatprep.mubr.f32.mxu0 0.0
        %2313 = vmatmul.mubr.f32.gmra.mrb[0].mxu0 %v2241
        %v2314 = vpop.f32.mrb[0].mxu0
        %v2315 = vadd.f32 0.0, %v2314
        %v2316 = vpop.f32.mrb[0].mxu0
        %2317 = vdwg.mxu0
        %v2318 = vsel %vm820, %v2310, %v2235
        %v2319 = vsel %vm821, %v2315, %v2236
        %v2321 = vsel %vm857, %v2318, 0
        %v2324 = vsel %vm857, %v2319, 0
        %2326 = vmatprep.subr.mxu0 0.0
        %2327 = vmatpush1.msra.mxu0 %v770
        %2328 = vmatprep.subr.mxu0 0.0
        %2329 = vmatpush1.msra.mxu0 %v771
        %2330 = vmatprep.subr.mxu0 0.0
        %2331 = vmatpush1.msra.mxu0 0.0
        %2332 = vmatprep.subr.mxu0 0.0
        %2333 = vmatpush1.msra.mxu0 0.0
        %2334 = vmatprep.subr.mxu0 0.0
        %2335 = vmatpush1.msra.mxu0 0.0
        %2336 = vmatprep.subr.mxu0 0.0
        %2337 = vmatpush1.msra.mxu0 0.0
        %2338 = vmatprep.subr.mxu0 0.0
        %2339 = vmatpush1.msra.mxu0 0.0
        %2340 = vmatprep.subr.mxu0 0.0
        %2341 = vmatpush1.msra.mxu0 0.0
        %2342 = vmatprep.subr.mxu0 0.0
        %2343 = vmatpush1.msra.mxu0 0.0
        %2344 = vmatprep.subr.mxu0 0.0
        %2345 = vmatpush1.msra.mxu0 0.0
        %2346 = vmatprep.subr.mxu0 0.0
        %2347 = vmatpush1.msra.mxu0 0.0
        %2348 = vmatprep.subr.mxu0 0.0
        %2349 = vmatpush1.msra.mxu0 0.0
        %2350 = vmatprep.subr.mxu0 0.0
        %2351 = vmatpush1.msra.mxu0 0.0
        %2352 = vmatprep.subr.mxu0 0.0
        %2353 = vmatpush1.msra.mxu0 0.0
        %2354 = vmatprep.subr.mxu0 0.0
        %2355 = vmatpush1.msra.mxu0 0.0
        %2356 = vmatprep.subr.mxu0 0.0
        %2357 = vmatpush1.msra.mxu0 0.0
        %2358 = vmatprep.subr.mxu0 0.0
        %2359 = vmatpush1.msra.mxu0 0.0
        %2360 = vmatprep.subr.mxu0 0.0
        %2361 = vmatpush1.msra.mxu0 0.0
        %2362 = vmatprep.subr.mxu0 0.0
        %2363 = vmatpush1.msra.mxu0 0.0
        %2364 = vmatprep.subr.mxu0 0.0
        %2365 = vmatpush1.msra.mxu0 0.0
        %2366 = vmatprep.subr.mxu0 0.0
        %2367 = vmatpush1.msra.mxu0 0.0
        %2368 = vmatprep.subr.mxu0 0.0
        %2369 = vmatpush1.msra.mxu0 0.0
        %2370 = vmatprep.subr.mxu0 0.0
        %2371 = vmatpush1.msra.mxu0 0.0
        %2372 = vmatprep.subr.mxu0 0.0
        %2373 = vmatpush1.msra.mxu0 0.0
        %2374 = vmatprep.subr.mxu0 0.0
        %2375 = vmatpush1.msra.mxu0 0.0
        %2376 = vmatprep.subr.mxu0 0.0
        %2377 = vmatpush1.msra.mxu0 0.0
        %2378 = vmatprep.subr.mxu0 0.0
        %2379 = vmatpush1.msra.mxu0 0.0
        %2380 = vmatprep.subr.mxu0 0.0
        %2381 = vmatpush1.msra.mxu0 0.0
        %2382 = vmatprep.subr.mxu0 0.0
        %2383 = vmatpush1.msra.mxu0 0.0
        %2384 = vmatprep.subr.mxu0 0.0
        %2385 = vmatpush1.msra.mxu0 0.0
        %2386 = vmatprep.subr.mxu0 0.0
        %2387 = vmatpush1.msra.mxu0 0.0
        %2388 = vmatprep.subr.mxu0 0.0
        %2389 = vmatpush1.msra.mxu0 0.0
        %2390 = vmatprep.mubr.f32.mxu0 0.0
        %2391 = vmatmul.mubr.f32.gmra.mrb[0].mxu0 %v2321
        %v2392 = vpop.f32.mrb[0].mxu0
        %v2393 = vadd.f32 0.0, %v2392
        %v2394 = vpop.f32.mrb[0].mxu0
        %2395 = vmatprep.mubr.f32.mxu0 0.0
        %2396 = vmatmul.mubr.f32.gmra.mrb[0].mxu0 %v2324
        %v2397 = vpop.f32.mrb[0].mxu0
        %v2398 = vadd.f32 0.0, %v2397
        %v2399 = vpop.f32.mrb[0].mxu0
        %2400 = vdwg.mxu0
        %v2401 = vsel %vm835, %v2393, %v2318
        %v2402 = vsel %vm836, %v2398, %v2319
        %v2404 = vsel %vm857, %v2401, 0
        %v2407 = vsel %vm857, %v2402, 0
        %2409 = vmatprep.subr.mxu0 0.0
        %2410 = vmatpush1.msra.mxu0 %v773
        %2411 = vmatprep.subr.mxu0 0.0
        %2412 = vmatpush1.msra.mxu0 %v774
        %2413 = vmatprep.subr.mxu0 0.0
        %2414 = vmatpush1.msra.mxu0 0.0
        %2415 = vmatprep.subr.mxu0 0.0
        %2416 = vmatpush1.msra.mxu0 0.0
        %2417 = vmatprep.subr.mxu0 0.0
        %2418 = vmatpush1.msra.mxu0 0.0
        %2419 = vmatprep.subr.mxu0 0.0
        %2420 = vmatpush1.msra.mxu0 0.0
        %2421 = vmatprep.subr.mxu0 0.0
        %2422 = vmatpush1.msra.mxu0 0.0
        %2423 = vmatprep.subr.mxu0 0.0
        %2424 = vmatpush1.msra.mxu0 0.0
        %2425 = vmatprep.subr.mxu0 0.0
        %2426 = vmatpush1.msra.mxu0 0.0
        %2427 = vmatprep.subr.mxu0 0.0
        %2428 = vmatpush1.msra.mxu0 0.0
        %2429 = vmatprep.subr.mxu0 0.0
        %2430 = vmatpush1.msra.mxu0 0.0
        %2431 = vmatprep.subr.mxu0 0.0
        %2432 = vmatpush1.msra.mxu0 0.0
        %2433 = vmatprep.subr.mxu0 0.0
        %2434 = vmatpush1.msra.mxu0 0.0
        %2435 = vmatprep.subr.mxu0 0.0
        %2436 = vmatpush1.msra.mxu0 0.0
        %2437 = vmatprep.subr.mxu0 0.0
        %2438 = vmatpush1.msra.mxu0 0.0
        %2439 = vmatprep.subr.mxu0 0.0
        %2440 = vmatpush1.msra.mxu0 0.0
        %2441 = vmatprep.subr.mxu0 0.0
        %2442 = vmatpush1.msra.mxu0 0.0
        %2443 = vmatprep.subr.mxu0 0.0
        %2444 = vmatpush1.msra.mxu0 0.0
        %2445 = vmatprep.subr.mxu0 0.0
        %2446 = vmatpush1.msra.mxu0 0.0
        %2447 = vmatprep.subr.mxu0 0.0
        %2448 = vmatpush1.msra.mxu0 0.0
        %2449 = vmatprep.subr.mxu0 0.0
        %2450 = vmatpush1.msra.mxu0 0.0
        %2451 = vmatprep.subr.mxu0 0.0
        %2452 = vmatpush1.msra.mxu0 0.0
        %2453 = vmatprep.subr.mxu0 0.0
        %2454 = vmatpush1.msra.mxu0 0.0
        %2455 = vmatprep.subr.mxu0 0.0
        %2456 = vmatpush1.msra.mxu0 0.0
        %2457 = vmatprep.subr.mxu0 0.0
        %2458 = vmatpush1.msra.mxu0 0.0
        %2459 = vmatprep.subr.mxu0 0.0
        %2460 = vmatpush1.msra.mxu0 0.0
        %2461 = vmatprep.subr.mxu0 0.0
        %2462 = vmatpush1.msra.mxu0 0.0
        %2463 = vmatprep.subr.mxu0 0.0
        %2464 = vmatpush1.msra.mxu0 0.0
        %2465 = vmatprep.subr.mxu0 0.0
        %2466 = vmatpush1.msra.mxu0 0.0
        %2467 = vmatprep.subr.mxu0 0.0
        %2468 = vmatpush1.msra.mxu0 0.0
        %2469 = vmatprep.subr.mxu0 0.0
        %2470 = vmatpush1.msra.mxu0 0.0
        %2471 = vmatprep.subr.mxu0 0.0
        %2472 = vmatpush1.msra.mxu0 0.0
        %2473 = vmatprep.mubr.f32.mxu0 0.0
        %2474 = vmatmul.mubr.f32.gmra.mrb[0].mxu0 %v2404
        %v2475 = vpop.f32.mrb[0].mxu0
        %v2476 = vadd.f32 0.0, %v2475
        %v2477 = vpop.f32.mrb[0].mxu0
        %2478 = vmatprep.mubr.f32.mxu0 0.0
        %2479 = vmatmul.mubr.f32.gmra.mrb[0].mxu0 %v2407
        %v2480 = vpop.f32.mrb[0].mxu0
        %v2481 = vadd.f32 0.0, %v2480
        %v2482 = vpop.f32.mrb[0].mxu0
        %2483 = vdwg.mxu0
        %v2484 = vsel %vm850, %v2476, %v2401
        %v2485 = vsel %vm851, %v2481, %v2402
        %v2486 = vsel %vm857, %v2484, 0.0
        %v2487 = vsel %vm857, %v2485, 0.0
        %v2488 = vadd.f32 %v2486, %v2487
        %v2489 = vrot.slane %v2488, 4
        %v2490 = vadd.f32 %v2488, %v2489
        %v2491 = vrot.slane %v2490, 2
        %v2492 = vadd.f32 %v2490, %v2491
        %v2493 = vrot.slane %v2492, 1
        %v2494 = vadd.f32 %v2492, %v2493
        %v2495 = vmul.f32 %v2494, 0.03125
        %v2496 = vsel %vm857, %v2495, -inf
        %2497 = vmax.xlane.f32.xlu0 %v2496
        %v2498 = vpop.xlane.xlu0 %2497
        %vm2499 = vcmp.ge.f32.partialorder %v2495, %v2498
        %v2500 = vsel %vm2499, 1, 0
        %v2501 = vcvt.s32.f32 %v2500
        %vm2502 = vcmp.gt.f32.partialorder %v2501, 0.0
        %v2503 = vsel %vm2502, -1e+30, %v2495
        %v2504 = vsel %vm857, %v2503, -inf
        %2505 = vmax.xlane.f32.xlu0 %v2504
        %v2506 = vpop.xlane.xlu0 %2505
        %vm2507 = vcmp.ge.f32.partialorder %v2503, %v2506
        %v2508 = vsel %vm2507, 1, 0
        %v2509 = vcvt.s32.f32 %v2508
        %v2510 = vsub.f32 %v2498, %v2498
        %v2511 = vmul.f32 %v2510, 1.442695
        %v2512 = vpow.pop %v2511
        %v2513 = vsub.f32 %v2506, %v2498
        %v2514 = vmul.f32 %v2513, 1.442695
        %v2515 = vpow.pop %v2514
        %v2516 = vadd.f32 %v2512, %v2515
        %v2517 = vrcp.pop %v2516
        %v2518 = vmul.f32 1.0, %v2517
        %v2519 = vmul.f32 %v2512, %v2518
        %v2520 = vmul.f32 %v2501, %v2519
        %v2521 = vmul.f32 %v2515, %v2518
        %v2522 = vmul.f32 %v2509, %v2521
        %v2523 = vadd.f32 %v2520, %v2522
        %v2525 = vsel %vm857, %v2523, 0
        %2527 = vmatprep.subr.mxu0 0.0
        %2528 = vmatpush1.msra.mxu0 %v776
        %2529 = vmatprep.subr.mxu0 0.0
        %2530 = vmatpush1.msra.mxu0 %v777
        %2531 = vmatprep.subr.mxu0 0.0
        %2532 = vmatpush1.msra.mxu0 0.0
        %2533 = vmatprep.subr.mxu0 0.0
        %2534 = vmatpush1.msra.mxu0 0.0
        %2535 = vmatprep.subr.mxu0 0.0
        %2536 = vmatpush1.msra.mxu0 0.0
        %2537 = vmatprep.subr.mxu0 0.0
        %2538 = vmatpush1.msra.mxu0 0.0
        %2539 = vmatprep.subr.mxu0 0.0
        %2540 = vmatpush1.msra.mxu0 0.0
        %2541 = vmatprep.subr.mxu0 0.0
        %2542 = vmatpush1.msra.mxu0 0.0
        %2543 = vmatprep.subr.mxu0 0.0
        %2544 = vmatpush1.msra.mxu0 0.0
        %2545 = vmatprep.subr.mxu0 0.0
        %2546 = vmatpush1.msra.mxu0 0.0
        %2547 = vmatprep.subr.mxu0 0.0
        %2548 = vmatpush1.msra.mxu0 0.0
        %2549 = vmatprep.subr.mxu0 0.0
        %2550 = vmatpush1.msra.mxu0 0.0
        %2551 = vmatprep.subr.mxu0 0.0
        %2552 = vmatpush1.msra.mxu0 0.0
        %2553 = vmatprep.subr.mxu0 0.0
        %2554 = vmatpush1.msra.mxu0 0.0
        %2555 = vmatprep.subr.mxu0 0.0
        %2556 = vmatpush1.msra.mxu0 0.0
        %2557 = vmatprep.subr.mxu0 0.0
        %2558 = vmatpush1.msra.mxu0 0.0
        %2559 = vmatprep.subr.mxu0 0.0
        %2560 = vmatpush1.msra.mxu0 0.0
        %2561 = vmatprep.subr.mxu0 0.0
        %2562 = vmatpush1.msra.mxu0 0.0
        %2563 = vmatprep.subr.mxu0 0.0
        %2564 = vmatpush1.msra.mxu0 0.0
        %2565 = vmatprep.subr.mxu0 0.0
        %2566 = vmatpush1.msra.mxu0 0.0
        %2567 = vmatprep.subr.mxu0 0.0
        %2568 = vmatpush1.msra.mxu0 0.0
        %2569 = vmatprep.subr.mxu0 0.0
        %2570 = vmatpush1.msra.mxu0 0.0
        %2571 = vmatprep.subr.mxu0 0.0
        %2572 = vmatpush1.msra.mxu0 0.0
        %2573 = vmatprep.subr.mxu0 0.0
        %2574 = vmatpush1.msra.mxu0 0.0
        %2575 = vmatprep.subr.mxu0 0.0
        %2576 = vmatpush1.msra.mxu0 0.0
        %2577 = vmatprep.subr.mxu0 0.0
        %2578 = vmatpush1.msra.mxu0 0.0
        %2579 = vmatprep.subr.mxu0 0.0
        %2580 = vmatpush1.msra.mxu0 0.0
        %2581 = vmatprep.subr.mxu0 0.0
        %2582 = vmatpush1.msra.mxu0 0.0
        %2583 = vmatprep.subr.mxu0 0.0
        %2584 = vmatpush1.msra.mxu0 0.0
        %2585 = vmatprep.subr.mxu0 0.0
        %2586 = vmatpush1.msra.mxu0 0.0
        %2587 = vmatprep.subr.mxu0 0.0
        %2588 = vmatpush1.msra.mxu0 0.0
        %2589 = vmatprep.subr.mxu0 0.0
        %2590 = vmatpush1.msra.mxu0 0.0
        %2591 = vmatprep.mubr.f32.mxu0 0.0
        %2592 = vmatmul.mubr.f32.gmra.mrb[0].mxu0 %v2525
        %v2593 = vpop.f32.mrb[0].mxu0
        %v2594 = vadd.f32 0.0, %v2593
        %v2595 = vpop.f32.mrb[0].mxu0
        %2596 = vmatprep.mubr.f32.mxu0 0.0
        %2597 = vmatmul.mubr.f32.gmra.mrb[0].mxu0 %v2525
        %v2598 = vpop.f32.mrb[0].mxu0
        %v2599 = vadd.f32 0.0, %v2598
        %v2600 = vpop.f32.mrb[0].mxu0
        %2601 = vdwg.mxu0
        %v2602 = vsel %vm805, %v2594, %v2523
        %v2603 = vsel %vm806, %v2599, %v2523
        %v2605 = vsel %vm857, %v2602, 0
        %v2608 = vsel %vm857, %v2603, 0
        %2610 = vmatprep.subr.mxu0 0.0
        %2611 = vmatpush1.msra.mxu0 %v779
        %2612 = vmatprep.subr.mxu0 0.0
        %2613 = vmatpush1.msra.mxu0 %v780
        %2614 = vmatprep.subr.mxu0 0.0
        %2615 = vmatpush1.msra.mxu0 0.0
        %2616 = vmatprep.subr.mxu0 0.0
        %2617 = vmatpush1.msra.mxu0 0.0
        %2618 = vmatprep.subr.mxu0 0.0
        %2619 = vmatpush1.msra.mxu0 0.0
        %2620 = vmatprep.subr.mxu0 0.0
        %2621 = vmatpush1.msra.mxu0 0.0
        %2622 = vmatprep.subr.mxu0 0.0
        %2623 = vmatpush1.msra.mxu0 0.0
        %2624 = vmatprep.subr.mxu0 0.0
        %2625 = vmatpush1.msra.mxu0 0.0
        %2626 = vmatprep.subr.mxu0 0.0
        %2627 = vmatpush1.msra.mxu0 0.0
        %2628 = vmatprep.subr.mxu0 0.0
        %2629 = vmatpush1.msra.mxu0 0.0
        %2630 = vmatprep.subr.mxu0 0.0
        %2631 = vmatpush1.msra.mxu0 0.0
        %2632 = vmatprep.subr.mxu0 0.0
        %2633 = vmatpush1.msra.mxu0 0.0
        %2634 = vmatprep.subr.mxu0 0.0
        %2635 = vmatpush1.msra.mxu0 0.0
        %2636 = vmatprep.subr.mxu0 0.0
        %2637 = vmatpush1.msra.mxu0 0.0
        %2638 = vmatprep.subr.mxu0 0.0
        %2639 = vmatpush1.msra.mxu0 0.0
        %2640 = vmatprep.subr.mxu0 0.0
        %2641 = vmatpush1.msra.mxu0 0.0
        %2642 = vmatprep.subr.mxu0 0.0
        %2643 = vmatpush1.msra.mxu0 0.0
        %2644 = vmatprep.subr.mxu0 0.0
        %2645 = vmatpush1.msra.mxu0 0.0
        %2646 = vmatprep.subr.mxu0 0.0
        %2647 = vmatpush1.msra.mxu0 0.0
        %2648 = vmatprep.subr.mxu0 0.0
        %2649 = vmatpush1.msra.mxu0 0.0
        %2650 = vmatprep.subr.mxu0 0.0
        %2651 = vmatpush1.msra.mxu0 0.0
        %2652 = vmatprep.subr.mxu0 0.0
        %2653 = vmatpush1.msra.mxu0 0.0
        %2654 = vmatprep.subr.mxu0 0.0
        %2655 = vmatpush1.msra.mxu0 0.0
        %2656 = vmatprep.subr.mxu0 0.0
        %2657 = vmatpush1.msra.mxu0 0.0
        %2658 = vmatprep.subr.mxu0 0.0
        %2659 = vmatpush1.msra.mxu0 0.0
        %2660 = vmatprep.subr.mxu0 0.0
        %2661 = vmatpush1.msra.mxu0 0.0
        %2662 = vmatprep.subr.mxu0 0.0
        %2663 = vmatpush1.msra.mxu0 0.0
        %2664 = vmatprep.subr.mxu0 0.0
        %2665 = vmatpush1.msra.mxu0 0.0
        %2666 = vmatprep.subr.mxu0 0.0
        %2667 = vmatpush1.msra.mxu0 0.0
        %2668 = vmatprep.subr.mxu0 0.0
        %2669 = vmatpush1.msra.mxu0 0.0
        %2670 = vmatprep.subr.mxu0 0.0
        %2671 = vmatpush1.msra.mxu0 0.0
        %2672 = vmatprep.subr.mxu0 0.0
        %2673 = vmatpush1.msra.mxu0 0.0
        %2674 = vmatprep.mubr.f32.mxu0 0.0
        %2675 = vmatmul.mubr.f32.gmra.mrb[0].mxu0 %v2605
        %v2676 = vpop.f32.mrb[0].mxu0
        %v2677 = vadd.f32 0.0, %v2676
        %v2678 = vpop.f32.mrb[0].mxu0
        %2679 = vmatprep.mubr.f32.mxu0 0.0
        %2680 = vmatmul.mubr.f32.gmra.mrb[0].mxu0 %v2608
        %v2681 = vpop.f32.mrb[0].mxu0
        %v2682 = vadd.f32 0.0, %v2681
        %v2683 = vpop.f32.mrb[0].mxu0
        %2684 = vdwg.mxu0
        %v2685 = vsel %vm820, %v2677, %v2602
        %v2686 = vsel %vm821, %v2682, %v2603
        %v2688 = vsel %vm857, %v2685, 0
        %v2691 = vsel %vm857, %v2686, 0
        %2693 = vmatprep.subr.mxu0 0.0
        %2694 = vmatpush1.msra.mxu0 %v782
        %2695 = vmatprep.subr.mxu0 0.0
        %2696 = vmatpush1.msra.mxu0 %v783
        %2697 = vmatprep.subr.mxu0 0.0
        %2698 = vmatpush1.msra.mxu0 0.0
        %2699 = vmatprep.subr.mxu0 0.0
        %2700 = vmatpush1.msra.mxu0 0.0
        %2701 = vmatprep.subr.mxu0 0.0
        %2702 = vmatpush1.msra.mxu0 0.0
        %2703 = vmatprep.subr.mxu0 0.0
        %2704 = vmatpush1.msra.mxu0 0.0
        %2705 = vmatprep.subr.mxu0 0.0
        %2706 = vmatpush1.msra.mxu0 0.0
        %2707 = vmatprep.subr.mxu0 0.0
        %2708 = vmatpush1.msra.mxu0 0.0
        %2709 = vmatprep.subr.mxu0 0.0
        %2710 = vmatpush1.msra.mxu0 0.0
        %2711 = vmatprep.subr.mxu0 0.0
        %2712 = vmatpush1.msra.mxu0 0.0
        %2713 = vmatprep.subr.mxu0 0.0
        %2714 = vmatpush1.msra.mxu0 0.0
        %2715 = vmatprep.subr.mxu0 0.0
        %2716 = vmatpush1.msra.mxu0 0.0
        %2717 = vmatprep.subr.mxu0 0.0
        %2718 = vmatpush1.msra.mxu0 0.0
        %2719 = vmatprep.subr.mxu0 0.0
        %2720 = vmatpush1.msra.mxu0 0.0
        %2721 = vmatprep.subr.mxu0 0.0
        %2722 = vmatpush1.msra.mxu0 0.0
        %2723 = vmatprep.subr.mxu0 0.0
        %2724 = vmatpush1.msra.mxu0 0.0
        %2725 = vmatprep.subr.mxu0 0.0
        %2726 = vmatpush1.msra.mxu0 0.0
        %2727 = vmatprep.subr.mxu0 0.0
        %2728 = vmatpush1.msra.mxu0 0.0
        %2729 = vmatprep.subr.mxu0 0.0
        %2730 = vmatpush1.msra.mxu0 0.0
        %2731 = vmatprep.subr.mxu0 0.0
        %2732 = vmatpush1.msra.mxu0 0.0
        %2733 = vmatprep.subr.mxu0 0.0
        %2734 = vmatpush1.msra.mxu0 0.0
        %2735 = vmatprep.subr.mxu0 0.0
        %2736 = vmatpush1.msra.mxu0 0.0
        %2737 = vmatprep.subr.mxu0 0.0
        %2738 = vmatpush1.msra.mxu0 0.0
        %2739 = vmatprep.subr.mxu0 0.0
        %2740 = vmatpush1.msra.mxu0 0.0
        %2741 = vmatprep.subr.mxu0 0.0
        %2742 = vmatpush1.msra.mxu0 0.0
        %2743 = vmatprep.subr.mxu0 0.0
        %2744 = vmatpush1.msra.mxu0 0.0
        %2745 = vmatprep.subr.mxu0 0.0
        %2746 = vmatpush1.msra.mxu0 0.0
        %2747 = vmatprep.subr.mxu0 0.0
        %2748 = vmatpush1.msra.mxu0 0.0
        %2749 = vmatprep.subr.mxu0 0.0
        %2750 = vmatpush1.msra.mxu0 0.0
        %2751 = vmatprep.subr.mxu0 0.0
        %2752 = vmatpush1.msra.mxu0 0.0
        %2753 = vmatprep.subr.mxu0 0.0
        %2754 = vmatpush1.msra.mxu0 0.0
        %2755 = vmatprep.subr.mxu0 0.0
        %2756 = vmatpush1.msra.mxu0 0.0
        %2757 = vmatprep.mubr.f32.mxu0 0.0
        %2758 = vmatmul.mubr.f32.gmra.mrb[0].mxu0 %v2688
        %v2759 = vpop.f32.mrb[0].mxu0
        %v2760 = vadd.f32 0.0, %v2759
        %v2761 = vpop.f32.mrb[0].mxu0
        %2762 = vmatprep.mubr.f32.mxu0 0.0
        %2763 = vmatmul.mubr.f32.gmra.mrb[0].mxu0 %v2691
        %v2764 = vpop.f32.mrb[0].mxu0
        %v2765 = vadd.f32 0.0, %v2764
        %v2766 = vpop.f32.mrb[0].mxu0
        %2767 = vdwg.mxu0
        %v2768 = vsel %vm835, %v2760, %v2685
        %v2769 = vsel %vm836, %v2765, %v2686
        %v2771 = vsel %vm857, %v2768, 0
        %v2774 = vsel %vm857, %v2769, 0
        %2776 = vmatprep.subr.mxu0 0.0
        %2777 = vmatpush1.msra.mxu0 %v785
        %2778 = vmatprep.subr.mxu0 0.0
        %2779 = vmatpush1.msra.mxu0 %v786
        %2780 = vmatprep.subr.mxu0 0.0
        %2781 = vmatpush1.msra.mxu0 0.0
        %2782 = vmatprep.subr.mxu0 0.0
        %2783 = vmatpush1.msra.mxu0 0.0
        %2784 = vmatprep.subr.mxu0 0.0
        %2785 = vmatpush1.msra.mxu0 0.0
        %2786 = vmatprep.subr.mxu0 0.0
        %2787 = vmatpush1.msra.mxu0 0.0
        %2788 = vmatprep.subr.mxu0 0.0
        %2789 = vmatpush1.msra.mxu0 0.0
        %2790 = vmatprep.subr.mxu0 0.0
        %2791 = vmatpush1.msra.mxu0 0.0
        %2792 = vmatprep.subr.mxu0 0.0
        %2793 = vmatpush1.msra.mxu0 0.0
        %2794 = vmatprep.subr.mxu0 0.0
        %2795 = vmatpush1.msra.mxu0 0.0
        %2796 = vmatprep.subr.mxu0 0.0
        %2797 = vmatpush1.msra.mxu0 0.0
        %2798 = vmatprep.subr.mxu0 0.0
        %2799 = vmatpush1.msra.mxu0 0.0
        %2800 = vmatprep.subr.mxu0 0.0
        %2801 = vmatpush1.msra.mxu0 0.0
        %2802 = vmatprep.subr.mxu0 0.0
        %2803 = vmatpush1.msra.mxu0 0.0
        %2804 = vmatprep.subr.mxu0 0.0
        %2805 = vmatpush1.msra.mxu0 0.0
        %2806 = vmatprep.subr.mxu0 0.0
        %2807 = vmatpush1.msra.mxu0 0.0
        %2808 = vmatprep.subr.mxu0 0.0
        %2809 = vmatpush1.msra.mxu0 0.0
        %2810 = vmatprep.subr.mxu0 0.0
        %2811 = vmatpush1.msra.mxu0 0.0
        %2812 = vmatprep.subr.mxu0 0.0
        %2813 = vmatpush1.msra.mxu0 0.0
        %2814 = vmatprep.subr.mxu0 0.0
        %2815 = vmatpush1.msra.mxu0 0.0
        %2816 = vmatprep.subr.mxu0 0.0
        %2817 = vmatpush1.msra.mxu0 0.0
        %2818 = vmatprep.subr.mxu0 0.0
        %2819 = vmatpush1.msra.mxu0 0.0
        %2820 = vmatprep.subr.mxu0 0.0
        %2821 = vmatpush1.msra.mxu0 0.0
        %2822 = vmatprep.subr.mxu0 0.0
        %2823 = vmatpush1.msra.mxu0 0.0
        %2824 = vmatprep.subr.mxu0 0.0
        %2825 = vmatpush1.msra.mxu0 0.0
        %2826 = vmatprep.subr.mxu0 0.0
        %2827 = vmatpush1.msra.mxu0 0.0
        %2828 = vmatprep.subr.mxu0 0.0
        %2829 = vmatpush1.msra.mxu0 0.0
        %2830 = vmatprep.subr.mxu0 0.0
        %2831 = vmatpush1.msra.mxu0 0.0
        %2832 = vmatprep.subr.mxu0 0.0
        %2833 = vmatpush1.msra.mxu0 0.0
        %2834 = vmatprep.subr.mxu0 0.0
        %2835 = vmatpush1.msra.mxu0 0.0
        %2836 = vmatprep.subr.mxu0 0.0
        %2837 = vmatpush1.msra.mxu0 0.0
        %2838 = vmatprep.subr.mxu0 0.0
        %2839 = vmatpush1.msra.mxu0 0.0
        %2840 = vmatprep.mubr.f32.mxu0 0.0
        %2841 = vmatmul.mubr.f32.gmra.mrb[0].mxu0 %v2771
        %v2842 = vpop.f32.mrb[0].mxu0
        %v2843 = vadd.f32 0.0, %v2842
        %v2844 = vpop.f32.mrb[0].mxu0
        %2845 = vmatprep.mubr.f32.mxu0 0.0
        %2846 = vmatmul.mubr.f32.gmra.mrb[0].mxu0 %v2774
        %v2847 = vpop.f32.mrb[0].mxu0
        %v2848 = vadd.f32 0.0, %v2847
        %v2849 = vpop.f32.mrb[0].mxu0
        %2850 = vdwg.mxu0
        %v2851 = vsel %vm850, %v2843, %v2768
        %v2852 = vsel %vm851, %v2848, %v2769
        %2855 = vrot.lane.b32.xlu0 %v2061, 64
        %v2856 = vpop.permute.xlu0 %2855
        %2857 = vrot.lane.b32.xlu0 %v2062, 64
        %v2858 = vpop.permute.xlu0 %2857
        %v2862 = vsel %vm857, %v2851, 0
        %v2865 = vsel %vm857, %v2852, 0
        %2867 = vmatprep.subr.mxu0 0.0
        %2868 = vmatpush1.msra.mxu0 %v2856
        %2869 = vmatprep.subr.mxu0 0.0
        %2870 = vmatpush1.msra.mxu0 %v2858
        %2871 = vmatprep.subr.mxu0 0.0
        %2872 = vmatpush1.msra.mxu0 0.0
        %2873 = vmatprep.subr.mxu0 0.0
        %2874 = vmatpush1.msra.mxu0 0.0
        %2875 = vmatprep.subr.mxu0 0.0
        %2876 = vmatpush1.msra.mxu0 0.0
        %2877 = vmatprep.subr.mxu0 0.0
        %2878 = vmatpush1.msra.mxu0 0.0
        %2879 = vmatprep.subr.mxu0 0.0
        %2880 = vmatpush1.msra.mxu0 0.0
        %2881 = vmatprep.subr.mxu0 0.0
        %2882 = vmatpush1.msra.mxu0 0.0
        %2883 = vmatprep.subr.mxu0 0.0
        %2884 = vmatpush1.msra.mxu0 0.0
        %2885 = vmatprep.subr.mxu0 0.0
        %2886 = vmatpush1.msra.mxu0 0.0
        %2887 = vmatprep.subr.mxu0 0.0
        %2888 = vmatpush1.msra.mxu0 0.0
        %2889 = vmatprep.subr.mxu0 0.0
        %2890 = vmatpush1.msra.mxu0 0.0
        %2891 = vmatprep.subr.mxu0 0.0
        %2892 = vmatpush1.msra.mxu0 0.0
        %2893 = vmatprep.subr.mxu0 0.0
        %2894 = vmatpush1.msra.mxu0 0.0
        %2895 = vmatprep.subr.mxu0 0.0
        %2896 = vmatpush1.msra.mxu0 0.0
        %2897 = vmatprep.subr.mxu0 0.0
        %2898 = vmatpush1.msra.mxu0 0.0
        %2899 = vmatprep.subr.mxu0 0.0
        %2900 = vmatpush1.msra.mxu0 0.0
        %2901 = vmatprep.subr.mxu0 0.0
        %2902 = vmatpush1.msra.mxu0 0.0
        %2903 = vmatprep.subr.mxu0 0.0
        %2904 = vmatpush1.msra.mxu0 0.0
        %2905 = vmatprep.subr.mxu0 0.0
        %2906 = vmatpush1.msra.mxu0 0.0
        %2907 = vmatprep.subr.mxu0 0.0
        %2908 = vmatpush1.msra.mxu0 0.0
        %2909 = vmatprep.subr.mxu0 0.0
        %2910 = vmatpush1.msra.mxu0 0.0
        %2911 = vmatprep.subr.mxu0 0.0
        %2912 = vmatpush1.msra.mxu0 0.0
        %2913 = vmatprep.subr.mxu0 0.0
        %2914 = vmatpush1.msra.mxu0 0.0
        %2915 = vmatprep.subr.mxu0 0.0
        %2916 = vmatpush1.msra.mxu0 0.0
        %2917 = vmatprep.subr.mxu0 0.0
        %2918 = vmatpush1.msra.mxu0 0.0
        %2919 = vmatprep.subr.mxu0 0.0
        %2920 = vmatpush1.msra.mxu0 0.0
        %2921 = vmatprep.subr.mxu0 0.0
        %2922 = vmatpush1.msra.mxu0 0.0
        %2923 = vmatprep.subr.mxu0 0.0
        %2924 = vmatpush1.msra.mxu0 0.0
        %2925 = vmatprep.subr.mxu0 0.0
        %2926 = vmatpush1.msra.mxu0 0.0
        %2927 = vmatprep.subr.mxu0 0.0
        %2928 = vmatpush1.msra.mxu0 0.0
        %2929 = vmatprep.subr.mxu0 0.0
        %2930 = vmatpush1.msra.mxu0 0.0
        %2931 = vmatprep.mubr.f32.mxu0 0.0
        %2932 = vmatmul.mubr.f32.gmra.mrb[0].mxu0 %v2862
        %v2933 = vpop.f32.mrb[0].mxu0
        %v2934 = vadd.f32 0.0, %v2933
        %v2935 = vpop.f32.mrb[0].mxu0
        %2936 = vmatprep.mubr.f32.mxu0 0.0
        %2937 = vmatmul.mubr.f32.gmra.mrb[0].mxu0 %v2865
        %v2938 = vpop.f32.mrb[0].mxu0
        %v2939 = vadd.f32 0.0, %v2938
        %v2940 = vpop.f32.mrb[0].mxu0
        %2941 = vdwg.mxu0
        %v2942 = vld [vmem:[%s5] sm:$0xff]
        %v2943 = vld [vmem:[%s5 + $0x8] sm:$0xff]
        %v2944 = vld [vmem:[%s5 + $0x10] sm:$0xff]
        %v2945 = vld [vmem:[%s5 + $0x18] sm:$0xff]
        %v2946 = vlaneseq
        %v2947 = vshrl.u32 %v2946, 7
        %v2948 = vsub.s32 3, %v2947
        %v2949 = vrot.slane %v1950, %v2948
        %v2951 = vsel %vm1955, %v2934, 0
        %v2954 = vsel %vm1955, %v2939, 0
        %2956 = vmatprep.subr.mxu0 0.0
        %2957 = vmatpush1.msra.mxu0 %v2942
        %2958 = vmatprep.subr.mxu0 0.0
        %2959 = vmatpush1.msra.mxu0 %v2943
        %2960 = vmatprep.subr.mxu0 0.0
        %2961 = vmatpush1.msra.mxu0 %v2944
        %2962 = vmatprep.subr.mxu0 0.0
        %2963 = vmatpush1.msra.mxu0 %v2945
        %2964 = vmatprep.subr.mxu0 0.0
        %2965 = vmatpush1.msra.mxu0 0.0
        %2966 = vmatprep.subr.mxu0 0.0
        %2967 = vmatpush1.msra.mxu0 0.0
        %2968 = vmatprep.subr.mxu0 0.0
        %2969 = vmatpush1.msra.mxu0 0.0
        %2970 = vmatprep.subr.mxu0 0.0
        %2971 = vmatpush1.msra.mxu0 0.0
        %2972 = vmatprep.subr.mxu0 0.0
        %2973 = vmatpush1.msra.mxu0 0.0
        %2974 = vmatprep.subr.mxu0 0.0
        %2975 = vmatpush1.msra.mxu0 0.0
        %2976 = vmatprep.subr.mxu0 0.0
        %2977 = vmatpush1.msra.mxu0 0.0
        %2978 = vmatprep.subr.mxu0 0.0
        %2979 = vmatpush1.msra.mxu0 0.0
        %2980 = vmatprep.subr.mxu0 0.0
        %2981 = vmatpush1.msra.mxu0 0.0
        %2982 = vmatprep.subr.mxu0 0.0
        %2983 = vmatpush1.msra.mxu0 0.0
        %2984 = vmatprep.subr.mxu0 0.0
        %2985 = vmatpush1.msra.mxu0 0.0
        %2986 = vmatprep.subr.mxu0 0.0
        %2987 = vmatpush1.msra.mxu0 0.0
        %2988 = vmatprep.subr.mxu0 0.0
        %2989 = vmatpush1.msra.mxu0 0.0
        %2990 = vmatprep.subr.mxu0 0.0
        %2991 = vmatpush1.msra.mxu0 0.0
        %2992 = vmatprep.subr.mxu0 0.0
        %2993 = vmatpush1.msra.mxu0 0.0
        %2994 = vmatprep.subr.mxu0 0.0
        %2995 = vmatpush1.msra.mxu0 0.0
        %2996 = vmatprep.subr.mxu0 0.0
        %2997 = vmatpush1.msra.mxu0 0.0
        %2998 = vmatprep.subr.mxu0 0.0
        %2999 = vmatpush1.msra.mxu0 0.0
        %3000 = vmatprep.subr.mxu0 0.0
        %3001 = vmatpush1.msra.mxu0 0.0
        %3002 = vmatprep.subr.mxu0 0.0
        %3003 = vmatpush1.msra.mxu0 0.0
        %3004 = vmatprep.subr.mxu0 0.0
        %3005 = vmatpush1.msra.mxu0 0.0
        %3006 = vmatprep.subr.mxu0 0.0
        %3007 = vmatpush1.msra.mxu0 0.0
        %3008 = vmatprep.subr.mxu0 0.0
        %3009 = vmatpush1.msra.mxu0 0.0
        %3010 = vmatprep.subr.mxu0 0.0
        %3011 = vmatpush1.msra.mxu0 0.0
        %3012 = vmatprep.subr.mxu0 0.0
        %3013 = vmatpush1.msra.mxu0 0.0
        %3014 = vmatprep.subr.mxu0 0.0
        %3015 = vmatpush1.msra.mxu0 0.0
        %3016 = vmatprep.subr.mxu0 0.0
        %3017 = vmatpush1.msra.mxu0 0.0
        %3018 = vmatprep.subr.mxu0 0.0
        %3019 = vmatpush1.msra.mxu0 0.0
        %3020 = vmatprep.mubr.f32.mxu0 0.0
        %3021 = vmatmul.mubr.f32.gmra.mrb[0].mxu0 %v2951
        %v3022 = vpop.f32.mrb[0].mxu0
        %v3023 = vadd.f32 %v2949, %v3022
        %v3024 = vpop.f32.mrb[0].mxu0
        %3025 = vmatprep.mubr.f32.mxu0 0.0
        %3026 = vmatmul.mubr.f32.gmra.mrb[0].mxu0 %v2954
        %v3027 = vpop.f32.mrb[0].mxu0
        %v3028 = vadd.f32 %v2949, %v3027
        %v3029 = vpop.f32.mrb[0].mxu0
        %3030 = vdwg.mxu0
        %v3031 = vadd.f32 %v1538, %v3023
        %v3032 = vadd.f32 %v1539, %v3028
        %3033 = vmatprep.subr.mxu0 0.0
        %3034 = vmatpush1.msra.mxu0 %v3031
        %3035 = vmatprep.subr.mxu0 0.0
        %3036 = vmatpush1.msra.mxu0 %v3032
        %3037 = vmatprep.subr.mxu0 0.0
        %3038 = vmatpush1.msra.mxu0 0.0
        %3039 = vmatprep.subr.mxu0 0.0
        %3040 = vmatpush1.msra.mxu0 0.0
        %3041 = vmatprep.subr.mxu0 0.0
        %3042 = vmatpush1.msra.mxu0 0.0
        %3043 = vmatprep.subr.mxu0 0.0
        %3044 = vmatpush1.msra.mxu0 0.0
        %3045 = vmatprep.subr.mxu0 0.0
        %3046 = vmatpush1.msra.mxu0 0.0
        %3047 = vmatprep.subr.mxu0 0.0
        %3048 = vmatpush1.msra.mxu0 0.0
        %3049 = vmatprep.subr.mxu0 0.0
        %3050 = vmatpush1.msra.mxu0 0.0
        %3051 = vmatprep.subr.mxu0 0.0
        %3052 = vmatpush1.msra.mxu0 0.0
        %3053 = vmatprep.subr.mxu0 0.0
        %3054 = vmatpush1.msra.mxu0 0.0
        %3055 = vmatprep.subr.mxu0 0.0
        %3056 = vmatpush1.msra.mxu0 0.0
        %3057 = vmatprep.subr.mxu0 0.0
        %3058 = vmatpush1.msra.mxu0 0.0
        %3059 = vmatprep.subr.mxu0 0.0
        %3060 = vmatpush1.msra.mxu0 0.0
        %3061 = vmatprep.subr.mxu0 0.0
        %3062 = vmatpush1.msra.mxu0 0.0
        %3063 = vmatprep.subr.mxu0 0.0
        %3064 = vmatpush1.msra.mxu0 0.0
        %3065 = vmatprep.subr.mxu0 0.0
        %3066 = vmatpush1.msra.mxu0 0.0
        %3067 = vmatprep.subr.mxu0 0.0
        %3068 = vmatpush1.msra.mxu0 0.0
        %3069 = vmatprep.subr.mxu0 0.0
        %3070 = vmatpush1.msra.mxu0 0.0
        %3071 = vmatprep.subr.mxu0 0.0
        %3072 = vmatpush1.msra.mxu0 0.0
        %3073 = vmatprep.subr.mxu0 0.0
        %3074 = vmatpush1.msra.mxu0 0.0
        %3075 = vmatprep.subr.mxu0 0.0
        %3076 = vmatpush1.msra.mxu0 0.0
        %3077 = vmatprep.subr.mxu0 0.0
        %3078 = vmatpush1.msra.mxu0 0.0
        %3079 = vmatprep.subr.mxu0 0.0
        %3080 = vmatpush1.msra.mxu0 0.0
        %3081 = vmatprep.subr.mxu0 0.0
        %3082 = vmatpush1.msra.mxu0 0.0
        %3083 = vmatprep.subr.mxu0 0.0
        %3084 = vmatpush1.msra.mxu0 0.0
        %3085 = vmatprep.subr.mxu0 0.0
        %3086 = vmatpush1.msra.mxu0 0.0
        %3087 = vmatprep.subr.mxu0 0.0
        %3088 = vmatpush1.msra.mxu0 0.0
        %3089 = vmatprep.subr.mxu0 0.0
        %3090 = vmatpush1.msra.mxu0 0.0
        %3091 = vmatprep.subr.mxu0 0.0
        %3092 = vmatpush1.msra.mxu0 0.0
        %3093 = vmatprep.subr.mxu0 0.0
        %3094 = vmatpush1.msra.mxu0 0.0
        %3095 = vmatprep.subr.mxu0 0.0
        %3096 = vmatpush1.msra.mxu0 0.0
        %3097 = vmatprep.mubr.f32.mxu0 0.0
        %3098 = vmatmul.mubr.f32.gmra.mrb[0].mxu0 %v859
        %v3099 = vpop.f32.mrb[0].mxu0
        %v3100 = vadd.f32 0.0, %v3099
        %v3101 = vpop.f32.mrb[0].mxu0
        %3102 = vmatprep.mubr.f32.mxu0 0.0
        %3103 = vmatmul.mubr.f32.gmra.mrb[0].mxu0 %v862
        %v3104 = vpop.f32.mrb[0].mxu0
        %v3105 = vadd.f32 0.0, %v3104
        %v3106 = vpop.f32.mrb[0].mxu0
        %3107 = vdwg.mxu0
        %v3108 = vsub.f32 %v3031, %v3100
        %v3109 = vsub.f32 %v3032, %v3105
        %v3110 = vld [vmem:[%s6] sm:$0xff]
        %v3111 = vld [vmem:[%s6 + $0x8] sm:$0xff]
        %v3112 = vld [vmem:[%s6 + $0x10] sm:$0xff]
        %v3113 = vld [vmem:[%s6 + $0x18] sm:$0xff]
        %v3115 = vsel %vm1955, %v3108, 0
        %v3118 = vsel %vm1955, %v3109, 0
        %3120 = vmatprep.subr.mxu0 0.0
        %3121 = vmatpush1.msra.mxu0 %v3110
        %3122 = vmatprep.subr.mxu0 0.0
        %3123 = vmatpush1.msra.mxu0 %v3111
        %3124 = vmatprep.subr.mxu0 0.0
        %3125 = vmatpush1.msra.mxu0 %v3112
        %3126 = vmatprep.subr.mxu0 0.0
        %3127 = vmatpush1.msra.mxu0 %v3113
        %3128 = vmatprep.subr.mxu0 0.0
        %3129 = vmatpush1.msra.mxu0 0.0
        %3130 = vmatprep.subr.mxu0 0.0
        %3131 = vmatpush1.msra.mxu0 0.0
        %3132 = vmatprep.subr.mxu0 0.0
        %3133 = vmatpush1.msra.mxu0 0.0
        %3134 = vmatprep.subr.mxu0 0.0
        %3135 = vmatpush1.msra.mxu0 0.0
        %3136 = vmatprep.subr.mxu0 0.0
        %3137 = vmatpush1.msra.mxu0 0.0
        %3138 = vmatprep.subr.mxu0 0.0
        %3139 = vmatpush1.msra.mxu0 0.0
        %3140 = vmatprep.subr.mxu0 0.0
        %3141 = vmatpush1.msra.mxu0 0.0
        %3142 = vmatprep.subr.mxu0 0.0
        %3143 = vmatpush1.msra.mxu0 0.0
        %3144 = vmatprep.subr.mxu0 0.0
        %3145 = vmatpush1.msra.mxu0 0.0
        %3146 = vmatprep.subr.mxu0 0.0
        %3147 = vmatpush1.msra.mxu0 0.0
        %3148 = vmatprep.subr.mxu0 0.0
        %3149 = vmatpush1.msra.mxu0 0.0
        %3150 = vmatprep.subr.mxu0 0.0
        %3151 = vmatpush1.msra.mxu0 0.0
        %3152 = vmatprep.subr.mxu0 0.0
        %3153 = vmatpush1.msra.mxu0 0.0
        %3154 = vmatprep.subr.mxu0 0.0
        %3155 = vmatpush1.msra.mxu0 0.0
        %3156 = vmatprep.subr.mxu0 0.0
        %3157 = vmatpush1.msra.mxu0 0.0
        %3158 = vmatprep.subr.mxu0 0.0
        %3159 = vmatpush1.msra.mxu0 0.0
        %3160 = vmatprep.subr.mxu0 0.0
        %3161 = vmatpush1.msra.mxu0 0.0
        %3162 = vmatprep.subr.mxu0 0.0
        %3163 = vmatpush1.msra.mxu0 0.0
        %3164 = vmatprep.subr.mxu0 0.0
        %3165 = vmatpush1.msra.mxu0 0.0
        %3166 = vmatprep.subr.mxu0 0.0
        %3167 = vmatpush1.msra.mxu0 0.0
        %3168 = vmatprep.subr.mxu0 0.0
        %3169 = vmatpush1.msra.mxu0 0.0
        %3170 = vmatprep.subr.mxu0 0.0
        %3171 = vmatpush1.msra.mxu0 0.0
        %3172 = vmatprep.subr.mxu0 0.0
        %3173 = vmatpush1.msra.mxu0 0.0
        %3174 = vmatprep.subr.mxu0 0.0
        %3175 = vmatpush1.msra.mxu0 0.0
        %3176 = vmatprep.subr.mxu0 0.0
        %3177 = vmatpush1.msra.mxu0 0.0
        %3178 = vmatprep.subr.mxu0 0.0
        %3179 = vmatpush1.msra.mxu0 0.0
        %3180 = vmatprep.subr.mxu0 0.0
        %3181 = vmatpush1.msra.mxu0 0.0
        %3182 = vmatprep.subr.mxu0 0.0
        %3183 = vmatpush1.msra.mxu0 0.0
        %3184 = vmatprep.mubr.f32.mxu0 0.0
        %3185 = vmatmul.mubr.f32.gmra.mrb[0].mxu0 %v3115
        %v3186 = vpop.f32.mrb[0].mxu0
        %v3187 = vadd.f32 0.0, %v3186
        %v3188 = vpop.f32.mrb[0].mxu0
        %3189 = vmatprep.mubr.f32.mxu0 0.0
        %3190 = vmatmul.mubr.f32.gmra.mrb[0].mxu0 %v3118
        %v3191 = vpop.f32.mrb[0].mxu0
        %v3192 = vadd.f32 0.0, %v3191
        %v3193 = vpop.f32.mrb[0].mxu0
        %3194 = vdwg.mxu0
        %v3195 = vmax.f32 %v3187, 0.0
        %v3196 = vmax.f32 %v3192, 0.0
        %v3197 = vld [vmem:[%s7] sm:$0xff]
        %v3198 = vld [vmem:[%s7 + $0x8] sm:$0xff]
        %v3199 = vld [vmem:[%s7 + $0x10] sm:$0xff]
        %v3200 = vld [vmem:[%s7 + $0x18] sm:$0xff]
        %v3201 = vld [vmem:[%s7 + $0x20] sm:$0xff]
        %v3202 = vld [vmem:[%s7 + $0x28] sm:$0xff]
        %v3203 = vld [vmem:[%s7 + $0x30] sm:$0xff]
        %v3204 = vld [vmem:[%s7 + $0x38] sm:$0xff]
        %vm3205 = vcmask 523264
        %v3207 = vsel %vm3205, %v3195, 0
        %v3210 = vsel %vm3205, %v3196, 0
        %3212 = vmatprep.subr.mxu0 0.0
        %3213 = vmatpush1.msra.mxu0 %v3197
        %3214 = vmatprep.subr.mxu0 0.0
        %3215 = vmatpush1.msra.mxu0 %v3198
        %3216 = vmatprep.subr.mxu0 0.0
        %3217 = vmatpush1.msra.mxu0 %v3199
        %3218 = vmatprep.subr.mxu0 0.0
        %3219 = vmatpush1.msra.mxu0 %v3200
        %3220 = vmatprep.subr.mxu0 0.0
        %3221 = vmatpush1.msra.mxu0 %v3201
        %3222 = vmatprep.subr.mxu0 0.0
        %3223 = vmatpush1.msra.mxu0 %v3202
        %3224 = vmatprep.subr.mxu0 0.0
        %3225 = vmatpush1.msra.mxu0 %v3203
        %3226 = vmatprep.subr.mxu0 0.0
        %3227 = vmatpush1.msra.mxu0 %v3204
        %3228 = vmatprep.subr.mxu0 0.0
        %3229 = vmatpush1.msra.mxu0 0.0
        %3230 = vmatprep.subr.mxu0 0.0
        %3231 = vmatpush1.msra.mxu0 0.0
        %3232 = vmatprep.subr.mxu0 0.0
        %3233 = vmatpush1.msra.mxu0 0.0
        %3234 = vmatprep.subr.mxu0 0.0
        %3235 = vmatpush1.msra.mxu0 0.0
        %3236 = vmatprep.subr.mxu0 0.0
        %3237 = vmatpush1.msra.mxu0 0.0
        %3238 = vmatprep.subr.mxu0 0.0
        %3239 = vmatpush1.msra.mxu0 0.0
        %3240 = vmatprep.subr.mxu0 0.0
        %3241 = vmatpush1.msra.mxu0 0.0
        %3242 = vmatprep.subr.mxu0 0.0
        %3243 = vmatpush1.msra.mxu0 0.0
        %3244 = vmatprep.subr.mxu0 0.0
        %3245 = vmatpush1.msra.mxu0 0.0
        %3246 = vmatprep.subr.mxu0 0.0
        %3247 = vmatpush1.msra.mxu0 0.0
        %3248 = vmatprep.subr.mxu0 0.0
        %3249 = vmatpush1.msra.mxu0 0.0
        %3250 = vmatprep.subr.mxu0 0.0
        %3251 = vmatpush1.msra.mxu0 0.0
        %3252 = vmatprep.subr.mxu0 0.0
        %3253 = vmatpush1.msra.mxu0 0.0
        %3254 = vmatprep.subr.mxu0 0.0
        %3255 = vmatpush1.msra.mxu0 0.0
        %3256 = vmatprep.subr.mxu0 0.0
        %3257 = vmatpush1.msra.mxu0 0.0
        %3258 = vmatprep.subr.mxu0 0.0
        %3259 = vmatpush1.msra.mxu0 0.0
        %3260 = vmatprep.subr.mxu0 0.0
        %3261 = vmatpush1.msra.mxu0 0.0
        %3262 = vmatprep.subr.mxu0 0.0
        %3263 = vmatpush1.msra.mxu0 0.0
        %3264 = vmatprep.subr.mxu0 0.0
        %3265 = vmatpush1.msra.mxu0 0.0
        %3266 = vmatprep.subr.mxu0 0.0
        %3267 = vmatpush1.msra.mxu0 0.0
        %3268 = vmatprep.subr.mxu0 0.0
        %3269 = vmatpush1.msra.mxu0 0.0
        %3270 = vmatprep.subr.mxu0 0.0
        %3271 = vmatpush1.msra.mxu0 0.0
        %3272 = vmatprep.subr.mxu0 0.0
        %3273 = vmatpush1.msra.mxu0 0.0
        %3274 = vmatprep.subr.mxu0 0.0
        %3275 = vmatpush1.msra.mxu0 0.0
        %3276 = vmatprep.mubr.f32.mxu0 0.0
        %3277 = vmatmul.mubr.f32.gmra.mrb[0].mxu0 %v3207
        %v3278 = vpop.f32.mrb[0].mxu0
        %v3279 = vadd.f32 0.0, %v3278
        %v3280 = vpop.f32.mrb[0].mxu0
        %3281 = vmatprep.mubr.f32.mxu0 0.0
        %3282 = vmatmul.mubr.f32.gmra.mrb[0].mxu0 %v3210
        %v3283 = vpop.f32.mrb[0].mxu0
        %v3284 = vadd.f32 0.0, %v3283
        %v3285 = vpop.f32.mrb[0].mxu0
        %3286 = vdwg.mxu0
        %v3287 = vadd.f32 %v3108, %v3279
        %v3288 = vadd.f32 %v3109, %v3284
        %3289 = vmatprep.subr.mxu0 0.0
        %3290 = vmatpush1.msra.mxu0 %v3287
        %3291 = vmatprep.subr.mxu0 0.0
        %3292 = vmatpush1.msra.mxu0 %v3288
        %3293 = vmatprep.subr.mxu0 0.0
        %3294 = vmatpush1.msra.mxu0 0.0
        %3295 = vmatprep.subr.mxu0 0.0
        %3296 = vmatpush1.msra.mxu0 0.0
        %3297 = vmatprep.subr.mxu0 0.0
        %3298 = vmatpush1.msra.mxu0 0.0
        %3299 = vmatprep.subr.mxu0 0.0
        %3300 = vmatpush1.msra.mxu0 0.0
        %3301 = vmatprep.subr.mxu0 0.0
        %3302 = vmatpush1.msra.mxu0 0.0
        %3303 = vmatprep.subr.mxu0 0.0
        %3304 = vmatpush1.msra.mxu0 0.0
        %3305 = vmatprep.subr.mxu0 0.0
        %3306 = vmatpush1.msra.mxu0 0.0
        %3307 = vmatprep.subr.mxu0 0.0
        %3308 = vmatpush1.msra.mxu0 0.0
        %3309 = vmatprep.subr.mxu0 0.0
        %3310 = vmatpush1.msra.mxu0 0.0
        %3311 = vmatprep.subr.mxu0 0.0
        %3312 = vmatpush1.msra.mxu0 0.0
        %3313 = vmatprep.subr.mxu0 0.0
        %3314 = vmatpush1.msra.mxu0 0.0
        %3315 = vmatprep.subr.mxu0 0.0
        %3316 = vmatpush1.msra.mxu0 0.0
        %3317 = vmatprep.subr.mxu0 0.0
        %3318 = vmatpush1.msra.mxu0 0.0
        %3319 = vmatprep.subr.mxu0 0.0
        %3320 = vmatpush1.msra.mxu0 0.0
        %3321 = vmatprep.subr.mxu0 0.0
        %3322 = vmatpush1.msra.mxu0 0.0
        %3323 = vmatprep.subr.mxu0 0.0
        %3324 = vmatpush1.msra.mxu0 0.0
        %3325 = vmatprep.subr.mxu0 0.0
        %3326 = vmatpush1.msra.mxu0 0.0
        %3327 = vmatprep.subr.mxu0 0.0
        %3328 = vmatpush1.msra.mxu0 0.0
        %3329 = vmatprep.subr.mxu0 0.0
        %3330 = vmatpush1.msra.mxu0 0.0
        %3331 = vmatprep.subr.mxu0 0.0
        %3332 = vmatpush1.msra.mxu0 0.0
        %3333 = vmatprep.subr.mxu0 0.0
        %3334 = vmatpush1.msra.mxu0 0.0
        %3335 = vmatprep.subr.mxu0 0.0
        %3336 = vmatpush1.msra.mxu0 0.0
        %3337 = vmatprep.subr.mxu0 0.0
        %3338 = vmatpush1.msra.mxu0 0.0
        %3339 = vmatprep.subr.mxu0 0.0
        %3340 = vmatpush1.msra.mxu0 0.0
        %3341 = vmatprep.subr.mxu0 0.0
        %3342 = vmatpush1.msra.mxu0 0.0
        %3343 = vmatprep.subr.mxu0 0.0
        %3344 = vmatpush1.msra.mxu0 0.0
        %3345 = vmatprep.subr.mxu0 0.0
        %3346 = vmatpush1.msra.mxu0 0.0
        %3347 = vmatprep.subr.mxu0 0.0
        %3348 = vmatpush1.msra.mxu0 0.0
        %3349 = vmatprep.subr.mxu0 0.0
        %3350 = vmatpush1.msra.mxu0 0.0
        %3351 = vmatprep.subr.mxu0 0.0
        %3352 = vmatpush1.msra.mxu0 0.0
        %3353 = vmatprep.mubr.f32.mxu0 0.0
        %3354 = vmatmul.mubr.f32.gmra.mrb[0].mxu0 %v859
        %v3355 = vpop.f32.mrb[0].mxu0
        %v3356 = vadd.f32 0.0, %v3355
        %v3357 = vpop.f32.mrb[0].mxu0
        %3358 = vmatprep.mubr.f32.mxu0 0.0
        %3359 = vmatmul.mubr.f32.gmra.mrb[0].mxu0 %v862
        %v3360 = vpop.f32.mrb[0].mxu0
        %v3361 = vadd.f32 0.0, %v3360
        %v3362 = vpop.f32.mrb[0].mxu0
        %3363 = vdwg.mxu0
        %v3364 = vsub.f32 %v3287, %v3356
        %v3365 = vsub.f32 %v3288, %v3361
        %v3366 = vld [vmem:[#allocation4] sm:$0x3]
        %v3367 = vsel %vm1955, %v3364, 0.0
        %3368 = vadd.xlane.f32.xlu0 %v3367
        %v3369 = vpop.xlane.xlu0 %3368
        %v3370 = vsel %vm1955, %v3365, 0.0
        %3371 = vadd.xlane.f32.xlu0 %v3370
        %v3372 = vpop.xlane.xlu0 %3371
        %v3373 = vrcp.pop 32.0
        %v3374 = vmul.f32 %v3369, %v3373
        %v3375 = vmul.f32 %v3372, %v3373
        %v3376 = vsub.f32 %v3364, %v3374
        %v3377 = vsub.f32 %v3365, %v3375
        %v3378 = vmul.f32 %v3376, %v3376
        %v3379 = vmul.f32 %v3377, %v3377
        %v3380 = vsel %vm1955, %v3378, 0.0
        %3381 = vadd.xlane.f32.xlu0 %v3380
        %v3382 = vpop.xlane.xlu0 %3381
        %v3383 = vsel %vm1955, %v3379, 0.0
        %3384 = vadd.xlane.f32.xlu0 %v3383
        %v3385 = vpop.xlane.xlu0 %3384
        %v3386 = vmul.f32 %v3382, %v3373
        %v3387 = vmul.f32 %v3385, %v3373
        %v3388 = vadd.f32 %v3386, 1e-05
        %v3389 = vadd.f32 %v3387, 1e-05
        %v3390 = vrsqrt.pop %v3388
        %v3391 = vrsqrt.pop %v3389
        %v3392 = vmul.f32 %v3376, %v3390
        %v3393 = vmul.f32 %v3377, %v3391
        %v3394 = vlaneseq
        %v3395 = vshrl.u32 %v3394, 7
        %v3396 = vsub.s32 0, %v3395
        %v3397 = vrot.slane %v3366, %v3396
        %v3398 = vmul.f32 %v3392, %v3397
        %v3399 = vmul.f32 %v3393, %v3397
        %v3400 = vlaneseq
        %v3401 = vshrl.u32 %v3400, 7
        %v3402 = vsub.s32 1, %v3401
        %v3403 = vrot.slane %v3366, %v3402
        %v3404 = vadd.f32 %v3398, %v3403
        %v3405 = vadd.f32 %v3399, %v3403
        %v3406 = vsel %vm1955, %v3404, 0.0
        %v3407 = vsel %vm1955, %v3405, 0.0
        %v3408 = vadd.f32 %v3406, %v3407
        %v3409 = vrot.slane %v3408, 4
        %v3410 = vadd.f32 %v3408, %v3409
        %v3411 = vrot.slane %v3410, 2
        %v3412 = vadd.f32 %v3410, %v3411
        %v3413 = vrot.slane %v3412, 1
        %v3414 = vadd.f32 %v3412, %v3413
        %v3415 = vmul.f32 %v3414, %v951
        %v3416 = vsub.f32 %v3404, %v3415
        %v3417 = vsub.f32 %v3405, %v3415
        %v3418 = vld [vmem:[#allocation12] sm:$0xff]
        %v3419 = vld [vmem:[%s10] sm:$0xff]
        %v3420 = vld [vmem:[%s10 + $0x8] sm:$0xff]
        %v3421 = vld [vmem:[%s10 + $0x10] sm:$0xff]
        %v3422 = vld [vmem:[%s10 + $0x18] sm:$0xff]
        %v3424 = vsel %vm1955, %v1948, 0
        %v3427 = vsel %vm1955, %v1949, 0
        %3429 = vmatprep.subr.mxu0 0.0
        %3430 = vmatpush1.msra.mxu0 %v3419
        %3431 = vmatprep.subr.mxu0 0.0
        %3432 = vmatpush1.msra.mxu0 %v3420
        %3433 = vmatprep.subr.mxu0 0.0
        %3434 = vmatpush1.msra.mxu0 %v3421
        %3435 = vmatprep.subr.mxu0 0.0
        %3436 = vmatpush1.msra.mxu0 %v3422
        %3437 = vmatprep.subr.mxu0 0.0
        %3438 = vmatpush1.msra.mxu0 0.0
        %3439 = vmatprep.subr.mxu0 0.0
        %3440 = vmatpush1.msra.mxu0 0.0
        %3441 = vmatprep.subr.mxu0 0.0
        %3442 = vmatpush1.msra.mxu0 0.0
        %3443 = vmatprep.subr.mxu0 0.0
        %3444 = vmatpush1.msra.mxu0 0.0
        %3445 = vmatprep.subr.mxu0 0.0
        %3446 = vmatpush1.msra.mxu0 0.0
        %3447 = vmatprep.subr.mxu0 0.0
        %3448 = vmatpush1.msra.mxu0 0.0
        %3449 = vmatprep.subr.mxu0 0.0
        %3450 = vmatpush1.msra.mxu0 0.0
        %3451 = vmatprep.subr.mxu0 0.0
        %3452 = vmatpush1.msra.mxu0 0.0
        %3453 = vmatprep.subr.mxu0 0.0
        %3454 = vmatpush1.msra.mxu0 0.0
        %3455 = vmatprep.subr.mxu0 0.0
        %3456 = vmatpush1.msra.mxu0 0.0
        %3457 = vmatprep.subr.mxu0 0.0
        %3458 = vmatpush1.msra.mxu0 0.0
        %3459 = vmatprep.subr.mxu0 0.0
        %3460 = vmatpush1.msra.mxu0 0.0
        %3461 = vmatprep.subr.mxu0 0.0
        %3462 = vmatpush1.msra.mxu0 0.0
        %3463 = vmatprep.subr.mxu0 0.0
        %3464 = vmatpush1.msra.mxu0 0.0
        %3465 = vmatprep.subr.mxu0 0.0
        %3466 = vmatpush1.msra.mxu0 0.0
        %3467 = vmatprep.subr.mxu0 0.0
        %3468 = vmatpush1.msra.mxu0 0.0
        %3469 = vmatprep.subr.mxu0 0.0
        %3470 = vmatpush1.msra.mxu0 0.0
        %3471 = vmatprep.subr.mxu0 0.0
        %3472 = vmatpush1.msra.mxu0 0.0
        %3473 = vmatprep.subr.mxu0 0.0
        %3474 = vmatpush1.msra.mxu0 0.0
        %3475 = vmatprep.subr.mxu0 0.0
        %3476 = vmatpush1.msra.mxu0 0.0
        %3477 = vmatprep.subr.mxu0 0.0
        %3478 = vmatpush1.msra.mxu0 0.0
        %3479 = vmatprep.subr.mxu0 0.0
        %3480 = vmatpush1.msra.mxu0 0.0
        %3481 = vmatprep.subr.mxu0 0.0
        %3482 = vmatpush1.msra.mxu0 0.0
        %3483 = vmatprep.subr.mxu0 0.0
        %3484 = vmatpush1.msra.mxu0 0.0
        %3485 = vmatprep.subr.mxu0 0.0
        %3486 = vmatpush1.msra.mxu0 0.0
        %3487 = vmatprep.subr.mxu0 0.0
        %3488 = vmatpush1.msra.mxu0 0.0
        %3489 = vmatprep.subr.mxu0 0.0
        %3490 = vmatpush1.msra.mxu0 0.0
        %3491 = vmatprep.subr.mxu0 0.0
        %3492 = vmatpush1.msra.mxu0 0.0
        %3493 = vmatprep.mubr.f32.mxu0 0.0
        %3494 = vmatmul.mubr.f32.gmra.mrb[0].mxu0 %v3424
        %v3495 = vpop.f32.mrb[0].mxu0
        %v3496 = vadd.f32 0.0, %v3495
        %v3497 = vpop.f32.mrb[0].mxu0
        %3498 = vmatprep.mubr.f32.mxu0 0.0
        %3499 = vmatmul.mubr.f32.gmra.mrb[0].mxu0 %v3427
        %v3500 = vpop.f32.mrb[0].mxu0
        %v3501 = vadd.f32 0.0, %v3500
        %v3502 = vpop.f32.mrb[0].mxu0
        %3503 = vdwg.mxu0
        %v3504 = vlaneseq
        %v3505 = vshrl.u32 %v3504, 7
        %v3506 = vsub.s32 0, %v3505
        %v3507 = vrot.slane %v3418, %v3506
        %v3508 = vadd.f32 %v3496, %v3507
        %v3509 = vadd.f32 %v3501, %v3507
        %v3510 = vlaneseq
        %v3511 = vshrl.u32 %v3510, 7
        %v3512 = vsub.s32 1, %v3511
        %v3513 = vrot.slane %v3418, %v3512
        %3515 = vrot.lane.b32.xlu0 %v3513, 32
        %v3516 = vpop.permute.xlu0 %3515
        %v3518 = vadd.f32 %v3496, %v3516
        %v3519 = vadd.f32 %v3501, %v3516
        %v3520 = vlaneseq
        %v3521 = vshrl.u32 %v3520, 7
        %v3522 = vsub.s32 2, %v3521
        %v3523 = vrot.slane %v3418, %v3522
        %3525 = vrot.lane.b32.xlu0 %v3523, 64
        %v3526 = vpop.permute.xlu0 %3525
        %v3528 = vadd.f32 %v3496, %v3526
        %v3529 = vadd.f32 %v3501, %v3526
        %3532 = vrot.lane.b32.xlu0 %v3518, 96
        %v3533 = vpop.permute.xlu0 %3532
        %3534 = vrot.lane.b32.xlu0 %v3519, 96
        %v3535 = vpop.permute.xlu0 %3534
        %v3536 = vsel %vm1955, %v3533, 0
        %v3538 = vsel %vm1955, %v3535, 0
        %v3541 = vsel %vm1955, %v3508, 0
        %v3544 = vsel %vm1955, %v3509, 0
        %3546 = vmatprep.subr.mxu0 0.0
        %3547 = vmatpush1.xpose.msra.mxu0 %v3541
        %3548 = vmatprep.subr.mxu0 0.0
        %3549 = vmatpush1.xpose.msra.mxu0 %v3544
        %3550 = vmatprep.subr.mxu0 0.0
        %3551 = vmatpush1.xpose.msra.mxu0 0.0
        %3552 = vmatprep.subr.mxu0 0.0
        %3553 = vmatpush1.xpose.msra.mxu0 0.0
        %3554 = vmatprep.subr.mxu0 0.0
        %3555 = vmatpush1.xpose.msra.mxu0 0.0
        %3556 = vmatprep.subr.mxu0 0.0
        %3557 = vmatpush1.xpose.msra.mxu0 0.0
        %3558 = vmatprep.subr.mxu0 0.0
        %3559 = vmatpush1.xpose.msra.mxu0 0.0
        %3560 = vmatprep.subr.mxu0 0.0
        %3561 = vmatpush1.xpose.msra.mxu0 0.0
        %3562 = vmatprep.subr.mxu0 0.0
        %3563 = vmatpush1.xpose.msra.mxu0 0.0
        %3564 = vmatprep.subr.mxu0 0.0
        %3565 = vmatpush1.xpose.msra.mxu0 0.0
        %3566 = vmatprep.subr.mxu0 0.0
        %3567 = vmatpush1.xpose.msra.mxu0 0.0
        %3568 = vmatprep.subr.mxu0 0.0
        %3569 = vmatpush1.xpose.msra.mxu0 0.0
        %3570 = vmatprep.subr.mxu0 0.0
        %3571 = vmatpush1.xpose.msra.mxu0 0.0
        %3572 = vmatprep.subr.mxu0 0.0
        %3573 = vmatpush1.xpose.msra.mxu0 0.0
        %3574 = vmatprep.subr.mxu0 0.0
        %3575 = vmatpush1.xpose.msra.mxu0 0.0
        %3576 = vmatprep.subr.mxu0 0.0
        %3577 = vmatpush1.xpose.msra.mxu0 0.0
        %3578 = vmatprep.subr.mxu0 0.0
        %3579 = vmatpush1.xpose.msra.mxu0 0.0
        %3580 = vmatprep.subr.mxu0 0.0
        %3581 = vmatpush1.xpose.msra.mxu0 0.0
        %3582 = vmatprep.subr.mxu0 0.0
        %3583 = vmatpush1.xpose.msra.mxu0 0.0
        %3584 = vmatprep.subr.mxu0 0.0
        %3585 = vmatpush1.xpose.msra.mxu0 0.0
        %3586 = vmatprep.subr.mxu0 0.0
        %3587 = vmatpush1.xpose.msra.mxu0 0.0
        %3588 = vmatprep.subr.mxu0 0.0
        %3589 = vmatpush1.xpose.msra.mxu0 0.0
        %3590 = vmatprep.subr.mxu0 0.0
        %3591 = vmatpush1.xpose.msra.mxu0 0.0
        %3592 = vmatprep.subr.mxu0 0.0
        %3593 = vmatpush1.xpose.msra.mxu0 0.0
        %3594 = vmatprep.subr.mxu0 0.0
        %3595 = vmatpush1.xpose.msra.mxu0 0.0
        %3596 = vmatprep.subr.mxu0 0.0
        %3597 = vmatpush1.xpose.msra.mxu0 0.0
        %3598 = vmatprep.subr.mxu0 0.0
        %3599 = vmatpush1.xpose.msra.mxu0 0.0
        %3600 = vmatprep.subr.mxu0 0.0
        %3601 = vmatpush1.xpose.msra.mxu0 0.0
        %3602 = vmatprep.subr.mxu0 0.0
        %3603 = vmatpush1.xpose.msra.mxu0 0.0
        %3604 = vmatprep.subr.mxu0 0.0
        %3605 = vmatpush1.xpose.msra.mxu0 0.0
        %3606 = vmatprep.subr.mxu0 0.0
        %3607 = vmatpush1.xpose.msra.mxu0 0.0
        %3608 = vmatprep.subr.mxu0 0.0
        %3609 = vmatpush1.xpose.msra.mxu0 0.0
        %3610 = vmatprep.mubr.f32.mxu0 0.0
        %3611 = vmatmul.mubr.f32.gmra.mrb[0].mxu0 %v3536
        %v3612 = vpop.f32.mrb[0].mxu0
        %v3613 = vadd.f32 0.0, %v3612
        %v3614 = vpop.f32.mrb[0].mxu0
        %3615 = vmatprep.mubr.f32.mxu0 0.0
        %3616 = vmatmul.mubr.f32.gmra.mrb[0].mxu0 %v3538
        %v3617 = vpop.f32.mrb[0].mxu0
        %v3618 = vadd.f32 0.0, %v3617
        %v3619 = vpop.f32.mrb[0].mxu0
        %3620 = vdwg.mxu0
        %v3622 = vsel %vm857, %v3613, 0
        %v3625 = vsel %vm857, %v3618, 0
        %3627 = vmatprep.subr.mxu0 0.0
        %3628 = vmatpush1.msra.mxu0 %v764
        %3629 = vmatprep.subr.mxu0 0.0
        %3630 = vmatpush1.msra.mxu0 %v765
        %3631 = vmatprep.subr.mxu0 0.0
        %3632 = vmatpush1.msra.mxu0 0.0
        %3633 = vmatprep.subr.mxu0 0.0
        %3634 = vmatpush1.msra.mxu0 0.0
        %3635 = vmatprep.subr.mxu0 0.0
        %3636 = vmatpush1.msra.mxu0 0.0
        %3637 = vmatprep.subr.mxu0 0.0
        %3638 = vmatpush1.msra.mxu0 0.0
        %3639 = vmatprep.subr.mxu0 0.0
        %3640 = vmatpush1.msra.mxu0 0.0
        %3641 = vmatprep.subr.mxu0 0.0
        %3642 = vmatpush1.msra.mxu0 0.0
        %3643 = vmatprep.subr.mxu0 0.0
        %3644 = vmatpush1.msra.mxu0 0.0
        %3645 = vmatprep.subr.mxu0 0.0
        %3646 = vmatpush1.msra.mxu0 0.0
        %3647 = vmatprep.subr.mxu0 0.0
        %3648 = vmatpush1.msra.mxu0 0.0
        %3649 = vmatprep.subr.mxu0 0.0
        %3650 = vmatpush1.msra.mxu0 0.0
        %3651 = vmatprep.subr.mxu0 0.0
        %3652 = vmatpush1.msra.mxu0 0.0
        %3653 = vmatprep.subr.mxu0 0.0
        %3654 = vmatpush1.msra.mxu0 0.0
        %3655 = vmatprep.subr.mxu0 0.0
        %3656 = vmatpush1.msra.mxu0 0.0
        %3657 = vmatprep.subr.mxu0 0.0
        %3658 = vmatpush1.msra.mxu0 0.0
        %3659 = vmatprep.subr.mxu0 0.0
        %3660 = vmatpush1.msra.mxu0 0.0
        %3661 = vmatprep.subr.mxu0 0.0
        %3662 = vmatpush1.msra.mxu0 0.0
        %3663 = vmatprep.subr.mxu0 0.0
        %3664 = vmatpush1.msra.mxu0 0.0
        %3665 = vmatprep.subr.mxu0 0.0
        %3666 = vmatpush1.msra.mxu0 0.0
        %3667 = vmatprep.subr.mxu0 0.0
        %3668 = vmatpush1.msra.mxu0 0.0
        %3669 = vmatprep.subr.mxu0 0.0
        %3670 = vmatpush1.msra.mxu0 0.0
        %3671 = vmatprep.subr.mxu0 0.0
        %3672 = vmatpush1.msra.mxu0 0.0
        %3673 = vmatprep.subr.mxu0 0.0
        %3674 = vmatpush1.msra.mxu0 0.0
        %3675 = vmatprep.subr.mxu0 0.0
        %3676 = vmatpush1.msra.mxu0 0.0
        %3677 = vmatprep.subr.mxu0 0.0
        %3678 = vmatpush1.msra.mxu0 0.0
        %3679 = vmatprep.subr.mxu0 0.0
        %3680 = vmatpush1.msra.mxu0 0.0
        %3681 = vmatprep.subr.mxu0 0.0
        %3682 = vmatpush1.msra.mxu0 0.0
        %3683 = vmatprep.subr.mxu0 0.0
        %3684 = vmatpush1.msra.mxu0 0.0
        %3685 = vmatprep.subr.mxu0 0.0
        %3686 = vmatpush1.msra.mxu0 0.0
        %3687 = vmatprep.subr.mxu0 0.0
        %3688 = vmatpush1.msra.mxu0 0.0
        %3689 = vmatprep.subr.mxu0 0.0
        %3690 = vmatpush1.msra.mxu0 0.0
        %3691 = vmatprep.mubr.f32.mxu0 0.0
        %3692 = vmatmul.mubr.f32.gmra.mrb[0].mxu0 %v3622
        %v3693 = vpop.f32.mrb[0].mxu0
        %v3694 = vadd.f32 0.0, %v3693
        %v3695 = vpop.f32.mrb[0].mxu0
        %3696 = vmatprep.mubr.f32.mxu0 0.0
        %3697 = vmatmul.mubr.f32.gmra.mrb[0].mxu0 %v3625
        %v3698 = vpop.f32.mrb[0].mxu0
        %v3699 = vadd.f32 0.0, %v3698
        %v3700 = vpop.f32.mrb[0].mxu0
        %3701 = vdwg.mxu0
        %v3702 = vsel %vm805, %v3694, %v3613
        %v3703 = vsel %vm806, %v3699, %v3618
        %v3705 = vsel %vm857, %v3702, 0
        %v3708 = vsel %vm857, %v3703, 0
        %3710 = vmatprep.subr.mxu0 0.0
        %3711 = vmatpush1.msra.mxu0 %v767
        %3712 = vmatprep.subr.mxu0 0.0
        %3713 = vmatpush1.msra.mxu0 %v768
        %3714 = vmatprep.subr.mxu0 0.0
        %3715 = vmatpush1.msra.mxu0 0.0
        %3716 = vmatprep.subr.mxu0 0.0
        %3717 = vmatpush1.msra.mxu0 0.0
        %3718 = vmatprep.subr.mxu0 0.0
        %3719 = vmatpush1.msra.mxu0 0.0
        %3720 = vmatprep.subr.mxu0 0.0
        %3721 = vmatpush1.msra.mxu0 0.0
        %3722 = vmatprep.subr.mxu0 0.0
        %3723 = vmatpush1.msra.mxu0 0.0
        %3724 = vmatprep.subr.mxu0 0.0
        %3725 = vmatpush1.msra.mxu0 0.0
        %3726 = vmatprep.subr.mxu0 0.0
        %3727 = vmatpush1.msra.mxu0 0.0
        %3728 = vmatprep.subr.mxu0 0.0
        %3729 = vmatpush1.msra.mxu0 0.0
        %3730 = vmatprep.subr.mxu0 0.0
        %3731 = vmatpush1.msra.mxu0 0.0
        %3732 = vmatprep.subr.mxu0 0.0
        %3733 = vmatpush1.msra.mxu0 0.0
        %3734 = vmatprep.subr.mxu0 0.0
        %3735 = vmatpush1.msra.mxu0 0.0
        %3736 = vmatprep.subr.mxu0 0.0
        %3737 = vmatpush1.msra.mxu0 0.0
        %3738 = vmatprep.subr.mxu0 0.0
        %3739 = vmatpush1.msra.mxu0 0.0
        %3740 = vmatprep.subr.mxu0 0.0
        %3741 = vmatpush1.msra.mxu0 0.0
        %3742 = vmatprep.subr.mxu0 0.0
        %3743 = vmatpush1.msra.mxu0 0.0
        %3744 = vmatprep.subr.mxu0 0.0
        %3745 = vmatpush1.msra.mxu0 0.0
        %3746 = vmatprep.subr.mxu0 0.0
        %3747 = vmatpush1.msra.mxu0 0.0
        %3748 = vmatprep.subr.mxu0 0.0
        %3749 = vmatpush1.msra.mxu0 0.0
        %3750 = vmatprep.subr.mxu0 0.0
        %3751 = vmatpush1.msra.mxu0 0.0
        %3752 = vmatprep.subr.mxu0 0.0
        %3753 = vmatpush1.msra.mxu0 0.0
        %3754 = vmatprep.subr.mxu0 0.0
        %3755 = vmatpush1.msra.mxu0 0.0
        %3756 = vmatprep.subr.mxu0 0.0
        %3757 = vmatpush1.msra.mxu0 0.0
        %3758 = vmatprep.subr.mxu0 0.0
        %3759 = vmatpush1.msra.mxu0 0.0
        %3760 = vmatprep.subr.mxu0 0.0
        %3761 = vmatpush1.msra.mxu0 0.0
        %3762 = vmatprep.subr.mxu0 0.0
        %3763 = vmatpush1.msra.mxu0 0.0
        %3764 = vmatprep.subr.mxu0 0.0
        %3765 = vmatpush1.msra.mxu0 0.0
        %3766 = vmatprep.subr.mxu0 0.0
        %3767 = vmatpush1.msra.mxu0 0.0
        %3768 = vmatprep.subr.mxu0 0.0
        %3769 = vmatpush1.msra.mxu0 0.0
        %3770 = vmatprep.subr.mxu0 0.0
        %3771 = vmatpush1.msra.mxu0 0.0
        %3772 = vmatprep.subr.mxu0 0.0
        %3773 = vmatpush1.msra.mxu0 0.0
        %3774 = vmatprep.mubr.f32.mxu0 0.0
        %3775 = vmatmul.mubr.f32.gmra.mrb[0].mxu0 %v3705
        %v3776 = vpop.f32.mrb[0].mxu0
        %v3777 = vadd.f32 0.0, %v3776
        %v3778 = vpop.f32.mrb[0].mxu0
        %3779 = vmatprep.mubr.f32.mxu0 0.0
        %3780 = vmatmul.mubr.f32.gmra.mrb[0].mxu0 %v3708
        %v3781 = vpop.f32.mrb[0].mxu0
        %v3782 = vadd.f32 0.0, %v3781
        %v3783 = vpop.f32.mrb[0].mxu0
        %3784 = vdwg.mxu0
        %v3785 = vsel %vm820, %v3777, %v3702
        %v3786 = vsel %vm821, %v3782, %v3703
        %v3788 = vsel %vm857, %v3785, 0
        %v3791 = vsel %vm857, %v3786, 0
        %3793 = vmatprep.subr.mxu0 0.0
        %3794 = vmatpush1.msra.mxu0 %v770
        %3795 = vmatprep.subr.mxu0 0.0
        %3796 = vmatpush1.msra.mxu0 %v771
        %3797 = vmatprep.subr.mxu0 0.0
        %3798 = vmatpush1.msra.mxu0 0.0
        %3799 = vmatprep.subr.mxu0 0.0
        %3800 = vmatpush1.msra.mxu0 0.0
        %3801 = vmatprep.subr.mxu0 0.0
        %3802 = vmatpush1.msra.mxu0 0.0
        %3803 = vmatprep.subr.mxu0 0.0
        %3804 = vmatpush1.msra.mxu0 0.0
        %3805 = vmatprep.subr.mxu0 0.0
        %3806 = vmatpush1.msra.mxu0 0.0
        %3807 = vmatprep.subr.mxu0 0.0
        %3808 = vmatpush1.msra.mxu0 0.0
        %3809 = vmatprep.subr.mxu0 0.0
        %3810 = vmatpush1.msra.mxu0 0.0
        %3811 = vmatprep.subr.mxu0 0.0
        %3812 = vmatpush1.msra.mxu0 0.0
        %3813 = vmatprep.subr.mxu0 0.0
        %3814 = vmatpush1.msra.mxu0 0.0
        %3815 = vmatprep.subr.mxu0 0.0
        %3816 = vmatpush1.msra.mxu0 0.0
        %3817 = vmatprep.subr.mxu0 0.0
        %3818 = vmatpush1.msra.mxu0 0.0
        %3819 = vmatprep.subr.mxu0 0.0
        %3820 = vmatpush1.msra.mxu0 0.0
        %3821 = vmatprep.subr.mxu0 0.0
        %3822 = vmatpush1.msra.mxu0 0.0
        %3823 = vmatprep.subr.mxu0 0.0
        %3824 = vmatpush1.msra.mxu0 0.0
        %3825 = vmatprep.subr.mxu0 0.0
        %3826 = vmatpush1.msra.mxu0 0.0
        %3827 = vmatprep.subr.mxu0 0.0
        %3828 = vmatpush1.msra.mxu0 0.0
        %3829 = vmatprep.subr.mxu0 0.0
        %3830 = vmatpush1.msra.mxu0 0.0
        %3831 = vmatprep.subr.mxu0 0.0
        %3832 = vmatpush1.msra.mxu0 0.0
        %3833 = vmatprep.subr.mxu0 0.0
        %3834 = vmatpush1.msra.mxu0 0.0
        %3835 = vmatprep.subr.mxu0 0.0
        %3836 = vmatpush1.msra.mxu0 0.0
        %3837 = vmatprep.subr.mxu0 0.0
        %3838 = vmatpush1.msra.mxu0 0.0
        %3839 = vmatprep.subr.mxu0 0.0
        %3840 = vmatpush1.msra.mxu0 0.0
        %3841 = vmatprep.subr.mxu0 0.0
        %3842 = vmatpush1.msra.mxu0 0.0
        %3843 = vmatprep.subr.mxu0 0.0
        %3844 = vmatpush1.msra.mxu0 0.0
        %3845 = vmatprep.subr.mxu0 0.0
        %3846 = vmatpush1.msra.mxu0 0.0
        %3847 = vmatprep.subr.mxu0 0.0
        %3848 = vmatpush1.msra.mxu0 0.0
        %3849 = vmatprep.subr.mxu0 0.0
        %3850 = vmatpush1.msra.mxu0 0.0
        %3851 = vmatprep.subr.mxu0 0.0
        %3852 = vmatpush1.msra.mxu0 0.0
        %3853 = vmatprep.subr.mxu0 0.0
        %3854 = vmatpush1.msra.mxu0 0.0
        %3855 = vmatprep.subr.mxu0 0.0
        %3856 = vmatpush1.msra.mxu0 0.0
        %3857 = vmatprep.mubr.f32.mxu0 0.0
        %3858 = vmatmul.mubr.f32.gmra.mrb[0].mxu0 %v3788
        %v3859 = vpop.f32.mrb[0].mxu0
        %v3860 = vadd.f32 0.0, %v3859
        %v3861 = vpop.f32.mrb[0].mxu0
        %3862 = vmatprep.mubr.f32.mxu0 0.0
        %3863 = vmatmul.mubr.f32.gmra.mrb[0].mxu0 %v3791
        %v3864 = vpop.f32.mrb[0].mxu0
        %v3865 = vadd.f32 0.0, %v3864
        %v3866 = vpop.f32.mrb[0].mxu0
        %3867 = vdwg.mxu0
        %v3868 = vsel %vm835, %v3860, %v3785
        %v3869 = vsel %vm836, %v3865, %v3786
        %v3871 = vsel %vm857, %v3868, 0
        %v3874 = vsel %vm857, %v3869, 0
        %3876 = vmatprep.subr.mxu0 0.0
        %3877 = vmatpush1.msra.mxu0 %v773
        %3878 = vmatprep.subr.mxu0 0.0
        %3879 = vmatpush1.msra.mxu0 %v774
        %3880 = vmatprep.subr.mxu0 0.0
        %3881 = vmatpush1.msra.mxu0 0.0
        %3882 = vmatprep.subr.mxu0 0.0
        %3883 = vmatpush1.msra.mxu0 0.0
        %3884 = vmatprep.subr.mxu0 0.0
        %3885 = vmatpush1.msra.mxu0 0.0
        %3886 = vmatprep.subr.mxu0 0.0
        %3887 = vmatpush1.msra.mxu0 0.0
        %3888 = vmatprep.subr.mxu0 0.0
        %3889 = vmatpush1.msra.mxu0 0.0
        %3890 = vmatprep.subr.mxu0 0.0
        %3891 = vmatpush1.msra.mxu0 0.0
        %3892 = vmatprep.subr.mxu0 0.0
        %3893 = vmatpush1.msra.mxu0 0.0
        %3894 = vmatprep.subr.mxu0 0.0
        %3895 = vmatpush1.msra.mxu0 0.0
        %3896 = vmatprep.subr.mxu0 0.0
        %3897 = vmatpush1.msra.mxu0 0.0
        %3898 = vmatprep.subr.mxu0 0.0
        %3899 = vmatpush1.msra.mxu0 0.0
        %3900 = vmatprep.subr.mxu0 0.0
        %3901 = vmatpush1.msra.mxu0 0.0
        %3902 = vmatprep.subr.mxu0 0.0
        %3903 = vmatpush1.msra.mxu0 0.0
        %3904 = vmatprep.subr.mxu0 0.0
        %3905 = vmatpush1.msra.mxu0 0.0
        %3906 = vmatprep.subr.mxu0 0.0
        %3907 = vmatpush1.msra.mxu0 0.0
        %3908 = vmatprep.subr.mxu0 0.0
        %3909 = vmatpush1.msra.mxu0 0.0
        %3910 = vmatprep.subr.mxu0 0.0
        %3911 = vmatpush1.msra.mxu0 0.0
        %3912 = vmatprep.subr.mxu0 0.0
        %3913 = vmatpush1.msra.mxu0 0.0
        %3914 = vmatprep.subr.mxu0 0.0
        %3915 = vmatpush1.msra.mxu0 0.0
        %3916 = vmatprep.subr.mxu0 0.0
        %3917 = vmatpush1.msra.mxu0 0.0
        %3918 = vmatprep.subr.mxu0 0.0
        %3919 = vmatpush1.msra.mxu0 0.0
        %3920 = vmatprep.subr.mxu0 0.0
        %3921 = vmatpush1.msra.mxu0 0.0
        %3922 = vmatprep.subr.mxu0 0.0
        %3923 = vmatpush1.msra.mxu0 0.0
        %3924 = vmatprep.subr.mxu0 0.0
        %3925 = vmatpush1.msra.mxu0 0.0
        %3926 = vmatprep.subr.mxu0 0.0
        %3927 = vmatpush1.msra.mxu0 0.0
        %3928 = vmatprep.subr.mxu0 0.0
        %3929 = vmatpush1.msra.mxu0 0.0
        %3930 = vmatprep.subr.mxu0 0.0
        %3931 = vmatpush1.msra.mxu0 0.0
        %3932 = vmatprep.subr.mxu0 0.0
        %3933 = vmatpush1.msra.mxu0 0.0
        %3934 = vmatprep.subr.mxu0 0.0
        %3935 = vmatpush1.msra.mxu0 0.0
        %3936 = vmatprep.subr.mxu0 0.0
        %3937 = vmatpush1.msra.mxu0 0.0
        %3938 = vmatprep.subr.mxu0 0.0
        %3939 = vmatpush1.msra.mxu0 0.0
        %3940 = vmatprep.mubr.f32.mxu0 0.0
        %3941 = vmatmul.mubr.f32.gmra.mrb[0].mxu0 %v3871
        %v3942 = vpop.f32.mrb[0].mxu0
        %v3943 = vadd.f32 0.0, %v3942
        %v3944 = vpop.f32.mrb[0].mxu0
        %3945 = vmatprep.mubr.f32.mxu0 0.0
        %3946 = vmatmul.mubr.f32.gmra.mrb[0].mxu0 %v3874
        %v3947 = vpop.f32.mrb[0].mxu0
        %v3948 = vadd.f32 0.0, %v3947
        %v3949 = vpop.f32.mrb[0].mxu0
        %3950 = vdwg.mxu0
        %v3951 = vsel %vm850, %v3943, %v3868
        %v3952 = vsel %vm851, %v3948, %v3869
        %v3953 = vsel %vm857, %v3951, 0.0
        %v3954 = vsel %vm857, %v3952, 0.0
        %v3955 = vadd.f32 %v3953, %v3954
        %v3956 = vrot.slane %v3955, 4
        %v3957 = vadd.f32 %v3955, %v3956
        %v3958 = vrot.slane %v3957, 2
        %v3959 = vadd.f32 %v3957, %v3958
        %v3960 = vrot.slane %v3959, 1
        %v3961 = vadd.f32 %v3959, %v3960
        %v3962 = vmul.f32 %v3961, 0.03125
        %v3963 = vsel %vm857, %v3962, -inf
        %3964 = vmax.xlane.f32.xlu0 %v3963
        %v3965 = vpop.xlane.xlu0 %3964
        %vm3966 = vcmp.ge.f32.partialorder %v3962, %v3965
        %v3967 = vsel %vm3966, 1, 0
        %v3968 = vcvt.s32.f32 %v3967
        %vm3969 = vcmp.gt.f32.partialorder %v3968, 0.0
        %v3970 = vsel %vm3969, -1e+30, %v3962
        %v3971 = vsel %vm857, %v3970, -inf
        %3972 = vmax.xlane.f32.xlu0 %v3971
        %v3973 = vpop.xlane.xlu0 %3972
        %vm3974 = vcmp.ge.f32.partialorder %v3970, %v3973
        %v3975 = vsel %vm3974, 1, 0
        %v3976 = vcvt.s32.f32 %v3975
        %v3977 = vsub.f32 %v3965, %v3965
        %v3978 = vmul.f32 %v3977, 1.442695
        %v3979 = vpow.pop %v3978
        %v3980 = vsub.f32 %v3973, %v3965
        %v3981 = vmul.f32 %v3980, 1.442695
        %v3982 = vpow.pop %v3981
        %v3983 = vadd.f32 %v3979, %v3982
        %v3984 = vrcp.pop %v3983
        %v3985 = vmul.f32 1.0, %v3984
        %v3986 = vmul.f32 %v3979, %v3985
        %v3987 = vmul.f32 %v3968, %v3986
        %v3988 = vmul.f32 %v3982, %v3985
        %v3989 = vmul.f32 %v3976, %v3988
        %v3990 = vadd.f32 %v3987, %v3989
        %v3992 = vsel %vm857, %v3990, 0
        %3994 = vmatprep.subr.mxu0 0.0
        %3995 = vmatpush1.msra.mxu0 %v776
        %3996 = vmatprep.subr.mxu0 0.0
        %3997 = vmatpush1.msra.mxu0 %v777
        %3998 = vmatprep.subr.mxu0 0.0
        %3999 = vmatpush1.msra.mxu0 0.0
        %4000 = vmatprep.subr.mxu0 0.0
        %4001 = vmatpush1.msra.mxu0 0.0
        %4002 = vmatprep.subr.mxu0 0.0
        %4003 = vmatpush1.msra.mxu0 0.0
        %4004 = vmatprep.subr.mxu0 0.0
        %4005 = vmatpush1.msra.mxu0 0.0
        %4006 = vmatprep.subr.mxu0 0.0
        %4007 = vmatpush1.msra.mxu0 0.0
        %4008 = vmatprep.subr.mxu0 0.0
        %4009 = vmatpush1.msra.mxu0 0.0
        %4010 = vmatprep.subr.mxu0 0.0
        %4011 = vmatpush1.msra.mxu0 0.0
        %4012 = vmatprep.subr.mxu0 0.0
        %4013 = vmatpush1.msra.mxu0 0.0
        %4014 = vmatprep.subr.mxu0 0.0
        %4015 = vmatpush1.msra.mxu0 0.0
        %4016 = vmatprep.subr.mxu0 0.0
        %4017 = vmatpush1.msra.mxu0 0.0
        %4018 = vmatprep.subr.mxu0 0.0
        %4019 = vmatpush1.msra.mxu0 0.0
        %4020 = vmatprep.subr.mxu0 0.0
        %4021 = vmatpush1.msra.mxu0 0.0
        %4022 = vmatprep.subr.mxu0 0.0
        %4023 = vmatpush1.msra.mxu0 0.0
        %4024 = vmatprep.subr.mxu0 0.0
        %4025 = vmatpush1.msra.mxu0 0.0
        %4026 = vmatprep.subr.mxu0 0.0
        %4027 = vmatpush1.msra.mxu0 0.0
        %4028 = vmatprep.subr.mxu0 0.0
        %4029 = vmatpush1.msra.mxu0 0.0
        %4030 = vmatprep.subr.mxu0 0.0
        %4031 = vmatpush1.msra.mxu0 0.0
        %4032 = vmatprep.subr.mxu0 0.0
        %4033 = vmatpush1.msra.mxu0 0.0
        %4034 = vmatprep.subr.mxu0 0.0
        %4035 = vmatpush1.msra.mxu0 0.0
        %4036 = vmatprep.subr.mxu0 0.0
        %4037 = vmatpush1.msra.mxu0 0.0
        %4038 = vmatprep.subr.mxu0 0.0
        %4039 = vmatpush1.msra.mxu0 0.0
        %4040 = vmatprep.subr.mxu0 0.0
        %4041 = vmatpush1.msra.mxu0 0.0
        %4042 = vmatprep.subr.mxu0 0.0
        %4043 = vmatpush1.msra.mxu0 0.0
        %4044 = vmatprep.subr.mxu0 0.0
        %4045 = vmatpush1.msra.mxu0 0.0
        %4046 = vmatprep.subr.mxu0 0.0
        %4047 = vmatpush1.msra.mxu0 0.0
        %4048 = vmatprep.subr.mxu0 0.0
        %4049 = vmatpush1.msra.mxu0 0.0
        %4050 = vmatprep.subr.mxu0 0.0
        %4051 = vmatpush1.msra.mxu0 0.0
        %4052 = vmatprep.subr.mxu0 0.0
        %4053 = vmatpush1.msra.mxu0 0.0
        %4054 = vmatprep.subr.mxu0 0.0
        %4055 = vmatpush1.msra.mxu0 0.0
        %4056 = vmatprep.subr.mxu0 0.0
        %4057 = vmatpush1.msra.mxu0 0.0
        %4058 = vmatprep.mubr.f32.mxu0 0.0
        %4059 = vmatmul.mubr.f32.gmra.mrb[0].mxu0 %v3992
        %v4060 = vpop.f32.mrb[0].mxu0
        %v4061 = vadd.f32 0.0, %v4060
        %v4062 = vpop.f32.mrb[0].mxu0
        %4063 = vmatprep.mubr.f32.mxu0 0.0
        %4064 = vmatmul.mubr.f32.gmra.mrb[0].mxu0 %v3992
        %v4065 = vpop.f32.mrb[0].mxu0
        %v4066 = vadd.f32 0.0, %v4065
        %v4067 = vpop.f32.mrb[0].mxu0
        %4068 = vdwg.mxu0
        %v4069 = vsel %vm805, %v4061, %v3990
        %v4070 = vsel %vm806, %v4066, %v3990
        %v4072 = vsel %vm857, %v4069, 0
        %v4075 = vsel %vm857, %v4070, 0
        %4077 = vmatprep.subr.mxu0 0.0
        %4078 = vmatpush1.msra.mxu0 %v779
        %4079 = vmatprep.subr.mxu0 0.0
        %4080 = vmatpush1.msra.mxu0 %v780
        %4081 = vmatprep.subr.mxu0 0.0
        %4082 = vmatpush1.msra.mxu0 0.0
        %4083 = vmatprep.subr.mxu0 0.0
        %4084 = vmatpush1.msra.mxu0 0.0
        %4085 = vmatprep.subr.mxu0 0.0
        %4086 = vmatpush1.msra.mxu0 0.0
        %4087 = vmatprep.subr.mxu0 0.0
        %4088 = vmatpush1.msra.mxu0 0.0
        %4089 = vmatprep.subr.mxu0 0.0
        %4090 = vmatpush1.msra.mxu0 0.0
        %4091 = vmatprep.subr.mxu0 0.0
        %4092 = vmatpush1.msra.mxu0 0.0
        %4093 = vmatprep.subr.mxu0 0.0
        %4094 = vmatpush1.msra.mxu0 0.0
        %4095 = vmatprep.subr.mxu0 0.0
        %4096 = vmatpush1.msra.mxu0 0.0
        %4097 = vmatprep.subr.mxu0 0.0
        %4098 = vmatpush1.msra.mxu0 0.0
        %4099 = vmatprep.subr.mxu0 0.0
        %4100 = vmatpush1.msra.mxu0 0.0
        %4101 = vmatprep.subr.mxu0 0.0
        %4102 = vmatpush1.msra.mxu0 0.0
        %4103 = vmatprep.subr.mxu0 0.0
        %4104 = vmatpush1.msra.mxu0 0.0
        %4105 = vmatprep.subr.mxu0 0.0
        %4106 = vmatpush1.msra.mxu0 0.0
        %4107 = vmatprep.subr.mxu0 0.0
        %4108 = vmatpush1.msra.mxu0 0.0
        %4109 = vmatprep.subr.mxu0 0.0
        %4110 = vmatpush1.msra.mxu0 0.0
        %4111 = vmatprep.subr.mxu0 0.0
        %4112 = vmatpush1.msra.mxu0 0.0
        %4113 = vmatprep.subr.mxu0 0.0
        %4114 = vmatpush1.msra.mxu0 0.0
        %4115 = vmatprep.subr.mxu0 0.0
        %4116 = vmatpush1.msra.mxu0 0.0
        %4117 = vmatprep.subr.mxu0 0.0
        %4118 = vmatpush1.msra.mxu0 0.0
        %4119 = vmatprep.subr.mxu0 0.0
        %4120 = vmatpush1.msra.mxu0 0.0
        %4121 = vmatprep.subr.mxu0 0.0
        %4122 = vmatpush1.msra.mxu0 0.0
        %4123 = vmatprep.subr.mxu0 0.0
        %4124 = vmatpush1.msra.mxu0 0.0
        %4125 = vmatprep.subr.mxu0 0.0
        %4126 = vmatpush1.msra.mxu0 0.0
        %4127 = vmatprep.subr.mxu0 0.0
        %4128 = vmatpush1.msra.mxu0 0.0
        %4129 = vmatprep.subr.mxu0 0.0
        %4130 = vmatpush1.msra.mxu0 0.0
        %4131 = vmatprep.subr.mxu0 0.0
        %4132 = vmatpush1.msra.mxu0 0.0
        %4133 = vmatprep.subr.mxu0 0.0
        %4134 = vmatpush1.msra.mxu0 0.0
        %4135 = vmatprep.subr.mxu0 0.0
        %4136 = vmatpush1.msra.mxu0 0.0
        %4137 = vmatprep.subr.mxu0 0.0
        %4138 = vmatpush1.msra.mxu0 0.0
        %4139 = vmatprep.subr.mxu0 0.0
        %4140 = vmatpush1.msra.mxu0 0.0
        %4141 = vmatprep.mubr.f32.mxu0 0.0
        %4142 = vmatmul.mubr.f32.gmra.mrb[0].mxu0 %v4072
        %v4143 = vpop.f32.mrb[0].mxu0
        %v4144 = vadd.f32 0.0, %v4143
        %v4145 = vpop.f32.mrb[0].mxu0
        %4146 = vmatprep.mubr.f32.mxu0 0.0
        %4147 = vmatmul.mubr.f32.gmra.mrb[0].mxu0 %v4075
        %v4148 = vpop.f32.mrb[0].mxu0
        %v4149 = vadd.f32 0.0, %v4148
        %v4150 = vpop.f32.mrb[0].mxu0
        %4151 = vdwg.mxu0
        %v4152 = vsel %vm820, %v4144, %v4069
        %v4153 = vsel %vm821, %v4149, %v4070
        %v4155 = vsel %vm857, %v4152, 0
        %v4158 = vsel %vm857, %v4153, 0
        %4160 = vmatprep.subr.mxu0 0.0
        %4161 = vmatpush1.msra.mxu0 %v782
        %4162 = vmatprep.subr.mxu0 0.0
        %4163 = vmatpush1.msra.mxu0 %v783
        %4164 = vmatprep.subr.mxu0 0.0
        %4165 = vmatpush1.msra.mxu0 0.0
        %4166 = vmatprep.subr.mxu0 0.0
        %4167 = vmatpush1.msra.mxu0 0.0
        %4168 = vmatprep.subr.mxu0 0.0
        %4169 = vmatpush1.msra.mxu0 0.0
        %4170 = vmatprep.subr.mxu0 0.0
        %4171 = vmatpush1.msra.mxu0 0.0
        %4172 = vmatprep.subr.mxu0 0.0
        %4173 = vmatpush1.msra.mxu0 0.0
        %4174 = vmatprep.subr.mxu0 0.0
        %4175 = vmatpush1.msra.mxu0 0.0
        %4176 = vmatprep.subr.mxu0 0.0
        %4177 = vmatpush1.msra.mxu0 0.0
        %4178 = vmatprep.subr.mxu0 0.0
        %4179 = vmatpush1.msra.mxu0 0.0
        %4180 = vmatprep.subr.mxu0 0.0
        %4181 = vmatpush1.msra.mxu0 0.0
        %4182 = vmatprep.subr.mxu0 0.0
        %4183 = vmatpush1.msra.mxu0 0.0
        %4184 = vmatprep.subr.mxu0 0.0
        %4185 = vmatpush1.msra.mxu0 0.0
        %4186 = vmatprep.subr.mxu0 0.0
        %4187 = vmatpush1.msra.mxu0 0.0
        %4188 = vmatprep.subr.mxu0 0.0
        %4189 = vmatpush1.msra.mxu0 0.0
        %4190 = vmatprep.subr.mxu0 0.0
        %4191 = vmatpush1.msra.mxu0 0.0
        %4192 = vmatprep.subr.mxu0 0.0
        %4193 = vmatpush1.msra.mxu0 0.0
        %4194 = vmatprep.subr.mxu0 0.0
        %4195 = vmatpush1.msra.mxu0 0.0
        %4196 = vmatprep.subr.mxu0 0.0
        %4197 = vmatpush1.msra.mxu0 0.0
        %4198 = vmatprep.subr.mxu0 0.0
        %4199 = vmatpush1.msra.mxu0 0.0
        %4200 = vmatprep.subr.mxu0 0.0
        %4201 = vmatpush1.msra.mxu0 0.0
        %4202 = vmatprep.subr.mxu0 0.0
        %4203 = vmatpush1.msra.mxu0 0.0
        %4204 = vmatprep.subr.mxu0 0.0
        %4205 = vmatpush1.msra.mxu0 0.0
        %4206 = vmatprep.subr.mxu0 0.0
        %4207 = vmatpush1.msra.mxu0 0.0
        %4208 = vmatprep.subr.mxu0 0.0
        %4209 = vmatpush1.msra.mxu0 0.0
        %4210 = vmatprep.subr.mxu0 0.0
        %4211 = vmatpush1.msra.mxu0 0.0
        %4212 = vmatprep.subr.mxu0 0.0
        %4213 = vmatpush1.msra.mxu0 0.0
        %4214 = vmatprep.subr.mxu0 0.0
        %4215 = vmatpush1.msra.mxu0 0.0
        %4216 = vmatprep.subr.mxu0 0.0
        %4217 = vmatpush1.msra.mxu0 0.0
        %4218 = vmatprep.subr.mxu0 0.0
        %4219 = vmatpush1.msra.mxu0 0.0
        %4220 = vmatprep.subr.mxu0 0.0
        %4221 = vmatpush1.msra.mxu0 0.0
        %4222 = vmatprep.subr.mxu0 0.0
        %4223 = vmatpush1.msra.mxu0 0.0
        %4224 = vmatprep.mubr.f32.mxu0 0.0
        %4225 = vmatmul.mubr.f32.gmra.mrb[0].mxu0 %v4155
        %v4226 = vpop.f32.mrb[0].mxu0
        %v4227 = vadd.f32 0.0, %v4226
        %v4228 = vpop.f32.mrb[0].mxu0
        %4229 = vmatprep.mubr.f32.mxu0 0.0
        %4230 = vmatmul.mubr.f32.gmra.mrb[0].mxu0 %v4158
        %v4231 = vpop.f32.mrb[0].mxu0
        %v4232 = vadd.f32 0.0, %v4231
        %v4233 = vpop.f32.mrb[0].mxu0
        %4234 = vdwg.mxu0
        %v4235 = vsel %vm835, %v4227, %v4152
        %v4236 = vsel %vm836, %v4232, %v4153
        %v4238 = vsel %vm857, %v4235, 0
        %v4241 = vsel %vm857, %v4236, 0
        %4243 = vmatprep.subr.mxu0 0.0
        %4244 = vmatpush1.msra.mxu0 %v785
        %4245 = vmatprep.subr.mxu0 0.0
        %4246 = vmatpush1.msra.mxu0 %v786
        %4247 = vmatprep.subr.mxu0 0.0
        %4248 = vmatpush1.msra.mxu0 0.0
        %4249 = vmatprep.subr.mxu0 0.0
        %4250 = vmatpush1.msra.mxu0 0.0
        %4251 = vmatprep.subr.mxu0 0.0
        %4252 = vmatpush1.msra.mxu0 0.0
        %4253 = vmatprep.subr.mxu0 0.0
        %4254 = vmatpush1.msra.mxu0 0.0
        %4255 = vmatprep.subr.mxu0 0.0
        %4256 = vmatpush1.msra.mxu0 0.0
        %4257 = vmatprep.subr.mxu0 0.0
        %4258 = vmatpush1.msra.mxu0 0.0
        %4259 = vmatprep.subr.mxu0 0.0
        %4260 = vmatpush1.msra.mxu0 0.0
        %4261 = vmatprep.subr.mxu0 0.0
        %4262 = vmatpush1.msra.mxu0 0.0
        %4263 = vmatprep.subr.mxu0 0.0
        %4264 = vmatpush1.msra.mxu0 0.0
        %4265 = vmatprep.subr.mxu0 0.0
        %4266 = vmatpush1.msra.mxu0 0.0
        %4267 = vmatprep.subr.mxu0 0.0
        %4268 = vmatpush1.msra.mxu0 0.0
        %4269 = vmatprep.subr.mxu0 0.0
        %4270 = vmatpush1.msra.mxu0 0.0
        %4271 = vmatprep.subr.mxu0 0.0
        %4272 = vmatpush1.msra.mxu0 0.0
        %4273 = vmatprep.subr.mxu0 0.0
        %4274 = vmatpush1.msra.mxu0 0.0
        %4275 = vmatprep.subr.mxu0 0.0
        %4276 = vmatpush1.msra.mxu0 0.0
        %4277 = vmatprep.subr.mxu0 0.0
        %4278 = vmatpush1.msra.mxu0 0.0
        %4279 = vmatprep.subr.mxu0 0.0
        %4280 = vmatpush1.msra.mxu0 0.0
        %4281 = vmatprep.subr.mxu0 0.0
        %4282 = vmatpush1.msra.mxu0 0.0
        %4283 = vmatprep.subr.mxu0 0.0
        %4284 = vmatpush1.msra.mxu0 0.0
        %4285 = vmatprep.subr.mxu0 0.0
        %4286 = vmatpush1.msra.mxu0 0.0
        %4287 = vmatprep.subr.mxu0 0.0
        %4288 = vmatpush1.msra.mxu0 0.0
        %4289 = vmatprep.subr.mxu0 0.0
        %4290 = vmatpush1.msra.mxu0 0.0
        %4291 = vmatprep.subr.mxu0 0.0
        %4292 = vmatpush1.msra.mxu0 0.0
        %4293 = vmatprep.subr.mxu0 0.0
        %4294 = vmatpush1.msra.mxu0 0.0
        %4295 = vmatprep.subr.mxu0 0.0
        %4296 = vmatpush1.msra.mxu0 0.0
        %4297 = vmatprep.subr.mxu0 0.0
        %4298 = vmatpush1.msra.mxu0 0.0
        %4299 = vmatprep.subr.mxu0 0.0
        %4300 = vmatpush1.msra.mxu0 0.0
        %4301 = vmatprep.subr.mxu0 0.0
        %4302 = vmatpush1.msra.mxu0 0.0
        %4303 = vmatprep.subr.mxu0 0.0
        %4304 = vmatpush1.msra.mxu0 0.0
        %4305 = vmatprep.subr.mxu0 0.0
        %4306 = vmatpush1.msra.mxu0 0.0
        %4307 = vmatprep.mubr.f32.mxu0 0.0
        %4308 = vmatmul.mubr.f32.gmra.mrb[0].mxu0 %v4238
        %v4309 = vpop.f32.mrb[0].mxu0
        %v4310 = vadd.f32 0.0, %v4309
        %v4311 = vpop.f32.mrb[0].mxu0
        %4312 = vmatprep.mubr.f32.mxu0 0.0
        %4313 = vmatmul.mubr.f32.gmra.mrb[0].mxu0 %v4241
        %v4314 = vpop.f32.mrb[0].mxu0
        %v4315 = vadd.f32 0.0, %v4314
        %v4316 = vpop.f32.mrb[0].mxu0
        %4317 = vdwg.mxu0
        %v4318 = vsel %vm850, %v4310, %v4235
        %v4319 = vsel %vm851, %v4315, %v4236
        %4322 = vrot.lane.b32.xlu0 %v3528, 64
        %v4323 = vpop.permute.xlu0 %4322
        %4324 = vrot.lane.b32.xlu0 %v3529, 64
        %v4325 = vpop.permute.xlu0 %4324
        %v4329 = vsel %vm857, %v4318, 0
        %v4332 = vsel %vm857, %v4319, 0
        %4334 = vmatprep.subr.mxu0 0.0
        %4335 = vmatpush1.msra.mxu0 %v4323
        %4336 = vmatprep.subr.mxu0 0.0
        %4337 = vmatpush1.msra.mxu0 %v4325
        %4338 = vmatprep.subr.mxu0 0.0
        %4339 = vmatpush1.msra.mxu0 0.0
        %4340 = vmatprep.subr.mxu0 0.0
        %4341 = vmatpush1.msra.mxu0 0.0
        %4342 = vmatprep.subr.mxu0 0.0
        %4343 = vmatpush1.msra.mxu0 0.0
        %4344 = vmatprep.subr.mxu0 0.0
        %4345 = vmatpush1.msra.mxu0 0.0
        %4346 = vmatprep.subr.mxu0 0.0
        %4347 = vmatpush1.msra.mxu0 0.0
        %4348 = vmatprep.subr.mxu0 0.0
        %4349 = vmatpush1.msra.mxu0 0.0
        %4350 = vmatprep.subr.mxu0 0.0
        %4351 = vmatpush1.msra.mxu0 0.0
        %4352 = vmatprep.subr.mxu0 0.0
        %4353 = vmatpush1.msra.mxu0 0.0
        %4354 = vmatprep.subr.mxu0 0.0
        %4355 = vmatpush1.msra.mxu0 0.0
        %4356 = vmatprep.subr.mxu0 0.0
        %4357 = vmatpush1.msra.mxu0 0.0
        %4358 = vmatprep.subr.mxu0 0.0
        %4359 = vmatpush1.msra.mxu0 0.0
        %4360 = vmatprep.subr.mxu0 0.0
        %4361 = vmatpush1.msra.mxu0 0.0
        %4362 = vmatprep.subr.mxu0 0.0
        %4363 = vmatpush1.msra.mxu0 0.0
        %4364 = vmatprep.subr.mxu0 0.0
        %4365 = vmatpush1.msra.mxu0 0.0
        %4366 = vmatprep.subr.mxu0 0.0
        %4367 = vmatpush1.msra.mxu0 0.0
        %4368 = vmatprep.subr.mxu0 0.0
        %4369 = vmatpush1.msra.mxu0 0.0
        %4370 = vmatprep.subr.mxu0 0.0
        %4371 = vmatpush1.msra.mxu0 0.0
        %4372 = vmatprep.subr.mxu0 0.0
        %4373 = vmatpush1.msra.mxu0 0.0
        %4374 = vmatprep.subr.mxu0 0.0
        %4375 = vmatpush1.msra.mxu0 0.0
        %4376 = vmatprep.subr.mxu0 0.0
        %4377 = vmatpush1.msra.mxu0 0.0
        %4378 = vmatprep.subr.mxu0 0.0
        %4379 = vmatpush1.msra.mxu0 0.0
        %4380 = vmatprep.subr.mxu0 0.0
        %4381 = vmatpush1.msra.mxu0 0.0
        %4382 = vmatprep.subr.mxu0 0.0
        %4383 = vmatpush1.msra.mxu0 0.0
        %4384 = vmatprep.subr.mxu0 0.0
        %4385 = vmatpush1.msra.mxu0 0.0
        %4386 = vmatprep.subr.mxu0 0.0
        %4387 = vmatpush1.msra.mxu0 0.0
        %4388 = vmatprep.subr.mxu0 0.0
        %4389 = vmatpush1.msra.mxu0 0.0
        %4390 = vmatprep.subr.mxu0 0.0
        %4391 = vmatpush1.msra.mxu0 0.0
        %4392 = vmatprep.subr.mxu0 0.0
        %4393 = vmatpush1.msra.mxu0 0.0
        %4394 = vmatprep.subr.mxu0 0.0
        %4395 = vmatpush1.msra.mxu0 0.0
        %4396 = vmatprep.subr.mxu0 0.0
        %4397 = vmatpush1.msra.mxu0 0.0
        %4398 = vmatprep.mubr.f32.mxu0 0.0
        %4399 = vmatmul.mubr.f32.gmra.mrb[0].mxu0 %v4329
        %v4400 = vpop.f32.mrb[0].mxu0
        %v4401 = vadd.f32 0.0, %v4400
        %v4402 = vpop.f32.mrb[0].mxu0
        %4403 = vmatprep.mubr.f32.mxu0 0.0
        %4404 = vmatmul.mubr.f32.gmra.mrb[0].mxu0 %v4332
        %v4405 = vpop.f32.mrb[0].mxu0
        %v4406 = vadd.f32 0.0, %v4405
        %v4407 = vpop.f32.mrb[0].mxu0
        %4408 = vdwg.mxu0
        %v4409 = vld [vmem:[#allocation6] sm:$0xff]
        %v4410 = vld [vmem:[#allocation6 + $0x8] sm:$0xff]
        %v4411 = vld [vmem:[#allocation6 + $0x10] sm:$0xff]
        %v4412 = vld [vmem:[#allocation6 + $0x18] sm:$0xff]
        %v4413 = vlaneseq
        %v4414 = vshrl.u32 %v4413, 7
        %v4415 = vsub.s32 3, %v4414
        %v4416 = vrot.slane %v3418, %v4415
        %v4418 = vsel %vm1955, %v4401, 0
        %v4421 = vsel %vm1955, %v4406, 0
        %4423 = vmatprep.subr.mxu0 0.0
        %4424 = vmatpush1.msra.mxu0 %v4409
        %4425 = vmatprep.subr.mxu0 0.0
        %4426 = vmatpush1.msra.mxu0 %v4410
        %4427 = vmatprep.subr.mxu0 0.0
        %4428 = vmatpush1.msra.mxu0 %v4411
        %4429 = vmatprep.subr.mxu0 0.0
        %4430 = vmatpush1.msra.mxu0 %v4412
        %4431 = vmatprep.subr.mxu0 0.0
        %4432 = vmatpush1.msra.mxu0 0.0
        %4433 = vmatprep.subr.mxu0 0.0
        %4434 = vmatpush1.msra.mxu0 0.0
        %4435 = vmatprep.subr.mxu0 0.0
        %4436 = vmatpush1.msra.mxu0 0.0
        %4437 = vmatprep.subr.mxu0 0.0
        %4438 = vmatpush1.msra.mxu0 0.0
        %4439 = vmatprep.subr.mxu0 0.0
        %4440 = vmatpush1.msra.mxu0 0.0
        %4441 = vmatprep.subr.mxu0 0.0
        %4442 = vmatpush1.msra.mxu0 0.0
        %4443 = vmatprep.subr.mxu0 0.0
        %4444 = vmatpush1.msra.mxu0 0.0
        %4445 = vmatprep.subr.mxu0 0.0
        %4446 = vmatpush1.msra.mxu0 0.0
        %4447 = vmatprep.subr.mxu0 0.0
        %4448 = vmatpush1.msra.mxu0 0.0
        %4449 = vmatprep.subr.mxu0 0.0
        %4450 = vmatpush1.msra.mxu0 0.0
        %4451 = vmatprep.subr.mxu0 0.0
        %4452 = vmatpush1.msra.mxu0 0.0
        %4453 = vmatprep.subr.mxu0 0.0
        %4454 = vmatpush1.msra.mxu0 0.0
        %4455 = vmatprep.subr.mxu0 0.0
        %4456 = vmatpush1.msra.mxu0 0.0
        %4457 = vmatprep.subr.mxu0 0.0
        %4458 = vmatpush1.msra.mxu0 0.0
        %4459 = vmatprep.subr.mxu0 0.0
        %4460 = vmatpush1.msra.mxu0 0.0
        %4461 = vmatprep.subr.mxu0 0.0
        %4462 = vmatpush1.msra.mxu0 0.0
        %4463 = vmatprep.subr.mxu0 0.0
        %4464 = vmatpush1.msra.mxu0 0.0
        %4465 = vmatprep.subr.mxu0 0.0
        %4466 = vmatpush1.msra.mxu0 0.0
        %4467 = vmatprep.subr.mxu0 0.0
        %4468 = vmatpush1.msra.mxu0 0.0
        %4469 = vmatprep.subr.mxu0 0.0
        %4470 = vmatpush1.msra.mxu0 0.0
        %4471 = vmatprep.subr.mxu0 0.0
        %4472 = vmatpush1.msra.mxu0 0.0
        %4473 = vmatprep.subr.mxu0 0.0
        %4474 = vmatpush1.msra.mxu0 0.0
        %4475 = vmatprep.subr.mxu0 0.0
        %4476 = vmatpush1.msra.mxu0 0.0
        %4477 = vmatprep.subr.mxu0 0.0
        %4478 = vmatpush1.msra.mxu0 0.0
        %4479 = vmatprep.subr.mxu0 0.0
        %4480 = vmatpush1.msra.mxu0 0.0
        %4481 = vmatprep.subr.mxu0 0.0
        %4482 = vmatpush1.msra.mxu0 0.0
        %4483 = vmatprep.subr.mxu0 0.0
        %4484 = vmatpush1.msra.mxu0 0.0
        %4485 = vmatprep.subr.mxu0 0.0
        %4486 = vmatpush1.msra.mxu0 0.0
        %4487 = vmatprep.mubr.f32.mxu0 0.0
        %4488 = vmatmul.mubr.f32.gmra.mrb[0].mxu0 %v4418
        %v4489 = vpop.f32.mrb[0].mxu0
        %v4490 = vadd.f32 %v4416, %v4489
        %v4491 = vpop.f32.mrb[0].mxu0
        %4492 = vmatprep.mubr.f32.mxu0 0.0
        %4493 = vmatmul.mubr.f32.gmra.mrb[0].mxu0 %v4421
        %v4494 = vpop.f32.mrb[0].mxu0
        %v4495 = vadd.f32 %v4416, %v4494
        %v4496 = vpop.f32.mrb[0].mxu0
        %4497 = vdwg.mxu0
        %v4498 = vadd.f32 %v1948, %v4490
        %v4499 = vadd.f32 %v1949, %v4495
        %4500 = vmatprep.subr.mxu0 0.0
        %4501 = vmatpush1.msra.mxu0 %v4498
        %4502 = vmatprep.subr.mxu0 0.0
        %4503 = vmatpush1.msra.mxu0 %v4499
        %4504 = vmatprep.subr.mxu0 0.0
        %4505 = vmatpush1.msra.mxu0 0.0
        %4506 = vmatprep.subr.mxu0 0.0
        %4507 = vmatpush1.msra.mxu0 0.0
        %4508 = vmatprep.subr.mxu0 0.0
        %4509 = vmatpush1.msra.mxu0 0.0
        %4510 = vmatprep.subr.mxu0 0.0
        %4511 = vmatpush1.msra.mxu0 0.0
        %4512 = vmatprep.subr.mxu0 0.0
        %4513 = vmatpush1.msra.mxu0 0.0
        %4514 = vmatprep.subr.mxu0 0.0
        %4515 = vmatpush1.msra.mxu0 0.0
        %4516 = vmatprep.subr.mxu0 0.0
        %4517 = vmatpush1.msra.mxu0 0.0
        %4518 = vmatprep.subr.mxu0 0.0
        %4519 = vmatpush1.msra.mxu0 0.0
        %4520 = vmatprep.subr.mxu0 0.0
        %4521 = vmatpush1.msra.mxu0 0.0
        %4522 = vmatprep.subr.mxu0 0.0
        %4523 = vmatpush1.msra.mxu0 0.0
        %4524 = vmatprep.subr.mxu0 0.0
        %4525 = vmatpush1.msra.mxu0 0.0
        %4526 = vmatprep.subr.mxu0 0.0
        %4527 = vmatpush1.msra.mxu0 0.0
        %4528 = vmatprep.subr.mxu0 0.0
        %4529 = vmatpush1.msra.mxu0 0.0
        %4530 = vmatprep.subr.mxu0 0.0
        %4531 = vmatpush1.msra.mxu0 0.0
        %4532 = vmatprep.subr.mxu0 0.0
        %4533 = vmatpush1.msra.mxu0 0.0
        %4534 = vmatprep.subr.mxu0 0.0
        %4535 = vmatpush1.msra.mxu0 0.0
        %4536 = vmatprep.subr.mxu0 0.0
        %4537 = vmatpush1.msra.mxu0 0.0
        %4538 = vmatprep.subr.mxu0 0.0
        %4539 = vmatpush1.msra.mxu0 0.0
        %4540 = vmatprep.subr.mxu0 0.0
        %4541 = vmatpush1.msra.mxu0 0.0
        %4542 = vmatprep.subr.mxu0 0.0
        %4543 = vmatpush1.msra.mxu0 0.0
        %4544 = vmatprep.subr.mxu0 0.0
        %4545 = vmatpush1.msra.mxu0 0.0
        %4546 = vmatprep.subr.mxu0 0.0
        %4547 = vmatpush1.msra.mxu0 0.0
        %4548 = vmatprep.subr.mxu0 0.0
        %4549 = vmatpush1.msra.mxu0 0.0
        %4550 = vmatprep.subr.mxu0 0.0
        %4551 = vmatpush1.msra.mxu0 0.0
        %4552 = vmatprep.subr.mxu0 0.0
        %4553 = vmatpush1.msra.mxu0 0.0
        %4554 = vmatprep.subr.mxu0 0.0
        %4555 = vmatpush1.msra.mxu0 0.0
        %4556 = vmatprep.subr.mxu0 0.0
        %4557 = vmatpush1.msra.mxu0 0.0
        %4558 = vmatprep.subr.mxu0 0.0
        %4559 = vmatpush1.msra.mxu0 0.0
        %4560 = vmatprep.subr.mxu0 0.0
        %4561 = vmatpush1.msra.mxu0 0.0
        %4562 = vmatprep.subr.mxu0 0.0
        %4563 = vmatpush1.msra.mxu0 0.0
        %4564 = vmatprep.mubr.f32.mxu0 0.0
        %4565 = vmatmul.mubr.f32.gmra.mrb[0].mxu0 %v859
        %v4566 = vpop.f32.mrb[0].mxu0
        %v4567 = vadd.f32 0.0, %v4566
        %v4568 = vpop.f32.mrb[0].mxu0
        %4569 = vmatprep.mubr.f32.mxu0 0.0
        %4570 = vmatmul.mubr.f32.gmra.mrb[0].mxu0 %v862
        %v4571 = vpop.f32.mrb[0].mxu0
        %v4572 = vadd.f32 0.0, %v4571
        %v4573 = vpop.f32.mrb[0].mxu0
        %4574 = vdwg.mxu0
        %v4575 = vsub.f32 %v4498, %v4567
        %v4576 = vsub.f32 %v4499, %v4572
        %v4577 = vld [vmem:[#allocation7] sm:$0xff]
        %v4578 = vld [vmem:[#allocation7 + $0x8] sm:$0xff]
        %v4579 = vld [vmem:[#allocation7 + $0x10] sm:$0xff]
        %v4580 = vld [vmem:[#allocation7 + $0x18] sm:$0xff]
        %v4581 = vlaneseq
        %v4582 = vshrl.u32 %v4581, 7
        %v4583 = vsub.s32 4, %v4582
        %v4584 = vrot.slane %v3418, %v4583
        %v4586 = vsel %vm1955, %v4575, 0
        %v4589 = vsel %vm1955, %v4576, 0
        %4591 = vmatprep.subr.mxu0 0.0
        %4592 = vmatpush1.msra.mxu0 %v4577
        %4593 = vmatprep.subr.mxu0 0.0
        %4594 = vmatpush1.msra.mxu0 %v4578
        %4595 = vmatprep.subr.mxu0 0.0
        %4596 = vmatpush1.msra.mxu0 %v4579
        %4597 = vmatprep.subr.mxu0 0.0
        %4598 = vmatpush1.msra.mxu0 %v4580
        %4599 = vmatprep.subr.mxu0 0.0
        %4600 = vmatpush1.msra.mxu0 0.0
        %4601 = vmatprep.subr.mxu0 0.0
        %4602 = vmatpush1.msra.mxu0 0.0
        %4603 = vmatprep.subr.mxu0 0.0
        %4604 = vmatpush1.msra.mxu0 0.0
        %4605 = vmatprep.subr.mxu0 0.0
        %4606 = vmatpush1.msra.mxu0 0.0
        %4607 = vmatprep.subr.mxu0 0.0
        %4608 = vmatpush1.msra.mxu0 0.0
        %4609 = vmatprep.subr.mxu0 0.0
        %4610 = vmatpush1.msra.mxu0 0.0
        %4611 = vmatprep.subr.mxu0 0.0
        %4612 = vmatpush1.msra.mxu0 0.0
        %4613 = vmatprep.subr.mxu0 0.0
        %4614 = vmatpush1.msra.mxu0 0.0
        %4615 = vmatprep.subr.mxu0 0.0
        %4616 = vmatpush1.msra.mxu0 0.0
        %4617 = vmatprep.subr.mxu0 0.0
        %4618 = vmatpush1.msra.mxu0 0.0
        %4619 = vmatprep.subr.mxu0 0.0
        %4620 = vmatpush1.msra.mxu0 0.0
        %4621 = vmatprep.subr.mxu0 0.0
        %4622 = vmatpush1.msra.mxu0 0.0
        %4623 = vmatprep.subr.mxu0 0.0
        %4624 = vmatpush1.msra.mxu0 0.0
        %4625 = vmatprep.subr.mxu0 0.0
        %4626 = vmatpush1.msra.mxu0 0.0
        %4627 = vmatprep.subr.mxu0 0.0
        %4628 = vmatpush1.msra.mxu0 0.0
        %4629 = vmatprep.subr.mxu0 0.0
        %4630 = vmatpush1.msra.mxu0 0.0
        %4631 = vmatprep.subr.mxu0 0.0
        %4632 = vmatpush1.msra.mxu0 0.0
        %4633 = vmatprep.subr.mxu0 0.0
        %4634 = vmatpush1.msra.mxu0 0.0
        %4635 = vmatprep.subr.mxu0 0.0
        %4636 = vmatpush1.msra.mxu0 0.0
        %4637 = vmatprep.subr.mxu0 0.0
        %4638 = vmatpush1.msra.mxu0 0.0
        %4639 = vmatprep.subr.mxu0 0.0
        %4640 = vmatpush1.msra.mxu0 0.0
        %4641 = vmatprep.subr.mxu0 0.0
        %4642 = vmatpush1.msra.mxu0 0.0
        %4643 = vmatprep.subr.mxu0 0.0
        %4644 = vmatpush1.msra.mxu0 0.0
        %4645 = vmatprep.subr.mxu0 0.0
        %4646 = vmatpush1.msra.mxu0 0.0
        %4647 = vmatprep.subr.mxu0 0.0
        %4648 = vmatpush1.msra.mxu0 0.0
        %4649 = vmatprep.subr.mxu0 0.0
        %4650 = vmatpush1.msra.mxu0 0.0
        %4651 = vmatprep.subr.mxu0 0.0
        %4652 = vmatpush1.msra.mxu0 0.0
        %4653 = vmatprep.subr.mxu0 0.0
        %4654 = vmatpush1.msra.mxu0 0.0
        %4655 = vmatprep.mubr.f32.mxu0 0.0
        %4656 = vmatmul.mubr.f32.gmra.mrb[0].mxu0 %v4586
        %v4657 = vpop.f32.mrb[0].mxu0
        %v4658 = vadd.f32 %v4584, %v4657
        %v4659 = vpop.f32.mrb[0].mxu0
        %4660 = vmatprep.mubr.f32.mxu0 0.0
        %4661 = vmatmul.mubr.f32.gmra.mrb[0].mxu0 %v4589
        %v4662 = vpop.f32.mrb[0].mxu0
        %v4663 = vadd.f32 %v4584, %v4662
        %v4664 = vpop.f32.mrb[0].mxu0
        %4665 = vdwg.mxu0
        %v4666 = vld [vmem:[#allocation9] sm:$0xff]
        %v4667 = vld [vmem:[#allocation9 + $0x8] sm:$0xff]
        %v4668 = vld [vmem:[#allocation9 + $0x10] sm:$0xff]
        %v4669 = vld [vmem:[#allocation9 + $0x18] sm:$0xff]
        %v4671 = vsel %vm1955, %v3416, 0
        %v4674 = vsel %vm1955, %v3417, 0
        %4676 = vmatprep.subr.mxu0 0.0
        %4677 = vmatpush1.msra.mxu0 %v4666
        %4678 = vmatprep.subr.mxu0 0.0
        %4679 = vmatpush1.msra.mxu0 %v4667
        %4680 = vmatprep.subr.mxu0 0.0
        %4681 = vmatpush1.msra.mxu0 %v4668
        %4682 = vmatprep.subr.mxu0 0.0
        %4683 = vmatpush1.msra.mxu0 %v4669
        %4684 = vmatprep.subr.mxu0 0.0
        %4685 = vmatpush1.msra.mxu0 0.0
        %4686 = vmatprep.subr.mxu0 0.0
        %4687 = vmatpush1.msra.mxu0 0.0
        %4688 = vmatprep.subr.mxu0 0.0
        %4689 = vmatpush1.msra.mxu0 0.0
        %4690 = vmatprep.subr.mxu0 0.0
        %4691 = vmatpush1.msra.mxu0 0.0
        %4692 = vmatprep.subr.mxu0 0.0
        %4693 = vmatpush1.msra.mxu0 0.0
        %4694 = vmatprep.subr.mxu0 0.0
        %4695 = vmatpush1.msra.mxu0 0.0
        %4696 = vmatprep.subr.mxu0 0.0
        %4697 = vmatpush1.msra.mxu0 0.0
        %4698 = vmatprep.subr.mxu0 0.0
        %4699 = vmatpush1.msra.mxu0 0.0
        %4700 = vmatprep.subr.mxu0 0.0
        %4701 = vmatpush1.msra.mxu0 0.0
        %4702 = vmatprep.subr.mxu0 0.0
        %4703 = vmatpush1.msra.mxu0 0.0
        %4704 = vmatprep.subr.mxu0 0.0
        %4705 = vmatpush1.msra.mxu0 0.0
        %4706 = vmatprep.subr.mxu0 0.0
        %4707 = vmatpush1.msra.mxu0 0.0
        %4708 = vmatprep.subr.mxu0 0.0
        %4709 = vmatpush1.msra.mxu0 0.0
        %4710 = vmatprep.subr.mxu0 0.0
        %4711 = vmatpush1.msra.mxu0 0.0
        %4712 = vmatprep.subr.mxu0 0.0
        %4713 = vmatpush1.msra.mxu0 0.0
        %4714 = vmatprep.subr.mxu0 0.0
        %4715 = vmatpush1.msra.mxu0 0.0
        %4716 = vmatprep.subr.mxu0 0.0
        %4717 = vmatpush1.msra.mxu0 0.0
        %4718 = vmatprep.subr.mxu0 0.0
        %4719 = vmatpush1.msra.mxu0 0.0
        %4720 = vmatprep.subr.mxu0 0.0
        %4721 = vmatpush1.msra.mxu0 0.0
        %4722 = vmatprep.subr.mxu0 0.0
        %4723 = vmatpush1.msra.mxu0 0.0
        %4724 = vmatprep.subr.mxu0 0.0
        %4725 = vmatpush1.msra.mxu0 0.0
        %4726 = vmatprep.subr.mxu0 0.0
        %4727 = vmatpush1.msra.mxu0 0.0
        %4728 = vmatprep.subr.mxu0 0.0
        %4729 = vmatpush1.msra.mxu0 0.0
        %4730 = vmatprep.subr.mxu0 0.0
        %4731 = vmatpush1.msra.mxu0 0.0
        %4732 = vmatprep.subr.mxu0 0.0
        %4733 = vmatpush1.msra.mxu0 0.0
        %4734 = vmatprep.subr.mxu0 0.0
        %4735 = vmatpush1.msra.mxu0 0.0
        %4736 = vmatprep.subr.mxu0 0.0
        %4737 = vmatpush1.msra.mxu0 0.0
        %4738 = vmatprep.subr.mxu0 0.0
        %4739 = vmatpush1.msra.mxu0 0.0
        %4740 = vmatprep.mubr.f32.mxu0 0.0
        %4741 = vmatmul.mubr.f32.gmra.mrb[0].mxu0 %v4671
        %v4742 = vpop.f32.mrb[0].mxu0
        %v4743 = vadd.f32 0.0, %v4742
        %v4744 = vpop.f32.mrb[0].mxu0
        %4745 = vmatprep.mubr.f32.mxu0 0.0
        %4746 = vmatmul.mubr.f32.gmra.mrb[0].mxu0 %v4674
        %v4747 = vpop.f32.mrb[0].mxu0
        %v4748 = vadd.f32 0.0, %v4747
        %v4749 = vpop.f32.mrb[0].mxu0
        %4750 = vdwg.mxu0
        %v4751 = vlaneseq
        %v4752 = vshrl.u32 %v4751, 7
        %v4753 = vsub.s32 5, %v4752
        %v4754 = vrot.slane %v3418, %v4753
        %v4755 = vadd.f32 %v4743, %v4754
        %v4756 = vadd.f32 %v4748, %v4754
        %v4757 = vlaneseq
        %v4758 = vshrl.u32 %v4757, 7
        %v4759 = vsub.s32 6, %v4758
        %v4760 = vrot.slane %v3418, %v4759
        %4762 = vrot.lane.b32.xlu0 %v4760, 32
        %v4763 = vpop.permute.xlu0 %4762
        %v4765 = vadd.f32 %v4743, %v4763
        %v4766 = vadd.f32 %v4748, %v4763
        %v4768 = vsel %vm1955, %v4755, 0
        %v4771 = vsel %vm1955, %v4756, 0
        %v4774 = vsel %vm1955, %v4658, 0
        %v4777 = vsel %vm1955, %v4663, 0
        %4779 = vmatprep.subr.mxu0 0.0
        %4780 = vmatpush1.xpose.msra.mxu0 %v4774
        %4781 = vmatprep.subr.mxu0 0.0
        %4782 = vmatpush1.xpose.msra.mxu0 %v4777
        %4783 = vmatprep.subr.mxu0 0.0
        %4784 = vmatpush1.xpose.msra.mxu0 0.0
        %4785 = vmatprep.subr.mxu0 0.0
        %4786 = vmatpush1.xpose.msra.mxu0 0.0
        %4787 = vmatprep.subr.mxu0 0.0
        %4788 = vmatpush1.xpose.msra.mxu0 0.0
        %4789 = vmatprep.subr.mxu0 0.0
        %4790 = vmatpush1.xpose.msra.mxu0 0.0
        %4791 = vmatprep.subr.mxu0 0.0
        %4792 = vmatpush1.xpose.msra.mxu0 0.0
        %4793 = vmatprep.subr.mxu0 0.0
        %4794 = vmatpush1.xpose.msra.mxu0 0.0
        %4795 = vmatprep.subr.mxu0 0.0
        %4796 = vmatpush1.xpose.msra.mxu0 0.0
        %4797 = vmatprep.subr.mxu0 0.0
        %4798 = vmatpush1.xpose.msra.mxu0 0.0
        %4799 = vmatprep.subr.mxu0 0.0
        %4800 = vmatpush1.xpose.msra.mxu0 0.0
        %4801 = vmatprep.subr.mxu0 0.0
        %4802 = vmatpush1.xpose.msra.mxu0 0.0
        %4803 = vmatprep.subr.mxu0 0.0
        %4804 = vmatpush1.xpose.msra.mxu0 0.0
        %4805 = vmatprep.subr.mxu0 0.0
        %4806 = vmatpush1.xpose.msra.mxu0 0.0
        %4807 = vmatprep.subr.mxu0 0.0
        %4808 = vmatpush1.xpose.msra.mxu0 0.0
        %4809 = vmatprep.subr.mxu0 0.0
        %4810 = vmatpush1.xpose.msra.mxu0 0.0
        %4811 = vmatprep.subr.mxu0 0.0
        %4812 = vmatpush1.xpose.msra.mxu0 0.0
        %4813 = vmatprep.subr.mxu0 0.0
        %4814 = vmatpush1.xpose.msra.mxu0 0.0
        %4815 = vmatprep.subr.mxu0 0.0
        %4816 = vmatpush1.xpose.msra.mxu0 0.0
        %4817 = vmatprep.subr.mxu0 0.0
        %4818 = vmatpush1.xpose.msra.mxu0 0.0
        %4819 = vmatprep.subr.mxu0 0.0
        %4820 = vmatpush1.xpose.msra.mxu0 0.0
        %4821 = vmatprep.subr.mxu0 0.0
        %4822 = vmatpush1.xpose.msra.mxu0 0.0
        %4823 = vmatprep.subr.mxu0 0.0
        %4824 = vmatpush1.xpose.msra.mxu0 0.0
        %4825 = vmatprep.subr.mxu0 0.0
        %4826 = vmatpush1.xpose.msra.mxu0 0.0
        %4827 = vmatprep.subr.mxu0 0.0
        %4828 = vmatpush1.xpose.msra.mxu0 0.0
        %4829 = vmatprep.subr.mxu0 0.0
        %4830 = vmatpush1.xpose.msra.mxu0 0.0
        %4831 = vmatprep.subr.mxu0 0.0
        %4832 = vmatpush1.xpose.msra.mxu0 0.0
        %4833 = vmatprep.subr.mxu0 0.0
        %4834 = vmatpush1.xpose.msra.mxu0 0.0
        %4835 = vmatprep.subr.mxu0 0.0
        %4836 = vmatpush1.xpose.msra.mxu0 0.0
        %4837 = vmatprep.subr.mxu0 0.0
        %4838 = vmatpush1.xpose.msra.mxu0 0.0
        %4839 = vmatprep.subr.mxu0 0.0
        %4840 = vmatpush1.xpose.msra.mxu0 0.0
        %4841 = vmatprep.subr.mxu0 0.0
        %4842 = vmatpush1.xpose.msra.mxu0 0.0
        %4843 = vmatprep.mubr.f32.mxu0 0.0
        %4844 = vmatmul.mubr.f32.gmra.mrb[0].mxu0 %v4768
        %v4845 = vpop.f32.mrb[0].mxu0
        %v4846 = vadd.f32 0.0, %v4845
        %v4847 = vpop.f32.mrb[0].mxu0
        %4848 = vmatprep.mubr.f32.mxu0 0.0
        %4849 = vmatmul.mubr.f32.gmra.mrb[0].mxu0 %v4771
        %v4850 = vpop.f32.mrb[0].mxu0
        %v4851 = vadd.f32 0.0, %v4850
        %v4852 = vpop.f32.mrb[0].mxu0
        %4853 = vdwg.mxu0
        %v4855 = vsel %vm857, %v4846, 0
        %v4858 = vsel %vm857, %v4851, 0
        %4860 = vmatprep.subr.mxu0 0.0
        %4861 = vmatpush1.msra.mxu0 %v764
        %4862 = vmatprep.subr.mxu0 0.0
        %4863 = vmatpush1.msra.mxu0 %v765
        %4864 = vmatprep.subr.mxu0 0.0
        %4865 = vmatpush1.msra.mxu0 0.0
        %4866 = vmatprep.subr.mxu0 0.0
        %4867 = vmatpush1.msra.mxu0 0.0
        %4868 = vmatprep.subr.mxu0 0.0
        %4869 = vmatpush1.msra.mxu0 0.0
        %4870 = vmatprep.subr.mxu0 0.0
        %4871 = vmatpush1.msra.mxu0 0.0
        %4872 = vmatprep.subr.mxu0 0.0
        %4873 = vmatpush1.msra.mxu0 0.0
        %4874 = vmatprep.subr.mxu0 0.0
        %4875 = vmatpush1.msra.mxu0 0.0
        %4876 = vmatprep.subr.mxu0 0.0
        %4877 = vmatpush1.msra.mxu0 0.0
        %4878 = vmatprep.subr.mxu0 0.0
        %4879 = vmatpush1.msra.mxu0 0.0
        %4880 = vmatprep.subr.mxu0 0.0
        %4881 = vmatpush1.msra.mxu0 0.0
        %4882 = vmatprep.subr.mxu0 0.0
        %4883 = vmatpush1.msra.mxu0 0.0
        %4884 = vmatprep.subr.mxu0 0.0
        %4885 = vmatpush1.msra.mxu0 0.0
        %4886 = vmatprep.subr.mxu0 0.0
        %4887 = vmatpush1.msra.mxu0 0.0
        %4888 = vmatprep.subr.mxu0 0.0
        %4889 = vmatpush1.msra.mxu0 0.0
        %4890 = vmatprep.subr.mxu0 0.0
        %4891 = vmatpush1.msra.mxu0 0.0
        %4892 = vmatprep.subr.mxu0 0.0
        %4893 = vmatpush1.msra.mxu0 0.0
        %4894 = vmatprep.subr.mxu0 0.0
        %4895 = vmatpush1.msra.mxu0 0.0
        %4896 = vmatprep.subr.mxu0 0.0
        %4897 = vmatpush1.msra.mxu0 0.0
        %4898 = vmatprep.subr.mxu0 0.0
        %4899 = vmatpush1.msra.mxu0 0.0
        %4900 = vmatprep.subr.mxu0 0.0
        %4901 = vmatpush1.msra.mxu0 0.0
        %4902 = vmatprep.subr.mxu0 0.0
        %4903 = vmatpush1.msra.mxu0 0.0
        %4904 = vmatprep.subr.mxu0 0.0
        %4905 = vmatpush1.msra.mxu0 0.0
        %4906 = vmatprep.subr.mxu0 0.0
        %4907 = vmatpush1.msra.mxu0 0.0
        %4908 = vmatprep.subr.mxu0 0.0
        %4909 = vmatpush1.msra.mxu0 0.0
        %4910 = vmatprep.subr.mxu0 0.0
        %4911 = vmatpush1.msra.mxu0 0.0
        %4912 = vmatprep.subr.mxu0 0.0
        %4913 = vmatpush1.msra.mxu0 0.0
        %4914 = vmatprep.subr.mxu0 0.0
        %4915 = vmatpush1.msra.mxu0 0.0
        %4916 = vmatprep.subr.mxu0 0.0
        %4917 = vmatpush1.msra.mxu0 0.0
        %4918 = vmatprep.subr.mxu0 0.0
        %4919 = vmatpush1.msra.mxu0 0.0
        %4920 = vmatprep.subr.mxu0 0.0
        %4921 = vmatpush1.msra.mxu0 0.0
        %4922 = vmatprep.subr.mxu0 0.0
        %4923 = vmatpush1.msra.mxu0 0.0
        %4924 = vmatprep.mubr.f32.mxu0 0.0
        %4925 = vmatmul.mubr.f32.gmra.mrb[0].mxu0 %v4855
        %v4926 = vpop.f32.mrb[0].mxu0
        %v4927 = vadd.f32 0.0, %v4926
        %v4928 = vpop.f32.mrb[0].mxu0
        %4929 = vmatprep.mubr.f32.mxu0 0.0
        %4930 = vmatmul.mubr.f32.gmra.mrb[0].mxu0 %v4858
        %v4931 = vpop.f32.mrb[0].mxu0
        %v4932 = vadd.f32 0.0, %v4931
        %v4933 = vpop.f32.mrb[0].mxu0
        %4934 = vdwg.mxu0
        %v4935 = vsel %vm805, %v4927, %v4846
        %v4936 = vsel %vm806, %v4932, %v4851
        %v4938 = vsel %vm857, %v4935, 0
        %v4941 = vsel %vm857, %v4936, 0
        %4943 = vmatprep.subr.mxu0 0.0
        %4944 = vmatpush1.msra.mxu0 %v767
        %4945 = vmatprep.subr.mxu0 0.0
        %4946 = vmatpush1.msra.mxu0 %v768
        %4947 = vmatprep.subr.mxu0 0.0
        %4948 = vmatpush1.msra.mxu0 0.0
        %4949 = vmatprep.subr.mxu0 0.0
        %4950 = vmatpush1.msra.mxu0 0.0
        %4951 = vmatprep.subr.mxu0 0.0
        %4952 = vmatpush1.msra.mxu0 0.0
        %4953 = vmatprep.subr.mxu0 0.0
        %4954 = vmatpush1.msra.mxu0 0.0
        %4955 = vmatprep.subr.mxu0 0.0
        %4956 = vmatpush1.msra.mxu0 0.0
        %4957 = vmatprep.subr.mxu0 0.0
        %4958 = vmatpush1.msra.mxu0 0.0
        %4959 = vmatprep.subr.mxu0 0.0
        %4960 = vmatpush1.msra.mxu0 0.0
        %4961 = vmatprep.subr.mxu0 0.0
        %4962 = vmatpush1.msra.mxu0 0.0
        %4963 = vmatprep.subr.mxu0 0.0
        %4964 = vmatpush1.msra.mxu0 0.0
        %4965 = vmatprep.subr.mxu0 0.0
        %4966 = vmatpush1.msra.mxu0 0.0
        %4967 = vmatprep.subr.mxu0 0.0
        %4968 = vmatpush1.msra.mxu0 0.0
        %4969 = vmatprep.subr.mxu0 0.0
        %4970 = vmatpush1.msra.mxu0 0.0
        %4971 = vmatprep.subr.mxu0 0.0
        %4972 = vmatpush1.msra.mxu0 0.0
        %4973 = vmatprep.subr.mxu0 0.0
        %4974 = vmatpush1.msra.mxu0 0.0
        %4975 = vmatprep.subr.mxu0 0.0
        %4976 = vmatpush1.msra.mxu0 0.0
        %4977 = vmatprep.subr.mxu0 0.0
        %4978 = vmatpush1.msra.mxu0 0.0
        %4979 = vmatprep.subr.mxu0 0.0
        %4980 = vmatpush1.msra.mxu0 0.0
        %4981 = vmatprep.subr.mxu0 0.0
        %4982 = vmatpush1.msra.mxu0 0.0
        %4983 = vmatprep.subr.mxu0 0.0
        %4984 = vmatpush1.msra.mxu0 0.0
        %4985 = vmatprep.subr.mxu0 0.0
        %4986 = vmatpush1.msra.mxu0 0.0
        %4987 = vmatprep.subr.mxu0 0.0
        %4988 = vmatpush1.msra.mxu0 0.0
        %4989 = vmatprep.subr.mxu0 0.0
        %4990 = vmatpush1.msra.mxu0 0.0
        %4991 = vmatprep.subr.mxu0 0.0
        %4992 = vmatpush1.msra.mxu0 0.0
        %4993 = vmatprep.subr.mxu0 0.0
        %4994 = vmatpush1.msra.mxu0 0.0
        %4995 = vmatprep.subr.mxu0 0.0
        %4996 = vmatpush1.msra.mxu0 0.0
        %4997 = vmatprep.subr.mxu0 0.0
        %4998 = vmatpush1.msra.mxu0 0.0
        %4999 = vmatprep.subr.mxu0 0.0
        %5000 = vmatpush1.msra.mxu0 0.0
        %5001 = vmatprep.subr.mxu0 0.0
        %5002 = vmatpush1.msra.mxu0 0.0
        %5003 = vmatprep.subr.mxu0 0.0
        %5004 = vmatpush1.msra.mxu0 0.0
        %5005 = vmatprep.subr.mxu0 0.0
        %5006 = vmatpush1.msra.mxu0 0.0
        %5007 = vmatprep.mubr.f32.mxu0 0.0
        %5008 = vmatmul.mubr.f32.gmra.mrb[0].mxu0 %v4938
        %v5009 = vpop.f32.mrb[0].mxu0
        %v5010 = vadd.f32 0.0, %v5009
        %v5011 = vpop.f32.mrb[0].mxu0
        %5012 = vmatprep.mubr.f32.mxu0 0.0
        %5013 = vmatmul.mubr.f32.gmra.mrb[0].mxu0 %v4941
        %v5014 = vpop.f32.mrb[0].mxu0
        %v5015 = vadd.f32 0.0, %v5014
        %v5016 = vpop.f32.mrb[0].mxu0
        %5017 = vdwg.mxu0
        %v5018 = vsel %vm820, %v5010, %v4935
        %v5019 = vsel %vm821, %v5015, %v4936
        %v5021 = vsel %vm857, %v5018, 0
        %v5024 = vsel %vm857, %v5019, 0
        %5026 = vmatprep.subr.mxu0 0.0
        %5027 = vmatpush1.msra.mxu0 %v770
        %5028 = vmatprep.subr.mxu0 0.0
        %5029 = vmatpush1.msra.mxu0 %v771
        %5030 = vmatprep.subr.mxu0 0.0
        %5031 = vmatpush1.msra.mxu0 0.0
        %5032 = vmatprep.subr.mxu0 0.0
        %5033 = vmatpush1.msra.mxu0 0.0
        %5034 = vmatprep.subr.mxu0 0.0
        %5035 = vmatpush1.msra.mxu0 0.0
        %5036 = vmatprep.subr.mxu0 0.0
        %5037 = vmatpush1.msra.mxu0 0.0
        %5038 = vmatprep.subr.mxu0 0.0
        %5039 = vmatpush1.msra.mxu0 0.0
        %5040 = vmatprep.subr.mxu0 0.0
        %5041 = vmatpush1.msra.mxu0 0.0
        %5042 = vmatprep.subr.mxu0 0.0
        %5043 = vmatpush1.msra.mxu0 0.0
        %5044 = vmatprep.subr.mxu0 0.0
        %5045 = vmatpush1.msra.mxu0 0.0
        %5046 = vmatprep.subr.mxu0 0.0
        %5047 = vmatpush1.msra.mxu0 0.0
        %5048 = vmatprep.subr.mxu0 0.0
        %5049 = vmatpush1.msra.mxu0 0.0
        %5050 = vmatprep.subr.mxu0 0.0
        %5051 = vmatpush1.msra.mxu0 0.0
        %5052 = vmatprep.subr.mxu0 0.0
        %5053 = vmatpush1.msra.mxu0 0.0
        %5054 = vmatprep.subr.mxu0 0.0
        %5055 = vmatpush1.msra.mxu0 0.0
        %5056 = vmatprep.subr.mxu0 0.0
        %5057 = vmatpush1.msra.mxu0 0.0
        %5058 = vmatprep.subr.mxu0 0.0
        %5059 = vmatpush1.msra.mxu0 0.0
        %5060 = vmatprep.subr.mxu0 0.0
        %5061 = vmatpush1.msra.mxu0 0.0
        %5062 = vmatprep.subr.mxu0 0.0
        %5063 = vmatpush1.msra.mxu0 0.0
        %5064 = vmatprep.subr.mxu0 0.0
        %5065 = vmatpush1.msra.mxu0 0.0
        %5066 = vmatprep.subr.mxu0 0.0
        %5067 = vmatpush1.msra.mxu0 0.0
        %5068 = vmatprep.subr.mxu0 0.0
        %5069 = vmatpush1.msra.mxu0 0.0
        %5070 = vmatprep.subr.mxu0 0.0
        %5071 = vmatpush1.msra.mxu0 0.0
        %5072 = vmatprep.subr.mxu0 0.0
        %5073 = vmatpush1.msra.mxu0 0.0
        %5074 = vmatprep.subr.mxu0 0.0
        %5075 = vmatpush1.msra.mxu0 0.0
        %5076 = vmatprep.subr.mxu0 0.0
        %5077 = vmatpush1.msra.mxu0 0.0
        %5078 = vmatprep.subr.mxu0 0.0
        %5079 = vmatpush1.msra.mxu0 0.0
        %5080 = vmatprep.subr.mxu0 0.0
        %5081 = vmatpush1.msra.mxu0 0.0
        %5082 = vmatprep.subr.mxu0 0.0
        %5083 = vmatpush1.msra.mxu0 0.0
        %5084 = vmatprep.subr.mxu0 0.0
        %5085 = vmatpush1.msra.mxu0 0.0
        %5086 = vmatprep.subr.mxu0 0.0
        %5087 = vmatpush1.msra.mxu0 0.0
        %5088 = vmatprep.subr.mxu0 0.0
        %5089 = vmatpush1.msra.mxu0 0.0
        %5090 = vmatprep.mubr.f32.mxu0 0.0
        %5091 = vmatmul.mubr.f32.gmra.mrb[0].mxu0 %v5021
        %v5092 = vpop.f32.mrb[0].mxu0
        %v5093 = vadd.f32 0.0, %v5092
        %v5094 = vpop.f32.mrb[0].mxu0
        %5095 = vmatprep.mubr.f32.mxu0 0.0
        %5096 = vmatmul.mubr.f32.gmra.mrb[0].mxu0 %v5024
        %v5097 = vpop.f32.mrb[0].mxu0
        %v5098 = vadd.f32 0.0, %v5097
        %v5099 = vpop.f32.mrb[0].mxu0
        %5100 = vdwg.mxu0
        %v5101 = vsel %vm835, %v5093, %v5018
        %v5102 = vsel %vm836, %v5098, %v5019
        %v5104 = vsel %vm857, %v5101, 0
        %v5107 = vsel %vm857, %v5102, 0
        %5109 = vmatprep.subr.mxu0 0.0
        %5110 = vmatpush1.msra.mxu0 %v773
        %5111 = vmatprep.subr.mxu0 0.0
        %5112 = vmatpush1.msra.mxu0 %v774
        %5113 = vmatprep.subr.mxu0 0.0
        %5114 = vmatpush1.msra.mxu0 0.0
        %5115 = vmatprep.subr.mxu0 0.0
        %5116 = vmatpush1.msra.mxu0 0.0
        %5117 = vmatprep.subr.mxu0 0.0
        %5118 = vmatpush1.msra.mxu0 0.0
        %5119 = vmatprep.subr.mxu0 0.0
        %5120 = vmatpush1.msra.mxu0 0.0
        %5121 = vmatprep.subr.mxu0 0.0
        %5122 = vmatpush1.msra.mxu0 0.0
        %5123 = vmatprep.subr.mxu0 0.0
        %5124 = vmatpush1.msra.mxu0 0.0
        %5125 = vmatprep.subr.mxu0 0.0
        %5126 = vmatpush1.msra.mxu0 0.0
        %5127 = vmatprep.subr.mxu0 0.0
        %5128 = vmatpush1.msra.mxu0 0.0
        %5129 = vmatprep.subr.mxu0 0.0
        %5130 = vmatpush1.msra.mxu0 0.0
        %5131 = vmatprep.subr.mxu0 0.0
        %5132 = vmatpush1.msra.mxu0 0.0
        %5133 = vmatprep.subr.mxu0 0.0
        %5134 = vmatpush1.msra.mxu0 0.0
        %5135 = vmatprep.subr.mxu0 0.0
        %5136 = vmatpush1.msra.mxu0 0.0
        %5137 = vmatprep.subr.mxu0 0.0
        %5138 = vmatpush1.msra.mxu0 0.0
        %5139 = vmatprep.subr.mxu0 0.0
        %5140 = vmatpush1.msra.mxu0 0.0
        %5141 = vmatprep.subr.mxu0 0.0
        %5142 = vmatpush1.msra.mxu0 0.0
        %5143 = vmatprep.subr.mxu0 0.0
        %5144 = vmatpush1.msra.mxu0 0.0
        %5145 = vmatprep.subr.mxu0 0.0
        %5146 = vmatpush1.msra.mxu0 0.0
        %5147 = vmatprep.subr.mxu0 0.0
        %5148 = vmatpush1.msra.mxu0 0.0
        %5149 = vmatprep.subr.mxu0 0.0
        %5150 = vmatpush1.msra.mxu0 0.0
        %5151 = vmatprep.subr.mxu0 0.0
        %5152 = vmatpush1.msra.mxu0 0.0
        %5153 = vmatprep.subr.mxu0 0.0
        %5154 = vmatpush1.msra.mxu0 0.0
        %5155 = vmatprep.subr.mxu0 0.0
        %5156 = vmatpush1.msra.mxu0 0.0
        %5157 = vmatprep.subr.mxu0 0.0
        %5158 = vmatpush1.msra.mxu0 0.0
        %5159 = vmatprep.subr.mxu0 0.0
        %5160 = vmatpush1.msra.mxu0 0.0
        %5161 = vmatprep.subr.mxu0 0.0
        %5162 = vmatpush1.msra.mxu0 0.0
        %5163 = vmatprep.subr.mxu0 0.0
        %5164 = vmatpush1.msra.mxu0 0.0
        %5165 = vmatprep.subr.mxu0 0.0
        %5166 = vmatpush1.msra.mxu0 0.0
        %5167 = vmatprep.subr.mxu0 0.0
        %5168 = vmatpush1.msra.mxu0 0.0
        %5169 = vmatprep.subr.mxu0 0.0
        %5170 = vmatpush1.msra.mxu0 0.0
        %5171 = vmatprep.subr.mxu0 0.0
        %5172 = vmatpush1.msra.mxu0 0.0
        %5173 = vmatprep.mubr.f32.mxu0 0.0
        %5174 = vmatmul.mubr.f32.gmra.mrb[0].mxu0 %v5104
        %v5175 = vpop.f32.mrb[0].mxu0
        %v5176 = vadd.f32 0.0, %v5175
        %v5177 = vpop.f32.mrb[0].mxu0
        %5178 = vmatprep.mubr.f32.mxu0 0.0
        %5179 = vmatmul.mubr.f32.gmra.mrb[0].mxu0 %v5107
        %v5180 = vpop.f32.mrb[0].mxu0
        %v5181 = vadd.f32 0.0, %v5180
        %v5182 = vpop.f32.mrb[0].mxu0
        %5183 = vdwg.mxu0
        %v5184 = vsel %vm850, %v5176, %v5101
        %v5185 = vsel %vm851, %v5181, %v5102
        %v5186 = vsel %vm857, %v5184, 0.0
        %v5187 = vsel %vm857, %v5185, 0.0
        %v5188 = vadd.f32 %v5186, %v5187
        %v5189 = vrot.slane %v5188, 4
        %v5190 = vadd.f32 %v5188, %v5189
        %v5191 = vrot.slane %v5190, 2
        %v5192 = vadd.f32 %v5190, %v5191
        %v5193 = vrot.slane %v5192, 1
        %v5194 = vadd.f32 %v5192, %v5193
        %v5195 = vmul.f32 %v5194, 0.03125
        %v5196 = vsel %vm857, %v5195, -inf
        %5197 = vmax.xlane.f32.xlu0 %v5196
        %v5198 = vpop.xlane.xlu0 %5197
        %vm5199 = vcmp.ge.f32.partialorder %v5195, %v5198
        %v5200 = vsel %vm5199, 1, 0
        %v5201 = vcvt.s32.f32 %v5200
        %vm5202 = vcmp.gt.f32.partialorder %v5201, 0.0
        %v5203 = vsel %vm5202, -1e+30, %v5195
        %v5204 = vsel %vm857, %v5203, -inf
        %5205 = vmax.xlane.f32.xlu0 %v5204
        %v5206 = vpop.xlane.xlu0 %5205
        %vm5207 = vcmp.ge.f32.partialorder %v5203, %v5206
        %v5208 = vsel %vm5207, 1, 0
        %v5209 = vcvt.s32.f32 %v5208
        %v5210 = vsub.f32 %v5198, %v5198
        %v5211 = vmul.f32 %v5210, 1.442695
        %v5212 = vpow.pop %v5211
        %v5213 = vsub.f32 %v5206, %v5198
        %v5214 = vmul.f32 %v5213, 1.442695
        %v5215 = vpow.pop %v5214
        %v5216 = vadd.f32 %v5212, %v5215
        %v5217 = vrcp.pop %v5216
        %v5218 = vmul.f32 1.0, %v5217
        %v5219 = vmul.f32 %v5212, %v5218
        %v5220 = vmul.f32 %v5201, %v5219
        %v5221 = vmul.f32 %v5215, %v5218
        %v5222 = vmul.f32 %v5209, %v5221
        %v5223 = vadd.f32 %v5220, %v5222
        %v5225 = vsel %vm857, %v5223, 0
        %5227 = vmatprep.subr.mxu0 0.0
        %5228 = vmatpush1.msra.mxu0 %v776
        %5229 = vmatprep.subr.mxu0 0.0
        %5230 = vmatpush1.msra.mxu0 %v777
        %5231 = vmatprep.subr.mxu0 0.0
        %5232 = vmatpush1.msra.mxu0 0.0
        %5233 = vmatprep.subr.mxu0 0.0
        %5234 = vmatpush1.msra.mxu0 0.0
        %5235 = vmatprep.subr.mxu0 0.0
        %5236 = vmatpush1.msra.mxu0 0.0
        %5237 = vmatprep.subr.mxu0 0.0
        %5238 = vmatpush1.msra.mxu0 0.0
        %5239 = vmatprep.subr.mxu0 0.0
        %5240 = vmatpush1.msra.mxu0 0.0
        %5241 = vmatprep.subr.mxu0 0.0
        %5242 = vmatpush1.msra.mxu0 0.0
        %5243 = vmatprep.subr.mxu0 0.0
        %5244 = vmatpush1.msra.mxu0 0.0
        %5245 = vmatprep.subr.mxu0 0.0
        %5246 = vmatpush1.msra.mxu0 0.0
        %5247 = vmatprep.subr.mxu0 0.0
        %5248 = vmatpush1.msra.mxu0 0.0
        %5249 = vmatprep.subr.mxu0 0.0
        %5250 = vmatpush1.msra.mxu0 0.0
        %5251 = vmatprep.subr.mxu0 0.0
        %5252 = vmatpush1.msra.mxu0 0.0
        %5253 = vmatprep.subr.mxu0 0.0
        %5254 = vmatpush1.msra.mxu0 0.0
        %5255 = vmatprep.subr.mxu0 0.0
        %5256 = vmatpush1.msra.mxu0 0.0
        %5257 = vmatprep.subr.mxu0 0.0
        %5258 = vmatpush1.msra.mxu0 0.0
        %5259 = vmatprep.subr.mxu0 0.0
        %5260 = vmatpush1.msra.mxu0 0.0
        %5261 = vmatprep.subr.mxu0 0.0
        %5262 = vmatpush1.msra.mxu0 0.0
        %5263 = vmatprep.subr.mxu0 0.0
        %5264 = vmatpush1.msra.mxu0 0.0
        %5265 = vmatprep.subr.mxu0 0.0
        %5266 = vmatpush1.msra.mxu0 0.0
        %5267 = vmatprep.subr.mxu0 0.0
        %5268 = vmatpush1.msra.mxu0 0.0
        %5269 = vmatprep.subr.mxu0 0.0
        %5270 = vmatpush1.msra.mxu0 0.0
        %5271 = vmatprep.subr.mxu0 0.0
        %5272 = vmatpush1.msra.mxu0 0.0
        %5273 = vmatprep.subr.mxu0 0.0
        %5274 = vmatpush1.msra.mxu0 0.0
        %5275 = vmatprep.subr.mxu0 0.0
        %5276 = vmatpush1.msra.mxu0 0.0
        %5277 = vmatprep.subr.mxu0 0.0
        %5278 = vmatpush1.msra.mxu0 0.0
        %5279 = vmatprep.subr.mxu0 0.0
        %5280 = vmatpush1.msra.mxu0 0.0
        %5281 = vmatprep.subr.mxu0 0.0
        %5282 = vmatpush1.msra.mxu0 0.0
        %5283 = vmatprep.subr.mxu0 0.0
        %5284 = vmatpush1.msra.mxu0 0.0
        %5285 = vmatprep.subr.mxu0 0.0
        %5286 = vmatpush1.msra.mxu0 0.0
        %5287 = vmatprep.subr.mxu0 0.0
        %5288 = vmatpush1.msra.mxu0 0.0
        %5289 = vmatprep.subr.mxu0 0.0
        %5290 = vmatpush1.msra.mxu0 0.0
        %5291 = vmatprep.mubr.f32.mxu0 0.0
        %5292 = vmatmul.mubr.f32.gmra.mrb[0].mxu0 %v5225
        %v5293 = vpop.f32.mrb[0].mxu0
        %v5294 = vadd.f32 0.0, %v5293
        %v5295 = vpop.f32.mrb[0].mxu0
        %5296 = vmatprep.mubr.f32.mxu0 0.0
        %5297 = vmatmul.mubr.f32.gmra.mrb[0].mxu0 %v5225
        %v5298 = vpop.f32.mrb[0].mxu0
        %v5299 = vadd.f32 0.0, %v5298
        %v5300 = vpop.f32.mrb[0].mxu0
        %5301 = vdwg.mxu0
        %v5302 = vsel %vm805, %v5294, %v5223
        %v5303 = vsel %vm806, %v5299, %v5223
        %v5305 = vsel %vm857, %v5302, 0
        %v5308 = vsel %vm857, %v5303, 0
        %5310 = vmatprep.subr.mxu0 0.0
        %5311 = vmatpush1.msra.mxu0 %v779
        %5312 = vmatprep.subr.mxu0 0.0
        %5313 = vmatpush1.msra.mxu0 %v780
        %5314 = vmatprep.subr.mxu0 0.0
        %5315 = vmatpush1.msra.mxu0 0.0
        %5316 = vmatprep.subr.mxu0 0.0
        %5317 = vmatpush1.msra.mxu0 0.0
        %5318 = vmatprep.subr.mxu0 0.0
        %5319 = vmatpush1.msra.mxu0 0.0
        %5320 = vmatprep.subr.mxu0 0.0
        %5321 = vmatpush1.msra.mxu0 0.0
        %5322 = vmatprep.subr.mxu0 0.0
        %5323 = vmatpush1.msra.mxu0 0.0
        %5324 = vmatprep.subr.mxu0 0.0
        %5325 = vmatpush1.msra.mxu0 0.0
        %5326 = vmatprep.subr.mxu0 0.0
        %5327 = vmatpush1.msra.mxu0 0.0
        %5328 = vmatprep.subr.mxu0 0.0
        %5329 = vmatpush1.msra.mxu0 0.0
        %5330 = vmatprep.subr.mxu0 0.0
        %5331 = vmatpush1.msra.mxu0 0.0
        %5332 = vmatprep.subr.mxu0 0.0
        %5333 = vmatpush1.msra.mxu0 0.0
        %5334 = vmatprep.subr.mxu0 0.0
        %5335 = vmatpush1.msra.mxu0 0.0
        %5336 = vmatprep.subr.mxu0 0.0
        %5337 = vmatpush1.msra.mxu0 0.0
        %5338 = vmatprep.subr.mxu0 0.0
        %5339 = vmatpush1.msra.mxu0 0.0
        %5340 = vmatprep.subr.mxu0 0.0
        %5341 = vmatpush1.msra.mxu0 0.0
        %5342 = vmatprep.subr.mxu0 0.0
        %5343 = vmatpush1.msra.mxu0 0.0
        %5344 = vmatprep.subr.mxu0 0.0
        %5345 = vmatpush1.msra.mxu0 0.0
        %5346 = vmatprep.subr.mxu0 0.0
        %5347 = vmatpush1.msra.mxu0 0.0
        %5348 = vmatprep.subr.mxu0 0.0
        %5349 = vmatpush1.msra.mxu0 0.0
        %5350 = vmatprep.subr.mxu0 0.0
        %5351 = vmatpush1.msra.mxu0 0.0
        %5352 = vmatprep.subr.mxu0 0.0
        %5353 = vmatpush1.msra.mxu0 0.0
        %5354 = vmatprep.subr.mxu0 0.0
        %5355 = vmatpush1.msra.mxu0 0.0
        %5356 = vmatprep.subr.mxu0 0.0
        %5357 = vmatpush1.msra.mxu0 0.0
        %5358 = vmatprep.subr.mxu0 0.0
        %5359 = vmatpush1.msra.mxu0 0.0
        %5360 = vmatprep.subr.mxu0 0.0
        %5361 = vmatpush1.msra.mxu0 0.0
        %5362 = vmatprep.subr.mxu0 0.0
        %5363 = vmatpush1.msra.mxu0 0.0
        %5364 = vmatprep.subr.mxu0 0.0
        %5365 = vmatpush1.msra.mxu0 0.0
        %5366 = vmatprep.subr.mxu0 0.0
        %5367 = vmatpush1.msra.mxu0 0.0
        %5368 = vmatprep.subr.mxu0 0.0
        %5369 = vmatpush1.msra.mxu0 0.0
        %5370 = vmatprep.subr.mxu0 0.0
        %5371 = vmatpush1.msra.mxu0 0.0
        %5372 = vmatprep.subr.mxu0 0.0
        %5373 = vmatpush1.msra.mxu0 0.0
        %5374 = vmatprep.mubr.f32.mxu0 0.0
        %5375 = vmatmul.mubr.f32.gmra.mrb[0].mxu0 %v5305
        %v5376 = vpop.f32.mrb[0].mxu0
        %v5377 = vadd.f32 0.0, %v5376
        %v5378 = vpop.f32.mrb[0].mxu0
        %5379 = vmatprep.mubr.f32.mxu0 0.0
        %5380 = vmatmul.mubr.f32.gmra.mrb[0].mxu0 %v5308
        %v5381 = vpop.f32.mrb[0].mxu0
        %v5382 = vadd.f32 0.0, %v5381
        %v5383 = vpop.f32.mrb[0].mxu0
        %5384 = vdwg.mxu0
        %v5385 = vsel %vm820, %v5377, %v5302
        %v5386 = vsel %vm821, %v5382, %v5303
        %v5388 = vsel %vm857, %v5385, 0
        %v5391 = vsel %vm857, %v5386, 0
        %5393 = vmatprep.subr.mxu0 0.0
        %5394 = vmatpush1.msra.mxu0 %v782
        %5395 = vmatprep.subr.mxu0 0.0
        %5396 = vmatpush1.msra.mxu0 %v783
        %5397 = vmatprep.subr.mxu0 0.0
        %5398 = vmatpush1.msra.mxu0 0.0
        %5399 = vmatprep.subr.mxu0 0.0
        %5400 = vmatpush1.msra.mxu0 0.0
        %5401 = vmatprep.subr.mxu0 0.0
        %5402 = vmatpush1.msra.mxu0 0.0
        %5403 = vmatprep.subr.mxu0 0.0
        %5404 = vmatpush1.msra.mxu0 0.0
        %5405 = vmatprep.subr.mxu0 0.0
        %5406 = vmatpush1.msra.mxu0 0.0
        %5407 = vmatprep.subr.mxu0 0.0
        %5408 = vmatpush1.msra.mxu0 0.0
        %5409 = vmatprep.subr.mxu0 0.0
        %5410 = vmatpush1.msra.mxu0 0.0
        %5411 = vmatprep.subr.mxu0 0.0
        %5412 = vmatpush1.msra.mxu0 0.0
        %5413 = vmatprep.subr.mxu0 0.0
        %5414 = vmatpush1.msra.mxu0 0.0
        %5415 = vmatprep.subr.mxu0 0.0
        %5416 = vmatpush1.msra.mxu0 0.0
        %5417 = vmatprep.subr.mxu0 0.0
        %5418 = vmatpush1.msra.mxu0 0.0
        %5419 = vmatprep.subr.mxu0 0.0
        %5420 = vmatpush1.msra.mxu0 0.0
        %5421 = vmatprep.subr.mxu0 0.0
        %5422 = vmatpush1.msra.mxu0 0.0
        %5423 = vmatprep.subr.mxu0 0.0
        %5424 = vmatpush1.msra.mxu0 0.0
        %5425 = vmatprep.subr.mxu0 0.0
        %5426 = vmatpush1.msra.mxu0 0.0
        %5427 = vmatprep.subr.mxu0 0.0
        %5428 = vmatpush1.msra.mxu0 0.0
        %5429 = vmatprep.subr.mxu0 0.0
        %5430 = vmatpush1.msra.mxu0 0.0
        %5431 = vmatprep.subr.mxu0 0.0
        %5432 = vmatpush1.msra.mxu0 0.0
        %5433 = vmatprep.subr.mxu0 0.0
        %5434 = vmatpush1.msra.mxu0 0.0
        %5435 = vmatprep.subr.mxu0 0.0
        %5436 = vmatpush1.msra.mxu0 0.0
        %5437 = vmatprep.subr.mxu0 0.0
        %5438 = vmatpush1.msra.mxu0 0.0
        %5439 = vmatprep.subr.mxu0 0.0
        %5440 = vmatpush1.msra.mxu0 0.0
        %5441 = vmatprep.subr.mxu0 0.0
        %5442 = vmatpush1.msra.mxu0 0.0
        %5443 = vmatprep.subr.mxu0 0.0
        %5444 = vmatpush1.msra.mxu0 0.0
        %5445 = vmatprep.subr.mxu0 0.0
        %5446 = vmatpush1.msra.mxu0 0.0
        %5447 = vmatprep.subr.mxu0 0.0
        %5448 = vmatpush1.msra.mxu0 0.0
        %5449 = vmatprep.subr.mxu0 0.0
        %5450 = vmatpush1.msra.mxu0 0.0
        %5451 = vmatprep.subr.mxu0 0.0
        %5452 = vmatpush1.msra.mxu0 0.0
        %5453 = vmatprep.subr.mxu0 0.0
        %5454 = vmatpush1.msra.mxu0 0.0
        %5455 = vmatprep.subr.mxu0 0.0
        %5456 = vmatpush1.msra.mxu0 0.0
        %5457 = vmatprep.mubr.f32.mxu0 0.0
        %5458 = vmatmul.mubr.f32.gmra.mrb[0].mxu0 %v5388
        %v5459 = vpop.f32.mrb[0].mxu0
        %v5460 = vadd.f32 0.0, %v5459
        %v5461 = vpop.f32.mrb[0].mxu0
        %5462 = vmatprep.mubr.f32.mxu0 0.0
        %5463 = vmatmul.mubr.f32.gmra.mrb[0].mxu0 %v5391
        %v5464 = vpop.f32.mrb[0].mxu0
        %v5465 = vadd.f32 0.0, %v5464
        %v5466 = vpop.f32.mrb[0].mxu0
        %5467 = vdwg.mxu0
        %v5468 = vsel %vm835, %v5460, %v5385
        %v5469 = vsel %vm836, %v5465, %v5386
        %v5471 = vsel %vm857, %v5468, 0
        %v5474 = vsel %vm857, %v5469, 0
        %5476 = vmatprep.subr.mxu0 0.0
        %5477 = vmatpush1.msra.mxu0 %v785
        %5478 = vmatprep.subr.mxu0 0.0
        %5479 = vmatpush1.msra.mxu0 %v786
        %5480 = vmatprep.subr.mxu0 0.0
        %5481 = vmatpush1.msra.mxu0 0.0
        %5482 = vmatprep.subr.mxu0 0.0
        %5483 = vmatpush1.msra.mxu0 0.0
        %5484 = vmatprep.subr.mxu0 0.0
        %5485 = vmatpush1.msra.mxu0 0.0
        %5486 = vmatprep.subr.mxu0 0.0
        %5487 = vmatpush1.msra.mxu0 0.0
        %5488 = vmatprep.subr.mxu0 0.0
        %5489 = vmatpush1.msra.mxu0 0.0
        %5490 = vmatprep.subr.mxu0 0.0
        %5491 = vmatpush1.msra.mxu0 0.0
        %5492 = vmatprep.subr.mxu0 0.0
        %5493 = vmatpush1.msra.mxu0 0.0
        %5494 = vmatprep.subr.mxu0 0.0
        %5495 = vmatpush1.msra.mxu0 0.0
        %5496 = vmatprep.subr.mxu0 0.0
        %5497 = vmatpush1.msra.mxu0 0.0
        %5498 = vmatprep.subr.mxu0 0.0
        %5499 = vmatpush1.msra.mxu0 0.0
        %5500 = vmatprep.subr.mxu0 0.0
        %5501 = vmatpush1.msra.mxu0 0.0
        %5502 = vmatprep.subr.mxu0 0.0
        %5503 = vmatpush1.msra.mxu0 0.0
        %5504 = vmatprep.subr.mxu0 0.0
        %5505 = vmatpush1.msra.mxu0 0.0
        %5506 = vmatprep.subr.mxu0 0.0
        %5507 = vmatpush1.msra.mxu0 0.0
        %5508 = vmatprep.subr.mxu0 0.0
        %5509 = vmatpush1.msra.mxu0 0.0
        %5510 = vmatprep.subr.mxu0 0.0
        %5511 = vmatpush1.msra.mxu0 0.0
        %5512 = vmatprep.subr.mxu0 0.0
        %5513 = vmatpush1.msra.mxu0 0.0
        %5514 = vmatprep.subr.mxu0 0.0
        %5515 = vmatpush1.msra.mxu0 0.0
        %5516 = vmatprep.subr.mxu0 0.0
        %5517 = vmatpush1.msra.mxu0 0.0
        %5518 = vmatprep.subr.mxu0 0.0
        %5519 = vmatpush1.msra.mxu0 0.0
        %5520 = vmatprep.subr.mxu0 0.0
        %5521 = vmatpush1.msra.mxu0 0.0
        %5522 = vmatprep.subr.mxu0 0.0
        %5523 = vmatpush1.msra.mxu0 0.0
        %5524 = vmatprep.subr.mxu0 0.0
        %5525 = vmatpush1.msra.mxu0 0.0
        %5526 = vmatprep.subr.mxu0 0.0
        %5527 = vmatpush1.msra.mxu0 0.0
        %5528 = vmatprep.subr.mxu0 0.0
        %5529 = vmatpush1.msra.mxu0 0.0
        %5530 = vmatprep.subr.mxu0 0.0
        %5531 = vmatpush1.msra.mxu0 0.0
        %5532 = vmatprep.subr.mxu0 0.0
        %5533 = vmatpush1.msra.mxu0 0.0
        %5534 = vmatprep.subr.mxu0 0.0
        %5535 = vmatpush1.msra.mxu0 0.0
        %5536 = vmatprep.subr.mxu0 0.0
        %5537 = vmatpush1.msra.mxu0 0.0
        %5538 = vmatprep.subr.mxu0 0.0
        %5539 = vmatpush1.msra.mxu0 0.0
        %5540 = vmatprep.mubr.f32.mxu0 0.0
        %5541 = vmatmul.mubr.f32.gmra.mrb[0].mxu0 %v5471
        %v5542 = vpop.f32.mrb[0].mxu0
        %v5543 = vadd.f32 0.0, %v5542
        %v5544 = vpop.f32.mrb[0].mxu0
        %5545 = vmatprep.mubr.f32.mxu0 0.0
        %5546 = vmatmul.mubr.f32.gmra.mrb[0].mxu0 %v5474
        %v5547 = vpop.f32.mrb[0].mxu0
        %v5548 = vadd.f32 0.0, %v5547
        %v5549 = vpop.f32.mrb[0].mxu0
        %5550 = vdwg.mxu0
        %v5551 = vsel %vm850, %v5543, %v5468
        %v5552 = vsel %vm851, %v5548, %v5469
        %5555 = vrot.lane.b32.xlu0 %v4765, 96
        %v5556 = vpop.permute.xlu0 %5555
        %5557 = vrot.lane.b32.xlu0 %v4766, 96
        %v5558 = vpop.permute.xlu0 %5557
        %v5562 = vsel %vm857, %v5551, 0
        %v5565 = vsel %vm857, %v5552, 0
        %5567 = vmatprep.subr.mxu0 0.0
        %5568 = vmatpush1.msra.mxu0 %v5556
        %5569 = vmatprep.subr.mxu0 0.0
        %5570 = vmatpush1.msra.mxu0 %v5558
        %5571 = vmatprep.subr.mxu0 0.0
        %5572 = vmatpush1.msra.mxu0 0.0
        %5573 = vmatprep.subr.mxu0 0.0
        %5574 = vmatpush1.msra.mxu0 0.0
        %5575 = vmatprep.subr.mxu0 0.0
        %5576 = vmatpush1.msra.mxu0 0.0
        %5577 = vmatprep.subr.mxu0 0.0
        %5578 = vmatpush1.msra.mxu0 0.0
        %5579 = vmatprep.subr.mxu0 0.0
        %5580 = vmatpush1.msra.mxu0 0.0
        %5581 = vmatprep.subr.mxu0 0.0
        %5582 = vmatpush1.msra.mxu0 0.0
        %5583 = vmatprep.subr.mxu0 0.0
        %5584 = vmatpush1.msra.mxu0 0.0
        %5585 = vmatprep.subr.mxu0 0.0
        %5586 = vmatpush1.msra.mxu0 0.0
        %5587 = vmatprep.subr.mxu0 0.0
        %5588 = vmatpush1.msra.mxu0 0.0
        %5589 = vmatprep.subr.mxu0 0.0
        %5590 = vmatpush1.msra.mxu0 0.0
        %5591 = vmatprep.subr.mxu0 0.0
        %5592 = vmatpush1.msra.mxu0 0.0
        %5593 = vmatprep.subr.mxu0 0.0
        %5594 = vmatpush1.msra.mxu0 0.0
        %5595 = vmatprep.subr.mxu0 0.0
        %5596 = vmatpush1.msra.mxu0 0.0
        %5597 = vmatprep.subr.mxu0 0.0
        %5598 = vmatpush1.msra.mxu0 0.0
        %5599 = vmatprep.subr.mxu0 0.0
        %5600 = vmatpush1.msra.mxu0 0.0
        %5601 = vmatprep.subr.mxu0 0.0
        %5602 = vmatpush1.msra.mxu0 0.0
        %5603 = vmatprep.subr.mxu0 0.0
        %5604 = vmatpush1.msra.mxu0 0.0
        %5605 = vmatprep.subr.mxu0 0.0
        %5606 = vmatpush1.msra.mxu0 0.0
        %5607 = vmatprep.subr.mxu0 0.0
        %5608 = vmatpush1.msra.mxu0 0.0
        %5609 = vmatprep.subr.mxu0 0.0
        %5610 = vmatpush1.msra.mxu0 0.0
        %5611 = vmatprep.subr.mxu0 0.0
        %5612 = vmatpush1.msra.mxu0 0.0
        %5613 = vmatprep.subr.mxu0 0.0
        %5614 = vmatpush1.msra.mxu0 0.0
        %5615 = vmatprep.subr.mxu0 0.0
        %5616 = vmatpush1.msra.mxu0 0.0
        %5617 = vmatprep.subr.mxu0 0.0
        %5618 = vmatpush1.msra.mxu0 0.0
        %5619 = vmatprep.subr.mxu0 0.0
        %5620 = vmatpush1.msra.mxu0 0.0
        %5621 = vmatprep.subr.mxu0 0.0
        %5622 = vmatpush1.msra.mxu0 0.0
        %5623 = vmatprep.subr.mxu0 0.0
        %5624 = vmatpush1.msra.mxu0 0.0
        %5625 = vmatprep.subr.mxu0 0.0
        %5626 = vmatpush1.msra.mxu0 0.0
        %5627 = vmatprep.subr.mxu0 0.0
        %5628 = vmatpush1.msra.mxu0 0.0
        %5629 = vmatprep.subr.mxu0 0.0
        %5630 = vmatpush1.msra.mxu0 0.0
        %5631 = vmatprep.mubr.f32.mxu0 0.0
        %5632 = vmatmul.mubr.f32.gmra.mrb[0].mxu0 %v5562
        %v5633 = vpop.f32.mrb[0].mxu0
        %v5634 = vadd.f32 0.0, %v5633
        %v5635 = vpop.f32.mrb[0].mxu0
        %5636 = vmatprep.mubr.f32.mxu0 0.0
        %5637 = vmatmul.mubr.f32.gmra.mrb[0].mxu0 %v5565
        %v5638 = vpop.f32.mrb[0].mxu0
        %v5639 = vadd.f32 0.0, %v5638
        %v5640 = vpop.f32.mrb[0].mxu0
        %5641 = vdwg.mxu0
        %v5642 = vld [vmem:[#allocation10] sm:$0xff]
        %v5643 = vld [vmem:[#allocation10 + $0x8] sm:$0xff]
        %v5644 = vld [vmem:[#allocation10 + $0x10] sm:$0xff]
        %v5645 = vld [vmem:[#allocation10 + $0x18] sm:$0xff]
        %v5646 = vlaneseq
        %v5647 = vshrl.u32 %v5646, 7
        %v5648 = vsub.s32 7, %v5647
        %v5649 = vrot.slane %v3418, %v5648
        %v5651 = vsel %vm1955, %v5634, 0
        %v5654 = vsel %vm1955, %v5639, 0
        %5656 = vmatprep.subr.mxu0 0.0
        %5657 = vmatpush1.msra.mxu0 %v5642
        %5658 = vmatprep.subr.mxu0 0.0
        %5659 = vmatpush1.msra.mxu0 %v5643
        %5660 = vmatprep.subr.mxu0 0.0
        %5661 = vmatpush1.msra.mxu0 %v5644
        %5662 = vmatprep.subr.mxu0 0.0
        %5663 = vmatpush1.msra.mxu0 %v5645
        %5664 = vmatprep.subr.mxu0 0.0
        %5665 = vmatpush1.msra.mxu0 0.0
        %5666 = vmatprep.subr.mxu0 0.0
        %5667 = vmatpush1.msra.mxu0 0.0
        %5668 = vmatprep.subr.mxu0 0.0
        %5669 = vmatpush1.msra.mxu0 0.0
        %5670 = vmatprep.subr.mxu0 0.0
        %5671 = vmatpush1.msra.mxu0 0.0
        %5672 = vmatprep.subr.mxu0 0.0
        %5673 = vmatpush1.msra.mxu0 0.0
        %5674 = vmatprep.subr.mxu0 0.0
        %5675 = vmatpush1.msra.mxu0 0.0
        %5676 = vmatprep.subr.mxu0 0.0
        %5677 = vmatpush1.msra.mxu0 0.0
        %5678 = vmatprep.subr.mxu0 0.0
        %5679 = vmatpush1.msra.mxu0 0.0
        %5680 = vmatprep.subr.mxu0 0.0
        %5681 = vmatpush1.msra.mxu0 0.0
        %5682 = vmatprep.subr.mxu0 0.0
        %5683 = vmatpush1.msra.mxu0 0.0
        %5684 = vmatprep.subr.mxu0 0.0
        %5685 = vmatpush1.msra.mxu0 0.0
        %5686 = vmatprep.subr.mxu0 0.0
        %5687 = vmatpush1.msra.mxu0 0.0
        %5688 = vmatprep.subr.mxu0 0.0
        %5689 = vmatpush1.msra.mxu0 0.0
        %5690 = vmatprep.subr.mxu0 0.0
        %5691 = vmatpush1.msra.mxu0 0.0
        %5692 = vmatprep.subr.mxu0 0.0
        %5693 = vmatpush1.msra.mxu0 0.0
        %5694 = vmatprep.subr.mxu0 0.0
        %5695 = vmatpush1.msra.mxu0 0.0
        %5696 = vmatprep.subr.mxu0 0.0
        %5697 = vmatpush1.msra.mxu0 0.0
        %5698 = vmatprep.subr.mxu0 0.0
        %5699 = vmatpush1.msra.mxu0 0.0
        %5700 = vmatprep.subr.mxu0 0.0
        %5701 = vmatpush1.msra.mxu0 0.0
        %5702 = vmatprep.subr.mxu0 0.0
        %5703 = vmatpush1.msra.mxu0 0.0
        %5704 = vmatprep.subr.mxu0 0.0
        %5705 = vmatpush1.msra.mxu0 0.0
        %5706 = vmatprep.subr.mxu0 0.0
        %5707 = vmatpush1.msra.mxu0 0.0
        %5708 = vmatprep.subr.mxu0 0.0
        %5709 = vmatpush1.msra.mxu0 0.0
        %5710 = vmatprep.subr.mxu0 0.0
        %5711 = vmatpush1.msra.mxu0 0.0
        %5712 = vmatprep.subr.mxu0 0.0
        %5713 = vmatpush1.msra.mxu0 0.0
        %5714 = vmatprep.subr.mxu0 0.0
        %5715 = vmatpush1.msra.mxu0 0.0
        %5716 = vmatprep.subr.mxu0 0.0
        %5717 = vmatpush1.msra.mxu0 0.0
        %5718 = vmatprep.subr.mxu0 0.0
        %5719 = vmatpush1.msra.mxu0 0.0
        %5720 = vmatprep.mubr.f32.mxu0 0.0
        %5721 = vmatmul.mubr.f32.gmra.mrb[0].mxu0 %v5651
        %v5722 = vpop.f32.mrb[0].mxu0
        %v5723 = vadd.f32 %v5649, %v5722
        %v5724 = vpop.f32.mrb[0].mxu0
        %5725 = vmatprep.mubr.f32.mxu0 0.0
        %5726 = vmatmul.mubr.f32.gmra.mrb[0].mxu0 %v5654
        %v5727 = vpop.f32.mrb[0].mxu0
        %v5728 = vadd.f32 %v5649, %v5727
        %v5729 = vpop.f32.mrb[0].mxu0
        %5730 = vdwg.mxu0
        %v5731 = vadd.f32 %v4575, %v5723
        %v5732 = vadd.f32 %v4576, %v5728
        %5733 = vmatprep.subr.mxu0 0.0
        %5734 = vmatpush1.msra.mxu0 %v5731
        %5735 = vmatprep.subr.mxu0 0.0
        %5736 = vmatpush1.msra.mxu0 %v5732
        %5737 = vmatprep.subr.mxu0 0.0
        %5738 = vmatpush1.msra.mxu0 0.0
        %5739 = vmatprep.subr.mxu0 0.0
        %5740 = vmatpush1.msra.mxu0 0.0
        %5741 = vmatprep.subr.mxu0 0.0
        %5742 = vmatpush1.msra.mxu0 0.0
        %5743 = vmatprep.subr.mxu0 0.0
        %5744 = vmatpush1.msra.mxu0 0.0
        %5745 = vmatprep.subr.mxu0 0.0
        %5746 = vmatpush1.msra.mxu0 0.0
        %5747 = vmatprep.subr.mxu0 0.0
        %5748 = vmatpush1.msra.mxu0 0.0
        %5749 = vmatprep.subr.mxu0 0.0
        %5750 = vmatpush1.msra.mxu0 0.0
        %5751 = vmatprep.subr.mxu0 0.0
        %5752 = vmatpush1.msra.mxu0 0.0
        %5753 = vmatprep.subr.mxu0 0.0
        %5754 = vmatpush1.msra.mxu0 0.0
        %5755 = vmatprep.subr.mxu0 0.0
        %5756 = vmatpush1.msra.mxu0 0.0
        %5757 = vmatprep.subr.mxu0 0.0
        %5758 = vmatpush1.msra.mxu0 0.0
        %5759 = vmatprep.subr.mxu0 0.0
        %5760 = vmatpush1.msra.mxu0 0.0
        %5761 = vmatprep.subr.mxu0 0.0
        %5762 = vmatpush1.msra.mxu0 0.0
        %5763 = vmatprep.subr.mxu0 0.0
        %5764 = vmatpush1.msra.mxu0 0.0
        %5765 = vmatprep.subr.mxu0 0.0
        %5766 = vmatpush1.msra.mxu0 0.0
        %5767 = vmatprep.subr.mxu0 0.0
        %5768 = vmatpush1.msra.mxu0 0.0
        %5769 = vmatprep.subr.mxu0 0.0
        %5770 = vmatpush1.msra.mxu0 0.0
        %5771 = vmatprep.subr.mxu0 0.0
        %5772 = vmatpush1.msra.mxu0 0.0
        %5773 = vmatprep.subr.mxu0 0.0
        %5774 = vmatpush1.msra.mxu0 0.0
        %5775 = vmatprep.subr.mxu0 0.0
        %5776 = vmatpush1.msra.mxu0 0.0
        %5777 = vmatprep.subr.mxu0 0.0
        %5778 = vmatpush1.msra.mxu0 0.0
        %5779 = vmatprep.subr.mxu0 0.0
        %5780 = vmatpush1.msra.mxu0 0.0
        %5781 = vmatprep.subr.mxu0 0.0
        %5782 = vmatpush1.msra.mxu0 0.0
        %5783 = vmatprep.subr.mxu0 0.0
        %5784 = vmatpush1.msra.mxu0 0.0
        %5785 = vmatprep.subr.mxu0 0.0
        %5786 = vmatpush1.msra.mxu0 0.0
        %5787 = vmatprep.subr.mxu0 0.0
        %5788 = vmatpush1.msra.mxu0 0.0
        %5789 = vmatprep.subr.mxu0 0.0
        %5790 = vmatpush1.msra.mxu0 0.0
        %5791 = vmatprep.subr.mxu0 0.0
        %5792 = vmatpush1.msra.mxu0 0.0
        %5793 = vmatprep.subr.mxu0 0.0
        %5794 = vmatpush1.msra.mxu0 0.0
        %5795 = vmatprep.subr.mxu0 0.0
        %5796 = vmatpush1.msra.mxu0 0.0
        %5797 = vmatprep.mubr.f32.mxu0 0.0
        %5798 = vmatmul.mubr.f32.gmra.mrb[0].mxu0 %v859
        %v5799 = vpop.f32.mrb[0].mxu0
        %v5800 = vadd.f32 0.0, %v5799
        %v5801 = vpop.f32.mrb[0].mxu0
        %5802 = vmatprep.mubr.f32.mxu0 0.0
        %5803 = vmatmul.mubr.f32.gmra.mrb[0].mxu0 %v862
        %v5804 = vpop.f32.mrb[0].mxu0
        %v5805 = vadd.f32 0.0, %v5804
        %v5806 = vpop.f32.mrb[0].mxu0
        %5807 = vdwg.mxu0
        %v5808 = vsub.f32 %v5731, %v5800
        %v5809 = vsub.f32 %v5732, %v5805
        %v5810 = vld [vmem:[%s15] sm:$0xff]
        %v5811 = vld [vmem:[%s15 + $0x8] sm:$0xff]
        %v5812 = vld [vmem:[%s15 + $0x10] sm:$0xff]
        %v5813 = vld [vmem:[%s15 + $0x18] sm:$0xff]
        %v5815 = vsel %vm1955, %v5808, 0
        %v5818 = vsel %vm1955, %v5809, 0
        %5820 = vmatprep.subr.mxu0 0.0
        %5821 = vmatpush1.msra.mxu0 %v5810
        %5822 = vmatprep.subr.mxu0 0.0
        %5823 = vmatpush1.msra.mxu0 %v5811
        %5824 = vmatprep.subr.mxu0 0.0
        %5825 = vmatpush1.msra.mxu0 %v5812
        %5826 = vmatprep.subr.mxu0 0.0
        %5827 = vmatpush1.msra.mxu0 %v5813
        %5828 = vmatprep.subr.mxu0 0.0
        %5829 = vmatpush1.msra.mxu0 0.0
        %5830 = vmatprep.subr.mxu0 0.0
        %5831 = vmatpush1.msra.mxu0 0.0
        %5832 = vmatprep.subr.mxu0 0.0
        %5833 = vmatpush1.msra.mxu0 0.0
        %5834 = vmatprep.subr.mxu0 0.0
        %5835 = vmatpush1.msra.mxu0 0.0
        %5836 = vmatprep.subr.mxu0 0.0
        %5837 = vmatpush1.msra.mxu0 0.0
        %5838 = vmatprep.subr.mxu0 0.0
        %5839 = vmatpush1.msra.mxu0 0.0
        %5840 = vmatprep.subr.mxu0 0.0
        %5841 = vmatpush1.msra.mxu0 0.0
        %5842 = vmatprep.subr.mxu0 0.0
        %5843 = vmatpush1.msra.mxu0 0.0
        %5844 = vmatprep.subr.mxu0 0.0
        %5845 = vmatpush1.msra.mxu0 0.0
        %5846 = vmatprep.subr.mxu0 0.0
        %5847 = vmatpush1.msra.mxu0 0.0
        %5848 = vmatprep.subr.mxu0 0.0
        %5849 = vmatpush1.msra.mxu0 0.0
        %5850 = vmatprep.subr.mxu0 0.0
        %5851 = vmatpush1.msra.mxu0 0.0
        %5852 = vmatprep.subr.mxu0 0.0
        %5853 = vmatpush1.msra.mxu0 0.0
        %5854 = vmatprep.subr.mxu0 0.0
        %5855 = vmatpush1.msra.mxu0 0.0
        %5856 = vmatprep.subr.mxu0 0.0
        %5857 = vmatpush1.msra.mxu0 0.0
        %5858 = vmatprep.subr.mxu0 0.0
        %5859 = vmatpush1.msra.mxu0 0.0
        %5860 = vmatprep.subr.mxu0 0.0
        %5861 = vmatpush1.msra.mxu0 0.0
        %5862 = vmatprep.subr.mxu0 0.0
        %5863 = vmatpush1.msra.mxu0 0.0
        %5864 = vmatprep.subr.mxu0 0.0
        %5865 = vmatpush1.msra.mxu0 0.0
        %5866 = vmatprep.subr.mxu0 0.0
        %5867 = vmatpush1.msra.mxu0 0.0
        %5868 = vmatprep.subr.mxu0 0.0
        %5869 = vmatpush1.msra.mxu0 0.0
        %5870 = vmatprep.subr.mxu0 0.0
        %5871 = vmatpush1.msra.mxu0 0.0
        %5872 = vmatprep.subr.mxu0 0.0
        %5873 = vmatpush1.msra.mxu0 0.0
        %5874 = vmatprep.subr.mxu0 0.0
        %5875 = vmatpush1.msra.mxu0 0.0
        %5876 = vmatprep.subr.mxu0 0.0
        %5877 = vmatpush1.msra.mxu0 0.0
        %5878 = vmatprep.subr.mxu0 0.0
        %5879 = vmatpush1.msra.mxu0 0.0
        %5880 = vmatprep.subr.mxu0 0.0
        %5881 = vmatpush1.msra.mxu0 0.0
        %5882 = vmatprep.subr.mxu0 0.0
        %5883 = vmatpush1.msra.mxu0 0.0
        %5884 = vmatprep.mubr.f32.mxu0 0.0
        %5885 = vmatmul.mubr.f32.gmra.mrb[0].mxu0 %v5815
        %v5886 = vpop.f32.mrb[0].mxu0
        %v5887 = vadd.f32 0.0, %v5886
        %v5888 = vpop.f32.mrb[0].mxu0
        %5889 = vmatprep.mubr.f32.mxu0 0.0
        %5890 = vmatmul.mubr.f32.gmra.mrb[0].mxu0 %v5818
        %v5891 = vpop.f32.mrb[0].mxu0
        %v5892 = vadd.f32 0.0, %v5891
        %v5893 = vpop.f32.mrb[0].mxu0
        %5894 = vdwg.mxu0
        %v5895 = vmax.f32 %v5887, 0.0
        %v5896 = vmax.f32 %v5892, 0.0
        %v5897 = vld [vmem:[%s16] sm:$0xff]
        %v5898 = vld [vmem:[%s16 + $0x8] sm:$0xff]
        %v5899 = vld [vmem:[%s16 + $0x10] sm:$0xff]
        %v5900 = vld [vmem:[%s16 + $0x18] sm:$0xff]
        %v5901 = vld [vmem:[%s16 + $0x20] sm:$0xff]
        %v5902 = vld [vmem:[%s16 + $0x28] sm:$0xff]
        %v5903 = vld [vmem:[%s16 + $0x30] sm:$0xff]
        %v5904 = vld [vmem:[%s16 + $0x38] sm:$0xff]
        %v5906 = vsel %vm3205, %v5895, 0
        %v5909 = vsel %vm3205, %v5896, 0
        %5911 = vmatprep.subr.mxu0 0.0
        %5912 = vmatpush1.msra.mxu0 %v5897
        %5913 = vmatprep.subr.mxu0 0.0
        %5914 = vmatpush1.msra.mxu0 %v5898
        %5915 = vmatprep.subr.mxu0 0.0
        %5916 = vmatpush1.msra.mxu0 %v5899
        %5917 = vmatprep.subr.mxu0 0.0
        %5918 = vmatpush1.msra.mxu0 %v5900
        %5919 = vmatprep.subr.mxu0 0.0
        %5920 = vmatpush1.msra.mxu0 %v5901
        %5921 = vmatprep.subr.mxu0 0.0
        %5922 = vmatpush1.msra.mxu0 %v5902
        %5923 = vmatprep.subr.mxu0 0.0
        %5924 = vmatpush1.msra.mxu0 %v5903
        %5925 = vmatprep.subr.mxu0 0.0
        %5926 = vmatpush1.msra.mxu0 %v5904
        %5927 = vmatprep.subr.mxu0 0.0
        %5928 = vmatpush1.msra.mxu0 0.0
        %5929 = vmatprep.subr.mxu0 0.0
        %5930 = vmatpush1.msra.mxu0 0.0
        %5931 = vmatprep.subr.mxu0 0.0
        %5932 = vmatpush1.msra.mxu0 0.0
        %5933 = vmatprep.subr.mxu0 0.0
        %5934 = vmatpush1.msra.mxu0 0.0
        %5935 = vmatprep.subr.mxu0 0.0
        %5936 = vmatpush1.msra.mxu0 0.0
        %5937 = vmatprep.subr.mxu0 0.0
        %5938 = vmatpush1.msra.mxu0 0.0
        %5939 = vmatprep.subr.mxu0 0.0
        %5940 = vmatpush1.msra.mxu0 0.0
        %5941 = vmatprep.subr.mxu0 0.0
        %5942 = vmatpush1.msra.mxu0 0.0
        %5943 = vmatprep.subr.mxu0 0.0
        %5944 = vmatpush1.msra.mxu0 0.0
        %5945 = vmatprep.subr.mxu0 0.0
        %5946 = vmatpush1.msra.mxu0 0.0
        %5947 = vmatprep.subr.mxu0 0.0
        %5948 = vmatpush1.msra.mxu0 0.0
        %5949 = vmatprep.subr.mxu0 0.0
        %5950 = vmatpush1.msra.mxu0 0.0
        %5951 = vmatprep.subr.mxu0 0.0
        %5952 = vmatpush1.msra.mxu0 0.0
        %5953 = vmatprep.subr.mxu0 0.0
        %5954 = vmatpush1.msra.mxu0 0.0
        %5955 = vmatprep.subr.mxu0 0.0
        %5956 = vmatpush1.msra.mxu0 0.0
        %5957 = vmatprep.subr.mxu0 0.0
        %5958 = vmatpush1.msra.mxu0 0.0
        %5959 = vmatprep.subr.mxu0 0.0
        %5960 = vmatpush1.msra.mxu0 0.0
        %5961 = vmatprep.subr.mxu0 0.0
        %5962 = vmatpush1.msra.mxu0 0.0
        %5963 = vmatprep.subr.mxu0 0.0
        %5964 = vmatpush1.msra.mxu0 0.0
        %5965 = vmatprep.subr.mxu0 0.0
        %5966 = vmatpush1.msra.mxu0 0.0
        %5967 = vmatprep.subr.mxu0 0.0
        %5968 = vmatpush1.msra.mxu0 0.0
        %5969 = vmatprep.subr.mxu0 0.0
        %5970 = vmatpush1.msra.mxu0 0.0
        %5971 = vmatprep.subr.mxu0 0.0
        %5972 = vmatpush1.msra.mxu0 0.0
        %5973 = vmatprep.subr.mxu0 0.0
        %5974 = vmatpush1.msra.mxu0 0.0
        %5975 = vmatprep.mubr.f32.mxu0 0.0
        %5976 = vmatmul.mubr.f32.gmra.mrb[0].mxu0 %v5906
        %v5977 = vpop.f32.mrb[0].mxu0
        %v5978 = vadd.f32 0.0, %v5977
        %v5979 = vpop.f32.mrb[0].mxu0
        %5980 = vmatprep.mubr.f32.mxu0 0.0
        %5981 = vmatmul.mubr.f32.gmra.mrb[0].mxu0 %v5909
        %v5982 = vpop.f32.mrb[0].mxu0
        %v5983 = vadd.f32 0.0, %v5982
        %v5984 = vpop.f32.mrb[0].mxu0
        %5985 = vdwg.mxu0
        %v5986 = vadd.f32 %v5808, %v5978
        %v5987 = vadd.f32 %v5809, %v5983
        %5988 = vmatprep.subr.mxu0 0.0
        %5989 = vmatpush1.msra.mxu0 %v5986
        %5990 = vmatprep.subr.mxu0 0.0
        %5991 = vmatpush1.msra.mxu0 %v5987
        %5992 = vmatprep.subr.mxu0 0.0
        %5993 = vmatpush1.msra.mxu0 0.0
        %5994 = vmatprep.subr.mxu0 0.0
        %5995 = vmatpush1.msra.mxu0 0.0
        %5996 = vmatprep.subr.mxu0 0.0
        %5997 = vmatpush1.msra.mxu0 0.0
        %5998 = vmatprep.subr.mxu0 0.0
        %5999 = vmatpush1.msra.mxu0 0.0
        %6000 = vmatprep.subr.mxu0 0.0
        %6001 = vmatpush1.msra.mxu0 0.0
        %6002 = vmatprep.subr.mxu0 0.0
        %6003 = vmatpush1.msra.mxu0 0.0
        %6004 = vmatprep.subr.mxu0 0.0
        %6005 = vmatpush1.msra.mxu0 0.0
        %6006 = vmatprep.subr.mxu0 0.0
        %6007 = vmatpush1.msra.mxu0 0.0
        %6008 = vmatprep.subr.mxu0 0.0
        %6009 = vmatpush1.msra.mxu0 0.0
        %6010 = vmatprep.subr.mxu0 0.0
        %6011 = vmatpush1.msra.mxu0 0.0
        %6012 = vmatprep.subr.mxu0 0.0
        %6013 = vmatpush1.msra.mxu0 0.0
        %6014 = vmatprep.subr.mxu0 0.0
        %6015 = vmatpush1.msra.mxu0 0.0
        %6016 = vmatprep.subr.mxu0 0.0
        %6017 = vmatpush1.msra.mxu0 0.0
        %6018 = vmatprep.subr.mxu0 0.0
        %6019 = vmatpush1.msra.mxu0 0.0
        %6020 = vmatprep.subr.mxu0 0.0
        %6021 = vmatpush1.msra.mxu0 0.0
        %6022 = vmatprep.subr.mxu0 0.0
        %6023 = vmatpush1.msra.mxu0 0.0
        %6024 = vmatprep.subr.mxu0 0.0
        %6025 = vmatpush1.msra.mxu0 0.0
        %6026 = vmatprep.subr.mxu0 0.0
        %6027 = vmatpush1.msra.mxu0 0.0
        %6028 = vmatprep.subr.mxu0 0.0
        %6029 = vmatpush1.msra.mxu0 0.0
        %6030 = vmatprep.subr.mxu0 0.0
        %6031 = vmatpush1.msra.mxu0 0.0
        %6032 = vmatprep.subr.mxu0 0.0
        %6033 = vmatpush1.msra.mxu0 0.0
        %6034 = vmatprep.subr.mxu0 0.0
        %6035 = vmatpush1.msra.mxu0 0.0
        %6036 = vmatprep.subr.mxu0 0.0
        %6037 = vmatpush1.msra.mxu0 0.0
        %6038 = vmatprep.subr.mxu0 0.0
        %6039 = vmatpush1.msra.mxu0 0.0
        %6040 = vmatprep.subr.mxu0 0.0
        %6041 = vmatpush1.msra.mxu0 0.0
        %6042 = vmatprep.subr.mxu0 0.0
        %6043 = vmatpush1.msra.mxu0 0.0
        %6044 = vmatprep.subr.mxu0 0.0
        %6045 = vmatpush1.msra.mxu0 0.0
        %6046 = vmatprep.subr.mxu0 0.0
        %6047 = vmatpush1.msra.mxu0 0.0
        %6048 = vmatprep.subr.mxu0 0.0
        %6049 = vmatpush1.msra.mxu0 0.0
        %6050 = vmatprep.subr.mxu0 0.0
        %6051 = vmatpush1.msra.mxu0 0.0
        %6052 = vmatprep.mubr.f32.mxu0 0.0
        %6053 = vmatmul.mubr.f32.gmra.mrb[0].mxu0 %v859
        %v6054 = vpop.f32.mrb[0].mxu0
        %v6055 = vadd.f32 0.0, %v6054
        %v6056 = vpop.f32.mrb[0].mxu0
        %6057 = vmatprep.mubr.f32.mxu0 0.0
        %6058 = vmatmul.mubr.f32.gmra.mrb[0].mxu0 %v862
        %v6059 = vpop.f32.mrb[0].mxu0
        %v6060 = vadd.f32 0.0, %v6059
        %v6061 = vpop.f32.mrb[0].mxu0
        %6062 = vdwg.mxu0
        %v6063 = vsub.f32 %v5986, %v6055
        %v6064 = vsub.f32 %v5987, %v6060
        %v6065 = vadd.f32 %v4567, %v5800
        %v6066 = vadd.f32 %v4572, %v5805
        %v6067 = vadd.f32 %v6065, %v6055
        %v6068 = vadd.f32 %v6066, %v6060
        %v6069 = vld [vmem:[%s17] sm:$0xff]
        %v6070 = vld [vmem:[%s17 + $0x8] sm:$0xff]
        %v6071 = vld [vmem:[%s17 + $0x10] sm:$0xff]
        %v6072 = vld [vmem:[%s17 + $0x18] sm:$0xff]
        %s6073 = scalar_lea.vmem %s17, 32
        %v6074 = vld [vmem:[%s6073] sm:$0xff]
        %v6075 = vld [vmem:[%s6073 + $0x8] sm:$0xff]
        %v6076 = vld [vmem:[%s6073 + $0x10] sm:$0xff]
        %v6077 = vld [vmem:[%s6073 + $0x18] sm:$0xff]
        %s6078 = scalar_lea.vmem %s17, 64
        %v6079 = vld [vmem:[%s6078] sm:$0xff]
        %v6080 = vld [vmem:[%s6078 + $0x8] sm:$0xff]
        %v6081 = vld [vmem:[%s6078 + $0x10] sm:$0xff]
        %v6082 = vld [vmem:[%s6078 + $0x18] sm:$0xff]
        %6083 = vmatprep.subr.mxu0 0.0
        %6084 = vmatpush1.msra.mxu0 %v6067
        %6085 = vmatprep.subr.mxu0 0.0
        %6086 = vmatpush1.msra.mxu0 %v6068
        %6087 = vmatprep.subr.mxu0 0.0
        %6088 = vmatpush1.msra.mxu0 0.0
        %6089 = vmatprep.subr.mxu0 0.0
        %6090 = vmatpush1.msra.mxu0 0.0
        %6091 = vmatprep.subr.mxu0 0.0
        %6092 = vmatpush1.msra.mxu0 0.0
        %6093 = vmatprep.subr.mxu0 0.0
        %6094 = vmatpush1.msra.mxu0 0.0
        %6095 = vmatprep.subr.mxu0 0.0
        %6096 = vmatpush1.msra.mxu0 0.0
        %6097 = vmatprep.subr.mxu0 0.0
        %6098 = vmatpush1.msra.mxu0 0.0
        %6099 = vmatprep.subr.mxu0 0.0
        %6100 = vmatpush1.msra.mxu0 0.0
        %6101 = vmatprep.subr.mxu0 0.0
        %6102 = vmatpush1.msra.mxu0 0.0
        %6103 = vmatprep.subr.mxu0 0.0
        %6104 = vmatpush1.msra.mxu0 0.0
        %6105 = vmatprep.subr.mxu0 0.0
        %6106 = vmatpush1.msra.mxu0 0.0
        %6107 = vmatprep.subr.mxu0 0.0
        %6108 = vmatpush1.msra.mxu0 0.0
        %6109 = vmatprep.subr.mxu0 0.0
        %6110 = vmatpush1.msra.mxu0 0.0
        %6111 = vmatprep.subr.mxu0 0.0
        %6112 = vmatpush1.msra.mxu0 0.0
        %6113 = vmatprep.subr.mxu0 0.0
        %6114 = vmatpush1.msra.mxu0 0.0
        %6115 = vmatprep.subr.mxu0 0.0
        %6116 = vmatpush1.msra.mxu0 0.0
        %6117 = vmatprep.subr.mxu0 0.0
        %6118 = vmatpush1.msra.mxu0 0.0
        %6119 = vmatprep.subr.mxu0 0.0
        %6120 = vmatpush1.msra.mxu0 0.0
        %6121 = vmatprep.subr.mxu0 0.0
        %6122 = vmatpush1.msra.mxu0 0.0
        %6123 = vmatprep.subr.mxu0 0.0
        %6124 = vmatpush1.msra.mxu0 0.0
        %6125 = vmatprep.subr.mxu0 0.0
        %6126 = vmatpush1.msra.mxu0 0.0
        %6127 = vmatprep.subr.mxu0 0.0
        %6128 = vmatpush1.msra.mxu0 0.0
        %6129 = vmatprep.subr.mxu0 0.0
        %6130 = vmatpush1.msra.mxu0 0.0
        %6131 = vmatprep.subr.mxu0 0.0
        %6132 = vmatpush1.msra.mxu0 0.0
        %6133 = vmatprep.subr.mxu0 0.0
        %6134 = vmatpush1.msra.mxu0 0.0
        %6135 = vmatprep.subr.mxu0 0.0
        %6136 = vmatpush1.msra.mxu0 0.0
        %6137 = vmatprep.subr.mxu0 0.0
        %6138 = vmatpush1.msra.mxu0 0.0
        %6139 = vmatprep.subr.mxu0 0.0
        %6140 = vmatpush1.msra.mxu0 0.0
        %6141 = vmatprep.subr.mxu0 0.0
        %6142 = vmatpush1.msra.mxu0 0.0
        %6143 = vmatprep.subr.mxu0 0.0
        %6144 = vmatpush1.msra.mxu0 0.0
        %6145 = vmatprep.subr.mxu0 0.0
        %6146 = vmatpush1.msra.mxu0 0.0
        %6147 = vmatprep.mubr.f32.mxu0 0.0
        %6148 = vmatmul.mubr.f32.gmra.mrb[0].mxu0 %v1124
        %v6149 = vpop.f32.mrb[0].mxu0
        %v6150 = vadd.f32 0.0, %v6149
        %v6151 = vpop.f32.mrb[0].mxu0
        %6152 = vmatprep.mubr.f32.mxu0 0.0
        %6153 = vmatmul.mubr.f32.gmra.mrb[0].mxu0 %v1127
        %v6154 = vpop.f32.mrb[0].mxu0
        %v6155 = vadd.f32 0.0, %v6154
        %v6156 = vpop.f32.mrb[0].mxu0
        %6157 = vdwg.mxu0
        %6158 = vmatprep.subr.mxu0 0.0
        %6159 = vmatpush1.msra.mxu0 %v6067
        %6160 = vmatprep.subr.mxu0 0.0
        %6161 = vmatpush1.msra.mxu0 %v6068
        %6162 = vmatprep.subr.mxu0 0.0
        %6163 = vmatpush1.msra.mxu0 0.0
        %6164 = vmatprep.subr.mxu0 0.0
        %6165 = vmatpush1.msra.mxu0 0.0
        %6166 = vmatprep.subr.mxu0 0.0
        %6167 = vmatpush1.msra.mxu0 0.0
        %6168 = vmatprep.subr.mxu0 0.0
        %6169 = vmatpush1.msra.mxu0 0.0
        %6170 = vmatprep.subr.mxu0 0.0
        %6171 = vmatpush1.msra.mxu0 0.0
        %6172 = vmatprep.subr.mxu0 0.0
        %6173 = vmatpush1.msra.mxu0 0.0
        %6174 = vmatprep.subr.mxu0 0.0
        %6175 = vmatpush1.msra.mxu0 0.0
        %6176 = vmatprep.subr.mxu0 0.0
        %6177 = vmatpush1.msra.mxu0 0.0
        %6178 = vmatprep.subr.mxu0 0.0
        %6179 = vmatpush1.msra.mxu0 0.0
        %6180 = vmatprep.subr.mxu0 0.0
        %6181 = vmatpush1.msra.mxu0 0.0
        %6182 = vmatprep.subr.mxu0 0.0
        %6183 = vmatpush1.msra.mxu0 0.0
        %6184 = vmatprep.subr.mxu0 0.0
        %6185 = vmatpush1.msra.mxu0 0.0
        %6186 = vmatprep.subr.mxu0 0.0
        %6187 = vmatpush1.msra.mxu0 0.0
        %6188 = vmatprep.subr.mxu0 0.0
        %6189 = vmatpush1.msra.mxu0 0.0
        %6190 = vmatprep.subr.mxu0 0.0
        %6191 = vmatpush1.msra.mxu0 0.0
        %6192 = vmatprep.subr.mxu0 0.0
        %6193 = vmatpush1.msra.mxu0 0.0
        %6194 = vmatprep.subr.mxu0 0.0
        %6195 = vmatpush1.msra.mxu0 0.0
        %6196 = vmatprep.subr.mxu0 0.0
        %6197 = vmatpush1.msra.mxu0 0.0
        %6198 = vmatprep.subr.mxu0 0.0
        %6199 = vmatpush1.msra.mxu0 0.0
        %6200 = vmatprep.subr.mxu0 0.0
        %6201 = vmatpush1.msra.mxu0 0.0
        %6202 = vmatprep.subr.mxu0 0.0
        %6203 = vmatpush1.msra.mxu0 0.0
        %6204 = vmatprep.subr.mxu0 0.0
        %6205 = vmatpush1.msra.mxu0 0.0
        %6206 = vmatprep.subr.mxu0 0.0
        %6207 = vmatpush1.msra.mxu0 0.0
        %6208 = vmatprep.subr.mxu0 0.0
        %6209 = vmatpush1.msra.mxu0 0.0
        %6210 = vmatprep.subr.mxu0 0.0
        %6211 = vmatpush1.msra.mxu0 0.0
        %6212 = vmatprep.subr.mxu0 0.0
        %6213 = vmatpush1.msra.mxu0 0.0
        %6214 = vmatprep.subr.mxu0 0.0
        %6215 = vmatpush1.msra.mxu0 0.0
        %6216 = vmatprep.subr.mxu0 0.0
        %6217 = vmatpush1.msra.mxu0 0.0
        %6218 = vmatprep.subr.mxu0 0.0
        %6219 = vmatpush1.msra.mxu0 0.0
        %6220 = vmatprep.subr.mxu0 0.0
        %6221 = vmatpush1.msra.mxu0 0.0
        %6222 = vmatprep.mubr.f32.mxu0 0.0
        %6223 = vmatmul.mubr.f32.gmra.mrb[0].mxu0 %v1205
        %v6224 = vpop.f32.mrb[0].mxu0
        %v6225 = vadd.f32 0.0, %v6224
        %v6226 = vpop.f32.mrb[0].mxu0
        %6227 = vmatprep.mubr.f32.mxu0 0.0
        %6228 = vmatmul.mubr.f32.gmra.mrb[0].mxu0 %v1208
        %v6229 = vpop.f32.mrb[0].mxu0
        %v6230 = vadd.f32 0.0, %v6229
        %v6231 = vpop.f32.mrb[0].mxu0
        %6232 = vdwg.mxu0
        %v6234 = vsel %vm1955, %v6067, 0
        %v6237 = vsel %vm1955, %v6068, 0
        %6239 = vmatprep.subr.mxu0 0.0
        %6240 = vmatpush1.msra.mxu0 %v6074
        %6241 = vmatprep.subr.mxu0 0.0
        %6242 = vmatpush1.msra.mxu0 %v6075
        %6243 = vmatprep.subr.mxu0 0.0
        %6244 = vmatpush1.msra.mxu0 %v6076
        %6245 = vmatprep.subr.mxu0 0.0
        %6246 = vmatpush1.msra.mxu0 %v6077
        %6247 = vmatprep.subr.mxu0 0.0
        %6248 = vmatpush1.msra.mxu0 0.0
        %6249 = vmatprep.subr.mxu0 0.0
        %6250 = vmatpush1.msra.mxu0 0.0
        %6251 = vmatprep.subr.mxu0 0.0
        %6252 = vmatpush1.msra.mxu0 0.0
        %6253 = vmatprep.subr.mxu0 0.0
        %6254 = vmatpush1.msra.mxu0 0.0
        %6255 = vmatprep.subr.mxu0 0.0
        %6256 = vmatpush1.msra.mxu0 0.0
        %6257 = vmatprep.subr.mxu0 0.0
        %6258 = vmatpush1.msra.mxu0 0.0
        %6259 = vmatprep.subr.mxu0 0.0
        %6260 = vmatpush1.msra.mxu0 0.0
        %6261 = vmatprep.subr.mxu0 0.0
        %6262 = vmatpush1.msra.mxu0 0.0
        %6263 = vmatprep.subr.mxu0 0.0
        %6264 = vmatpush1.msra.mxu0 0.0
        %6265 = vmatprep.subr.mxu0 0.0
        %6266 = vmatpush1.msra.mxu0 0.0
        %6267 = vmatprep.subr.mxu0 0.0
        %6268 = vmatpush1.msra.mxu0 0.0
        %6269 = vmatprep.subr.mxu0 0.0
        %6270 = vmatpush1.msra.mxu0 0.0
        %6271 = vmatprep.subr.mxu0 0.0
        %6272 = vmatpush1.msra.mxu0 0.0
        %6273 = vmatprep.subr.mxu0 0.0
        %6274 = vmatpush1.msra.mxu0 0.0
        %6275 = vmatprep.subr.mxu0 0.0
        %6276 = vmatpush1.msra.mxu0 0.0
        %6277 = vmatprep.subr.mxu0 0.0
        %6278 = vmatpush1.msra.mxu0 0.0
        %6279 = vmatprep.subr.mxu0 0.0
        %6280 = vmatpush1.msra.mxu0 0.0
        %6281 = vmatprep.subr.mxu0 0.0
        %6282 = vmatpush1.msra.mxu0 0.0
        %6283 = vmatprep.subr.mxu0 0.0
        %6284 = vmatpush1.msra.mxu0 0.0
        %6285 = vmatprep.subr.mxu0 0.0
        %6286 = vmatpush1.msra.mxu0 0.0
        %6287 = vmatprep.subr.mxu0 0.0
        %6288 = vmatpush1.msra.mxu0 0.0
        %6289 = vmatprep.subr.mxu0 0.0
        %6290 = vmatpush1.msra.mxu0 0.0
        %6291 = vmatprep.subr.mxu0 0.0
        %6292 = vmatpush1.msra.mxu0 0.0
        %6293 = vmatprep.subr.mxu0 0.0
        %6294 = vmatpush1.msra.mxu0 0.0
        %6295 = vmatprep.subr.mxu0 0.0
        %6296 = vmatpush1.msra.mxu0 0.0
        %6297 = vmatprep.subr.mxu0 0.0
        %6298 = vmatpush1.msra.mxu0 0.0
        %6299 = vmatprep.subr.mxu0 0.0
        %6300 = vmatpush1.msra.mxu0 0.0
        %6301 = vmatprep.subr.mxu0 0.0
        %6302 = vmatpush1.msra.mxu0 0.0
        %6303 = vmatprep.mubr.f32.mxu0 0.0
        %6304 = vmatmul.mubr.f32.gmra.mrb[0].mxu0 %v6234
        %v6305 = vpop.f32.mrb[0].mxu0
        %v6306 = vpop.f32.mrb[0].mxu0
        %6307 = vmatprep.mubr.f32.mxu0 0.0
        %6308 = vmatmul.mubr.f32.gmra.mrb[0].mxu0 %v6237
        %v6309 = vpop.f32.mrb[0].mxu0
        %v6310 = vadd.f32 0.0, %v6309
        %v6311 = vpop.f32.mrb[0].mxu0
        %6312 = vdwg.mxu0
        %v6314 = vsel %vm1955, %v6150, 0
        %v6317 = vsel %vm1955, %v6155, 0
        %6319 = vmatprep.subr.mxu0 0.0
        %6320 = vmatpush1.msra.mxu0 %v6069
        %6321 = vmatprep.subr.mxu0 0.0
        %6322 = vmatpush1.msra.mxu0 %v6070
        %6323 = vmatprep.subr.mxu0 0.0
        %6324 = vmatpush1.msra.mxu0 %v6071
        %6325 = vmatprep.subr.mxu0 0.0
        %6326 = vmatpush1.msra.mxu0 %v6072
        %6327 = vmatprep.subr.mxu0 0.0
        %6328 = vmatpush1.msra.mxu0 0.0
        %6329 = vmatprep.subr.mxu0 0.0
        %6330 = vmatpush1.msra.mxu0 0.0
        %6331 = vmatprep.subr.mxu0 0.0
        %6332 = vmatpush1.msra.mxu0 0.0
        %6333 = vmatprep.subr.mxu0 0.0
        %6334 = vmatpush1.msra.mxu0 0.0
        %6335 = vmatprep.subr.mxu0 0.0
        %6336 = vmatpush1.msra.mxu0 0.0
        %6337 = vmatprep.subr.mxu0 0.0
        %6338 = vmatpush1.msra.mxu0 0.0
        %6339 = vmatprep.subr.mxu0 0.0
        %6340 = vmatpush1.msra.mxu0 0.0
        %6341 = vmatprep.subr.mxu0 0.0
        %6342 = vmatpush1.msra.mxu0 0.0
        %6343 = vmatprep.subr.mxu0 0.0
        %6344 = vmatpush1.msra.mxu0 0.0
        %6345 = vmatprep.subr.mxu0 0.0
        %6346 = vmatpush1.msra.mxu0 0.0
        %6347 = vmatprep.subr.mxu0 0.0
        %6348 = vmatpush1.msra.mxu0 0.0
        %6349 = vmatprep.subr.mxu0 0.0
        %6350 = vmatpush1.msra.mxu0 0.0
        %6351 = vmatprep.subr.mxu0 0.0
        %6352 = vmatpush1.msra.mxu0 0.0
        %6353 = vmatprep.subr.mxu0 0.0
        %6354 = vmatpush1.msra.mxu0 0.0
        %6355 = vmatprep.subr.mxu0 0.0
        %6356 = vmatpush1.msra.mxu0 0.0
        %6357 = vmatprep.subr.mxu0 0.0
        %6358 = vmatpush1.msra.mxu0 0.0
        %6359 = vmatprep.subr.mxu0 0.0
        %6360 = vmatpush1.msra.mxu0 0.0
        %6361 = vmatprep.subr.mxu0 0.0
        %6362 = vmatpush1.msra.mxu0 0.0
        %6363 = vmatprep.subr.mxu0 0.0
        %6364 = vmatpush1.msra.mxu0 0.0
        %6365 = vmatprep.subr.mxu0 0.0
        %6366 = vmatpush1.msra.mxu0 0.0
        %6367 = vmatprep.subr.mxu0 0.0
        %6368 = vmatpush1.msra.mxu0 0.0
        %6369 = vmatprep.subr.mxu0 0.0
        %6370 = vmatpush1.msra.mxu0 0.0
        %6371 = vmatprep.subr.mxu0 0.0
        %6372 = vmatpush1.msra.mxu0 0.0
        %6373 = vmatprep.subr.mxu0 0.0
        %6374 = vmatpush1.msra.mxu0 0.0
        %6375 = vmatprep.subr.mxu0 0.0
        %6376 = vmatpush1.msra.mxu0 0.0
        %6377 = vmatprep.subr.mxu0 0.0
        %6378 = vmatpush1.msra.mxu0 0.0
        %6379 = vmatprep.subr.mxu0 0.0
        %6380 = vmatpush1.msra.mxu0 0.0
        %6381 = vmatprep.subr.mxu0 0.0
        %6382 = vmatpush1.msra.mxu0 0.0
        %6383 = vmatprep.mubr.f32.mxu0 0.0
        %6384 = vmatmul.mubr.f32.gmra.mrb[0].mxu0 %v6314
        %v6385 = vpop.f32.mrb[0].mxu0
        %v6386 = vpop.f32.mrb[0].mxu0
        %6387 = vmatprep.mubr.f32.mxu0 0.0
        %6388 = vmatmul.mubr.f32.gmra.mrb[0].mxu0 %v6317
        %v6389 = vpop.f32.mrb[0].mxu0
        %v6390 = vadd.f32 %v6310, %v6389
        %v6391 = vpop.f32.mrb[0].mxu0
        %6392 = vdwg.mxu0
        %v6394 = vsel %vm1955, %v6225, 0
        %v6397 = vsel %vm1955, %v6230, 0
        %6399 = vmatprep.subr.mxu0 0.0
        %6400 = vmatpush1.msra.mxu0 %v6079
        %6401 = vmatprep.subr.mxu0 0.0
        %6402 = vmatpush1.msra.mxu0 %v6080
        %6403 = vmatprep.subr.mxu0 0.0
        %6404 = vmatpush1.msra.mxu0 %v6081
        %6405 = vmatprep.subr.mxu0 0.0
        %6406 = vmatpush1.msra.mxu0 %v6082
        %6407 = vmatprep.subr.mxu0 0.0
        %6408 = vmatpush1.msra.mxu0 0.0
        %6409 = vmatprep.subr.mxu0 0.0
        %6410 = vmatpush1.msra.mxu0 0.0
        %6411 = vmatprep.subr.mxu0 0.0
        %6412 = vmatpush1.msra.mxu0 0.0
        %6413 = vmatprep.subr.mxu0 0.0
        %6414 = vmatpush1.msra.mxu0 0.0
        %6415 = vmatprep.subr.mxu0 0.0
        %6416 = vmatpush1.msra.mxu0 0.0
        %6417 = vmatprep.subr.mxu0 0.0
        %6418 = vmatpush1.msra.mxu0 0.0
        %6419 = vmatprep.subr.mxu0 0.0
        %6420 = vmatpush1.msra.mxu0 0.0
        %6421 = vmatprep.subr.mxu0 0.0
        %6422 = vmatpush1.msra.mxu0 0.0
        %6423 = vmatprep.subr.mxu0 0.0
        %6424 = vmatpush1.msra.mxu0 0.0
        %6425 = vmatprep.subr.mxu0 0.0
        %6426 = vmatpush1.msra.mxu0 0.0
        %6427 = vmatprep.subr.mxu0 0.0
        %6428 = vmatpush1.msra.mxu0 0.0
        %6429 = vmatprep.subr.mxu0 0.0
        %6430 = vmatpush1.msra.mxu0 0.0
        %6431 = vmatprep.subr.mxu0 0.0
        %6432 = vmatpush1.msra.mxu0 0.0
        %6433 = vmatprep.subr.mxu0 0.0
        %6434 = vmatpush1.msra.mxu0 0.0
        %6435 = vmatprep.subr.mxu0 0.0
        %6436 = vmatpush1.msra.mxu0 0.0
        %6437 = vmatprep.subr.mxu0 0.0
        %6438 = vmatpush1.msra.mxu0 0.0
        %6439 = vmatprep.subr.mxu0 0.0
        %6440 = vmatpush1.msra.mxu0 0.0
        %6441 = vmatprep.subr.mxu0 0.0
        %6442 = vmatpush1.msra.mxu0 0.0
        %6443 = vmatprep.subr.mxu0 0.0
        %6444 = vmatpush1.msra.mxu0 0.0
        %6445 = vmatprep.subr.mxu0 0.0
        %6446 = vmatpush1.msra.mxu0 0.0
        %6447 = vmatprep.subr.mxu0 0.0
        %6448 = vmatpush1.msra.mxu0 0.0
        %6449 = vmatprep.subr.mxu0 0.0
        %6450 = vmatpush1.msra.mxu0 0.0
        %6451 = vmatprep.subr.mxu0 0.0
        %6452 = vmatpush1.msra.mxu0 0.0
        %6453 = vmatprep.subr.mxu0 0.0
        %6454 = vmatpush1.msra.mxu0 0.0
        %6455 = vmatprep.subr.mxu0 0.0
        %6456 = vmatpush1.msra.mxu0 0.0
        %6457 = vmatprep.subr.mxu0 0.0
        %6458 = vmatpush1.msra.mxu0 0.0
        %6459 = vmatprep.subr.mxu0 0.0
        %6460 = vmatpush1.msra.mxu0 0.0
        %6461 = vmatprep.subr.mxu0 0.0
        %6462 = vmatpush1.msra.mxu0 0.0
        %6463 = vmatprep.mubr.f32.mxu0 0.0
        %6464 = vmatmul.mubr.f32.gmra.mrb[0].mxu0 %v6394
        %v6465 = vpop.f32.mrb[0].mxu0
        %v6466 = vpop.f32.mrb[0].mxu0
        %6467 = vmatprep.mubr.f32.mxu0 0.0
        %6468 = vmatmul.mubr.f32.gmra.mrb[0].mxu0 %v6397
        %v6469 = vpop.f32.mrb[0].mxu0
        %v6470 = vadd.f32 0.0, %v6469
        %v6471 = vpop.f32.mrb[0].mxu0
        %6472 = vdwg.mxu0
        %v6473 = vadd.f32 %v6390, %v6470
        %v6474 = vadd.f32 %v1115, %v6473
        %v6475 = vld [vmem:[#allocation13] sm:$0x3]
        %v6476 = vsel %vm1955, %v6063, 0.0
        %6477 = vadd.xlane.f32.xlu0 %v6476
        %v6478 = vpop.xlane.xlu0 %6477
        %v6479 = vsel %vm1955, %v6064, 0.0
        %6480 = vadd.xlane.f32.xlu0 %v6479
        %v6481 = vpop.xlane.xlu0 %6480
        %v6482 = vmul.f32 %v6478, %v3373
        %v6483 = vmul.f32 %v6481, %v3373
        %v6484 = vsub.f32 %v6063, %v6482
        %v6485 = vsub.f32 %v6064, %v6483
        %v6486 = vmul.f32 %v6484, %v6484
        %v6487 = vmul.f32 %v6485, %v6485
        %v6488 = vsel %vm1955, %v6486, 0.0
        %6489 = vadd.xlane.f32.xlu0 %v6488
        %v6490 = vpop.xlane.xlu0 %6489
        %v6491 = vsel %vm1955, %v6487, 0.0
        %6492 = vadd.xlane.f32.xlu0 %v6491
        %v6493 = vpop.xlane.xlu0 %6492
        %v6494 = vmul.f32 %v6490, %v3373
        %v6495 = vmul.f32 %v6493, %v3373
        %v6496 = vadd.f32 %v6494, 1e-05
        %v6497 = vadd.f32 %v6495, 1e-05
        %v6498 = vrsqrt.pop %v6496
        %v6499 = vrsqrt.pop %v6497
        %v6500 = vmul.f32 %v6484, %v6498
        %v6501 = vmul.f32 %v6485, %v6499
        %v6502 = vlaneseq
        %v6503 = vshrl.u32 %v6502, 7
        %v6504 = vsub.s32 0, %v6503
        %v6505 = vrot.slane %v6475, %v6504
        %v6506 = vmul.f32 %v6500, %v6505
        %v6507 = vmul.f32 %v6501, %v6505
        %v6508 = vlaneseq
        %v6509 = vshrl.u32 %v6508, 7
        %v6510 = vsub.s32 1, %v6509
        %v6511 = vrot.slane %v6475, %v6510
        %v6512 = vadd.f32 %v6506, %v6511
        %v6513 = vadd.f32 %v6507, %v6511
        %v6514 = vsel %vm1955, %v6512, 0.0
        %v6515 = vsel %vm1955, %v6513, 0.0
        %v6516 = vadd.f32 %v6514, %v6515
        %v6517 = vrot.slane %v6516, 4
        %v6518 = vadd.f32 %v6516, %v6517
        %v6519 = vrot.slane %v6518, 2
        %v6520 = vadd.f32 %v6518, %v6519
        %v6521 = vrot.slane %v6520, 1
        %v6522 = vadd.f32 %v6520, %v6521
        %v6523 = vmul.f32 %v6522, %v951
        %v6524 = vsub.f32 %v6512, %v6523
        %v6525 = vsub.f32 %v6513, %v6523
        %v6526 = vld [vmem:[%s20] sm:$0xff]
        %v6527 = vld [vmem:[%s20 + $0x8] sm:$0xff]
        %v6528 = vld [vmem:[%s20 + $0x10] sm:$0xff]
        %v6529 = vld [vmem:[%s20 + $0x18] sm:$0xff]
        %v6530 = vld [vmem:[%s20 + $0x20] sm:$0x1]
        %v6531 = vlaneseq
        %v6532 = vshrl.u32 %v6531, 7
        %v6533 = vsub.s32 0, %v6532
        %v6534 = vrot.slane %v6530, %v6533
        %v6536 = vsel %vm1955, %v6524, 0
        %v6539 = vsel %vm1955, %v6525, 0
        %6541 = vmatprep.subr.mxu0 0.0
        %6542 = vmatpush1.msra.mxu0 %v6526
        %6543 = vmatprep.subr.mxu0 0.0
        %6544 = vmatpush1.msra.mxu0 %v6527
        %6545 = vmatprep.subr.mxu0 0.0
        %6546 = vmatpush1.msra.mxu0 %v6528
        %6547 = vmatprep.subr.mxu0 0.0
        %6548 = vmatpush1.msra.mxu0 %v6529
        %6549 = vmatprep.subr.mxu0 0.0
        %6550 = vmatpush1.msra.mxu0 0.0
        %6551 = vmatprep.subr.mxu0 0.0
        %6552 = vmatpush1.msra.mxu0 0.0
        %6553 = vmatprep.subr.mxu0 0.0
        %6554 = vmatpush1.msra.mxu0 0.0
        %6555 = vmatprep.subr.mxu0 0.0
        %6556 = vmatpush1.msra.mxu0 0.0
        %6557 = vmatprep.subr.mxu0 0.0
        %6558 = vmatpush1.msra.mxu0 0.0
        %6559 = vmatprep.subr.mxu0 0.0
        %6560 = vmatpush1.msra.mxu0 0.0
        %6561 = vmatprep.subr.mxu0 0.0
        %6562 = vmatpush1.msra.mxu0 0.0
        %6563 = vmatprep.subr.mxu0 0.0
        %6564 = vmatpush1.msra.mxu0 0.0
        %6565 = vmatprep.subr.mxu0 0.0
        %6566 = vmatpush1.msra.mxu0 0.0
        %6567 = vmatprep.subr.mxu0 0.0
        %6568 = vmatpush1.msra.mxu0 0.0
        %6569 = vmatprep.subr.mxu0 0.0
        %6570 = vmatpush1.msra.mxu0 0.0
        %6571 = vmatprep.subr.mxu0 0.0
        %6572 = vmatpush1.msra.mxu0 0.0
        %6573 = vmatprep.subr.mxu0 0.0
        %6574 = vmatpush1.msra.mxu0 0.0
        %6575 = vmatprep.subr.mxu0 0.0
        %6576 = vmatpush1.msra.mxu0 0.0
        %6577 = vmatprep.subr.mxu0 0.0
        %6578 = vmatpush1.msra.mxu0 0.0
        %6579 = vmatprep.subr.mxu0 0.0
        %6580 = vmatpush1.msra.mxu0 0.0
        %6581 = vmatprep.subr.mxu0 0.0
        %6582 = vmatpush1.msra.mxu0 0.0
        %6583 = vmatprep.subr.mxu0 0.0
        %6584 = vmatpush1.msra.mxu0 0.0
        %6585 = vmatprep.subr.mxu0 0.0
        %6586 = vmatpush1.msra.mxu0 0.0
        %6587 = vmatprep.subr.mxu0 0.0
        %6588 = vmatpush1.msra.mxu0 0.0
        %6589 = vmatprep.subr.mxu0 0.0
        %6590 = vmatpush1.msra.mxu0 0.0
        %6591 = vmatprep.subr.mxu0 0.0
        %6592 = vmatpush1.msra.mxu0 0.0
        %6593 = vmatprep.subr.mxu0 0.0
        %6594 = vmatpush1.msra.mxu0 0.0
        %6595 = vmatprep.subr.mxu0 0.0
        %6596 = vmatpush1.msra.mxu0 0.0
        %6597 = vmatprep.subr.mxu0 0.0
        %6598 = vmatpush1.msra.mxu0 0.0
        %6599 = vmatprep.subr.mxu0 0.0
        %6600 = vmatpush1.msra.mxu0 0.0
        %6601 = vmatprep.subr.mxu0 0.0
        %6602 = vmatpush1.msra.mxu0 0.0
        %6603 = vmatprep.subr.mxu0 0.0
        %6604 = vmatpush1.msra.mxu0 0.0
        %6605 = vmatprep.mubr.f32.mxu0 0.0
        %6606 = vmatmul.mubr.f32.gmra.mrb[0].mxu0 %v6536
        %v6607 = vpop.f32.mrb[0].mxu0
        %v6608 = vpop.f32.mrb[0].mxu0
        %6609 = vmatprep.mubr.f32.mxu0 0.0
        %6610 = vmatmul.mubr.f32.gmra.mrb[0].mxu0 %v6539
        %v6611 = vpop.f32.mrb[0].mxu0
        %v6612 = vadd.f32 %v6534, %v6611
        %v6613 = vpop.f32.mrb[0].mxu0
        %6614 = vdwg.mxu0
        %v6615 = vadd.f32 %v6474, %v6612
        %6616 = vst.msk [vmem:[%s763] sm:$0xff] %vm941, %v6615
        %p6617 = scmp.lt.s32.totalorder %s37, 1
        %s6618 = scalar_select %p6617, %s37, 1
        %s6619 = smul.addr %s6618, 8
        %s6620 = scalar_lea.vmem %s21, %s6619
        // Predicated region
        $region137: #{_lambda_.1} parent=103 // pred_check
          %p6621 = pneg %p501
        $region138: #{_lambda_.1} parent=103 // pred_check_branch
          %6623 = sbr.rel (%p6621) target = $region140
        $region139: #{_lambda_.1} parent=103 // pred_region
          _
        $region140: #{_lambda_.1} parent=103 // pred_fallthru
          _
      $region104: #{_lambda_.1} parent=5 // pred_fallthru
        _
      %p6624 = scmp.le.s32.totalorder 2, %s32
      // Predicated region
      $region141: #{_lambda_.1} parent=5 // pred_check
        %p6625 = pneg %p6624
      $region142: #{_lambda_.1} parent=5 // pred_check_branch
        %6627 = sbr.rel (%p6625) target = $region144
      $region143: #{_lambda_.1} parent=5 // pred_region
        %s6628 = ssub.s32 %s32, 2
        // Predicated region
        $region145: #{_lambda_.1} parent=143 // pred_check
          %p6629 = pneg %p507
        $region146: #{_lambda_.1} parent=143 // pred_check_branch
          %6631 = sbr.rel (%p6629) target = $region148
        $region147: #{_lambda_.1} parent=143 // pred_region
          %p6632 = scmp.lt.s32.totalorder %s38, 1
          %s6633 = scalar_select %p6632, %s38, 1
          %s6634 = smul.addr %s6633, 8
          %s6635 = scalar_lea.vmem %s21, %s6634
        $region148: #{_lambda_.1} parent=143 // pred_fallthru
          _
      $region144: #{_lambda_.1} parent=5 // pred_fallthru
        _
    $region6: #{_lambda_.1} parent=1 // loop_footer
      %s36 = sadd.s32 1, %s32
    $region7: #{_lambda_.1} parent=1 // loop_footer_branch
      %31 = sbr.rel target = $region3
    $region8: #{_lambda_.1} parent=1 // loop_exit
      _
    %6636 = vsyncpa [#allocation3], 1
    %s6637 = scalar_lea.sflag [#allocation3], 1
    %6638 = vsyncpa %s6637, 1
    %6639 = vsyncpa [#allocation5], 1
    %6640 = vsyncpa [#allocation8], 1
    %6641 = vsyncpa [#allocation11], 1
    %6642 = vsyncpa [#allocation14], 1

</llo_original>
